<compile_context>
chip_gen: v7x
topology: tpu7x:2x2x1
jax: 0.10.0
libtpu: 0.0.40
codegen_flags: <defaults>
</compile_context>

<pallas_src>
import functools

import jax
import jax.numpy as jnp
from jax.experimental import pallas as pl
from jax.experimental.pallas import tpu as pltpu

# ----------------------- scaled-down ViT configuration -----------------------
PATCH = 16            # patch size (same as vit-base-patch16)
HIDDEN = 128          # hidden_size      (768 in vit-base)
NUM_HEADS = 4         # attention heads  (12 in vit-base)
HEAD_DIM = HIDDEN // NUM_HEADS
MLP_DIM = 256         # intermediate     (3072 in vit-base)
NUM_LAYERS = 2        # encoder layers   (12 in vit-base)
OUTPUT_DIM = 256      # self.fc out_features (1024 in the PyTorch module)
LN_EPS = 1e-12        # HF ViT layer_norm_eps


def _full_spec(shape):
    """Whole-array BlockSpec (single block, grid=())."""
    return pl.BlockSpec(shape, lambda: (0,) * len(shape))


# --------------------------- in-kernel helper math ----------------------------
def _layernorm(x, g, b):
    mean = jnp.mean(x, axis=-1, keepdims=True)
    var = jnp.mean(jnp.square(x - mean), axis=-1, keepdims=True)
    return (x - mean) * jax.lax.rsqrt(var + LN_EPS) * g + b


def _gelu(y):
    # TODO(synk): HF ViT uses exact erf-GELU; tanh approximation used here.
    c = jnp.float32(0.7978845608028654)  # sqrt(2/pi)
    return 0.5 * y * (1.0 + jnp.tanh(c * (y + 0.044715 * y * y * y)))


# --------------------------- fully fused forward kernel -----------------------
def _vit_forward_kernel(patches_ref, tokb_ref, pw_ref,
                        qkvw_ref, ow_ref, f1w_ref, f2w_ref, pvec_ref,
                        lnf_ref, fcw_ref, fcb_ref,
                        o_ref,
                        h_s, qkv_s, pool_s,
                        *, batch, seq, num_heads, head_dim, num_layers,
                        mlp_dim, scale):
    D = num_heads * head_dim

    # ---- patch embedding: single (B*S, PD) @ (PD, D) bf16 matmul ----
    # Row b*S of `patches` is all zeros, so that row of `emb` is 0 and the
    # per-token bias (cls + pos[0]) alone forms the [CLS] token.
    emb = jnp.dot(patches_ref[...], pw_ref[...],
                  preferred_element_type=jnp.float32)          # (B*S, D) f32
    h_s[...] = emb + tokb_ref[...]                             # + cls/pos/bias

    # ---- encoder layers (statically unrolled; weights VMEM-resident) ----
    for l in range(num_layers):
        # Packed small params: rows of the (8, 3D) per-layer block.
        ln1g = pvec_ref[l, 0:1, 0:D]
        ln1b = pvec_ref[l, 1:2, 0:D]
        ln2g = pvec_ref[l, 2:3, 0:D]
        ln2b = pvec_ref[l, 3:4, 0:D]
        o_b = pvec_ref[l, 4:5, 0:D]
        f2b = pvec_ref[l, 5:6, 0:D]
        qkvb = pvec_ref[l, 6:7, :]
        f1b = pvec_ref[l, 7:8, 0:mlp_dim]

        # --- self-attention block (pre-norm, HF ViT style) ---
        x = h_s[...]                                           # (B*S, D) f32
        hn = _layernorm(x, ln1g, ln1b)
        # Fused QKV projection, batch flattened into M: (B*S, D) @ (D, 3D).
        qkv_s[...] = (jnp.dot(hn.astype(jnp.bfloat16), qkvw_ref[l],
                              preferred_element_type=jnp.float32) + qkvb)

        # Per-head row-slices of the output projection, loaded once per layer.
        ow_h = [ow_ref[l, hi * head_dim:(hi + 1) * head_dim, :]
                for hi in range(num_heads)]

        for b in range(batch):                                 # tiny attn loop
            r0 = b * seq
            attn_b = o_b                                       # (1, D) bcast
            for hi in range(num_heads):
                c0 = hi * head_dim
                q = qkv_s[r0:r0 + seq, c0:c0 + head_dim]
                k = qkv_s[r0:r0 + seq, D + c0:D + c0 + head_dim]
                v = qkv_s[r0:r0 + seq, 2 * D + c0:2 * D + c0 + head_dim]
                s = jax.lax.dot_general(q, k, (((1,), (1,)), ((), ())),
                                        preferred_element_type=jnp.float32)
                s = s * scale
                s = s - jnp.max(s, axis=-1, keepdims=True)
                p = jnp.exp(s)
                # softmax normalization via EUP reciprocal (free slot)
                p = p * pl.reciprocal(jnp.sum(p, axis=-1, keepdims=True),
                                      approx=True)
                ctx = jnp.dot(p.astype(jnp.bfloat16), v.astype(jnp.bfloat16),
                              preferred_element_type=jnp.float32)   # (S, hd)
                # Output projection folded into the head loop -> no lane-sparse
                # ctx scratch stores, identical MXU FLOPs.
                attn_b = attn_b + jnp.dot(ctx.astype(jnp.bfloat16), ow_h[hi],
                                          preferred_element_type=jnp.float32)
            # residual 1 (read-modify-write of this image's rows)
            h_s[r0:r0 + seq, :] = h_s[r0:r0 + seq, :] + attn_b

        # --- MLP block (pre-norm), batch flattened into M ---
        x1 = h_s[...]
        hn2 = _layernorm(x1, ln2g, ln2b)
        m = _gelu(jnp.dot(hn2.astype(jnp.bfloat16), f1w_ref[l],
                          preferred_element_type=jnp.float32) + f1b)
        m = jnp.dot(m.astype(jnp.bfloat16), f2w_ref[l],
                    preferred_element_type=jnp.float32) + f2b
        h_s[...] = x1 + m                                      # residual 2

    # ---- final LayerNorm -> mean-pool over tokens -> fc ----
    xn = _layernorm(h_s[...], lnf_ref[0:1, :], lnf_ref[1:2, :])
    h_s[...] = xn            # park so per-image rows are cheap ref slices
    for b in range(batch):
        pool_s[b:b + 1, :] = jnp.mean(h_s[b * seq:(b + 1) * seq, :],
                                      axis=0, keepdims=True)
    y = jnp.dot(pool_s[...].astype(jnp.bfloat16), fcw_ref[...],
                preferred_element_type=jnp.float32) + fcb_ref[...]
    o_ref[...] = y.astype(o_ref.dtype)                         # (B, OUT)


# --------------------------------- parameters ----------------------------------
def init_params(key, channels_in, img_size):
    num_patches = (img_size // PATCH) ** 2
    patch_dim = channels_in * PATCH * PATCH
    keys = iter(jax.random.split(key, 32))

    def w(shape):
        return (0.02 * jax.random.normal(next(keys), shape)).astype(jnp.float32)

    L, D = NUM_LAYERS, HIDDEN

    # Layer weights stacked along a leading layer axis, stored in bf16.
    qkv_w = jnp.stack([w((D, 3 * D)) for _ in range(L)]).astype(jnp.bfloat16)
    o_w = jnp.stack([w((D, D)) for _ in range(L)]).astype(jnp.bfloat16)
    fc1_w = jnp.stack([w((D, MLP_DIM)) for _ in range(L)]).astype(jnp.bfloat16)
    fc2_w = jnp.stack([w((MLP_DIM, D)) for _ in range(L)]).astype(jnp.bfloat16)

    # Packed per-layer vector params, rows =
    #   [ln1_g, ln1_b, ln2_g, ln2_b, o_b, fc2_b, qkv_b, fc1_b]
    # (gammas init to 1, biases to 0, as in a fresh HF LayerNorm/Linear bias).
    pvec = jnp.zeros((L, 8, 3 * D), jnp.float32)
    pvec = pvec.at[:, 0, :D].set(1.0)     # ln1 gamma
    pvec = pvec.at[:, 2, :D].set(1.0)     # ln2 gamma

    lnf = jnp.concatenate([jnp.ones((1, D), jnp.float32),
                           jnp.zeros((1, D), jnp.float32)], axis=0)  # (2, D)

    return dict(
        # Conv2d(C, HIDDEN, 16, 16) weight flattened (C, kh, kw) -> patch_dim.
        patch_w=w((patch_dim, D)).astype(jnp.bfloat16),
        patch_b=jnp.zeros((1, D), jnp.float32),
        cls=w((1, D)),
        pos=w((num_patches + 1, D)),
        qkv_w=qkv_w, o_w=o_w, fc1_w=fc1_w, fc2_w=fc2_w, pvec=pvec,
        lnf=lnf,
        fc_w=w((D, OUTPUT_DIM)).astype(jnp.bfloat16),
        fc_b=jnp.zeros((1, OUTPUT_DIM), jnp.float32),
    )


# ---------------------------------- forward ------------------------------------
def vit_image_encoder(x, params):
    """x: NCHW (B, C, H, W) -> (B, 1, OUTPUT_DIM), mirroring the PyTorch forward."""
    B, C, H, W = x.shape
    nh, nw = H // PATCH, W // PATCH
    num_patches = nh * nw
    S = num_patches + 1
    patch_dim = C * PATCH * PATCH
    D = HIDDEN

    # im2col (layout plumbing only; the projection matmul runs in Pallas).
    patches = (x.reshape(B, C, nh, PATCH, nw, PATCH)
                .transpose(0, 2, 4, 1, 3, 5)
                .reshape(B, num_patches, patch_dim))
    # Zero row in the [CLS] slot so one flattened matmul yields the whole
    # sequence.  TODO(synk): could write the CLS row in-kernel instead and skip
    # this tiny host-side materialization.
    patches = jnp.concatenate(
        [jnp.zeros((B, 1, patch_dim), patches.dtype), patches], axis=1)
    patches = patches.reshape(B * S, patch_dim).astype(jnp.bfloat16)

    # Per-token additive bias: row 0 = cls + pos[0]; rows 1.. = pos + conv bias.
    pos = params["pos"]
    tok_bias = jnp.concatenate(
        [params["cls"] + pos[:1], pos[1:] + params["patch_b"]], axis=0)  # (S,D)
    tok_bias = jnp.tile(tok_bias, (B, 1))                                # (B*S,D)

    kern = functools.partial(
        _vit_forward_kernel,
        batch=B, seq=S, num_heads=NUM_HEADS, head_dim=HEAD_DIM,
        num_layers=NUM_LAYERS, mlp_dim=MLP_DIM,
        scale=1.0 / float(HEAD_DIM) ** 0.5)

    out = pl.pallas_call(
        kern,
        out_shape=jax.ShapeDtypeStruct((B, OUTPUT_DIM), jnp.float32),
        in_specs=[
            _full_spec((B * S, patch_dim)),                 # patches (bf16)
            _full_spec((B * S, D)),                         # tok_bias (f32)
            _full_spec((patch_dim, D)),                     # patch_w (bf16)
            _full_spec((NUM_LAYERS, D, 3 * D)),             # qkv_w stack
            _full_spec((NUM_LAYERS, D, D)),                 # o_w stack
            _full_spec((NUM_LAYERS, D, MLP_DIM)),           # fc1_w stack
            _full_spec((NUM_LAYERS, MLP_DIM, D)),           # fc2_w stack
            _full_spec((NUM_LAYERS, 8, 3 * D)),             # packed vec params
            _full_spec((2, D)),                             # final LN g/b
            _full_spec((D, OUTPUT_DIM)),                    # fc_w (bf16)
            _full_spec((1, OUTPUT_DIM)),                    # fc_b
        ],
        out_specs=_full_spec((B, OUTPUT_DIM)),
        scratch_shapes=[
            pltpu.VMEM((B * S, D), jnp.float32),            # activations h
            pltpu.VMEM((B * S, 3 * D), jnp.float32),        # fused QKV
            pltpu.VMEM((B, D), jnp.float32),                # pooled features
        ],
    )(patches, tok_bias, params["patch_w"],
      params["qkv_w"], params["o_w"], params["fc1_w"], params["fc2_w"],
      params["pvec"], params["lnf"], params["fc_w"], params["fc_b"])

    # pooled = mean(dim=1); fc; unsqueeze(1)
    return out[:, None, :]                                   # (B, 1, OUT)


# ------------------------------------ main --------------------------------------
if __name__ == "__main__":
    key = jax.random.PRNGKey(0)
    k_x, k_p = jax.random.split(key)

    B, C, IMG = 2, 4, 32                       # 2x2 = 4 patches -> seq len 5
    x = jax.random.normal(k_x, (B, C, IMG, IMG), dtype=jnp.float32)
    params = init_params(k_p, C, IMG)

    out = jax.jit(vit_image_encoder)(x, params)
    out = jax.block_until_ready(out)

    assert out.shape == (B, 1, OUTPUT_DIM), out.shape
    assert out.dtype == jnp.float32
    print("KERNEL_OK")
</pallas_src>

<mosaic_0001>
module attributes {stable_mosaic.version = 11 : i64} {
  func.func @_vit_forward_kernel(%arg0: memref<10x1024xbf16, #tpu.memory_space<vmem>>, %arg1: memref<10x128xf32, #tpu.memory_space<vmem>>, %arg2: memref<1024x128xbf16, #tpu.memory_space<vmem>>, %arg3: memref<2x128x384xbf16, #tpu.memory_space<vmem>>, %arg4: memref<2x128x128xbf16, #tpu.memory_space<vmem>>, %arg5: memref<2x128x256xbf16, #tpu.memory_space<vmem>>, %arg6: memref<2x256x128xbf16, #tpu.memory_space<vmem>>, %arg7: memref<2x8x384xf32, #tpu.memory_space<vmem>>, %arg8: memref<2x128xf32, #tpu.memory_space<vmem>>, %arg9: memref<128x256xbf16, #tpu.memory_space<vmem>>, %arg10: memref<1x256xf32, #tpu.memory_space<vmem>>, %arg11: memref<2x256xf32, #tpu.memory_space<vmem>>, %arg12: memref<10x128xf32, #tpu.memory_space<vmem>>, %arg13: memref<10x384xf32, #tpu.memory_space<vmem>>, %arg14: memref<2x128xf32, #tpu.memory_space<vmem>>) attributes {dimension_semantics = [], scalar_prefetch = 0 : i64, scratch_operands = 3 : i64, tpu.core_type = #tpu.core_type<tc>} {
    %c0 = arith.constant 0 : index
    %c0_0 = arith.constant 0 : index
    %0 = vector.load %arg0[%c0, %c0_0] : memref<10x1024xbf16, #tpu.memory_space<vmem>>, vector<10x1024xbf16>
    %c0_1 = arith.constant 0 : index
    %c0_2 = arith.constant 0 : index
    %1 = vector.load %arg2[%c0_1, %c0_2] : memref<1024x128xbf16, #tpu.memory_space<vmem>>, vector<1024x128xbf16>
    %cst = arith.constant dense<0.000000e+00> : vector<10x128xf32>
    %2 = tpu.matmul %0, %1, %cst {dimension_numbers = #tpu.dot_dimension_numbers<[1], [0], [0], [1], [0, 0, 1, 1], [], []>} : vector<10x1024xbf16>, vector<1024x128xbf16>, vector<10x128xf32> -> vector<10x128xf32>
    %c0_3 = arith.constant 0 : index
    %c0_4 = arith.constant 0 : index
    %3 = vector.load %arg1[%c0_3, %c0_4] : memref<10x128xf32, #tpu.memory_space<vmem>>, vector<10x128xf32>
    %4 = arith.addf %2, %3 : vector<10x128xf32>
    %c0_5 = arith.constant 0 : index
    %c0_6 = arith.constant 0 : index
    %5 = vector.load %arg12[%c0_5, %c0_6] : memref<10x128xf32, #tpu.memory_space<vmem>>, vector<10x128xf32>
    tpu.vector_store %arg12[%c0_5, %c0_6], %4 {strides = array<i32>} : memref<10x128xf32, #tpu.memory_space<vmem>>, vector<10x128xf32>,
    %c0_7 = arith.constant 0 : index
    %c0_8 = arith.constant 0 : index
    %c0_9 = arith.constant 0 : index
    %6 = vector.load %arg7[%c0_7, %c0_8, %c0_9] : memref<2x8x384xf32, #tpu.memory_space<vmem>>, vector<1x1x128xf32>
    %7 = vector.shape_cast %6 : vector<1x1x128xf32> to vector<1x128xf32>
    %c0_10 = arith.constant 0 : index
    %c1 = arith.constant 1 : index
    %c0_11 = arith.constant 0 : index
    %8 = vector.load %arg7[%c0_10, %c1, %c0_11] : memref<2x8x384xf32, #tpu.memory_space<vmem>>, vector<1x1x128xf32>
    %9 = vector.shape_cast %8 : vector<1x1x128xf32> to vector<1x128xf32>
    %c0_12 = arith.constant 0 : index
    %c2 = arith.constant 2 : index
    %c0_13 = arith.constant 0 : index
    %10 = vector.load %arg7[%c0_12, %c2, %c0_13] : memref<2x8x384xf32, #tpu.memory_space<vmem>>, vector<1x1x128xf32>
    %11 = vector.shape_cast %10 : vector<1x1x128xf32> to vector<1x128xf32>
    %c0_14 = arith.constant 0 : index
    %c3 = arith.constant 3 : index
    %c0_15 = arith.constant 0 : index
    %12 = vector.load %arg7[%c0_14, %c3, %c0_15] : memref<2x8x384xf32, #tpu.memory_space<vmem>>, vector<1x1x128xf32>
    %13 = vector.shape_cast %12 : vector<1x1x128xf32> to vector<1x128xf32>
    %c0_16 = arith.constant 0 : index
    %c4 = arith.constant 4 : index
    %c0_17 = arith.constant 0 : index
    %14 = vector.load %arg7[%c0_16, %c4, %c0_17] : memref<2x8x384xf32, #tpu.memory_space<vmem>>, vector<1x1x128xf32>
    %15 = vector.shape_cast %14 : vector<1x1x128xf32> to vector<1x128xf32>
    %c0_18 = arith.constant 0 : index
    %c5 = arith.constant 5 : index
    %c0_19 = arith.constant 0 : index
    %16 = vector.load %arg7[%c0_18, %c5, %c0_19] : memref<2x8x384xf32, #tpu.memory_space<vmem>>, vector<1x1x128xf32>
    %17 = vector.shape_cast %16 : vector<1x1x128xf32> to vector<1x128xf32>
    %c0_20 = arith.constant 0 : index
    %c6 = arith.constant 6 : index
    %c0_21 = arith.constant 0 : index
    %18 = vector.load %arg7[%c0_20, %c6, %c0_21] : memref<2x8x384xf32, #tpu.memory_space<vmem>>, vector<1x1x384xf32>
    %19 = vector.shape_cast %18 : vector<1x1x384xf32> to vector<1x384xf32>
    %c0_22 = arith.constant 0 : index
    %c7 = arith.constant 7 : index
    %c0_23 = arith.constant 0 : index
    %20 = vector.load %arg7[%c0_22, %c7, %c0_23] : memref<2x8x384xf32, #tpu.memory_space<vmem>>, vector<1x1x256xf32>
    %21 = vector.shape_cast %20 : vector<1x1x256xf32> to vector<1x256xf32>
    %c0_24 = arith.constant 0 : index
    %c0_25 = arith.constant 0 : index
    %22 = vector.load %arg12[%c0_24, %c0_25] : memref<10x128xf32, #tpu.memory_space<vmem>>, vector<10x128xf32>
    %cst_26 = arith.constant dense<0.000000e+00> : vector<10xf32>
    %23 = vector.multi_reduction <add>, %22, %cst_26 [1] : vector<10x128xf32> to vector<10xf32>
    %24 = vector.shape_cast %23 : vector<10xf32> to vector<10x1xf32>
    %cst_27 = arith.constant 1.280000e+02 : f32
    %25 = vector.broadcast %cst_27 : f32 to vector<10x1xf32>
    %26 = arith.divf %24, %25 : vector<10x1xf32>
    %27 = vector.broadcast %26 : vector<10x1xf32> to vector<10x128xf32>
    %28 = arith.subf %22, %27 : vector<10x128xf32>
    %29 = arith.mulf %28, %28 : vector<10x128xf32>
    %cst_28 = arith.constant dense<0.000000e+00> : vector<10xf32>
    %30 = vector.multi_reduction <add>, %29, %cst_28 [1] : vector<10x128xf32> to vector<10xf32>
    %31 = vector.shape_cast %30 : vector<10xf32> to vector<10x1xf32>
    %cst_29 = arith.constant 1.280000e+02 : f32
    %32 = vector.broadcast %cst_29 : f32 to vector<10x1xf32>
    %33 = arith.divf %31, %32 : vector<10x1xf32>
    %34 = vector.broadcast %26 : vector<10x1xf32> to vector<10x128xf32>
    %35 = arith.subf %22, %34 : vector<10x128xf32>
    %cst_30 = arith.constant 9.99999996E-13 : f32
    %36 = vector.broadcast %cst_30 : f32 to vector<10x1xf32>
    %37 = arith.addf %33, %36 : vector<10x1xf32>
    %38 = math.rsqrt %37 : vector<10x1xf32>
    %39 = vector.broadcast %38 : vector<10x1xf32> to vector<10x128xf32>
    %40 = arith.mulf %35, %39 : vector<10x128xf32>
    %41 = vector.broadcast %7 : vector<1x128xf32> to vector<10x128xf32>
    %42 = arith.mulf %40, %41 : vector<10x128xf32>
    %43 = vector.broadcast %9 : vector<1x128xf32> to vector<10x128xf32>
    %44 = arith.addf %42, %43 : vector<10x128xf32>
    %45 = arith.truncf %44 : vector<10x128xf32> to vector<10x128xbf16>
    %c0_31 = arith.constant 0 : index
    %c0_32 = arith.constant 0 : index
    %c0_33 = arith.constant 0 : index
    %46 = vector.load %arg3[%c0_31, %c0_32, %c0_33] : memref<2x128x384xbf16, #tpu.memory_space<vmem>>, vector<1x128x384xbf16>
    %47 = vector.shape_cast %46 : vector<1x128x384xbf16> to vector<128x384xbf16>
    %cst_34 = arith.constant dense<0.000000e+00> : vector<10x384xf32>
    %48 = tpu.matmul %45, %47, %cst_34 {dimension_numbers = #tpu.dot_dimension_numbers<[1], [0], [0], [1], [0, 0, 1, 1], [], []>} : vector<10x128xbf16>, vector<128x384xbf16>, vector<10x384xf32> -> vector<10x384xf32>
    %49 = vector.broadcast %19 : vector<1x384xf32> to vector<10x384xf32>
    %50 = arith.addf %48, %49 : vector<10x384xf32>
    %c0_35 = arith.constant 0 : index
    %c0_36 = arith.constant 0 : index
    %51 = vector.load %arg13[%c0_35, %c0_36] : memref<10x384xf32, #tpu.memory_space<vmem>>, vector<10x384xf32>
    tpu.vector_store %arg13[%c0_35, %c0_36], %50 {strides = array<i32>} : memref<10x384xf32, #tpu.memory_space<vmem>>, vector<10x384xf32>,
    %c0_37 = arith.constant 0 : index
    %c0_38 = arith.constant 0 : index
    %c0_39 = arith.constant 0 : index
    %52 = vector.load %arg4[%c0_37, %c0_38, %c0_39] : memref<2x128x128xbf16, #tpu.memory_space<vmem>>, vector<1x32x128xbf16>
    %53 = vector.shape_cast %52 : vector<1x32x128xbf16> to vector<32x128xbf16>
    %c0_40 = arith.constant 0 : index
    %c32 = arith.constant 32 : index
    %c0_41 = arith.constant 0 : index
    %54 = vector.load %arg4[%c0_40, %c32, %c0_41] : memref<2x128x128xbf16, #tpu.memory_space<vmem>>, vector<1x32x128xbf16>
    %55 = vector.shape_cast %54 : vector<1x32x128xbf16> to vector<32x128xbf16>
    %c0_42 = arith.constant 0 : index
    %c64 = arith.constant 64 : index
    %c0_43 = arith.constant 0 : index
    %56 = vector.load %arg4[%c0_42, %c64, %c0_43] : memref<2x128x128xbf16, #tpu.memory_space<vmem>>, vector<1x32x128xbf16>
    %57 = vector.shape_cast %56 : vector<1x32x128xbf16> to vector<32x128xbf16>
    %c0_44 = arith.constant 0 : index
    %c96 = arith.constant 96 : index
    %c0_45 = arith.constant 0 : index
    %58 = vector.load %arg4[%c0_44, %c96, %c0_45] : memref<2x128x128xbf16, #tpu.memory_space<vmem>>, vector<1x32x128xbf16>
    %59 = vector.shape_cast %58 : vector<1x32x128xbf16> to vector<32x128xbf16>
    %c0_46 = arith.constant 0 : index
    %c0_47 = arith.constant 0 : index
    %60 = vector.load %arg13[%c0_46, %c0_47] : memref<10x384xf32, #tpu.memory_space<vmem>>, vector<5x32xf32>
    %c0_48 = arith.constant 0 : index
    %c128 = arith.constant 128 : index
    %61 = vector.load %arg13[%c0_48, %c128] : memref<10x384xf32, #tpu.memory_space<vmem>>, vector<5x32xf32>
    %c0_49 = arith.constant 0 : index
    %c256 = arith.constant 256 : index
    %62 = vector.load %arg13[%c0_49, %c256] : memref<10x384xf32, #tpu.memory_space<vmem>>, vector<5x32xf32>
    %cst_50 = arith.constant dense<0.000000e+00> : vector<5x5xf32>
    %63 = tpu.matmul %60, %61, %cst_50 {dimension_numbers = #tpu.dot_dimension_numbers<[1], [1], [0], [0], [0, 0, 1, 0], [], []>} : vector<5x32xf32>, vector<5x32xf32>, vector<5x5xf32> -> vector<5x5xf32>
    %cst_51 = arith.constant 0.176776692 : f32
    %64 = vector.broadcast %cst_51 : f32 to vector<5x5xf32>
    %65 = arith.mulf %63, %64 : vector<5x5xf32>
    %cst_52 = arith.constant dense<0xFF800000> : vector<5xf32>
    %66 = vector.multi_reduction <maximumf>, %65, %cst_52 [1] : vector<5x5xf32> to vector<5xf32>
    %67 = vector.shape_cast %66 : vector<5xf32> to vector<5x1xf32>
    %68 = vector.broadcast %67 : vector<5x1xf32> to vector<5x5xf32>
    %69 = arith.subf %65, %68 : vector<5x5xf32>
    %70 = math.exp %69 : vector<5x5xf32>
    %cst_53 = arith.constant dense<0.000000e+00> : vector<5xf32>
    %71 = vector.multi_reduction <add>, %70, %cst_53 [1] : vector<5x5xf32> to vector<5xf32>
    %72 = vector.shape_cast %71 : vector<5xf32> to vector<5x1xf32>
    %73 = tpu.reciprocal %72 {approx = true} : vector<5x1xf32> -> vector<5x1xf32>
    %74 = vector.broadcast %73 : vector<5x1xf32> to vector<5x5xf32>
    %75 = arith.mulf %70, %74 : vector<5x5xf32>
    %76 = arith.truncf %75 : vector<5x5xf32> to vector<5x5xbf16>
    %77 = arith.truncf %62 : vector<5x32xf32> to vector<5x32xbf16>
    %cst_54 = arith.constant dense<0.000000e+00> : vector<5x32xf32>
    %78 = tpu.matmul %76, %77, %cst_54 {dimension_numbers = #tpu.dot_dimension_numbers<[1], [0], [0], [1], [0, 0, 1, 1], [], []>} : vector<5x5xbf16>, vector<5x32xbf16>, vector<5x32xf32> -> vector<5x32xf32>
    %79 = arith.truncf %78 : vector<5x32xf32> to vector<5x32xbf16>
    %cst_55 = arith.constant dense<0.000000e+00> : vector<5x128xf32>
    %80 = tpu.matmul %79, %53, %cst_55 {dimension_numbers = #tpu.dot_dimension_numbers<[1], [0], [0], [1], [0, 0, 1, 1], [], []>} : vector<5x32xbf16>, vector<32x128xbf16>, vector<5x128xf32> -> vector<5x128xf32>
    %81 = vector.broadcast %15 : vector<1x128xf32> to vector<5x128xf32>
    %82 = arith.addf %81, %80 : vector<5x128xf32>
    %c0_56 = arith.constant 0 : index
    %c32_57 = arith.constant 32 : index
    %83 = vector.load %arg13[%c0_56, %c32_57] : memref<10x384xf32, #tpu.memory_space<vmem>>, vector<5x32xf32>
    %c0_58 = arith.constant 0 : index
    %c160 = arith.constant 160 : index
    %84 = vector.load %arg13[%c0_58, %c160] : memref<10x384xf32, #tpu.memory_space<vmem>>, vector<5x32xf32>
    %c0_59 = arith.constant 0 : index
    %c288 = arith.constant 288 : index
    %85 = vector.load %arg13[%c0_59, %c288] : memref<10x384xf32, #tpu.memory_space<vmem>>, vector<5x32xf32>
    %cst_60 = arith.constant dense<0.000000e+00> : vector<5x5xf32>
    %86 = tpu.matmul %83, %84, %cst_60 {dimension_numbers = #tpu.dot_dimension_numbers<[1], [1], [0], [0], [0, 0, 1, 0], [], []>} : vector<5x32xf32>, vector<5x32xf32>, vector<5x5xf32> -> vector<5x5xf32>
    %cst_61 = arith.constant 0.176776692 : f32
    %87 = vector.broadcast %cst_61 : f32 to vector<5x5xf32>
    %88 = arith.mulf %86, %87 : vector<5x5xf32>
    %cst_62 = arith.constant dense<0xFF800000> : vector<5xf32>
    %89 = vector.multi_reduction <maximumf>, %88, %cst_62 [1] : vector<5x5xf32> to vector<5xf32>
    %90 = vector.shape_cast %89 : vector<5xf32> to vector<5x1xf32>
    %91 = vector.broadcast %90 : vector<5x1xf32> to vector<5x5xf32>
    %92 = arith.subf %88, %91 : vector<5x5xf32>
    %93 = math.exp %92 : vector<5x5xf32>
    %cst_63 = arith.constant dense<0.000000e+00> : vector<5xf32>
    %94 = vector.multi_reduction <add>, %93, %cst_63 [1] : vector<5x5xf32> to vector<5xf32>
    %95 = vector.shape_cast %94 : vector<5xf32> to vector<5x1xf32>
    %96 = tpu.reciprocal %95 {approx = true} : vector<5x1xf32> -> vector<5x1xf32>
    %97 = vector.broadcast %96 : vector<5x1xf32> to vector<5x5xf32>
    %98 = arith.mulf %93, %97 : vector<5x5xf32>
    %99 = arith.truncf %98 : vector<5x5xf32> to vector<5x5xbf16>
    %100 = arith.truncf %85 : vector<5x32xf32> to vector<5x32xbf16>
    %cst_64 = arith.constant dense<0.000000e+00> : vector<5x32xf32>
    %101 = tpu.matmul %99, %100, %cst_64 {dimension_numbers = #tpu.dot_dimension_numbers<[1], [0], [0], [1], [0, 0, 1, 1], [], []>} : vector<5x5xbf16>, vector<5x32xbf16>, vector<5x32xf32> -> vector<5x32xf32>
    %102 = arith.truncf %101 : vector<5x32xf32> to vector<5x32xbf16>
    %cst_65 = arith.constant dense<0.000000e+00> : vector<5x128xf32>
    %103 = tpu.matmul %102, %55, %cst_65 {dimension_numbers = #tpu.dot_dimension_numbers<[1], [0], [0], [1], [0, 0, 1, 1], [], []>} : vector<5x32xbf16>, vector<32x128xbf16>, vector<5x128xf32> -> vector<5x128xf32>
    %104 = arith.addf %82, %103 : vector<5x128xf32>
    %c0_66 = arith.constant 0 : index
    %c64_67 = arith.constant 64 : index
    %105 = vector.load %arg13[%c0_66, %c64_67] : memref<10x384xf32, #tpu.memory_space<vmem>>, vector<5x32xf32>
    %c0_68 = arith.constant 0 : index
    %c192 = arith.constant 192 : index
    %106 = vector.load %arg13[%c0_68, %c192] : memref<10x384xf32, #tpu.memory_space<vmem>>, vector<5x32xf32>
    %c0_69 = arith.constant 0 : index
    %c320 = arith.constant 320 : index
    %107 = vector.load %arg13[%c0_69, %c320] : memref<10x384xf32, #tpu.memory_space<vmem>>, vector<5x32xf32>
    %cst_70 = arith.constant dense<0.000000e+00> : vector<5x5xf32>
    %108 = tpu.matmul %105, %106, %cst_70 {dimension_numbers = #tpu.dot_dimension_numbers<[1], [1], [0], [0], [0, 0, 1, 0], [], []>} : vector<5x32xf32>, vector<5x32xf32>, vector<5x5xf32> -> vector<5x5xf32>
    %cst_71 = arith.constant 0.176776692 : f32
    %109 = vector.broadcast %cst_71 : f32 to vector<5x5xf32>
    %110 = arith.mulf %108, %109 : vector<5x5xf32>
    %cst_72 = arith.constant dense<0xFF800000> : vector<5xf32>
    %111 = vector.multi_reduction <maximumf>, %110, %cst_72 [1] : vector<5x5xf32> to vector<5xf32>
    %112 = vector.shape_cast %111 : vector<5xf32> to vector<5x1xf32>
    %113 = vector.broadcast %112 : vector<5x1xf32> to vector<5x5xf32>
    %114 = arith.subf %110, %113 : vector<5x5xf32>
    %115 = math.exp %114 : vector<5x5xf32>
    %cst_73 = arith.constant dense<0.000000e+00> : vector<5xf32>
    %116 = vector.multi_reduction <add>, %115, %cst_73 [1] : vector<5x5xf32> to vector<5xf32>
    %117 = vector.shape_cast %116 : vector<5xf32> to vector<5x1xf32>
    %118 = tpu.reciprocal %117 {approx = true} : vector<5x1xf32> -> vector<5x1xf32>
    %119 = vector.broadcast %118 : vector<5x1xf32> to vector<5x5xf32>
    %120 = arith.mulf %115, %119 : vector<5x5xf32>
    %121 = arith.truncf %120 : vector<5x5xf32> to vector<5x5xbf16>
    %122 = arith.truncf %107 : vector<5x32xf32> to vector<5x32xbf16>
    %cst_74 = arith.constant dense<0.000000e+00> : vector<5x32xf32>
    %123 = tpu.matmul %121, %122, %cst_74 {dimension_numbers = #tpu.dot_dimension_numbers<[1], [0], [0], [1], [0, 0, 1, 1], [], []>} : vector<5x5xbf16>, vector<5x32xbf16>, vector<5x32xf32> -> vector<5x32xf32>
    %124 = arith.truncf %123 : vector<5x32xf32> to vector<5x32xbf16>
    %cst_75 = arith.constant dense<0.000000e+00> : vector<5x128xf32>
    %125 = tpu.matmul %124, %57, %cst_75 {dimension_numbers = #tpu.dot_dimension_numbers<[1], [0], [0], [1], [0, 0, 1, 1], [], []>} : vector<5x32xbf16>, vector<32x128xbf16>, vector<5x128xf32> -> vector<5x128xf32>
    %126 = arith.addf %104, %125 : vector<5x128xf32>
    %c0_76 = arith.constant 0 : index
    %c96_77 = arith.constant 96 : index
    %127 = vector.load %arg13[%c0_76, %c96_77] : memref<10x384xf32, #tpu.memory_space<vmem>>, vector<5x32xf32>
    %c0_78 = arith.constant 0 : index
    %c224 = arith.constant 224 : index
    %128 = vector.load %arg13[%c0_78, %c224] : memref<10x384xf32, #tpu.memory_space<vmem>>, vector<5x32xf32>
    %c0_79 = arith.constant 0 : index
    %c352 = arith.constant 352 : index
    %129 = vector.load %arg13[%c0_79, %c352] : memref<10x384xf32, #tpu.memory_space<vmem>>, vector<5x32xf32>
    %cst_80 = arith.constant dense<0.000000e+00> : vector<5x5xf32>
    %130 = tpu.matmul %127, %128, %cst_80 {dimension_numbers = #tpu.dot_dimension_numbers<[1], [1], [0], [0], [0, 0, 1, 0], [], []>} : vector<5x32xf32>, vector<5x32xf32>, vector<5x5xf32> -> vector<5x5xf32>
    %cst_81 = arith.constant 0.176776692 : f32
    %131 = vector.broadcast %cst_81 : f32 to vector<5x5xf32>
    %132 = arith.mulf %130, %131 : vector<5x5xf32>
    %cst_82 = arith.constant dense<0xFF800000> : vector<5xf32>
    %133 = vector.multi_reduction <maximumf>, %132, %cst_82 [1] : vector<5x5xf32> to vector<5xf32>
    %134 = vector.shape_cast %133 : vector<5xf32> to vector<5x1xf32>
    %135 = vector.broadcast %134 : vector<5x1xf32> to vector<5x5xf32>
    %136 = arith.subf %132, %135 : vector<5x5xf32>
    %137 = math.exp %136 : vector<5x5xf32>
    %cst_83 = arith.constant dense<0.000000e+00> : vector<5xf32>
    %138 = vector.multi_reduction <add>, %137, %cst_83 [1] : vector<5x5xf32> to vector<5xf32>
    %139 = vector.shape_cast %138 : vector<5xf32> to vector<5x1xf32>
    %140 = tpu.reciprocal %139 {approx = true} : vector<5x1xf32> -> vector<5x1xf32>
    %141 = vector.broadcast %140 : vector<5x1xf32> to vector<5x5xf32>
    %142 = arith.mulf %137, %141 : vector<5x5xf32>
    %143 = arith.truncf %142 : vector<5x5xf32> to vector<5x5xbf16>
    %144 = arith.truncf %129 : vector<5x32xf32> to vector<5x32xbf16>
    %cst_84 = arith.constant dense<0.000000e+00> : vector<5x32xf32>
    %145 = tpu.matmul %143, %144, %cst_84 {dimension_numbers = #tpu.dot_dimension_numbers<[1], [0], [0], [1], [0, 0, 1, 1], [], []>} : vector<5x5xbf16>, vector<5x32xbf16>, vector<5x32xf32> -> vector<5x32xf32>
    %146 = arith.truncf %145 : vector<5x32xf32> to vector<5x32xbf16>
    %cst_85 = arith.constant dense<0.000000e+00> : vector<5x128xf32>
    %147 = tpu.matmul %146, %59, %cst_85 {dimension_numbers = #tpu.dot_dimension_numbers<[1], [0], [0], [1], [0, 0, 1, 1], [], []>} : vector<5x32xbf16>, vector<32x128xbf16>, vector<5x128xf32> -> vector<5x128xf32>
    %148 = arith.addf %126, %147 : vector<5x128xf32>
    %c0_86 = arith.constant 0 : index
    %c0_87 = arith.constant 0 : index
    %149 = vector.load %arg12[%c0_86, %c0_87] : memref<10x128xf32, #tpu.memory_space<vmem>>, vector<5x128xf32>
    %150 = arith.addf %149, %148 : vector<5x128xf32>
    %c0_88 = arith.constant 0 : index
    %c0_89 = arith.constant 0 : index
    %151 = vector.load %arg12[%c0_88, %c0_89] : memref<10x128xf32, #tpu.memory_space<vmem>>, vector<5x128xf32>
    tpu.vector_store %arg12[%c0_88, %c0_89], %150 {strides = array<i32>} : memref<10x128xf32, #tpu.memory_space<vmem>>, vector<5x128xf32>,
    %c5_90 = arith.constant 5 : index
    %c0_91 = arith.constant 0 : index
    %152 = vector.load %arg13[%c5_90, %c0_91] : memref<10x384xf32, #tpu.memory_space<vmem>>, vector<5x32xf32>
    %c5_92 = arith.constant 5 : index
    %c128_93 = arith.constant 128 : index
    %153 = vector.load %arg13[%c5_92, %c128_93] : memref<10x384xf32, #tpu.memory_space<vmem>>, vector<5x32xf32>
    %c5_94 = arith.constant 5 : index
    %c256_95 = arith.constant 256 : index
    %154 = vector.load %arg13[%c5_94, %c256_95] : memref<10x384xf32, #tpu.memory_space<vmem>>, vector<5x32xf32>
    %cst_96 = arith.constant dense<0.000000e+00> : vector<5x5xf32>
    %155 = tpu.matmul %152, %153, %cst_96 {dimension_numbers = #tpu.dot_dimension_numbers<[1], [1], [0], [0], [0, 0, 1, 0], [], []>} : vector<5x32xf32>, vector<5x32xf32>, vector<5x5xf32> -> vector<5x5xf32>
    %cst_97 = arith.constant 0.176776692 : f32
    %156 = vector.broadcast %cst_97 : f32 to vector<5x5xf32>
    %157 = arith.mulf %155, %156 : vector<5x5xf32>
    %cst_98 = arith.constant dense<0xFF800000> : vector<5xf32>
    %158 = vector.multi_reduction <maximumf>, %157, %cst_98 [1] : vector<5x5xf32> to vector<5xf32>
    %159 = vector.shape_cast %158 : vector<5xf32> to vector<5x1xf32>
    %160 = vector.broadcast %159 : vector<5x1xf32> to vector<5x5xf32>
    %161 = arith.subf %157, %160 : vector<5x5xf32>
    %162 = math.exp %161 : vector<5x5xf32>
    %cst_99 = arith.constant dense<0.000000e+00> : vector<5xf32>
    %163 = vector.multi_reduction <add>, %162, %cst_99 [1] : vector<5x5xf32> to vector<5xf32>
    %164 = vector.shape_cast %163 : vector<5xf32> to vector<5x1xf32>
    %165 = tpu.reciprocal %164 {approx = true} : vector<5x1xf32> -> vector<5x1xf32>
    %166 = vector.broadcast %165 : vector<5x1xf32> to vector<5x5xf32>
    %167 = arith.mulf %162, %166 : vector<5x5xf32>
    %168 = arith.truncf %167 : vector<5x5xf32> to vector<5x5xbf16>
    %169 = arith.truncf %154 : vector<5x32xf32> to vector<5x32xbf16>
    %cst_100 = arith.constant dense<0.000000e+00> : vector<5x32xf32>
    %170 = tpu.matmul %168, %169, %cst_100 {dimension_numbers = #tpu.dot_dimension_numbers<[1], [0], [0], [1], [0, 0, 1, 1], [], []>} : vector<5x5xbf16>, vector<5x32xbf16>, vector<5x32xf32> -> vector<5x32xf32>
    %171 = arith.truncf %170 : vector<5x32xf32> to vector<5x32xbf16>
    %cst_101 = arith.constant dense<0.000000e+00> : vector<5x128xf32>
    %172 = tpu.matmul %171, %53, %cst_101 {dimension_numbers = #tpu.dot_dimension_numbers<[1], [0], [0], [1], [0, 0, 1, 1], [], []>} : vector<5x32xbf16>, vector<32x128xbf16>, vector<5x128xf32> -> vector<5x128xf32>
    %173 = vector.broadcast %15 : vector<1x128xf32> to vector<5x128xf32>
    %174 = arith.addf %173, %172 : vector<5x128xf32>
    %c5_102 = arith.constant 5 : index
    %c32_103 = arith.constant 32 : index
    %175 = vector.load %arg13[%c5_102, %c32_103] : memref<10x384xf32, #tpu.memory_space<vmem>>, vector<5x32xf32>
    %c5_104 = arith.constant 5 : index
    %c160_105 = arith.constant 160 : index
    %176 = vector.load %arg13[%c5_104, %c160_105] : memref<10x384xf32, #tpu.memory_space<vmem>>, vector<5x32xf32>
    %c5_106 = arith.constant 5 : index
    %c288_107 = arith.constant 288 : index
    %177 = vector.load %arg13[%c5_106, %c288_107] : memref<10x384xf32, #tpu.memory_space<vmem>>, vector<5x32xf32>
    %cst_108 = arith.constant dense<0.000000e+00> : vector<5x5xf32>
    %178 = tpu.matmul %175, %176, %cst_108 {dimension_numbers = #tpu.dot_dimension_numbers<[1], [1], [0], [0], [0, 0, 1, 0], [], []>} : vector<5x32xf32>, vector<5x32xf32>, vector<5x5xf32> -> vector<5x5xf32>
    %cst_109 = arith.constant 0.176776692 : f32
    %179 = vector.broadcast %cst_109 : f32 to vector<5x5xf32>
    %180 = arith.mulf %178, %179 : vector<5x5xf32>
    %cst_110 = arith.constant dense<0xFF800000> : vector<5xf32>
    %181 = vector.multi_reduction <maximumf>, %180, %cst_110 [1] : vector<5x5xf32> to vector<5xf32>
    %182 = vector.shape_cast %181 : vector<5xf32> to vector<5x1xf32>
    %183 = vector.broadcast %182 : vector<5x1xf32> to vector<5x5xf32>
    %184 = arith.subf %180, %183 : vector<5x5xf32>
    %185 = math.exp %184 : vector<5x5xf32>
    %cst_111 = arith.constant dense<0.000000e+00> : vector<5xf32>
    %186 = vector.multi_reduction <add>, %185, %cst_111 [1] : vector<5x5xf32> to vector<5xf32>
    %187 = vector.shape_cast %186 : vector<5xf32> to vector<5x1xf32>
    %188 = tpu.reciprocal %187 {approx = true} : vector<5x1xf32> -> vector<5x1xf32>
    %189 = vector.broadcast %188 : vector<5x1xf32> to vector<5x5xf32>
    %190 = arith.mulf %185, %189 : vector<5x5xf32>
    %191 = arith.truncf %190 : vector<5x5xf32> to vector<5x5xbf16>
    %192 = arith.truncf %177 : vector<5x32xf32> to vector<5x32xbf16>
    %cst_112 = arith.constant dense<0.000000e+00> : vector<5x32xf32>
    %193 = tpu.matmul %191, %192, %cst_112 {dimension_numbers = #tpu.dot_dimension_numbers<[1], [0], [0], [1], [0, 0, 1, 1], [], []>} : vector<5x5xbf16>, vector<5x32xbf16>, vector<5x32xf32> -> vector<5x32xf32>
    %194 = arith.truncf %193 : vector<5x32xf32> to vector<5x32xbf16>
    %cst_113 = arith.constant dense<0.000000e+00> : vector<5x128xf32>
    %195 = tpu.matmul %194, %55, %cst_113 {dimension_numbers = #tpu.dot_dimension_numbers<[1], [0], [0], [1], [0, 0, 1, 1], [], []>} : vector<5x32xbf16>, vector<32x128xbf16>, vector<5x128xf32> -> vector<5x128xf32>
    %196 = arith.addf %174, %195 : vector<5x128xf32>
    %c5_114 = arith.constant 5 : index
    %c64_115 = arith.constant 64 : index
    %197 = vector.load %arg13[%c5_114, %c64_115] : memref<10x384xf32, #tpu.memory_space<vmem>>, vector<5x32xf32>
    %c5_116 = arith.constant 5 : index
    %c192_117 = arith.constant 192 : index
    %198 = vector.load %arg13[%c5_116, %c192_117] : memref<10x384xf32, #tpu.memory_space<vmem>>, vector<5x32xf32>
    %c5_118 = arith.constant 5 : index
    %c320_119 = arith.constant 320 : index
    %199 = vector.load %arg13[%c5_118, %c320_119] : memref<10x384xf32, #tpu.memory_space<vmem>>, vector<5x32xf32>
    %cst_120 = arith.constant dense<0.000000e+00> : vector<5x5xf32>
    %200 = tpu.matmul %197, %198, %cst_120 {dimension_numbers = #tpu.dot_dimension_numbers<[1], [1], [0], [0], [0, 0, 1, 0], [], []>} : vector<5x32xf32>, vector<5x32xf32>, vector<5x5xf32> -> vector<5x5xf32>
    %cst_121 = arith.constant 0.176776692 : f32
    %201 = vector.broadcast %cst_121 : f32 to vector<5x5xf32>
    %202 = arith.mulf %200, %201 : vector<5x5xf32>
    %cst_122 = arith.constant dense<0xFF800000> : vector<5xf32>
    %203 = vector.multi_reduction <maximumf>, %202, %cst_122 [1] : vector<5x5xf32> to vector<5xf32>
    %204 = vector.shape_cast %203 : vector<5xf32> to vector<5x1xf32>
    %205 = vector.broadcast %204 : vector<5x1xf32> to vector<5x5xf32>
    %206 = arith.subf %202, %205 : vector<5x5xf32>
    %207 = math.exp %206 : vector<5x5xf32>
    %cst_123 = arith.constant dense<0.000000e+00> : vector<5xf32>
    %208 = vector.multi_reduction <add>, %207, %cst_123 [1] : vector<5x5xf32> to vector<5xf32>
    %209 = vector.shape_cast %208 : vector<5xf32> to vector<5x1xf32>
    %210 = tpu.reciprocal %209 {approx = true} : vector<5x1xf32> -> vector<5x1xf32>
    %211 = vector.broadcast %210 : vector<5x1xf32> to vector<5x5xf32>
    %212 = arith.mulf %207, %211 : vector<5x5xf32>
    %213 = arith.truncf %212 : vector<5x5xf32> to vector<5x5xbf16>
    %214 = arith.truncf %199 : vector<5x32xf32> to vector<5x32xbf16>
    %cst_124 = arith.constant dense<0.000000e+00> : vector<5x32xf32>
    %215 = tpu.matmul %213, %214, %cst_124 {dimension_numbers = #tpu.dot_dimension_numbers<[1], [0], [0], [1], [0, 0, 1, 1], [], []>} : vector<5x5xbf16>, vector<5x32xbf16>, vector<5x32xf32> -> vector<5x32xf32>
    %216 = arith.truncf %215 : vector<5x32xf32> to vector<5x32xbf16>
    %cst_125 = arith.constant dense<0.000000e+00> : vector<5x128xf32>
    %217 = tpu.matmul %216, %57, %cst_125 {dimension_numbers = #tpu.dot_dimension_numbers<[1], [0], [0], [1], [0, 0, 1, 1], [], []>} : vector<5x32xbf16>, vector<32x128xbf16>, vector<5x128xf32> -> vector<5x128xf32>
    %218 = arith.addf %196, %217 : vector<5x128xf32>
    %c5_126 = arith.constant 5 : index
    %c96_127 = arith.constant 96 : index
    %219 = vector.load %arg13[%c5_126, %c96_127] : memref<10x384xf32, #tpu.memory_space<vmem>>, vector<5x32xf32>
    %c5_128 = arith.constant 5 : index
    %c224_129 = arith.constant 224 : index
    %220 = vector.load %arg13[%c5_128, %c224_129] : memref<10x384xf32, #tpu.memory_space<vmem>>, vector<5x32xf32>
    %c5_130 = arith.constant 5 : index
    %c352_131 = arith.constant 352 : index
    %221 = vector.load %arg13[%c5_130, %c352_131] : memref<10x384xf32, #tpu.memory_space<vmem>>, vector<5x32xf32>
    %cst_132 = arith.constant dense<0.000000e+00> : vector<5x5xf32>
    %222 = tpu.matmul %219, %220, %cst_132 {dimension_numbers = #tpu.dot_dimension_numbers<[1], [1], [0], [0], [0, 0, 1, 0], [], []>} : vector<5x32xf32>, vector<5x32xf32>, vector<5x5xf32> -> vector<5x5xf32>
    %cst_133 = arith.constant 0.176776692 : f32
    %223 = vector.broadcast %cst_133 : f32 to vector<5x5xf32>
    %224 = arith.mulf %222, %223 : vector<5x5xf32>
    %cst_134 = arith.constant dense<0xFF800000> : vector<5xf32>
    %225 = vector.multi_reduction <maximumf>, %224, %cst_134 [1] : vector<5x5xf32> to vector<5xf32>
    %226 = vector.shape_cast %225 : vector<5xf32> to vector<5x1xf32>
    %227 = vector.broadcast %226 : vector<5x1xf32> to vector<5x5xf32>
    %228 = arith.subf %224, %227 : vector<5x5xf32>
    %229 = math.exp %228 : vector<5x5xf32>
    %cst_135 = arith.constant dense<0.000000e+00> : vector<5xf32>
    %230 = vector.multi_reduction <add>, %229, %cst_135 [1] : vector<5x5xf32> to vector<5xf32>
    %231 = vector.shape_cast %230 : vector<5xf32> to vector<5x1xf32>
    %232 = tpu.reciprocal %231 {approx = true} : vector<5x1xf32> -> vector<5x1xf32>
    %233 = vector.broadcast %232 : vector<5x1xf32> to vector<5x5xf32>
    %234 = arith.mulf %229, %233 : vector<5x5xf32>
    %235 = arith.truncf %234 : vector<5x5xf32> to vector<5x5xbf16>
    %236 = arith.truncf %221 : vector<5x32xf32> to vector<5x32xbf16>
    %cst_136 = arith.constant dense<0.000000e+00> : vector<5x32xf32>
    %237 = tpu.matmul %235, %236, %cst_136 {dimension_numbers = #tpu.dot_dimension_numbers<[1], [0], [0], [1], [0, 0, 1, 1], [], []>} : vector<5x5xbf16>, vector<5x32xbf16>, vector<5x32xf32> -> vector<5x32xf32>
    %238 = arith.truncf %237 : vector<5x32xf32> to vector<5x32xbf16>
    %cst_137 = arith.constant dense<0.000000e+00> : vector<5x128xf32>
    %239 = tpu.matmul %238, %59, %cst_137 {dimension_numbers = #tpu.dot_dimension_numbers<[1], [0], [0], [1], [0, 0, 1, 1], [], []>} : vector<5x32xbf16>, vector<32x128xbf16>, vector<5x128xf32> -> vector<5x128xf32>
    %240 = arith.addf %218, %239 : vector<5x128xf32>
    %c5_138 = arith.constant 5 : index
    %c0_139 = arith.constant 0 : index
    %241 = vector.load %arg12[%c5_138, %c0_139] : memref<10x128xf32, #tpu.memory_space<vmem>>, vector<5x128xf32>
    %242 = arith.addf %241, %240 : vector<5x128xf32>
    %c5_140 = arith.constant 5 : index
    %c0_141 = arith.constant 0 : index
    %243 = vector.load %arg12[%c5_140, %c0_141] : memref<10x128xf32, #tpu.memory_space<vmem>>, vector<5x128xf32>
    tpu.vector_store %arg12[%c5_140, %c0_141], %242 {strides = array<i32>} : memref<10x128xf32, #tpu.memory_space<vmem>>, vector<5x128xf32>,
    %c0_142 = arith.constant 0 : index
    %c0_143 = arith.constant 0 : index
    %244 = vector.load %arg12[%c0_142, %c0_143] : memref<10x128xf32, #tpu.memory_space<vmem>>, vector<10x128xf32>
    %cst_144 = arith.constant dense<0.000000e+00> : vector<10xf32>
    %245 = vector.multi_reduction <add>, %244, %cst_144 [1] : vector<10x128xf32> to vector<10xf32>
    %246 = vector.shape_cast %245 : vector<10xf32> to vector<10x1xf32>
    %cst_145 = arith.constant 1.280000e+02 : f32
    %247 = vector.broadcast %cst_145 : f32 to vector<10x1xf32>
    %248 = arith.divf %246, %247 : vector<10x1xf32>
    %249 = vector.broadcast %248 : vector<10x1xf32> to vector<10x128xf32>
    %250 = arith.subf %244, %249 : vector<10x128xf32>
    %251 = arith.mulf %250, %250 : vector<10x128xf32>
    %cst_146 = arith.constant dense<0.000000e+00> : vector<10xf32>
    %252 = vector.multi_reduction <add>, %251, %cst_146 [1] : vector<10x128xf32> to vector<10xf32>
    %253 = vector.shape_cast %252 : vector<10xf32> to vector<10x1xf32>
    %cst_147 = arith.constant 1.280000e+02 : f32
    %254 = vector.broadcast %cst_147 : f32 to vector<10x1xf32>
    %255 = arith.divf %253, %254 : vector<10x1xf32>
    %256 = vector.broadcast %248 : vector<10x1xf32> to vector<10x128xf32>
    %257 = arith.subf %244, %256 : vector<10x128xf32>
    %cst_148 = arith.constant 9.99999996E-13 : f32
    %258 = vector.broadcast %cst_148 : f32 to vector<10x1xf32>
    %259 = arith.addf %255, %258 : vector<10x1xf32>
    %260 = math.rsqrt %259 : vector<10x1xf32>
    %261 = vector.broadcast %260 : vector<10x1xf32> to vector<10x128xf32>
    %262 = arith.mulf %257, %261 : vector<10x128xf32>
    %263 = vector.broadcast %11 : vector<1x128xf32> to vector<10x128xf32>
    %264 = arith.mulf %262, %263 : vector<10x128xf32>
    %265 = vector.broadcast %13 : vector<1x128xf32> to vector<10x128xf32>
    %266 = arith.addf %264, %265 : vector<10x128xf32>
    %267 = arith.truncf %266 : vector<10x128xf32> to vector<10x128xbf16>
    %c0_149 = arith.constant 0 : index
    %c0_150 = arith.constant 0 : index
    %c0_151 = arith.constant 0 : index
    %268 = vector.load %arg5[%c0_149, %c0_150, %c0_151] : memref<2x128x256xbf16, #tpu.memory_space<vmem>>, vector<1x128x256xbf16>
    %269 = vector.shape_cast %268 : vector<1x128x256xbf16> to vector<128x256xbf16>
    %cst_152 = arith.constant dense<0.000000e+00> : vector<10x256xf32>
    %270 = tpu.matmul %267, %269, %cst_152 {dimension_numbers = #tpu.dot_dimension_numbers<[1], [0], [0], [1], [0, 0, 1, 1], [], []>} : vector<10x128xbf16>, vector<128x256xbf16>, vector<10x256xf32> -> vector<10x256xf32>
    %271 = vector.broadcast %21 : vector<1x256xf32> to vector<10x256xf32>
    %272 = arith.addf %270, %271 : vector<10x256xf32>
    %cst_153 = arith.constant 5.000000e-01 : f32
    %273 = vector.broadcast %cst_153 : f32 to vector<10x256xf32>
    %274 = arith.mulf %273, %272 : vector<10x256xf32>
    %cst_154 = arith.constant 4.471500e-02 : f32
    %275 = vector.broadcast %cst_154 : f32 to vector<10x256xf32>
    %276 = arith.mulf %275, %272 : vector<10x256xf32>
    %277 = arith.mulf %276, %272 : vector<10x256xf32>
    %278 = arith.mulf %277, %272 : vector<10x256xf32>
    %279 = arith.addf %272, %278 : vector<10x256xf32>
    %cst_155 = arith.constant 0.797884583 : f32
    %280 = vector.broadcast %cst_155 : f32 to vector<10x256xf32>
    %281 = arith.mulf %280, %279 : vector<10x256xf32>
    %282 = math.tanh %281 : vector<10x256xf32>
    %cst_156 = arith.constant 1.000000e+00 : f32
    %283 = vector.broadcast %cst_156 : f32 to vector<10x256xf32>
    %284 = arith.addf %283, %282 : vector<10x256xf32>
    %285 = arith.mulf %274, %284 : vector<10x256xf32>
    %286 = arith.truncf %285 : vector<10x256xf32> to vector<10x256xbf16>
    %c0_157 = arith.constant 0 : index
    %c0_158 = arith.constant 0 : index
    %c0_159 = arith.constant 0 : index
    %287 = vector.load %arg6[%c0_157, %c0_158, %c0_159] : memref<2x256x128xbf16, #tpu.memory_space<vmem>>, vector<1x256x128xbf16>
    %288 = vector.shape_cast %287 : vector<1x256x128xbf16> to vector<256x128xbf16>
    %cst_160 = arith.constant dense<0.000000e+00> : vector<10x128xf32>
    %289 = tpu.matmul %286, %288, %cst_160 {dimension_numbers = #tpu.dot_dimension_numbers<[1], [0], [0], [1], [0, 0, 1, 1], [], []>} : vector<10x256xbf16>, vector<256x128xbf16>, vector<10x128xf32> -> vector<10x128xf32>
    %290 = vector.broadcast %17 : vector<1x128xf32> to vector<10x128xf32>
    %291 = arith.addf %289, %290 : vector<10x128xf32>
    %292 = arith.addf %244, %291 : vector<10x128xf32>
    %c0_161 = arith.constant 0 : index
    %c0_162 = arith.constant 0 : index
    %293 = vector.load %arg12[%c0_161, %c0_162] : memref<10x128xf32, #tpu.memory_space<vmem>>, vector<10x128xf32>
    tpu.vector_store %arg12[%c0_161, %c0_162], %292 {strides = array<i32>} : memref<10x128xf32, #tpu.memory_space<vmem>>, vector<10x128xf32>,
    %c1_163 = arith.constant 1 : index
    %c0_164 = arith.constant 0 : index
    %c0_165 = arith.constant 0 : index
    %294 = vector.load %arg7[%c1_163, %c0_164, %c0_165] : memref<2x8x384xf32, #tpu.memory_space<vmem>>, vector<1x1x128xf32>
    %295 = vector.shape_cast %294 : vector<1x1x128xf32> to vector<1x128xf32>
    %c1_166 = arith.constant 1 : index
    %c1_167 = arith.constant 1 : index
    %c0_168 = arith.constant 0 : index
    %296 = vector.load %arg7[%c1_166, %c1_167, %c0_168] : memref<2x8x384xf32, #tpu.memory_space<vmem>>, vector<1x1x128xf32>
    %297 = vector.shape_cast %296 : vector<1x1x128xf32> to vector<1x128xf32>
    %c1_169 = arith.constant 1 : index
    %c2_170 = arith.constant 2 : index
    %c0_171 = arith.constant 0 : index
    %298 = vector.load %arg7[%c1_169, %c2_170, %c0_171] : memref<2x8x384xf32, #tpu.memory_space<vmem>>, vector<1x1x128xf32>
    %299 = vector.shape_cast %298 : vector<1x1x128xf32> to vector<1x128xf32>
    %c1_172 = arith.constant 1 : index
    %c3_173 = arith.constant 3 : index
    %c0_174 = arith.constant 0 : index
    %300 = vector.load %arg7[%c1_172, %c3_173, %c0_174] : memref<2x8x384xf32, #tpu.memory_space<vmem>>, vector<1x1x128xf32>
    %301 = vector.shape_cast %300 : vector<1x1x128xf32> to vector<1x128xf32>
    %c1_175 = arith.constant 1 : index
    %c4_176 = arith.constant 4 : index
    %c0_177 = arith.constant 0 : index
    %302 = vector.load %arg7[%c1_175, %c4_176, %c0_177] : memref<2x8x384xf32, #tpu.memory_space<vmem>>, vector<1x1x128xf32>
    %303 = vector.shape_cast %302 : vector<1x1x128xf32> to vector<1x128xf32>
    %c1_178 = arith.constant 1 : index
    %c5_179 = arith.constant 5 : index
    %c0_180 = arith.constant 0 : index
    %304 = vector.load %arg7[%c1_178, %c5_179, %c0_180] : memref<2x8x384xf32, #tpu.memory_space<vmem>>, vector<1x1x128xf32>
    %305 = vector.shape_cast %304 : vector<1x1x128xf32> to vector<1x128xf32>
    %c1_181 = arith.constant 1 : index
    %c6_182 = arith.constant 6 : index
    %c0_183 = arith.constant 0 : index
    %306 = vector.load %arg7[%c1_181, %c6_182, %c0_183] : memref<2x8x384xf32, #tpu.memory_space<vmem>>, vector<1x1x384xf32>
    %307 = vector.shape_cast %306 : vector<1x1x384xf32> to vector<1x384xf32>
    %c1_184 = arith.constant 1 : index
    %c7_185 = arith.constant 7 : index
    %c0_186 = arith.constant 0 : index
    %308 = vector.load %arg7[%c1_184, %c7_185, %c0_186] : memref<2x8x384xf32, #tpu.memory_space<vmem>>, vector<1x1x256xf32>
    %309 = vector.shape_cast %308 : vector<1x1x256xf32> to vector<1x256xf32>
    %c0_187 = arith.constant 0 : index
    %c0_188 = arith.constant 0 : index
    %310 = vector.load %arg12[%c0_187, %c0_188] : memref<10x128xf32, #tpu.memory_space<vmem>>, vector<10x128xf32>
    %cst_189 = arith.constant dense<0.000000e+00> : vector<10xf32>
    %311 = vector.multi_reduction <add>, %310, %cst_189 [1] : vector<10x128xf32> to vector<10xf32>
    %312 = vector.shape_cast %311 : vector<10xf32> to vector<10x1xf32>
    %cst_190 = arith.constant 1.280000e+02 : f32
    %313 = vector.broadcast %cst_190 : f32 to vector<10x1xf32>
    %314 = arith.divf %312, %313 : vector<10x1xf32>
    %315 = vector.broadcast %314 : vector<10x1xf32> to vector<10x128xf32>
    %316 = arith.subf %310, %315 : vector<10x128xf32>
    %317 = arith.mulf %316, %316 : vector<10x128xf32>
    %cst_191 = arith.constant dense<0.000000e+00> : vector<10xf32>
    %318 = vector.multi_reduction <add>, %317, %cst_191 [1] : vector<10x128xf32> to vector<10xf32>
    %319 = vector.shape_cast %318 : vector<10xf32> to vector<10x1xf32>
    %cst_192 = arith.constant 1.280000e+02 : f32
    %320 = vector.broadcast %cst_192 : f32 to vector<10x1xf32>
    %321 = arith.divf %319, %320 : vector<10x1xf32>
    %322 = vector.broadcast %314 : vector<10x1xf32> to vector<10x128xf32>
    %323 = arith.subf %310, %322 : vector<10x128xf32>
    %cst_193 = arith.constant 9.99999996E-13 : f32
    %324 = vector.broadcast %cst_193 : f32 to vector<10x1xf32>
    %325 = arith.addf %321, %324 : vector<10x1xf32>
    %326 = math.rsqrt %325 : vector<10x1xf32>
    %327 = vector.broadcast %326 : vector<10x1xf32> to vector<10x128xf32>
    %328 = arith.mulf %323, %327 : vector<10x128xf32>
    %329 = vector.broadcast %295 : vector<1x128xf32> to vector<10x128xf32>
    %330 = arith.mulf %328, %329 : vector<10x128xf32>
    %331 = vector.broadcast %297 : vector<1x128xf32> to vector<10x128xf32>
    %332 = arith.addf %330, %331 : vector<10x128xf32>
    %333 = arith.truncf %332 : vector<10x128xf32> to vector<10x128xbf16>
    %c1_194 = arith.constant 1 : index
    %c0_195 = arith.constant 0 : index
    %c0_196 = arith.constant 0 : index
    %334 = vector.load %arg3[%c1_194, %c0_195, %c0_196] : memref<2x128x384xbf16, #tpu.memory_space<vmem>>, vector<1x128x384xbf16>
    %335 = vector.shape_cast %334 : vector<1x128x384xbf16> to vector<128x384xbf16>
    %cst_197 = arith.constant dense<0.000000e+00> : vector<10x384xf32>
    %336 = tpu.matmul %333, %335, %cst_197 {dimension_numbers = #tpu.dot_dimension_numbers<[1], [0], [0], [1], [0, 0, 1, 1], [], []>} : vector<10x128xbf16>, vector<128x384xbf16>, vector<10x384xf32> -> vector<10x384xf32>
    %337 = vector.broadcast %307 : vector<1x384xf32> to vector<10x384xf32>
    %338 = arith.addf %336, %337 : vector<10x384xf32>
    %c0_198 = arith.constant 0 : index
    %c0_199 = arith.constant 0 : index
    %339 = vector.load %arg13[%c0_198, %c0_199] : memref<10x384xf32, #tpu.memory_space<vmem>>, vector<10x384xf32>
    tpu.vector_store %arg13[%c0_198, %c0_199], %338 {strides = array<i32>} : memref<10x384xf32, #tpu.memory_space<vmem>>, vector<10x384xf32>,
    %c1_200 = arith.constant 1 : index
    %c0_201 = arith.constant 0 : index
    %c0_202 = arith.constant 0 : index
    %340 = vector.load %arg4[%c1_200, %c0_201, %c0_202] : memref<2x128x128xbf16, #tpu.memory_space<vmem>>, vector<1x32x128xbf16>
    %341 = vector.shape_cast %340 : vector<1x32x128xbf16> to vector<32x128xbf16>
    %c1_203 = arith.constant 1 : index
    %c32_204 = arith.constant 32 : index
    %c0_205 = arith.constant 0 : index
    %342 = vector.load %arg4[%c1_203, %c32_204, %c0_205] : memref<2x128x128xbf16, #tpu.memory_space<vmem>>, vector<1x32x128xbf16>
    %343 = vector.shape_cast %342 : vector<1x32x128xbf16> to vector<32x128xbf16>
    %c1_206 = arith.constant 1 : index
    %c64_207 = arith.constant 64 : index
    %c0_208 = arith.constant 0 : index
    %344 = vector.load %arg4[%c1_206, %c64_207, %c0_208] : memref<2x128x128xbf16, #tpu.memory_space<vmem>>, vector<1x32x128xbf16>
    %345 = vector.shape_cast %344 : vector<1x32x128xbf16> to vector<32x128xbf16>
    %c1_209 = arith.constant 1 : index
    %c96_210 = arith.constant 96 : index
    %c0_211 = arith.constant 0 : index
    %346 = vector.load %arg4[%c1_209, %c96_210, %c0_211] : memref<2x128x128xbf16, #tpu.memory_space<vmem>>, vector<1x32x128xbf16>
    %347 = vector.shape_cast %346 : vector<1x32x128xbf16> to vector<32x128xbf16>
    %c0_212 = arith.constant 0 : index
    %c0_213 = arith.constant 0 : index
    %348 = vector.load %arg13[%c0_212, %c0_213] : memref<10x384xf32, #tpu.memory_space<vmem>>, vector<5x32xf32>
    %c0_214 = arith.constant 0 : index
    %c128_215 = arith.constant 128 : index
    %349 = vector.load %arg13[%c0_214, %c128_215] : memref<10x384xf32, #tpu.memory_space<vmem>>, vector<5x32xf32>
    %c0_216 = arith.constant 0 : index
    %c256_217 = arith.constant 256 : index
    %350 = vector.load %arg13[%c0_216, %c256_217] : memref<10x384xf32, #tpu.memory_space<vmem>>, vector<5x32xf32>
    %cst_218 = arith.constant dense<0.000000e+00> : vector<5x5xf32>
    %351 = tpu.matmul %348, %349, %cst_218 {dimension_numbers = #tpu.dot_dimension_numbers<[1], [1], [0], [0], [0, 0, 1, 0], [], []>} : vector<5x32xf32>, vector<5x32xf32>, vector<5x5xf32> -> vector<5x5xf32>
    %cst_219 = arith.constant 0.176776692 : f32
    %352 = vector.broadcast %cst_219 : f32 to vector<5x5xf32>
    %353 = arith.mulf %351, %352 : vector<5x5xf32>
    %cst_220 = arith.constant dense<0xFF800000> : vector<5xf32>
    %354 = vector.multi_reduction <maximumf>, %353, %cst_220 [1] : vector<5x5xf32> to vector<5xf32>
    %355 = vector.shape_cast %354 : vector<5xf32> to vector<5x1xf32>
    %356 = vector.broadcast %355 : vector<5x1xf32> to vector<5x5xf32>
    %357 = arith.subf %353, %356 : vector<5x5xf32>
    %358 = math.exp %357 : vector<5x5xf32>
    %cst_221 = arith.constant dense<0.000000e+00> : vector<5xf32>
    %359 = vector.multi_reduction <add>, %358, %cst_221 [1] : vector<5x5xf32> to vector<5xf32>
    %360 = vector.shape_cast %359 : vector<5xf32> to vector<5x1xf32>
    %361 = tpu.reciprocal %360 {approx = true} : vector<5x1xf32> -> vector<5x1xf32>
    %362 = vector.broadcast %361 : vector<5x1xf32> to vector<5x5xf32>
    %363 = arith.mulf %358, %362 : vector<5x5xf32>
    %364 = arith.truncf %363 : vector<5x5xf32> to vector<5x5xbf16>
    %365 = arith.truncf %350 : vector<5x32xf32> to vector<5x32xbf16>
    %cst_222 = arith.constant dense<0.000000e+00> : vector<5x32xf32>
    %366 = tpu.matmul %364, %365, %cst_222 {dimension_numbers = #tpu.dot_dimension_numbers<[1], [0], [0], [1], [0, 0, 1, 1], [], []>} : vector<5x5xbf16>, vector<5x32xbf16>, vector<5x32xf32> -> vector<5x32xf32>
    %367 = arith.truncf %366 : vector<5x32xf32> to vector<5x32xbf16>
    %cst_223 = arith.constant dense<0.000000e+00> : vector<5x128xf32>
    %368 = tpu.matmul %367, %341, %cst_223 {dimension_numbers = #tpu.dot_dimension_numbers<[1], [0], [0], [1], [0, 0, 1, 1], [], []>} : vector<5x32xbf16>, vector<32x128xbf16>, vector<5x128xf32> -> vector<5x128xf32>
    %369 = vector.broadcast %303 : vector<1x128xf32> to vector<5x128xf32>
    %370 = arith.addf %369, %368 : vector<5x128xf32>
    %c0_224 = arith.constant 0 : index
    %c32_225 = arith.constant 32 : index
    %371 = vector.load %arg13[%c0_224, %c32_225] : memref<10x384xf32, #tpu.memory_space<vmem>>, vector<5x32xf32>
    %c0_226 = arith.constant 0 : index
    %c160_227 = arith.constant 160 : index
    %372 = vector.load %arg13[%c0_226, %c160_227] : memref<10x384xf32, #tpu.memory_space<vmem>>, vector<5x32xf32>
    %c0_228 = arith.constant 0 : index
    %c288_229 = arith.constant 288 : index
    %373 = vector.load %arg13[%c0_228, %c288_229] : memref<10x384xf32, #tpu.memory_space<vmem>>, vector<5x32xf32>
    %cst_230 = arith.constant dense<0.000000e+00> : vector<5x5xf32>
    %374 = tpu.matmul %371, %372, %cst_230 {dimension_numbers = #tpu.dot_dimension_numbers<[1], [1], [0], [0], [0, 0, 1, 0], [], []>} : vector<5x32xf32>, vector<5x32xf32>, vector<5x5xf32> -> vector<5x5xf32>
    %cst_231 = arith.constant 0.176776692 : f32
    %375 = vector.broadcast %cst_231 : f32 to vector<5x5xf32>
    %376 = arith.mulf %374, %375 : vector<5x5xf32>
    %cst_232 = arith.constant dense<0xFF800000> : vector<5xf32>
    %377 = vector.multi_reduction <maximumf>, %376, %cst_232 [1] : vector<5x5xf32> to vector<5xf32>
    %378 = vector.shape_cast %377 : vector<5xf32> to vector<5x1xf32>
    %379 = vector.broadcast %378 : vector<5x1xf32> to vector<5x5xf32>
    %380 = arith.subf %376, %379 : vector<5x5xf32>
    %381 = math.exp %380 : vector<5x5xf32>
    %cst_233 = arith.constant dense<0.000000e+00> : vector<5xf32>
    %382 = vector.multi_reduction <add>, %381, %cst_233 [1] : vector<5x5xf32> to vector<5xf32>
    %383 = vector.shape_cast %382 : vector<5xf32> to vector<5x1xf32>
    %384 = tpu.reciprocal %383 {approx = true} : vector<5x1xf32> -> vector<5x1xf32>
    %385 = vector.broadcast %384 : vector<5x1xf32> to vector<5x5xf32>
    %386 = arith.mulf %381, %385 : vector<5x5xf32>
    %387 = arith.truncf %386 : vector<5x5xf32> to vector<5x5xbf16>
    %388 = arith.truncf %373 : vector<5x32xf32> to vector<5x32xbf16>
    %cst_234 = arith.constant dense<0.000000e+00> : vector<5x32xf32>
    %389 = tpu.matmul %387, %388, %cst_234 {dimension_numbers = #tpu.dot_dimension_numbers<[1], [0], [0], [1], [0, 0, 1, 1], [], []>} : vector<5x5xbf16>, vector<5x32xbf16>, vector<5x32xf32> -> vector<5x32xf32>
    %390 = arith.truncf %389 : vector<5x32xf32> to vector<5x32xbf16>
    %cst_235 = arith.constant dense<0.000000e+00> : vector<5x128xf32>
    %391 = tpu.matmul %390, %343, %cst_235 {dimension_numbers = #tpu.dot_dimension_numbers<[1], [0], [0], [1], [0, 0, 1, 1], [], []>} : vector<5x32xbf16>, vector<32x128xbf16>, vector<5x128xf32> -> vector<5x128xf32>
    %392 = arith.addf %370, %391 : vector<5x128xf32>
    %c0_236 = arith.constant 0 : index
    %c64_237 = arith.constant 64 : index
    %393 = vector.load %arg13[%c0_236, %c64_237] : memref<10x384xf32, #tpu.memory_space<vmem>>, vector<5x32xf32>
    %c0_238 = arith.constant 0 : index
    %c192_239 = arith.constant 192 : index
    %394 = vector.load %arg13[%c0_238, %c192_239] : memref<10x384xf32, #tpu.memory_space<vmem>>, vector<5x32xf32>
    %c0_240 = arith.constant 0 : index
    %c320_241 = arith.constant 320 : index
    %395 = vector.load %arg13[%c0_240, %c320_241] : memref<10x384xf32, #tpu.memory_space<vmem>>, vector<5x32xf32>
    %cst_242 = arith.constant dense<0.000000e+00> : vector<5x5xf32>
    %396 = tpu.matmul %393, %394, %cst_242 {dimension_numbers = #tpu.dot_dimension_numbers<[1], [1], [0], [0], [0, 0, 1, 0], [], []>} : vector<5x32xf32>, vector<5x32xf32>, vector<5x5xf32> -> vector<5x5xf32>
    %cst_243 = arith.constant 0.176776692 : f32
    %397 = vector.broadcast %cst_243 : f32 to vector<5x5xf32>
    %398 = arith.mulf %396, %397 : vector<5x5xf32>
    %cst_244 = arith.constant dense<0xFF800000> : vector<5xf32>
    %399 = vector.multi_reduction <maximumf>, %398, %cst_244 [1] : vector<5x5xf32> to vector<5xf32>
    %400 = vector.shape_cast %399 : vector<5xf32> to vector<5x1xf32>
    %401 = vector.broadcast %400 : vector<5x1xf32> to vector<5x5xf32>
    %402 = arith.subf %398, %401 : vector<5x5xf32>
    %403 = math.exp %402 : vector<5x5xf32>
    %cst_245 = arith.constant dense<0.000000e+00> : vector<5xf32>
    %404 = vector.multi_reduction <add>, %403, %cst_245 [1] : vector<5x5xf32> to vector<5xf32>
    %405 = vector.shape_cast %404 : vector<5xf32> to vector<5x1xf32>
    %406 = tpu.reciprocal %405 {approx = true} : vector<5x1xf32> -> vector<5x1xf32>
    %407 = vector.broadcast %406 : vector<5x1xf32> to vector<5x5xf32>
    %408 = arith.mulf %403, %407 : vector<5x5xf32>
    %409 = arith.truncf %408 : vector<5x5xf32> to vector<5x5xbf16>
    %410 = arith.truncf %395 : vector<5x32xf32> to vector<5x32xbf16>
    %cst_246 = arith.constant dense<0.000000e+00> : vector<5x32xf32>
    %411 = tpu.matmul %409, %410, %cst_246 {dimension_numbers = #tpu.dot_dimension_numbers<[1], [0], [0], [1], [0, 0, 1, 1], [], []>} : vector<5x5xbf16>, vector<5x32xbf16>, vector<5x32xf32> -> vector<5x32xf32>
    %412 = arith.truncf %411 : vector<5x32xf32> to vector<5x32xbf16>
    %cst_247 = arith.constant dense<0.000000e+00> : vector<5x128xf32>
    %413 = tpu.matmul %412, %345, %cst_247 {dimension_numbers = #tpu.dot_dimension_numbers<[1], [0], [0], [1], [0, 0, 1, 1], [], []>} : vector<5x32xbf16>, vector<32x128xbf16>, vector<5x128xf32> -> vector<5x128xf32>
    %414 = arith.addf %392, %413 : vector<5x128xf32>
    %c0_248 = arith.constant 0 : index
    %c96_249 = arith.constant 96 : index
    %415 = vector.load %arg13[%c0_248, %c96_249] : memref<10x384xf32, #tpu.memory_space<vmem>>, vector<5x32xf32>
    %c0_250 = arith.constant 0 : index
    %c224_251 = arith.constant 224 : index
    %416 = vector.load %arg13[%c0_250, %c224_251] : memref<10x384xf32, #tpu.memory_space<vmem>>, vector<5x32xf32>
    %c0_252 = arith.constant 0 : index
    %c352_253 = arith.constant 352 : index
    %417 = vector.load %arg13[%c0_252, %c352_253] : memref<10x384xf32, #tpu.memory_space<vmem>>, vector<5x32xf32>
    %cst_254 = arith.constant dense<0.000000e+00> : vector<5x5xf32>
    %418 = tpu.matmul %415, %416, %cst_254 {dimension_numbers = #tpu.dot_dimension_numbers<[1], [1], [0], [0], [0, 0, 1, 0], [], []>} : vector<5x32xf32>, vector<5x32xf32>, vector<5x5xf32> -> vector<5x5xf32>
    %cst_255 = arith.constant 0.176776692 : f32
    %419 = vector.broadcast %cst_255 : f32 to vector<5x5xf32>
    %420 = arith.mulf %418, %419 : vector<5x5xf32>
    %cst_256 = arith.constant dense<0xFF800000> : vector<5xf32>
    %421 = vector.multi_reduction <maximumf>, %420, %cst_256 [1] : vector<5x5xf32> to vector<5xf32>
    %422 = vector.shape_cast %421 : vector<5xf32> to vector<5x1xf32>
    %423 = vector.broadcast %422 : vector<5x1xf32> to vector<5x5xf32>
    %424 = arith.subf %420, %423 : vector<5x5xf32>
    %425 = math.exp %424 : vector<5x5xf32>
    %cst_257 = arith.constant dense<0.000000e+00> : vector<5xf32>
    %426 = vector.multi_reduction <add>, %425, %cst_257 [1] : vector<5x5xf32> to vector<5xf32>
    %427 = vector.shape_cast %426 : vector<5xf32> to vector<5x1xf32>
    %428 = tpu.reciprocal %427 {approx = true} : vector<5x1xf32> -> vector<5x1xf32>
    %429 = vector.broadcast %428 : vector<5x1xf32> to vector<5x5xf32>
    %430 = arith.mulf %425, %429 : vector<5x5xf32>
    %431 = arith.truncf %430 : vector<5x5xf32> to vector<5x5xbf16>
    %432 = arith.truncf %417 : vector<5x32xf32> to vector<5x32xbf16>
    %cst_258 = arith.constant dense<0.000000e+00> : vector<5x32xf32>
    %433 = tpu.matmul %431, %432, %cst_258 {dimension_numbers = #tpu.dot_dimension_numbers<[1], [0], [0], [1], [0, 0, 1, 1], [], []>} : vector<5x5xbf16>, vector<5x32xbf16>, vector<5x32xf32> -> vector<5x32xf32>
    %434 = arith.truncf %433 : vector<5x32xf32> to vector<5x32xbf16>
    %cst_259 = arith.constant dense<0.000000e+00> : vector<5x128xf32>
    %435 = tpu.matmul %434, %347, %cst_259 {dimension_numbers = #tpu.dot_dimension_numbers<[1], [0], [0], [1], [0, 0, 1, 1], [], []>} : vector<5x32xbf16>, vector<32x128xbf16>, vector<5x128xf32> -> vector<5x128xf32>
    %436 = arith.addf %414, %435 : vector<5x128xf32>
    %c0_260 = arith.constant 0 : index
    %c0_261 = arith.constant 0 : index
    %437 = vector.load %arg12[%c0_260, %c0_261] : memref<10x128xf32, #tpu.memory_space<vmem>>, vector<5x128xf32>
    %438 = arith.addf %437, %436 : vector<5x128xf32>
    %c0_262 = arith.constant 0 : index
    %c0_263 = arith.constant 0 : index
    %439 = vector.load %arg12[%c0_262, %c0_263] : memref<10x128xf32, #tpu.memory_space<vmem>>, vector<5x128xf32>
    tpu.vector_store %arg12[%c0_262, %c0_263], %438 {strides = array<i32>} : memref<10x128xf32, #tpu.memory_space<vmem>>, vector<5x128xf32>,
    %c5_264 = arith.constant 5 : index
    %c0_265 = arith.constant 0 : index
    %440 = vector.load %arg13[%c5_264, %c0_265] : memref<10x384xf32, #tpu.memory_space<vmem>>, vector<5x32xf32>
    %c5_266 = arith.constant 5 : index
    %c128_267 = arith.constant 128 : index
    %441 = vector.load %arg13[%c5_266, %c128_267] : memref<10x384xf32, #tpu.memory_space<vmem>>, vector<5x32xf32>
    %c5_268 = arith.constant 5 : index
    %c256_269 = arith.constant 256 : index
    %442 = vector.load %arg13[%c5_268, %c256_269] : memref<10x384xf32, #tpu.memory_space<vmem>>, vector<5x32xf32>
    %cst_270 = arith.constant dense<0.000000e+00> : vector<5x5xf32>
    %443 = tpu.matmul %440, %441, %cst_270 {dimension_numbers = #tpu.dot_dimension_numbers<[1], [1], [0], [0], [0, 0, 1, 0], [], []>} : vector<5x32xf32>, vector<5x32xf32>, vector<5x5xf32> -> vector<5x5xf32>
    %cst_271 = arith.constant 0.176776692 : f32
    %444 = vector.broadcast %cst_271 : f32 to vector<5x5xf32>
    %445 = arith.mulf %443, %444 : vector<5x5xf32>
    %cst_272 = arith.constant dense<0xFF800000> : vector<5xf32>
    %446 = vector.multi_reduction <maximumf>, %445, %cst_272 [1] : vector<5x5xf32> to vector<5xf32>
    %447 = vector.shape_cast %446 : vector<5xf32> to vector<5x1xf32>
    %448 = vector.broadcast %447 : vector<5x1xf32> to vector<5x5xf32>
    %449 = arith.subf %445, %448 : vector<5x5xf32>
    %450 = math.exp %449 : vector<5x5xf32>
    %cst_273 = arith.constant dense<0.000000e+00> : vector<5xf32>
    %451 = vector.multi_reduction <add>, %450, %cst_273 [1] : vector<5x5xf32> to vector<5xf32>
    %452 = vector.shape_cast %451 : vector<5xf32> to vector<5x1xf32>
    %453 = tpu.reciprocal %452 {approx = true} : vector<5x1xf32> -> vector<5x1xf32>
    %454 = vector.broadcast %453 : vector<5x1xf32> to vector<5x5xf32>
    %455 = arith.mulf %450, %454 : vector<5x5xf32>
    %456 = arith.truncf %455 : vector<5x5xf32> to vector<5x5xbf16>
    %457 = arith.truncf %442 : vector<5x32xf32> to vector<5x32xbf16>
    %cst_274 = arith.constant dense<0.000000e+00> : vector<5x32xf32>
    %458 = tpu.matmul %456, %457, %cst_274 {dimension_numbers = #tpu.dot_dimension_numbers<[1], [0], [0], [1], [0, 0, 1, 1], [], []>} : vector<5x5xbf16>, vector<5x32xbf16>, vector<5x32xf32> -> vector<5x32xf32>
    %459 = arith.truncf %458 : vector<5x32xf32> to vector<5x32xbf16>
    %cst_275 = arith.constant dense<0.000000e+00> : vector<5x128xf32>
    %460 = tpu.matmul %459, %341, %cst_275 {dimension_numbers = #tpu.dot_dimension_numbers<[1], [0], [0], [1], [0, 0, 1, 1], [], []>} : vector<5x32xbf16>, vector<32x128xbf16>, vector<5x128xf32> -> vector<5x128xf32>
    %461 = vector.broadcast %303 : vector<1x128xf32> to vector<5x128xf32>
    %462 = arith.addf %461, %460 : vector<5x128xf32>
    %c5_276 = arith.constant 5 : index
    %c32_277 = arith.constant 32 : index
    %463 = vector.load %arg13[%c5_276, %c32_277] : memref<10x384xf32, #tpu.memory_space<vmem>>, vector<5x32xf32>
    %c5_278 = arith.constant 5 : index
    %c160_279 = arith.constant 160 : index
    %464 = vector.load %arg13[%c5_278, %c160_279] : memref<10x384xf32, #tpu.memory_space<vmem>>, vector<5x32xf32>
    %c5_280 = arith.constant 5 : index
    %c288_281 = arith.constant 288 : index
    %465 = vector.load %arg13[%c5_280, %c288_281] : memref<10x384xf32, #tpu.memory_space<vmem>>, vector<5x32xf32>
    %cst_282 = arith.constant dense<0.000000e+00> : vector<5x5xf32>
    %466 = tpu.matmul %463, %464, %cst_282 {dimension_numbers = #tpu.dot_dimension_numbers<[1], [1], [0], [0], [0, 0, 1, 0], [], []>} : vector<5x32xf32>, vector<5x32xf32>, vector<5x5xf32> -> vector<5x5xf32>
    %cst_283 = arith.constant 0.176776692 : f32
    %467 = vector.broadcast %cst_283 : f32 to vector<5x5xf32>
    %468 = arith.mulf %466, %467 : vector<5x5xf32>
    %cst_284 = arith.constant dense<0xFF800000> : vector<5xf32>
    %469 = vector.multi_reduction <maximumf>, %468, %cst_284 [1] : vector<5x5xf32> to vector<5xf32>
    %470 = vector.shape_cast %469 : vector<5xf32> to vector<5x1xf32>
    %471 = vector.broadcast %470 : vector<5x1xf32> to vector<5x5xf32>
    %472 = arith.subf %468, %471 : vector<5x5xf32>
    %473 = math.exp %472 : vector<5x5xf32>
    %cst_285 = arith.constant dense<0.000000e+00> : vector<5xf32>
    %474 = vector.multi_reduction <add>, %473, %cst_285 [1] : vector<5x5xf32> to vector<5xf32>
    %475 = vector.shape_cast %474 : vector<5xf32> to vector<5x1xf32>
    %476 = tpu.reciprocal %475 {approx = true} : vector<5x1xf32> -> vector<5x1xf32>
    %477 = vector.broadcast %476 : vector<5x1xf32> to vector<5x5xf32>
    %478 = arith.mulf %473, %477 : vector<5x5xf32>
    %479 = arith.truncf %478 : vector<5x5xf32> to vector<5x5xbf16>
    %480 = arith.truncf %465 : vector<5x32xf32> to vector<5x32xbf16>
    %cst_286 = arith.constant dense<0.000000e+00> : vector<5x32xf32>
    %481 = tpu.matmul %479, %480, %cst_286 {dimension_numbers = #tpu.dot_dimension_numbers<[1], [0], [0], [1], [0, 0, 1, 1], [], []>} : vector<5x5xbf16>, vector<5x32xbf16>, vector<5x32xf32> -> vector<5x32xf32>
    %482 = arith.truncf %481 : vector<5x32xf32> to vector<5x32xbf16>
    %cst_287 = arith.constant dense<0.000000e+00> : vector<5x128xf32>
    %483 = tpu.matmul %482, %343, %cst_287 {dimension_numbers = #tpu.dot_dimension_numbers<[1], [0], [0], [1], [0, 0, 1, 1], [], []>} : vector<5x32xbf16>, vector<32x128xbf16>, vector<5x128xf32> -> vector<5x128xf32>
    %484 = arith.addf %462, %483 : vector<5x128xf32>
    %c5_288 = arith.constant 5 : index
    %c64_289 = arith.constant 64 : index
    %485 = vector.load %arg13[%c5_288, %c64_289] : memref<10x384xf32, #tpu.memory_space<vmem>>, vector<5x32xf32>
    %c5_290 = arith.constant 5 : index
    %c192_291 = arith.constant 192 : index
    %486 = vector.load %arg13[%c5_290, %c192_291] : memref<10x384xf32, #tpu.memory_space<vmem>>, vector<5x32xf32>
    %c5_292 = arith.constant 5 : index
    %c320_293 = arith.constant 320 : index
    %487 = vector.load %arg13[%c5_292, %c320_293] : memref<10x384xf32, #tpu.memory_space<vmem>>, vector<5x32xf32>
    %cst_294 = arith.constant dense<0.000000e+00> : vector<5x5xf32>
    %488 = tpu.matmul %485, %486, %cst_294 {dimension_numbers = #tpu.dot_dimension_numbers<[1], [1], [0], [0], [0, 0, 1, 0], [], []>} : vector<5x32xf32>, vector<5x32xf32>, vector<5x5xf32> -> vector<5x5xf32>
    %cst_295 = arith.constant 0.176776692 : f32
    %489 = vector.broadcast %cst_295 : f32 to vector<5x5xf32>
    %490 = arith.mulf %488, %489 : vector<5x5xf32>
    %cst_296 = arith.constant dense<0xFF800000> : vector<5xf32>
    %491 = vector.multi_reduction <maximumf>, %490, %cst_296 [1] : vector<5x5xf32> to vector<5xf32>
    %492 = vector.shape_cast %491 : vector<5xf32> to vector<5x1xf32>
    %493 = vector.broadcast %492 : vector<5x1xf32> to vector<5x5xf32>
    %494 = arith.subf %490, %493 : vector<5x5xf32>
    %495 = math.exp %494 : vector<5x5xf32>
    %cst_297 = arith.constant dense<0.000000e+00> : vector<5xf32>
    %496 = vector.multi_reduction <add>, %495, %cst_297 [1] : vector<5x5xf32> to vector<5xf32>
    %497 = vector.shape_cast %496 : vector<5xf32> to vector<5x1xf32>
    %498 = tpu.reciprocal %497 {approx = true} : vector<5x1xf32> -> vector<5x1xf32>
    %499 = vector.broadcast %498 : vector<5x1xf32> to vector<5x5xf32>
    %500 = arith.mulf %495, %499 : vector<5x5xf32>
    %501 = arith.truncf %500 : vector<5x5xf32> to vector<5x5xbf16>
    %502 = arith.truncf %487 : vector<5x32xf32> to vector<5x32xbf16>
    %cst_298 = arith.constant dense<0.000000e+00> : vector<5x32xf32>
    %503 = tpu.matmul %501, %502, %cst_298 {dimension_numbers = #tpu.dot_dimension_numbers<[1], [0], [0], [1], [0, 0, 1, 1], [], []>} : vector<5x5xbf16>, vector<5x32xbf16>, vector<5x32xf32> -> vector<5x32xf32>
    %504 = arith.truncf %503 : vector<5x32xf32> to vector<5x32xbf16>
    %cst_299 = arith.constant dense<0.000000e+00> : vector<5x128xf32>
    %505 = tpu.matmul %504, %345, %cst_299 {dimension_numbers = #tpu.dot_dimension_numbers<[1], [0], [0], [1], [0, 0, 1, 1], [], []>} : vector<5x32xbf16>, vector<32x128xbf16>, vector<5x128xf32> -> vector<5x128xf32>
    %506 = arith.addf %484, %505 : vector<5x128xf32>
    %c5_300 = arith.constant 5 : index
    %c96_301 = arith.constant 96 : index
    %507 = vector.load %arg13[%c5_300, %c96_301] : memref<10x384xf32, #tpu.memory_space<vmem>>, vector<5x32xf32>
    %c5_302 = arith.constant 5 : index
    %c224_303 = arith.constant 224 : index
    %508 = vector.load %arg13[%c5_302, %c224_303] : memref<10x384xf32, #tpu.memory_space<vmem>>, vector<5x32xf32>
    %c5_304 = arith.constant 5 : index
    %c352_305 = arith.constant 352 : index
    %509 = vector.load %arg13[%c5_304, %c352_305] : memref<10x384xf32, #tpu.memory_space<vmem>>, vector<5x32xf32>
    %cst_306 = arith.constant dense<0.000000e+00> : vector<5x5xf32>
    %510 = tpu.matmul %507, %508, %cst_306 {dimension_numbers = #tpu.dot_dimension_numbers<[1], [1], [0], [0], [0, 0, 1, 0], [], []>} : vector<5x32xf32>, vector<5x32xf32>, vector<5x5xf32> -> vector<5x5xf32>
    %cst_307 = arith.constant 0.176776692 : f32
    %511 = vector.broadcast %cst_307 : f32 to vector<5x5xf32>
    %512 = arith.mulf %510, %511 : vector<5x5xf32>
    %cst_308 = arith.constant dense<0xFF800000> : vector<5xf32>
    %513 = vector.multi_reduction <maximumf>, %512, %cst_308 [1] : vector<5x5xf32> to vector<5xf32>
    %514 = vector.shape_cast %513 : vector<5xf32> to vector<5x1xf32>
    %515 = vector.broadcast %514 : vector<5x1xf32> to vector<5x5xf32>
    %516 = arith.subf %512, %515 : vector<5x5xf32>
    %517 = math.exp %516 : vector<5x5xf32>
    %cst_309 = arith.constant dense<0.000000e+00> : vector<5xf32>
    %518 = vector.multi_reduction <add>, %517, %cst_309 [1] : vector<5x5xf32> to vector<5xf32>
    %519 = vector.shape_cast %518 : vector<5xf32> to vector<5x1xf32>
    %520 = tpu.reciprocal %519 {approx = true} : vector<5x1xf32> -> vector<5x1xf32>
    %521 = vector.broadcast %520 : vector<5x1xf32> to vector<5x5xf32>
    %522 = arith.mulf %517, %521 : vector<5x5xf32>
    %523 = arith.truncf %522 : vector<5x5xf32> to vector<5x5xbf16>
    %524 = arith.truncf %509 : vector<5x32xf32> to vector<5x32xbf16>
    %cst_310 = arith.constant dense<0.000000e+00> : vector<5x32xf32>
    %525 = tpu.matmul %523, %524, %cst_310 {dimension_numbers = #tpu.dot_dimension_numbers<[1], [0], [0], [1], [0, 0, 1, 1], [], []>} : vector<5x5xbf16>, vector<5x32xbf16>, vector<5x32xf32> -> vector<5x32xf32>
    %526 = arith.truncf %525 : vector<5x32xf32> to vector<5x32xbf16>
    %cst_311 = arith.constant dense<0.000000e+00> : vector<5x128xf32>
    %527 = tpu.matmul %526, %347, %cst_311 {dimension_numbers = #tpu.dot_dimension_numbers<[1], [0], [0], [1], [0, 0, 1, 1], [], []>} : vector<5x32xbf16>, vector<32x128xbf16>, vector<5x128xf32> -> vector<5x128xf32>
    %528 = arith.addf %506, %527 : vector<5x128xf32>
    %c5_312 = arith.constant 5 : index
    %c0_313 = arith.constant 0 : index
    %529 = vector.load %arg12[%c5_312, %c0_313] : memref<10x128xf32, #tpu.memory_space<vmem>>, vector<5x128xf32>
    %530 = arith.addf %529, %528 : vector<5x128xf32>
    %c5_314 = arith.constant 5 : index
    %c0_315 = arith.constant 0 : index
    %531 = vector.load %arg12[%c5_314, %c0_315] : memref<10x128xf32, #tpu.memory_space<vmem>>, vector<5x128xf32>
    tpu.vector_store %arg12[%c5_314, %c0_315], %530 {strides = array<i32>} : memref<10x128xf32, #tpu.memory_space<vmem>>, vector<5x128xf32>,
    %c0_316 = arith.constant 0 : index
    %c0_317 = arith.constant 0 : index
    %532 = vector.load %arg12[%c0_316, %c0_317] : memref<10x128xf32, #tpu.memory_space<vmem>>, vector<10x128xf32>
    %cst_318 = arith.constant dense<0.000000e+00> : vector<10xf32>
    %533 = vector.multi_reduction <add>, %532, %cst_318 [1] : vector<10x128xf32> to vector<10xf32>
    %534 = vector.shape_cast %533 : vector<10xf32> to vector<10x1xf32>
    %cst_319 = arith.constant 1.280000e+02 : f32
    %535 = vector.broadcast %cst_319 : f32 to vector<10x1xf32>
    %536 = arith.divf %534, %535 : vector<10x1xf32>
    %537 = vector.broadcast %536 : vector<10x1xf32> to vector<10x128xf32>
    %538 = arith.subf %532, %537 : vector<10x128xf32>
    %539 = arith.mulf %538, %538 : vector<10x128xf32>
    %cst_320 = arith.constant dense<0.000000e+00> : vector<10xf32>
    %540 = vector.multi_reduction <add>, %539, %cst_320 [1] : vector<10x128xf32> to vector<10xf32>
    %541 = vector.shape_cast %540 : vector<10xf32> to vector<10x1xf32>
    %cst_321 = arith.constant 1.280000e+02 : f32
    %542 = vector.broadcast %cst_321 : f32 to vector<10x1xf32>
    %543 = arith.divf %541, %542 : vector<10x1xf32>
    %544 = vector.broadcast %536 : vector<10x1xf32> to vector<10x128xf32>
    %545 = arith.subf %532, %544 : vector<10x128xf32>
    %cst_322 = arith.constant 9.99999996E-13 : f32
    %546 = vector.broadcast %cst_322 : f32 to vector<10x1xf32>
    %547 = arith.addf %543, %546 : vector<10x1xf32>
    %548 = math.rsqrt %547 : vector<10x1xf32>
    %549 = vector.broadcast %548 : vector<10x1xf32> to vector<10x128xf32>
    %550 = arith.mulf %545, %549 : vector<10x128xf32>
    %551 = vector.broadcast %299 : vector<1x128xf32> to vector<10x128xf32>
    %552 = arith.mulf %550, %551 : vector<10x128xf32>
    %553 = vector.broadcast %301 : vector<1x128xf32> to vector<10x128xf32>
    %554 = arith.addf %552, %553 : vector<10x128xf32>
    %555 = arith.truncf %554 : vector<10x128xf32> to vector<10x128xbf16>
    %c1_323 = arith.constant 1 : index
    %c0_324 = arith.constant 0 : index
    %c0_325 = arith.constant 0 : index
    %556 = vector.load %arg5[%c1_323, %c0_324, %c0_325] : memref<2x128x256xbf16, #tpu.memory_space<vmem>>, vector<1x128x256xbf16>
    %557 = vector.shape_cast %556 : vector<1x128x256xbf16> to vector<128x256xbf16>
    %cst_326 = arith.constant dense<0.000000e+00> : vector<10x256xf32>
    %558 = tpu.matmul %555, %557, %cst_326 {dimension_numbers = #tpu.dot_dimension_numbers<[1], [0], [0], [1], [0, 0, 1, 1], [], []>} : vector<10x128xbf16>, vector<128x256xbf16>, vector<10x256xf32> -> vector<10x256xf32>
    %559 = vector.broadcast %309 : vector<1x256xf32> to vector<10x256xf32>
    %560 = arith.addf %558, %559 : vector<10x256xf32>
    %cst_327 = arith.constant 5.000000e-01 : f32
    %561 = vector.broadcast %cst_327 : f32 to vector<10x256xf32>
    %562 = arith.mulf %561, %560 : vector<10x256xf32>
    %cst_328 = arith.constant 4.471500e-02 : f32
    %563 = vector.broadcast %cst_328 : f32 to vector<10x256xf32>
    %564 = arith.mulf %563, %560 : vector<10x256xf32>
    %565 = arith.mulf %564, %560 : vector<10x256xf32>
    %566 = arith.mulf %565, %560 : vector<10x256xf32>
    %567 = arith.addf %560, %566 : vector<10x256xf32>
    %cst_329 = arith.constant 0.797884583 : f32
    %568 = vector.broadcast %cst_329 : f32 to vector<10x256xf32>
    %569 = arith.mulf %568, %567 : vector<10x256xf32>
    %570 = math.tanh %569 : vector<10x256xf32>
    %cst_330 = arith.constant 1.000000e+00 : f32
    %571 = vector.broadcast %cst_330 : f32 to vector<10x256xf32>
    %572 = arith.addf %571, %570 : vector<10x256xf32>
    %573 = arith.mulf %562, %572 : vector<10x256xf32>
    %574 = arith.truncf %573 : vector<10x256xf32> to vector<10x256xbf16>
    %c1_331 = arith.constant 1 : index
    %c0_332 = arith.constant 0 : index
    %c0_333 = arith.constant 0 : index
    %575 = vector.load %arg6[%c1_331, %c0_332, %c0_333] : memref<2x256x128xbf16, #tpu.memory_space<vmem>>, vector<1x256x128xbf16>
    %576 = vector.shape_cast %575 : vector<1x256x128xbf16> to vector<256x128xbf16>
    %cst_334 = arith.constant dense<0.000000e+00> : vector<10x128xf32>
    %577 = tpu.matmul %574, %576, %cst_334 {dimension_numbers = #tpu.dot_dimension_numbers<[1], [0], [0], [1], [0, 0, 1, 1], [], []>} : vector<10x256xbf16>, vector<256x128xbf16>, vector<10x128xf32> -> vector<10x128xf32>
    %578 = vector.broadcast %305 : vector<1x128xf32> to vector<10x128xf32>
    %579 = arith.addf %577, %578 : vector<10x128xf32>
    %580 = arith.addf %532, %579 : vector<10x128xf32>
    %c0_335 = arith.constant 0 : index
    %c0_336 = arith.constant 0 : index
    %581 = vector.load %arg12[%c0_335, %c0_336] : memref<10x128xf32, #tpu.memory_space<vmem>>, vector<10x128xf32>
    tpu.vector_store %arg12[%c0_335, %c0_336], %580 {strides = array<i32>} : memref<10x128xf32, #tpu.memory_space<vmem>>, vector<10x128xf32>,
    %c0_337 = arith.constant 0 : index
    %c0_338 = arith.constant 0 : index
    %582 = vector.load %arg12[%c0_337, %c0_338] : memref<10x128xf32, #tpu.memory_space<vmem>>, vector<10x128xf32>
    %c0_339 = arith.constant 0 : index
    %c0_340 = arith.constant 0 : index
    %583 = vector.load %arg8[%c0_339, %c0_340] : memref<2x128xf32, #tpu.memory_space<vmem>>, vector<1x128xf32>
    %c1_341 = arith.constant 1 : index
    %c0_342 = arith.constant 0 : index
    %584 = vector.load %arg8[%c1_341, %c0_342] : memref<2x128xf32, #tpu.memory_space<vmem>>, vector<1x128xf32>
    %cst_343 = arith.constant dense<0.000000e+00> : vector<10xf32>
    %585 = vector.multi_reduction <add>, %582, %cst_343 [1] : vector<10x128xf32> to vector<10xf32>
    %586 = vector.shape_cast %585 : vector<10xf32> to vector<10x1xf32>
    %cst_344 = arith.constant 1.280000e+02 : f32
    %587 = vector.broadcast %cst_344 : f32 to vector<10x1xf32>
    %588 = arith.divf %586, %587 : vector<10x1xf32>
    %589 = vector.broadcast %588 : vector<10x1xf32> to vector<10x128xf32>
    %590 = arith.subf %582, %589 : vector<10x128xf32>
    %591 = arith.mulf %590, %590 : vector<10x128xf32>
    %cst_345 = arith.constant dense<0.000000e+00> : vector<10xf32>
    %592 = vector.multi_reduction <add>, %591, %cst_345 [1] : vector<10x128xf32> to vector<10xf32>
    %593 = vector.shape_cast %592 : vector<10xf32> to vector<10x1xf32>
    %cst_346 = arith.constant 1.280000e+02 : f32
    %594 = vector.broadcast %cst_346 : f32 to vector<10x1xf32>
    %595 = arith.divf %593, %594 : vector<10x1xf32>
    %596 = vector.broadcast %588 : vector<10x1xf32> to vector<10x128xf32>
    %597 = arith.subf %582, %596 : vector<10x128xf32>
    %cst_347 = arith.constant 9.99999996E-13 : f32
    %598 = vector.broadcast %cst_347 : f32 to vector<10x1xf32>
    %599 = arith.addf %595, %598 : vector<10x1xf32>
    %600 = math.rsqrt %599 : vector<10x1xf32>
    %601 = vector.broadcast %600 : vector<10x1xf32> to vector<10x128xf32>
    %602 = arith.mulf %597, %601 : vector<10x128xf32>
    %603 = vector.broadcast %583 : vector<1x128xf32> to vector<10x128xf32>
    %604 = arith.mulf %602, %603 : vector<10x128xf32>
    %605 = vector.broadcast %584 : vector<1x128xf32> to vector<10x128xf32>
    %606 = arith.addf %604, %605 : vector<10x128xf32>
    %c0_348 = arith.constant 0 : index
    %c0_349 = arith.constant 0 : index
    %607 = vector.load %arg12[%c0_348, %c0_349] : memref<10x128xf32, #tpu.memory_space<vmem>>, vector<10x128xf32>
    tpu.vector_store %arg12[%c0_348, %c0_349], %606 {strides = array<i32>} : memref<10x128xf32, #tpu.memory_space<vmem>>, vector<10x128xf32>,
    %c0_350 = arith.constant 0 : index
    %c0_351 = arith.constant 0 : index
    %608 = vector.load %arg12[%c0_350, %c0_351] : memref<10x128xf32, #tpu.memory_space<vmem>>, vector<5x128xf32>
    %cst_352 = arith.constant dense<0.000000e+00> : vector<128xf32>
    %609 = vector.multi_reduction <add>, %608, %cst_352 [0] : vector<5x128xf32> to vector<128xf32>
    %610 = vector.shape_cast %609 : vector<128xf32> to vector<1x128xf32>
    %cst_353 = arith.constant 5.000000e+00 : f32
    %611 = vector.broadcast %cst_353 : f32 to vector<1x128xf32>
    %612 = arith.divf %610, %611 : vector<1x128xf32>
    %c0_354 = arith.constant 0 : index
    %c0_355 = arith.constant 0 : index
    %613 = vector.load %arg14[%c0_354, %c0_355] : memref<2x128xf32, #tpu.memory_space<vmem>>, vector<1x128xf32>
    tpu.vector_store %arg14[%c0_354, %c0_355], %612 {strides = array<i32>} : memref<2x128xf32, #tpu.memory_space<vmem>>, vector<1x128xf32>,
    %c5_356 = arith.constant 5 : index
    %c0_357 = arith.constant 0 : index
    %614 = vector.load %arg12[%c5_356, %c0_357] : memref<10x128xf32, #tpu.memory_space<vmem>>, vector<5x128xf32>
    %cst_358 = arith.constant dense<0.000000e+00> : vector<128xf32>
    %615 = vector.multi_reduction <add>, %614, %cst_358 [0] : vector<5x128xf32> to vector<128xf32>
    %616 = vector.shape_cast %615 : vector<128xf32> to vector<1x128xf32>
    %cst_359 = arith.constant 5.000000e+00 : f32
    %617 = vector.broadcast %cst_359 : f32 to vector<1x128xf32>
    %618 = arith.divf %616, %617 : vector<1x128xf32>
    %c1_360 = arith.constant 1 : index
    %c0_361 = arith.constant 0 : index
    %619 = vector.load %arg14[%c1_360, %c0_361] : memref<2x128xf32, #tpu.memory_space<vmem>>, vector<1x128xf32>
    tpu.vector_store %arg14[%c1_360, %c0_361], %618 {strides = array<i32>} : memref<2x128xf32, #tpu.memory_space<vmem>>, vector<1x128xf32>,
    %c0_362 = arith.constant 0 : index
    %c0_363 = arith.constant 0 : index
    %620 = vector.load %arg14[%c0_362, %c0_363] : memref<2x128xf32, #tpu.memory_space<vmem>>, vector<2x128xf32>
    %621 = arith.truncf %620 : vector<2x128xf32> to vector<2x128xbf16>
    %c0_364 = arith.constant 0 : index
    %c0_365 = arith.constant 0 : index
    %622 = vector.load %arg9[%c0_364, %c0_365] : memref<128x256xbf16, #tpu.memory_space<vmem>>, vector<128x256xbf16>
    %cst_366 = arith.constant dense<0.000000e+00> : vector<2x256xf32>
    %623 = tpu.matmul %621, %622, %cst_366 {dimension_numbers = #tpu.dot_dimension_numbers<[1], [0], [0], [1], [0, 0, 1, 1], [], []>} : vector<2x128xbf16>, vector<128x256xbf16>, vector<2x256xf32> -> vector<2x256xf32>
    %c0_367 = arith.constant 0 : index
    %c0_368 = arith.constant 0 : index
    %624 = vector.load %arg10[%c0_367, %c0_368] : memref<1x256xf32, #tpu.memory_space<vmem>>, vector<1x256xf32>
    %625 = vector.broadcast %624 : vector<1x256xf32> to vector<2x256xf32>
    %626 = arith.addf %623, %625 : vector<2x256xf32>
    %c0_369 = arith.constant 0 : index
    %c0_370 = arith.constant 0 : index
    %627 = vector.load %arg11[%c0_369, %c0_370] : memref<2x256xf32, #tpu.memory_space<vmem>>, vector<2x256xf32>
    tpu.vector_store %arg11[%c0_369, %c0_370], %626 {strides = array<i32>} : memref<2x256xf32, #tpu.memory_space<vmem>>, vector<2x256xf32>,
    return
  }
}

</mosaic_0001>

<llo_original>
// kernel: tile.9
$region0: #{tile.9}
  %s0 = inlined_call_operand.vmem [shape: f32[2,5,128], index: 0, kind: input, shape index: {}]
  %s1 = inlined_call_operand.vmem [shape: f32[10,128], index: 1, kind: output, shape index: {}]
  %v2 = vld [vmem:[%s0] sm:$0x1f]
  %3 = vst [vmem:[%s1] sm:$0x1f] %v2
  %s4 = scalar_lea.vmem %s0, 8
  %v5 = vld [vmem:[%s4] sm:$0x1f]
  %s6 = scalar_lea.vmem %s1, 5
  %7 = vst [vmem:[%s6] sm:$0x1f] %v5

// kernel: vit_image_encoder.1
$region0: #{vit_image_encoder.1}
  #allocation0 [shape = 'u32[]', space=smem, size = 0x4, offset = 0x4, fixed_abs, tag = 'smem constant byte address 0x4 - core index']
  #allocation1 [shape = 'u32[144,128]{1,0:T(1,128)}', space=vmem, size = 0x12000, scoped, tag = 'internal scratch']
  #allocation2 [shape = 'f32[10,128]{1,0:T(8,128)}', space=vmem, size = 0x2000, scoped, tag = 'scratch operand']
  #allocation3 [shape = 'f32[10,384]{1,0:T(8,128)}', space=vmem, size = 0x6000, scoped, tag = 'scratch operand']
  #allocation4 [shape = 'f32[2,128]{1,0:T(2,128)}', space=vmem, size = 0x400, scoped, tag = 'scratch operand']
  %s0 = inlined_call_operand.vmem [shape: bf16[10,1024], index: 0, kind: input, shape index: {}]
  %s1 = inlined_call_operand.vmem [shape: f32[10,128], index: 1, kind: input, shape index: {}]
  %s2 = inlined_call_operand.vmem [shape: bf16[1024,128], index: 2, kind: input, shape index: {}]
  %s3 = inlined_call_operand.vmem [shape: bf16[2,128,384], index: 3, kind: input, shape index: {}]
  %s4 = inlined_call_operand.vmem [shape: bf16[2,128,128], index: 4, kind: input, shape index: {}]
  %s5 = inlined_call_operand.vmem [shape: bf16[2,128,256], index: 5, kind: input, shape index: {}]
  %s6 = inlined_call_operand.vmem [shape: bf16[2,256,128], index: 6, kind: input, shape index: {}]
  %s7 = inlined_call_operand.vmem [shape: f32[2,8,384], index: 7, kind: input, shape index: {}]
  %s8 = inlined_call_operand.vmem [shape: f32[2,128], index: 8, kind: input, shape index: {}]
  %s9 = inlined_call_operand.vmem [shape: bf16[128,256], index: 9, kind: input, shape index: {}]
  %s10 = inlined_call_operand.vmem [shape: f32[1,256], index: 10, kind: input, shape index: {}]
  %s11 = inlined_call_operand.vmem [shape: f32[2,256], index: 11, kind: output, shape index: {}]
  %s12 = sld [smem:[#allocation0]]
  $region54: #{vit_image_encoder.1} parent=0
    _
  %s14 = ssub.s32 1, %s12
  %s15 = scalar_select 0, %s14, %s12
  // Predicated region
  $region2: #{vit_image_encoder.1} parent=0 // pred_check
    _
  $region3: #{vit_image_encoder.1} parent=0 // pred_check_branch
    %17 = sbr.rel (0) target = $region5
  $region4: #{vit_image_encoder.1} parent=0 // pred_region
    _
  $region5: #{vit_image_encoder.1} parent=0 // pred_fallthru
    _
  // Predicated region
  $region6: #{vit_image_encoder.1} parent=0 // pred_check
    _
  $region7: #{vit_image_encoder.1} parent=0 // pred_check_branch
    %19 = sbr.rel (0) target = $region9
  $region8: #{vit_image_encoder.1} parent=0 // pred_region
    _
  $region9: #{vit_image_encoder.1} parent=0 // pred_fallthru
    _
  // Predicated region
  $region10: #{vit_image_encoder.1} parent=0 // pred_check
    _
  $region11: #{vit_image_encoder.1} parent=0 // pred_check_branch
    %21 = sbr.rel (0) target = $region13
  $region12: #{vit_image_encoder.1} parent=0 // pred_region
    _
  $region13: #{vit_image_encoder.1} parent=0 // pred_fallthru
    _
  // Predicated region
  $region14: #{vit_image_encoder.1} parent=0 // pred_check
    _
  $region15: #{vit_image_encoder.1} parent=0 // pred_check_branch
    %23 = sbr.rel (0) target = $region17
  $region16: #{vit_image_encoder.1} parent=0 // pred_region
    _
  $region17: #{vit_image_encoder.1} parent=0 // pred_fallthru
    _
  // Predicated region
  $region18: #{vit_image_encoder.1} parent=0 // pred_check
    _
  $region19: #{vit_image_encoder.1} parent=0 // pred_check_branch
    %25 = sbr.rel (0) target = $region21
  $region20: #{vit_image_encoder.1} parent=0 // pred_region
    _
  $region21: #{vit_image_encoder.1} parent=0 // pred_fallthru
    _
  // Predicated region
  $region22: #{vit_image_encoder.1} parent=0 // pred_check
    _
  $region23: #{vit_image_encoder.1} parent=0 // pred_check_branch
    %27 = sbr.rel (0) target = $region25
  $region24: #{vit_image_encoder.1} parent=0 // pred_region
    _
  $region25: #{vit_image_encoder.1} parent=0 // pred_fallthru
    _
  // Predicated region
  $region26: #{vit_image_encoder.1} parent=0 // pred_check
    _
  $region27: #{vit_image_encoder.1} parent=0 // pred_check_branch
    %29 = sbr.rel (0) target = $region29
  $region28: #{vit_image_encoder.1} parent=0 // pred_region
    _
  $region29: #{vit_image_encoder.1} parent=0 // pred_fallthru
    _
  // Predicated region
  $region30: #{vit_image_encoder.1} parent=0 // pred_check
    _
  $region31: #{vit_image_encoder.1} parent=0 // pred_check_branch
    %31 = sbr.rel (0) target = $region33
  $region32: #{vit_image_encoder.1} parent=0 // pred_region
    _
  $region33: #{vit_image_encoder.1} parent=0 // pred_fallthru
    _
  // Predicated region
  $region34: #{vit_image_encoder.1} parent=0 // pred_check
    _
  $region35: #{vit_image_encoder.1} parent=0 // pred_check_branch
    %33 = sbr.rel (0) target = $region37
  $region36: #{vit_image_encoder.1} parent=0 // pred_region
    _
  $region37: #{vit_image_encoder.1} parent=0 // pred_fallthru
    _
  // Predicated region
  $region38: #{vit_image_encoder.1} parent=0 // pred_check
    _
  $region39: #{vit_image_encoder.1} parent=0 // pred_check_branch
    %35 = sbr.rel (0) target = $region41
  $region40: #{vit_image_encoder.1} parent=0 // pred_region
    _
  $region41: #{vit_image_encoder.1} parent=0 // pred_fallthru
    _
  // Predicated region
  $region42: #{vit_image_encoder.1} parent=0 // pred_check
    _
  $region43: #{vit_image_encoder.1} parent=0 // pred_check_branch
    %37 = sbr.rel (0) target = $region45
  $region44: #{vit_image_encoder.1} parent=0 // pred_region
    _
  $region45: #{vit_image_encoder.1} parent=0 // pred_fallthru
    _
  %v39 = vld [vmem:[%s0] sm:$0xff]
  %v40 = vld [vmem:[%s0 + $0x8] sm:$0xff]
  %v41 = vld [vmem:[%s0 + $0x10] sm:$0xff]
  %v42 = vld [vmem:[%s0 + $0x18] sm:$0xff]
  %v43 = vld [vmem:[%s0 + $0x20] sm:$0x11]
  %v44 = vld [vmem:[%s0 + $0x28] sm:$0x11]
  %v45 = vld [vmem:[%s0 + $0x30] sm:$0x11]
  %v46 = vld [vmem:[%s0 + $0x38] sm:$0x11]
  %v47 = vld [vmem:[%s2] sm:$0xf]
  %v48 = vld [vmem:[%s2 + $0x4] sm:$0xf]
  %v49 = vld [vmem:[%s2 + $0x8] sm:$0xf]
  %v50 = vld [vmem:[%s2 + $0xc] sm:$0xf]
  %v51 = vld [vmem:[%s2 + $0x10] sm:$0xf]
  %v52 = vld [vmem:[%s2 + $0x14] sm:$0xf]
  %v53 = vld [vmem:[%s2 + $0x18] sm:$0xf]
  %v54 = vld [vmem:[%s2 + $0x1c] sm:$0xf]
  %v55 = vld [vmem:[%s2 + $0x20] sm:$0xf]
  %v56 = vld [vmem:[%s2 + $0x24] sm:$0xf]
  %v57 = vld [vmem:[%s2 + $0x28] sm:$0xf]
  %v58 = vld [vmem:[%s2 + $0x2c] sm:$0xf]
  %v59 = vld [vmem:[%s2 + $0x30] sm:$0xf]
  %v60 = vld [vmem:[%s2 + $0x34] sm:$0xf]
  %v61 = vld [vmem:[%s2 + $0x38] sm:$0xf]
  %v62 = vld [vmem:[%s2 + $0x3c] sm:$0xf]
  %v63 = vld [vmem:[%s2 + $0x40] sm:$0xf]
  %v64 = vld [vmem:[%s2 + $0x44] sm:$0xf]
  %v65 = vld [vmem:[%s2 + $0x48] sm:$0xf]
  %v66 = vld [vmem:[%s2 + $0x4c] sm:$0xf]
  %v67 = vld [vmem:[%s2 + $0x50] sm:$0xf]
  %v68 = vld [vmem:[%s2 + $0x54] sm:$0xf]
  %v69 = vld [vmem:[%s2 + $0x58] sm:$0xf]
  %v70 = vld [vmem:[%s2 + $0x5c] sm:$0xf]
  %v71 = vld [vmem:[%s2 + $0x60] sm:$0xf]
  %v72 = vld [vmem:[%s2 + $0x64] sm:$0xf]
  %v73 = vld [vmem:[%s2 + $0x68] sm:$0xf]
  %v74 = vld [vmem:[%s2 + $0x6c] sm:$0xf]
  %v75 = vld [vmem:[%s2 + $0x70] sm:$0xf]
  %v76 = vld [vmem:[%s2 + $0x74] sm:$0xf]
  %v77 = vld [vmem:[%s2 + $0x78] sm:$0xf]
  %v78 = vld [vmem:[%s2 + $0x7c] sm:$0xf]
  %v79 = vld [vmem:[%s2 + $0x80] sm:$0xf]
  %v80 = vld [vmem:[%s2 + $0x84] sm:$0xf]
  %v81 = vld [vmem:[%s2 + $0x88] sm:$0xf]
  %v82 = vld [vmem:[%s2 + $0x8c] sm:$0xf]
  %v83 = vld [vmem:[%s2 + $0x90] sm:$0xf]
  %v84 = vld [vmem:[%s2 + $0x94] sm:$0xf]
  %v85 = vld [vmem:[%s2 + $0x98] sm:$0xf]
  %v86 = vld [vmem:[%s2 + $0x9c] sm:$0xf]
  %v87 = vld [vmem:[%s2 + $0xa0] sm:$0xf]
  %v88 = vld [vmem:[%s2 + $0xa4] sm:$0xf]
  %v89 = vld [vmem:[%s2 + $0xa8] sm:$0xf]
  %v90 = vld [vmem:[%s2 + $0xac] sm:$0xf]
  %v91 = vld [vmem:[%s2 + $0xb0] sm:$0xf]
  %v92 = vld [vmem:[%s2 + $0xb4] sm:$0xf]
  %v93 = vld [vmem:[%s2 + $0xb8] sm:$0xf]
  %v94 = vld [vmem:[%s2 + $0xbc] sm:$0xf]
  %v95 = vld [vmem:[%s2 + $0xc0] sm:$0xf]
  %v96 = vld [vmem:[%s2 + $0xc4] sm:$0xf]
  %v97 = vld [vmem:[%s2 + $0xc8] sm:$0xf]
  %v98 = vld [vmem:[%s2 + $0xcc] sm:$0xf]
  %v99 = vld [vmem:[%s2 + $0xd0] sm:$0xf]
  %v100 = vld [vmem:[%s2 + $0xd4] sm:$0xf]
  %v101 = vld [vmem:[%s2 + $0xd8] sm:$0xf]
  %v102 = vld [vmem:[%s2 + $0xdc] sm:$0xf]
  %v103 = vld [vmem:[%s2 + $0xe0] sm:$0xf]
  %v104 = vld [vmem:[%s2 + $0xe4] sm:$0xf]
  %v105 = vld [vmem:[%s2 + $0xe8] sm:$0xf]
  %v106 = vld [vmem:[%s2 + $0xec] sm:$0xf]
  %v107 = vld [vmem:[%s2 + $0xf0] sm:$0xf]
  %v108 = vld [vmem:[%s2 + $0xf4] sm:$0xf]
  %v109 = vld [vmem:[%s2 + $0xf8] sm:$0xf]
  %v110 = vld [vmem:[%s2 + $0xfc] sm:$0xf]
  %v111 = vld [vmem:[%s2 + $0x100] sm:$0xf]
  %v112 = vld [vmem:[%s2 + $0x104] sm:$0xf]
  %v113 = vld [vmem:[%s2 + $0x108] sm:$0xf]
  %v114 = vld [vmem:[%s2 + $0x10c] sm:$0xf]
  %v115 = vld [vmem:[%s2 + $0x110] sm:$0xf]
  %v116 = vld [vmem:[%s2 + $0x114] sm:$0xf]
  %v117 = vld [vmem:[%s2 + $0x118] sm:$0xf]
  %v118 = vld [vmem:[%s2 + $0x11c] sm:$0xf]
  %v119 = vld [vmem:[%s2 + $0x120] sm:$0xf]
  %v120 = vld [vmem:[%s2 + $0x124] sm:$0xf]
  %v121 = vld [vmem:[%s2 + $0x128] sm:$0xf]
  %v122 = vld [vmem:[%s2 + $0x12c] sm:$0xf]
  %v123 = vld [vmem:[%s2 + $0x130] sm:$0xf]
  %v124 = vld [vmem:[%s2 + $0x134] sm:$0xf]
  %v125 = vld [vmem:[%s2 + $0x138] sm:$0xf]
  %v126 = vld [vmem:[%s2 + $0x13c] sm:$0xf]
  %v127 = vld [vmem:[%s2 + $0x140] sm:$0xf]
  %v128 = vld [vmem:[%s2 + $0x144] sm:$0xf]
  %v129 = vld [vmem:[%s2 + $0x148] sm:$0xf]
  %v130 = vld [vmem:[%s2 + $0x14c] sm:$0xf]
  %v131 = vld [vmem:[%s2 + $0x150] sm:$0xf]
  %v132 = vld [vmem:[%s2 + $0x154] sm:$0xf]
  %v133 = vld [vmem:[%s2 + $0x158] sm:$0xf]
  %v134 = vld [vmem:[%s2 + $0x15c] sm:$0xf]
  %v135 = vld [vmem:[%s2 + $0x160] sm:$0xf]
  %v136 = vld [vmem:[%s2 + $0x164] sm:$0xf]
  %v137 = vld [vmem:[%s2 + $0x168] sm:$0xf]
  %v138 = vld [vmem:[%s2 + $0x16c] sm:$0xf]
  %v139 = vld [vmem:[%s2 + $0x170] sm:$0xf]
  %v140 = vld [vmem:[%s2 + $0x174] sm:$0xf]
  %v141 = vld [vmem:[%s2 + $0x178] sm:$0xf]
  %v142 = vld [vmem:[%s2 + $0x17c] sm:$0xf]
  %v143 = vld [vmem:[%s2 + $0x180] sm:$0xf]
  %v144 = vld [vmem:[%s2 + $0x184] sm:$0xf]
  %v145 = vld [vmem:[%s2 + $0x188] sm:$0xf]
  %v146 = vld [vmem:[%s2 + $0x18c] sm:$0xf]
  %v147 = vld [vmem:[%s2 + $0x190] sm:$0xf]
  %v148 = vld [vmem:[%s2 + $0x194] sm:$0xf]
  %v149 = vld [vmem:[%s2 + $0x198] sm:$0xf]
  %v150 = vld [vmem:[%s2 + $0x19c] sm:$0xf]
  %v151 = vld [vmem:[%s2 + $0x1a0] sm:$0xf]
  %v152 = vld [vmem:[%s2 + $0x1a4] sm:$0xf]
  %v153 = vld [vmem:[%s2 + $0x1a8] sm:$0xf]
  %v154 = vld [vmem:[%s2 + $0x1ac] sm:$0xf]
  %v155 = vld [vmem:[%s2 + $0x1b0] sm:$0xf]
  %v156 = vld [vmem:[%s2 + $0x1b4] sm:$0xf]
  %v157 = vld [vmem:[%s2 + $0x1b8] sm:$0xf]
  %v158 = vld [vmem:[%s2 + $0x1bc] sm:$0xf]
  %v159 = vld [vmem:[%s2 + $0x1c0] sm:$0xf]
  %v160 = vld [vmem:[%s2 + $0x1c4] sm:$0xf]
  %v161 = vld [vmem:[%s2 + $0x1c8] sm:$0xf]
  %v162 = vld [vmem:[%s2 + $0x1cc] sm:$0xf]
  %v163 = vld [vmem:[%s2 + $0x1d0] sm:$0xf]
  %v164 = vld [vmem:[%s2 + $0x1d4] sm:$0xf]
  %v165 = vld [vmem:[%s2 + $0x1d8] sm:$0xf]
  %v166 = vld [vmem:[%s2 + $0x1dc] sm:$0xf]
  %v167 = vld [vmem:[%s2 + $0x1e0] sm:$0xf]
  %v168 = vld [vmem:[%s2 + $0x1e4] sm:$0xf]
  %v169 = vld [vmem:[%s2 + $0x1e8] sm:$0xf]
  %v170 = vld [vmem:[%s2 + $0x1ec] sm:$0xf]
  %v171 = vld [vmem:[%s2 + $0x1f0] sm:$0xf]
  %v172 = vld [vmem:[%s2 + $0x1f4] sm:$0xf]
  %v173 = vld [vmem:[%s2 + $0x1f8] sm:$0xf]
  %v174 = vld [vmem:[%s2 + $0x1fc] sm:$0xf]
  %v175 = vld [vmem:[%s1] sm:$0xff]
  %v176 = vld [vmem:[%s1 + $0x8] sm:$0x3]
  %v185 = vunpack.c.l.b16 %v39
  %v186 = vunpack.c.h.b16 %v39
  %v187 = vunpack.c.l.b16 %v40
  %v188 = vunpack.c.h.b16 %v40
  %v189 = vunpack.c.l.b16 %v41
  %v190 = vunpack.c.h.b16 %v41
  %v191 = vunpack.c.l.b16 %v42
  %v192 = vunpack.c.h.b16 %v42
  %v193 = vunpack.c.l.b16 %v43
  %v194 = vunpack.c.h.b16 %v43
  %v195 = vunpack.c.l.b16 %v44
  %v196 = vunpack.c.h.b16 %v44
  %v197 = vunpack.c.l.b16 %v45
  %v198 = vunpack.c.h.b16 %v45
  %v199 = vunpack.c.l.b16 %v46
  %v200 = vunpack.c.h.b16 %v46
  %v201 = vpack.c.b16 %v193, %v185
  %v202 = vpack.c.b16 %v194, %v186
  %v203 = vpack.c.b16 %v195, %v187
  %v204 = vpack.c.b16 %v196, %v188
  %v205 = vpack.c.b16 %v197, %v189
  %v206 = vpack.c.b16 %v198, %v190
  %v207 = vpack.c.b16 %v199, %v191
  %v208 = vpack.c.b16 %v200, %v192
  %v345 = vunpack.c.l.b16 %v47
  %v346 = vunpack.c.l.b16 %v48
  %v347 = vunpack.c.l.b16 %v49
  %v348 = vunpack.c.l.b16 %v50
  %v349 = vunpack.c.l.b16 %v51
  %v350 = vunpack.c.l.b16 %v52
  %v351 = vunpack.c.l.b16 %v53
  %v352 = vunpack.c.l.b16 %v54
  %v353 = vunpack.c.l.b16 %v55
  %v354 = vunpack.c.l.b16 %v56
  %v355 = vunpack.c.l.b16 %v57
  %v356 = vunpack.c.l.b16 %v58
  %v357 = vunpack.c.l.b16 %v59
  %v358 = vunpack.c.l.b16 %v60
  %v359 = vunpack.c.l.b16 %v61
  %v360 = vunpack.c.l.b16 %v62
  %v361 = vunpack.c.l.b16 %v63
  %v362 = vunpack.c.l.b16 %v64
  %v363 = vunpack.c.l.b16 %v65
  %v364 = vunpack.c.l.b16 %v66
  %v365 = vunpack.c.l.b16 %v67
  %v366 = vunpack.c.l.b16 %v68
  %v367 = vunpack.c.l.b16 %v69
  %v368 = vunpack.c.l.b16 %v70
  %v369 = vunpack.c.l.b16 %v71
  %v370 = vunpack.c.l.b16 %v72
  %v371 = vunpack.c.l.b16 %v73
  %v372 = vunpack.c.l.b16 %v74
  %v373 = vunpack.c.l.b16 %v75
  %v374 = vunpack.c.l.b16 %v76
  %v375 = vunpack.c.l.b16 %v77
  %v376 = vunpack.c.l.b16 %v78
  %v377 = vunpack.c.l.b16 %v79
  %v378 = vunpack.c.l.b16 %v80
  %v379 = vunpack.c.l.b16 %v81
  %v380 = vunpack.c.l.b16 %v82
  %v381 = vunpack.c.l.b16 %v83
  %v382 = vunpack.c.l.b16 %v84
  %v383 = vunpack.c.l.b16 %v85
  %v384 = vunpack.c.l.b16 %v86
  %v385 = vunpack.c.l.b16 %v87
  %v386 = vunpack.c.l.b16 %v88
  %v387 = vunpack.c.l.b16 %v89
  %v388 = vunpack.c.l.b16 %v90
  %v389 = vunpack.c.l.b16 %v91
  %v390 = vunpack.c.l.b16 %v92
  %v391 = vunpack.c.l.b16 %v93
  %v392 = vunpack.c.l.b16 %v94
  %v393 = vunpack.c.l.b16 %v95
  %v394 = vunpack.c.l.b16 %v96
  %v395 = vunpack.c.l.b16 %v97
  %v396 = vunpack.c.l.b16 %v98
  %v397 = vunpack.c.l.b16 %v99
  %v398 = vunpack.c.l.b16 %v100
  %v399 = vunpack.c.l.b16 %v101
  %v400 = vunpack.c.l.b16 %v102
  %v401 = vunpack.c.l.b16 %v103
  %v402 = vunpack.c.l.b16 %v104
  %v403 = vunpack.c.l.b16 %v105
  %v404 = vunpack.c.l.b16 %v106
  %v405 = vunpack.c.l.b16 %v107
  %v406 = vunpack.c.l.b16 %v108
  %v407 = vunpack.c.l.b16 %v109
  %v408 = vunpack.c.l.b16 %v110
  %v409 = vunpack.c.l.b16 %v111
  %v410 = vunpack.c.l.b16 %v112
  %v411 = vunpack.c.l.b16 %v113
  %v412 = vunpack.c.l.b16 %v114
  %v413 = vunpack.c.l.b16 %v115
  %v414 = vunpack.c.l.b16 %v116
  %v415 = vunpack.c.l.b16 %v117
  %v416 = vunpack.c.l.b16 %v118
  %v417 = vunpack.c.l.b16 %v119
  %v418 = vunpack.c.l.b16 %v120
  %v419 = vunpack.c.l.b16 %v121
  %v420 = vunpack.c.l.b16 %v122
  %v421 = vunpack.c.l.b16 %v123
  %v422 = vunpack.c.l.b16 %v124
  %v423 = vunpack.c.l.b16 %v125
  %v424 = vunpack.c.l.b16 %v126
  %v425 = vunpack.c.l.b16 %v127
  %v426 = vunpack.c.l.b16 %v128
  %v427 = vunpack.c.l.b16 %v129
  %v428 = vunpack.c.l.b16 %v130
  %v429 = vunpack.c.l.b16 %v131
  %v430 = vunpack.c.l.b16 %v132
  %v431 = vunpack.c.l.b16 %v133
  %v432 = vunpack.c.l.b16 %v134
  %v433 = vunpack.c.l.b16 %v135
  %v434 = vunpack.c.l.b16 %v136
  %v435 = vunpack.c.l.b16 %v137
  %v436 = vunpack.c.l.b16 %v138
  %v437 = vunpack.c.l.b16 %v139
  %v438 = vunpack.c.l.b16 %v140
  %v439 = vunpack.c.l.b16 %v141
  %v440 = vunpack.c.l.b16 %v142
  %v441 = vunpack.c.l.b16 %v143
  %v442 = vunpack.c.l.b16 %v144
  %v443 = vunpack.c.l.b16 %v145
  %v444 = vunpack.c.l.b16 %v146
  %v445 = vunpack.c.l.b16 %v147
  %v446 = vunpack.c.l.b16 %v148
  %v447 = vunpack.c.l.b16 %v149
  %v448 = vunpack.c.l.b16 %v150
  %v449 = vunpack.c.l.b16 %v151
  %v450 = vunpack.c.l.b16 %v152
  %v451 = vunpack.c.l.b16 %v153
  %v452 = vunpack.c.l.b16 %v154
  %v453 = vunpack.c.l.b16 %v155
  %v454 = vunpack.c.l.b16 %v156
  %v455 = vunpack.c.l.b16 %v157
  %v456 = vunpack.c.l.b16 %v158
  %v457 = vunpack.c.l.b16 %v159
  %v458 = vunpack.c.l.b16 %v160
  %v459 = vunpack.c.l.b16 %v161
  %v460 = vunpack.c.l.b16 %v162
  %v461 = vunpack.c.l.b16 %v163
  %v462 = vunpack.c.l.b16 %v164
  %v463 = vunpack.c.l.b16 %v165
  %v464 = vunpack.c.l.b16 %v166
  %v465 = vunpack.c.l.b16 %v167
  %v466 = vunpack.c.l.b16 %v168
  %v467 = vunpack.c.l.b16 %v169
  %v468 = vunpack.c.l.b16 %v170
  %v469 = vunpack.c.l.b16 %v171
  %v470 = vunpack.c.l.b16 %v172
  %v471 = vunpack.c.l.b16 %v173
  %v472 = vunpack.c.l.b16 %v174
  %v473 = vpack.c.b16 %v346, %v345
  %v474 = vpack.c.b16 %v348, %v347
  %v475 = vpack.c.b16 %v350, %v349
  %v476 = vpack.c.b16 %v352, %v351
  %v477 = vpack.c.b16 %v354, %v353
  %v478 = vpack.c.b16 %v356, %v355
  %v479 = vpack.c.b16 %v358, %v357
  %v480 = vpack.c.b16 %v360, %v359
  %v481 = vpack.c.b16 %v362, %v361
  %v482 = vpack.c.b16 %v364, %v363
  %v483 = vpack.c.b16 %v366, %v365
  %v484 = vpack.c.b16 %v368, %v367
  %v485 = vpack.c.b16 %v370, %v369
  %v486 = vpack.c.b16 %v372, %v371
  %v487 = vpack.c.b16 %v374, %v373
  %v488 = vpack.c.b16 %v376, %v375
  %v489 = vpack.c.b16 %v378, %v377
  %v490 = vpack.c.b16 %v380, %v379
  %v491 = vpack.c.b16 %v382, %v381
  %v492 = vpack.c.b16 %v384, %v383
  %v493 = vpack.c.b16 %v386, %v385
  %v494 = vpack.c.b16 %v388, %v387
  %v495 = vpack.c.b16 %v390, %v389
  %v496 = vpack.c.b16 %v392, %v391
  %v497 = vpack.c.b16 %v394, %v393
  %v498 = vpack.c.b16 %v396, %v395
  %v499 = vpack.c.b16 %v398, %v397
  %v500 = vpack.c.b16 %v400, %v399
  %v501 = vpack.c.b16 %v402, %v401
  %v502 = vpack.c.b16 %v404, %v403
  %v503 = vpack.c.b16 %v406, %v405
  %v504 = vpack.c.b16 %v408, %v407
  %v505 = vpack.c.b16 %v410, %v409
  %v506 = vpack.c.b16 %v412, %v411
  %v507 = vpack.c.b16 %v414, %v413
  %v508 = vpack.c.b16 %v416, %v415
  %v509 = vpack.c.b16 %v418, %v417
  %v510 = vpack.c.b16 %v420, %v419
  %v511 = vpack.c.b16 %v422, %v421
  %v512 = vpack.c.b16 %v424, %v423
  %v513 = vpack.c.b16 %v426, %v425
  %v514 = vpack.c.b16 %v428, %v427
  %v515 = vpack.c.b16 %v430, %v429
  %v516 = vpack.c.b16 %v432, %v431
  %v517 = vpack.c.b16 %v434, %v433
  %v518 = vpack.c.b16 %v436, %v435
  %v519 = vpack.c.b16 %v438, %v437
  %v520 = vpack.c.b16 %v440, %v439
  %v521 = vpack.c.b16 %v442, %v441
  %v522 = vpack.c.b16 %v444, %v443
  %v523 = vpack.c.b16 %v446, %v445
  %v524 = vpack.c.b16 %v448, %v447
  %v525 = vpack.c.b16 %v450, %v449
  %v526 = vpack.c.b16 %v452, %v451
  %v527 = vpack.c.b16 %v454, %v453
  %v528 = vpack.c.b16 %v456, %v455
  %v529 = vpack.c.b16 %v458, %v457
  %v530 = vpack.c.b16 %v460, %v459
  %v531 = vpack.c.b16 %v462, %v461
  %v532 = vpack.c.b16 %v464, %v463
  %v533 = vpack.c.b16 %v466, %v465
  %v534 = vpack.c.b16 %v468, %v467
  %v535 = vpack.c.b16 %v470, %v469
  %v536 = vpack.c.b16 %v472, %v471
  %601 = vmatprep.subr.bf16.mxu0 0
  %602 = vmatpush1.bf16.msra.mxu0 %v473
  %603 = vmatprep.subr.bf16.mxu0 0
  %604 = vmatpush1.bf16.msra.mxu0 %v474
  %605 = vmatprep.subr.bf16.mxu0 0
  %606 = vmatpush1.bf16.msra.mxu0 %v475
  %607 = vmatprep.subr.bf16.mxu0 0
  %608 = vmatpush1.bf16.msra.mxu0 %v476
  %609 = vmatprep.subr.bf16.mxu0 0
  %610 = vmatpush1.bf16.msra.mxu0 %v477
  %611 = vmatprep.subr.bf16.mxu0 0
  %612 = vmatpush1.bf16.msra.mxu0 %v478
  %613 = vmatprep.subr.bf16.mxu0 0
  %614 = vmatpush1.bf16.msra.mxu0 %v479
  %615 = vmatprep.subr.bf16.mxu0 0
  %616 = vmatpush1.bf16.msra.mxu0 %v480
  %617 = vmatprep.subr.bf16.mxu0 0
  %618 = vmatpush1.bf16.msra.mxu0 %v481
  %619 = vmatprep.subr.bf16.mxu0 0
  %620 = vmatpush1.bf16.msra.mxu0 %v482
  %621 = vmatprep.subr.bf16.mxu0 0
  %622 = vmatpush1.bf16.msra.mxu0 %v483
  %623 = vmatprep.subr.bf16.mxu0 0
  %624 = vmatpush1.bf16.msra.mxu0 %v484
  %625 = vmatprep.subr.bf16.mxu0 0
  %626 = vmatpush1.bf16.msra.mxu0 %v485
  %627 = vmatprep.subr.bf16.mxu0 0
  %628 = vmatpush1.bf16.msra.mxu0 %v486
  %629 = vmatprep.subr.bf16.mxu0 0
  %630 = vmatpush1.bf16.msra.mxu0 %v487
  %631 = vmatprep.subr.bf16.mxu0 0
  %632 = vmatpush1.bf16.msra.mxu0 %v488
  %633 = vmatprep.mubr.bf16.mxu0 %v202
  %634 = vmatmul.mubr.bf16.gmra.mrb[0].mxu0 %v201
  %v635 = vpop.f32.mrb[0].mxu0
  %v636 = vadd.f32 %v175, %v635
  %v637 = vpop.f32.mrb[0].mxu0
  %v638 = vpop.f32.mrb[0].mxu0
  %v639 = vadd.f32 %v176, %v638
  %v640 = vpop.f32.mrb[0].mxu0
  %641 = vdwg.mxu0
  %642 = vmatprep.subr.bf16.mxu0 0
  %643 = vmatpush1.bf16.msra.mxu0 %v489
  %644 = vmatprep.subr.bf16.mxu0 0
  %645 = vmatpush1.bf16.msra.mxu0 %v490
  %646 = vmatprep.subr.bf16.mxu0 0
  %647 = vmatpush1.bf16.msra.mxu0 %v491
  %648 = vmatprep.subr.bf16.mxu0 0
  %649 = vmatpush1.bf16.msra.mxu0 %v492
  %650 = vmatprep.subr.bf16.mxu0 0
  %651 = vmatpush1.bf16.msra.mxu0 %v493
  %652 = vmatprep.subr.bf16.mxu0 0
  %653 = vmatpush1.bf16.msra.mxu0 %v494
  %654 = vmatprep.subr.bf16.mxu0 0
  %655 = vmatpush1.bf16.msra.mxu0 %v495
  %656 = vmatprep.subr.bf16.mxu0 0
  %657 = vmatpush1.bf16.msra.mxu0 %v496
  %658 = vmatprep.subr.bf16.mxu0 0
  %659 = vmatpush1.bf16.msra.mxu0 %v497
  %660 = vmatprep.subr.bf16.mxu0 0
  %661 = vmatpush1.bf16.msra.mxu0 %v498
  %662 = vmatprep.subr.bf16.mxu0 0
  %663 = vmatpush1.bf16.msra.mxu0 %v499
  %664 = vmatprep.subr.bf16.mxu0 0
  %665 = vmatpush1.bf16.msra.mxu0 %v500
  %666 = vmatprep.subr.bf16.mxu0 0
  %667 = vmatpush1.bf16.msra.mxu0 %v501
  %668 = vmatprep.subr.bf16.mxu0 0
  %669 = vmatpush1.bf16.msra.mxu0 %v502
  %670 = vmatprep.subr.bf16.mxu0 0
  %671 = vmatpush1.bf16.msra.mxu0 %v503
  %672 = vmatprep.subr.bf16.mxu0 0
  %673 = vmatpush1.bf16.msra.mxu0 %v504
  %674 = vmatprep.mubr.bf16.mxu0 %v204
  %675 = vmatmul.mubr.bf16.gmra.mrb[0].mxu0 %v203
  %v676 = vpop.f32.mrb[0].mxu0
  %v677 = vadd.f32 %v636, %v676
  %v678 = vpop.f32.mrb[0].mxu0
  %v679 = vpop.f32.mrb[0].mxu0
  %v680 = vadd.f32 %v639, %v679
  %v681 = vpop.f32.mrb[0].mxu0
  %682 = vdwg.mxu0
  %683 = vmatprep.subr.bf16.mxu0 0
  %684 = vmatpush1.bf16.msra.mxu0 %v505
  %685 = vmatprep.subr.bf16.mxu0 0
  %686 = vmatpush1.bf16.msra.mxu0 %v506
  %687 = vmatprep.subr.bf16.mxu0 0
  %688 = vmatpush1.bf16.msra.mxu0 %v507
  %689 = vmatprep.subr.bf16.mxu0 0
  %690 = vmatpush1.bf16.msra.mxu0 %v508
  %691 = vmatprep.subr.bf16.mxu0 0
  %692 = vmatpush1.bf16.msra.mxu0 %v509
  %693 = vmatprep.subr.bf16.mxu0 0
  %694 = vmatpush1.bf16.msra.mxu0 %v510
  %695 = vmatprep.subr.bf16.mxu0 0
  %696 = vmatpush1.bf16.msra.mxu0 %v511
  %697 = vmatprep.subr.bf16.mxu0 0
  %698 = vmatpush1.bf16.msra.mxu0 %v512
  %699 = vmatprep.subr.bf16.mxu0 0
  %700 = vmatpush1.bf16.msra.mxu0 %v513
  %701 = vmatprep.subr.bf16.mxu0 0
  %702 = vmatpush1.bf16.msra.mxu0 %v514
  %703 = vmatprep.subr.bf16.mxu0 0
  %704 = vmatpush1.bf16.msra.mxu0 %v515
  %705 = vmatprep.subr.bf16.mxu0 0
  %706 = vmatpush1.bf16.msra.mxu0 %v516
  %707 = vmatprep.subr.bf16.mxu0 0
  %708 = vmatpush1.bf16.msra.mxu0 %v517
  %709 = vmatprep.subr.bf16.mxu0 0
  %710 = vmatpush1.bf16.msra.mxu0 %v518
  %711 = vmatprep.subr.bf16.mxu0 0
  %712 = vmatpush1.bf16.msra.mxu0 %v519
  %713 = vmatprep.subr.bf16.mxu0 0
  %714 = vmatpush1.bf16.msra.mxu0 %v520
  %715 = vmatprep.mubr.bf16.mxu0 %v206
  %716 = vmatmul.mubr.bf16.gmra.mrb[0].mxu0 %v205
  %v717 = vpop.f32.mrb[0].mxu0
  %v718 = vadd.f32 %v677, %v717
  %v719 = vpop.f32.mrb[0].mxu0
  %v720 = vpop.f32.mrb[0].mxu0
  %v721 = vadd.f32 %v680, %v720
  %v722 = vpop.f32.mrb[0].mxu0
  %723 = vdwg.mxu0
  %724 = vmatprep.subr.bf16.mxu0 0
  %725 = vmatpush1.bf16.msra.mxu0 %v521
  %726 = vmatprep.subr.bf16.mxu0 0
  %727 = vmatpush1.bf16.msra.mxu0 %v522
  %728 = vmatprep.subr.bf16.mxu0 0
  %729 = vmatpush1.bf16.msra.mxu0 %v523
  %730 = vmatprep.subr.bf16.mxu0 0
  %731 = vmatpush1.bf16.msra.mxu0 %v524
  %732 = vmatprep.subr.bf16.mxu0 0
  %733 = vmatpush1.bf16.msra.mxu0 %v525
  %734 = vmatprep.subr.bf16.mxu0 0
  %735 = vmatpush1.bf16.msra.mxu0 %v526
  %736 = vmatprep.subr.bf16.mxu0 0
  %737 = vmatpush1.bf16.msra.mxu0 %v527
  %738 = vmatprep.subr.bf16.mxu0 0
  %739 = vmatpush1.bf16.msra.mxu0 %v528
  %740 = vmatprep.subr.bf16.mxu0 0
  %741 = vmatpush1.bf16.msra.mxu0 %v529
  %742 = vmatprep.subr.bf16.mxu0 0
  %743 = vmatpush1.bf16.msra.mxu0 %v530
  %744 = vmatprep.subr.bf16.mxu0 0
  %745 = vmatpush1.bf16.msra.mxu0 %v531
  %746 = vmatprep.subr.bf16.mxu0 0
  %747 = vmatpush1.bf16.msra.mxu0 %v532
  %748 = vmatprep.subr.bf16.mxu0 0
  %749 = vmatpush1.bf16.msra.mxu0 %v533
  %750 = vmatprep.subr.bf16.mxu0 0
  %751 = vmatpush1.bf16.msra.mxu0 %v534
  %752 = vmatprep.subr.bf16.mxu0 0
  %753 = vmatpush1.bf16.msra.mxu0 %v535
  %754 = vmatprep.subr.bf16.mxu0 0
  %755 = vmatpush1.bf16.msra.mxu0 %v536
  %756 = vmatprep.mubr.bf16.mxu0 %v208
  %757 = vmatmul.mubr.bf16.gmra.mrb[0].mxu0 %v207
  %v758 = vpop.f32.mrb[0].mxu0
  %v759 = vadd.f32 %v718, %v758
  %v760 = vpop.f32.mrb[0].mxu0
  %v761 = vpop.f32.mrb[0].mxu0
  %v762 = vadd.f32 %v721, %v761
  %v763 = vpop.f32.mrb[0].mxu0
  %764 = vdwg.mxu0
  %765 = vst [vmem:[#allocation2] sm:$0xff] %v759
  %766 = vst [vmem:[#allocation2 + $0x8] sm:$0x3] %v762
  %v767 = vld [vmem:[%s7] ss:$0 sm:$0xff]
  %v768 = vld [vmem:[%s7 + $0x1] ss:$0 sm:$0xff]
  %v769 = vld [vmem:[%s7 + $0x2] ss:$0 sm:$0xff]
  %v770 = vld [vmem:[%s7 + $0x3] ss:$0 sm:$0xff]
  %v771 = vld [vmem:[%s7 + $0x4] ss:$0 sm:$0xff]
  %v772 = vld [vmem:[%s7 + $0x5] ss:$0 sm:$0xff]
  %s773 = scalar_lea.vmem %s7, 6
  %v774 = vld [vmem:[%s773] ss:$8 sm:$0x7]
  %s775 = scalar_lea.vmem %s7, 7
  %v776 = vld [vmem:[%s775] ss:$8 sm:$0x3]
  %v777 = vld [vmem:[#allocation2] sm:$0xff]
  %v778 = vld [vmem:[#allocation2 + $0x8] sm:$0x3]
  %779 = vadd.xlane.f32.xlu0 %v777
  %v780 = vpop.xlane.xlu0 %779
  %vm781 = vcmask 1041408
  %v782 = vsel %vm781, %v778, 0.0
  %783 = vadd.xlane.f32.xlu0 %v782
  %v784 = vpop.xlane.xlu0 %783
  %v785 = vrcp.pop 128.0
  %v786 = vmul.f32 %v780, %v785
  %v787 = vmul.f32 %v784, %v785
  %v788 = vsub.f32 %v777, %v786
  %v789 = vsub.f32 %v778, %v787
  %v790 = vmul.f32 %v788, %v788
  %v791 = vmul.f32 %v789, %v789
  %792 = vadd.xlane.f32.xlu0 %v790
  %v793 = vpop.xlane.xlu0 %792
  %v794 = vsel %vm781, %v791, 0.0
  %795 = vadd.xlane.f32.xlu0 %v794
  %v796 = vpop.xlane.xlu0 %795
  %v797 = vmul.f32 %v793, %v785
  %v798 = vmul.f32 %v796, %v785
  %v799 = vadd.f32 %v797, 1e-12
  %v800 = vadd.f32 %v798, 1e-12
  %v801 = vrsqrt.pop %v799
  %v802 = vrsqrt.pop %v800
  %v803 = vmul.f32 %v788, %v801
  %v804 = vmul.f32 %v789, %v802
  %v805 = vmul.f32 %v803, %v767
  %v806 = vmul.f32 %v804, %v767
  %v807 = vadd.f32 %v805, %v768
  %v808 = vadd.f32 %v806, %v768
  %v809 = vpack.c.bf16 %v808, %v807
  %v810 = vld [vmem:[%s3] sm:$0xff]
  %v811 = vld [vmem:[%s3 + $0x8] sm:$0xf]
  %v812 = vld [vmem:[%s3 + $0xc] sm:$0xff]
  %v813 = vld [vmem:[%s3 + $0x14] sm:$0xf]
  %v814 = vld [vmem:[%s3 + $0x18] sm:$0xff]
  %v815 = vld [vmem:[%s3 + $0x20] sm:$0xf]
  %v816 = vld [vmem:[%s3 + $0x24] sm:$0xff]
  %v817 = vld [vmem:[%s3 + $0x2c] sm:$0xf]
  %v818 = vld [vmem:[%s3 + $0x30] sm:$0xff]
  %v819 = vld [vmem:[%s3 + $0x38] sm:$0xf]
  %v820 = vld [vmem:[%s3 + $0x3c] sm:$0xff]
  %v821 = vld [vmem:[%s3 + $0x44] sm:$0xf]
  %v822 = vld [vmem:[%s3 + $0x48] sm:$0xff]
  %v823 = vld [vmem:[%s3 + $0x50] sm:$0xf]
  %v824 = vld [vmem:[%s3 + $0x54] sm:$0xff]
  %v825 = vld [vmem:[%s3 + $0x5c] sm:$0xf]
  %v826 = vld [vmem:[%s3 + $0x60] sm:$0xff]
  %v827 = vld [vmem:[%s3 + $0x68] sm:$0xf]
  %v828 = vld [vmem:[%s3 + $0x6c] sm:$0xff]
  %v829 = vld [vmem:[%s3 + $0x74] sm:$0xf]
  %v830 = vld [vmem:[%s3 + $0x78] sm:$0xff]
  %v831 = vld [vmem:[%s3 + $0x80] sm:$0xf]
  %v832 = vld [vmem:[%s3 + $0x84] sm:$0xff]
  %v833 = vld [vmem:[%s3 + $0x8c] sm:$0xf]
  %v834 = vld [vmem:[%s3 + $0x90] sm:$0xff]
  %v835 = vld [vmem:[%s3 + $0x98] sm:$0xf]
  %v836 = vld [vmem:[%s3 + $0x9c] sm:$0xff]
  %v837 = vld [vmem:[%s3 + $0xa4] sm:$0xf]
  %v838 = vld [vmem:[%s3 + $0xa8] sm:$0xff]
  %v839 = vld [vmem:[%s3 + $0xb0] sm:$0xf]
  %v840 = vld [vmem:[%s3 + $0xb4] sm:$0xff]
  %v841 = vld [vmem:[%s3 + $0xbc] sm:$0xf]
  %v843 = vlaneseq
  %v844 = vshrl.u32 %v843, 7
  %v845 = vsub.s32 0, %v844
  %v846 = vrot.slane %v774, %v845
  %v847 = vlaneseq
  %v848 = vshrl.u32 %v847, 7
  %v849 = vsub.s32 1, %v848
  %v850 = vrot.slane %v774, %v849
  %v851 = vlaneseq
  %v852 = vshrl.u32 %v851, 7
  %v853 = vsub.s32 2, %v852
  %v854 = vrot.slane %v774, %v853
  %v890 = vunpack.c.l.b16 %v810
  %v891 = vunpack.c.h.b16 %v810
  %v892 = vunpack.c.l.b16 %v811
  %v893 = vunpack.c.l.b16 %v812
  %v894 = vunpack.c.h.b16 %v812
  %v895 = vunpack.c.l.b16 %v813
  %v896 = vunpack.c.l.b16 %v814
  %v897 = vunpack.c.h.b16 %v814
  %v898 = vunpack.c.l.b16 %v815
  %v899 = vunpack.c.l.b16 %v816
  %v900 = vunpack.c.h.b16 %v816
  %v901 = vunpack.c.l.b16 %v817
  %v902 = vunpack.c.l.b16 %v818
  %v903 = vunpack.c.h.b16 %v818
  %v904 = vunpack.c.l.b16 %v819
  %v905 = vunpack.c.l.b16 %v820
  %v906 = vunpack.c.h.b16 %v820
  %v907 = vunpack.c.l.b16 %v821
  %v908 = vunpack.c.l.b16 %v822
  %v909 = vunpack.c.h.b16 %v822
  %v910 = vunpack.c.l.b16 %v823
  %v911 = vunpack.c.l.b16 %v824
  %v912 = vunpack.c.h.b16 %v824
  %v913 = vunpack.c.l.b16 %v825
  %v914 = vunpack.c.l.b16 %v826
  %v915 = vunpack.c.h.b16 %v826
  %v916 = vunpack.c.l.b16 %v827
  %v917 = vunpack.c.l.b16 %v828
  %v918 = vunpack.c.h.b16 %v828
  %v919 = vunpack.c.l.b16 %v829
  %v920 = vunpack.c.l.b16 %v830
  %v921 = vunpack.c.h.b16 %v830
  %v922 = vunpack.c.l.b16 %v831
  %v923 = vunpack.c.l.b16 %v832
  %v924 = vunpack.c.h.b16 %v832
  %v925 = vunpack.c.l.b16 %v833
  %v926 = vunpack.c.l.b16 %v834
  %v927 = vunpack.c.h.b16 %v834
  %v928 = vunpack.c.l.b16 %v835
  %v929 = vunpack.c.l.b16 %v836
  %v930 = vunpack.c.h.b16 %v836
  %v931 = vunpack.c.l.b16 %v837
  %v932 = vunpack.c.l.b16 %v838
  %v933 = vunpack.c.h.b16 %v838
  %v934 = vunpack.c.l.b16 %v839
  %v935 = vunpack.c.l.b16 %v840
  %v936 = vunpack.c.h.b16 %v840
  %v937 = vunpack.c.l.b16 %v841
  %v938 = vpack.c.b16 %v893, %v890
  %v939 = vpack.c.b16 %v894, %v891
  %v940 = vpack.c.b16 %v895, %v892
  %v941 = vpack.c.b16 %v899, %v896
  %v942 = vpack.c.b16 %v900, %v897
  %v943 = vpack.c.b16 %v901, %v898
  %v944 = vpack.c.b16 %v905, %v902
  %v945 = vpack.c.b16 %v906, %v903
  %v946 = vpack.c.b16 %v907, %v904
  %v947 = vpack.c.b16 %v911, %v908
  %v948 = vpack.c.b16 %v912, %v909
  %v949 = vpack.c.b16 %v913, %v910
  %v950 = vpack.c.b16 %v917, %v914
  %v951 = vpack.c.b16 %v918, %v915
  %v952 = vpack.c.b16 %v919, %v916
  %v953 = vpack.c.b16 %v923, %v920
  %v954 = vpack.c.b16 %v924, %v921
  %v955 = vpack.c.b16 %v925, %v922
  %v956 = vpack.c.b16 %v929, %v926
  %v957 = vpack.c.b16 %v930, %v927
  %v958 = vpack.c.b16 %v931, %v928
  %v959 = vpack.c.b16 %v935, %v932
  %v960 = vpack.c.b16 %v936, %v933
  %v961 = vpack.c.b16 %v937, %v934
  %986 = vmatprep.subr.bf16.mxu0 %v939
  %987 = vmatpush1.bf16.msra.mxu0 %v938
  %988 = vmatprep.subr.bf16.mxu0 %v942
  %989 = vmatpush1.bf16.msra.mxu0 %v941
  %990 = vmatprep.subr.bf16.mxu0 %v945
  %991 = vmatpush1.bf16.msra.mxu0 %v944
  %992 = vmatprep.subr.bf16.mxu0 %v948
  %993 = vmatpush1.bf16.msra.mxu0 %v947
  %994 = vmatprep.subr.bf16.mxu0 %v951
  %995 = vmatpush1.bf16.msra.mxu0 %v950
  %996 = vmatprep.subr.bf16.mxu0 %v954
  %997 = vmatpush1.bf16.msra.mxu0 %v953
  %998 = vmatprep.subr.bf16.mxu0 %v957
  %999 = vmatpush1.bf16.msra.mxu0 %v956
  %1000 = vmatprep.subr.bf16.mxu0 %v960
  %1001 = vmatpush1.bf16.msra.mxu0 %v959
  %1002 = vmatprep.subr.bf16.mxu0 0
  %1003 = vmatpush1.bf16.msra.mxu0 0
  %1004 = vmatprep.subr.bf16.mxu0 0
  %1005 = vmatpush1.bf16.msra.mxu0 0
  %1006 = vmatprep.subr.bf16.mxu0 0
  %1007 = vmatpush1.bf16.msra.mxu0 0
  %1008 = vmatprep.subr.bf16.mxu0 0
  %1009 = vmatpush1.bf16.msra.mxu0 0
  %1010 = vmatprep.subr.bf16.mxu0 0
  %1011 = vmatpush1.bf16.msra.mxu0 0
  %1012 = vmatprep.subr.bf16.mxu0 0
  %1013 = vmatpush1.bf16.msra.mxu0 0
  %1014 = vmatprep.subr.bf16.mxu0 0
  %1015 = vmatpush1.bf16.msra.mxu0 0
  %1016 = vmatprep.subr.bf16.mxu0 0
  %1017 = vmatpush1.bf16.msra.mxu0 0
  %1018 = vmatprep.mubr.bf16.mxu0 0
  %1019 = vmatmul.mubr.bf16.gmra.mrb[0].mxu0 %v809
  %v1020 = vpop.f32.mrb[0].mxu0
  %v1021 = vadd.f32 %v846, %v1020
  %v1022 = vpop.f32.mrb[0].mxu0
  %v1023 = vadd.f32 %v850, %v1022
  %v1024 = vpop.f32.mrb[0].mxu0
  %v1025 = vadd.f32 %v846, %v1024
  %v1026 = vpop.f32.mrb[0].mxu0
  %v1027 = vadd.f32 %v850, %v1026
  %1028 = vdwg.mxu0
  %1029 = vmatprep.subr.bf16.mxu0 0
  %1030 = vmatpush1.bf16.msra.mxu0 %v940
  %1031 = vmatprep.subr.bf16.mxu0 0
  %1032 = vmatpush1.bf16.msra.mxu0 %v943
  %1033 = vmatprep.subr.bf16.mxu0 0
  %1034 = vmatpush1.bf16.msra.mxu0 %v946
  %1035 = vmatprep.subr.bf16.mxu0 0
  %1036 = vmatpush1.bf16.msra.mxu0 %v949
  %1037 = vmatprep.subr.bf16.mxu0 0
  %1038 = vmatpush1.bf16.msra.mxu0 %v952
  %1039 = vmatprep.subr.bf16.mxu0 0
  %1040 = vmatpush1.bf16.msra.mxu0 %v955
  %1041 = vmatprep.subr.bf16.mxu0 0
  %1042 = vmatpush1.bf16.msra.mxu0 %v958
  %1043 = vmatprep.subr.bf16.mxu0 0
  %1044 = vmatpush1.bf16.msra.mxu0 %v961
  %1045 = vmatprep.subr.bf16.mxu0 0
  %1046 = vmatpush1.bf16.msra.mxu0 0
  %1047 = vmatprep.subr.bf16.mxu0 0
  %1048 = vmatpush1.bf16.msra.mxu0 0
  %1049 = vmatprep.subr.bf16.mxu0 0
  %1050 = vmatpush1.bf16.msra.mxu0 0
  %1051 = vmatprep.subr.bf16.mxu0 0
  %1052 = vmatpush1.bf16.msra.mxu0 0
  %1053 = vmatprep.subr.bf16.mxu0 0
  %1054 = vmatpush1.bf16.msra.mxu0 0
  %1055 = vmatprep.subr.bf16.mxu0 0
  %1056 = vmatpush1.bf16.msra.mxu0 0
  %1057 = vmatprep.subr.bf16.mxu0 0
  %1058 = vmatpush1.bf16.msra.mxu0 0
  %1059 = vmatprep.subr.bf16.mxu0 0
  %1060 = vmatpush1.bf16.msra.mxu0 0
  %1061 = vmatprep.mubr.bf16.mxu0 0
  %1062 = vmatmul.mubr.bf16.gmra.mrb[0].mxu0 %v809
  %v1063 = vpop.f32.mrb[0].mxu0
  %v1064 = vadd.f32 %v854, %v1063
  %v1065 = vpop.f32.mrb[0].mxu0
  %v1066 = vpop.f32.mrb[0].mxu0
  %v1067 = vadd.f32 %v854, %v1066
  %v1068 = vpop.f32.mrb[0].mxu0
  %1069 = vdwg.mxu0
  %1070 = vst [vmem:[#allocation3] sm:$0xff] %v1021
  %1071 = vst [vmem:[#allocation3 + $0x8] sm:$0xff] %v1023
  %1072 = vst [vmem:[#allocation3 + $0x10] sm:$0xff] %v1064
  %1073 = vst [vmem:[#allocation3 + $0x18] sm:$0x3] %v1025
  %1074 = vst [vmem:[#allocation3 + $0x20] sm:$0x3] %v1027
  %1075 = vst [vmem:[#allocation3 + $0x28] sm:$0x3] %v1067
  %v1076 = vld [vmem:[%s4] sm:$0xf]
  %v1077 = vld [vmem:[%s4 + $0x4] sm:$0xf]
  %v1078 = vld [vmem:[%s4 + $0x8] sm:$0xf]
  %v1079 = vld [vmem:[%s4 + $0xc] sm:$0xf]
  %v1080 = vld [vmem:[%s4 + $0x10] sm:$0xf]
  %v1081 = vld [vmem:[%s4 + $0x14] sm:$0xf]
  %v1082 = vld [vmem:[%s4 + $0x18] sm:$0xf]
  %v1083 = vld [vmem:[%s4 + $0x1c] sm:$0xf]
  %v1084 = vld [vmem:[%s4 + $0x20] sm:$0xf]
  %v1085 = vld [vmem:[%s4 + $0x24] sm:$0xf]
  %v1086 = vld [vmem:[%s4 + $0x28] sm:$0xf]
  %v1087 = vld [vmem:[%s4 + $0x2c] sm:$0xf]
  %v1088 = vld [vmem:[%s4 + $0x30] sm:$0xf]
  %v1089 = vld [vmem:[%s4 + $0x34] sm:$0xf]
  %v1090 = vld [vmem:[%s4 + $0x38] sm:$0xf]
  %v1091 = vld [vmem:[%s4 + $0x3c] sm:$0xf]
  %v1092 = vld [vmem:[#allocation3] sm:$0x1f]
  %v1093 = vld [vmem:[#allocation3 + $0x8] sm:$0x1f]
  %v1094 = vld [vmem:[#allocation3 + $0x10] sm:$0x1f]
  %vm1095 = vcmask 261120
  %v1097 = vsel %vm1095, %v1092, 0
  %v1100 = vsel %vm1095, %v1093, 0
  %1102 = vmatprep.subr.mxu0 0.0
  %1103 = vmatpush1.xpose.msra.mxu0 %v1100
  %1104 = vmatprep.subr.mxu0 0.0
  %1105 = vmatpush1.xpose.msra.mxu0 0.0
  %1106 = vmatprep.subr.mxu0 0.0
  %1107 = vmatpush1.xpose.msra.mxu0 0.0
  %1108 = vmatprep.subr.mxu0 0.0
  %1109 = vmatpush1.xpose.msra.mxu0 0.0
  %1110 = vmatprep.subr.mxu0 0.0
  %1111 = vmatpush1.xpose.msra.mxu0 0.0
  %1112 = vmatprep.subr.mxu0 0.0
  %1113 = vmatpush1.xpose.msra.mxu0 0.0
  %1114 = vmatprep.subr.mxu0 0.0
  %1115 = vmatpush1.xpose.msra.mxu0 0.0
  %1116 = vmatprep.subr.mxu0 0.0
  %1117 = vmatpush1.xpose.msra.mxu0 0.0
  %1118 = vmatprep.subr.mxu0 0.0
  %1119 = vmatpush1.xpose.msra.mxu0 0.0
  %1120 = vmatprep.subr.mxu0 0.0
  %1121 = vmatpush1.xpose.msra.mxu0 0.0
  %1122 = vmatprep.subr.mxu0 0.0
  %1123 = vmatpush1.xpose.msra.mxu0 0.0
  %1124 = vmatprep.subr.mxu0 0.0
  %1125 = vmatpush1.xpose.msra.mxu0 0.0
  %1126 = vmatprep.subr.mxu0 0.0
  %1127 = vmatpush1.xpose.msra.mxu0 0.0
  %1128 = vmatprep.subr.mxu0 0.0
  %1129 = vmatpush1.xpose.msra.mxu0 0.0
  %1130 = vmatprep.subr.mxu0 0.0
  %1131 = vmatpush1.xpose.msra.mxu0 0.0
  %1132 = vmatprep.subr.mxu0 0.0
  %1133 = vmatpush1.xpose.msra.mxu0 0.0
  %1134 = vmatprep.subr.mxu0 0.0
  %1135 = vmatpush1.xpose.msra.mxu0 0.0
  %1136 = vmatprep.subr.mxu0 0.0
  %1137 = vmatpush1.xpose.msra.mxu0 0.0
  %1138 = vmatprep.subr.mxu0 0.0
  %1139 = vmatpush1.xpose.msra.mxu0 0.0
  %1140 = vmatprep.subr.mxu0 0.0
  %1141 = vmatpush1.xpose.msra.mxu0 0.0
  %1142 = vmatprep.subr.mxu0 0.0
  %1143 = vmatpush1.xpose.msra.mxu0 0.0
  %1144 = vmatprep.subr.mxu0 0.0
  %1145 = vmatpush1.xpose.msra.mxu0 0.0
  %1146 = vmatprep.subr.mxu0 0.0
  %1147 = vmatpush1.xpose.msra.mxu0 0.0
  %1148 = vmatprep.subr.mxu0 0.0
  %1149 = vmatpush1.xpose.msra.mxu0 0.0
  %1150 = vmatprep.subr.mxu0 0.0
  %1151 = vmatpush1.xpose.msra.mxu0 0.0
  %1152 = vmatprep.subr.mxu0 0.0
  %1153 = vmatpush1.xpose.msra.mxu0 0.0
  %1154 = vmatprep.subr.mxu0 0.0
  %1155 = vmatpush1.xpose.msra.mxu0 0.0
  %1156 = vmatprep.subr.mxu0 0.0
  %1157 = vmatpush1.xpose.msra.mxu0 0.0
  %1158 = vmatprep.subr.mxu0 0.0
  %1159 = vmatpush1.xpose.msra.mxu0 0.0
  %1160 = vmatprep.subr.mxu0 0.0
  %1161 = vmatpush1.xpose.msra.mxu0 0.0
  %1162 = vmatprep.subr.mxu0 0.0
  %1163 = vmatpush1.xpose.msra.mxu0 0.0
  %1164 = vmatprep.subr.mxu0 0.0
  %1165 = vmatpush1.xpose.msra.mxu0 0.0
  %1166 = vmatprep.mubr.f32.mxu0 0.0
  %1167 = vmatmul.mubr.f32.gmra.mrb[0].mxu0 %v1097
  %v1168 = vpop.f32.mrb[0].mxu0
  %v1169 = vadd.f32 0.0, %v1168
  %v1170 = vpop.f32.mrb[0].mxu0
  %1171 = vdwg.mxu0
  %v1172 = vmul.f32 %v1169, 0.17677669
  %vm1173 = vcmask 36864
  %v1174 = vsel %vm1173, %v1172, -inf
  %1175 = vmax.xlane.f32.xlu0 %v1174
  %v1176 = vpop.xlane.xlu0 %1175
  %v1177 = vsub.f32 %v1172, %v1176
  %v1178 = vmul.f32 %v1177, 1.442695
  %v1179 = vpow.pop %v1178
  %v1180 = vsel %vm1173, %v1179, 0.0
  %1181 = vadd.xlane.f32.xlu0 %v1180
  %v1182 = vpop.xlane.xlu0 %1181
  %v1183 = vrcp.pop %v1182
  %v1184 = vmul.f32 %v1179, %v1183
  %v1185 = vpack.c.bf16 %v1184, %v1184
  %v1186 = vpack.c.bf16 %v1094, %v1094
  %vm1187 = vcmask 39936
  %v1189 = vsel %vm1187, %v1185, 0
  %vm1191 = vcmask 1042432
  %v1192 = vsel %vm781, 4294967295, 65535
  %v1193 = vsel %vm1191, %v1192, 0
  %v1195 = vand.u32 %v1186, %v1193
  %1197 = vmatprep.subr.bf16.mxu0 0
  %1198 = vmatpush1.bf16.msra.mxu0 %v1195
  %1199 = vmatprep.subr.bf16.mxu0 0
  %1200 = vmatpush1.bf16.msra.mxu0 0
  %1201 = vmatprep.subr.bf16.mxu0 0
  %1202 = vmatpush1.bf16.msra.mxu0 0
  %1203 = vmatprep.subr.bf16.mxu0 0
  %1204 = vmatpush1.bf16.msra.mxu0 0
  %1205 = vmatprep.subr.bf16.mxu0 0
  %1206 = vmatpush1.bf16.msra.mxu0 0
  %1207 = vmatprep.subr.bf16.mxu0 0
  %1208 = vmatpush1.bf16.msra.mxu0 0
  %1209 = vmatprep.subr.bf16.mxu0 0
  %1210 = vmatpush1.bf16.msra.mxu0 0
  %1211 = vmatprep.subr.bf16.mxu0 0
  %1212 = vmatpush1.bf16.msra.mxu0 0
  %1213 = vmatprep.subr.bf16.mxu0 0
  %1214 = vmatpush1.bf16.msra.mxu0 0
  %1215 = vmatprep.subr.bf16.mxu0 0
  %1216 = vmatpush1.bf16.msra.mxu0 0
  %1217 = vmatprep.subr.bf16.mxu0 0
  %1218 = vmatpush1.bf16.msra.mxu0 0
  %1219 = vmatprep.subr.bf16.mxu0 0
  %1220 = vmatpush1.bf16.msra.mxu0 0
  %1221 = vmatprep.subr.bf16.mxu0 0
  %1222 = vmatpush1.bf16.msra.mxu0 0
  %1223 = vmatprep.subr.bf16.mxu0 0
  %1224 = vmatpush1.bf16.msra.mxu0 0
  %1225 = vmatprep.subr.bf16.mxu0 0
  %1226 = vmatpush1.bf16.msra.mxu0 0
  %1227 = vmatprep.subr.bf16.mxu0 0
  %1228 = vmatpush1.bf16.msra.mxu0 0
  %1229 = vmatprep.mubr.bf16.mxu0 0
  %1230 = vmatmul.mubr.bf16.gmra.mrb[0].mxu0 %v1189
  %v1231 = vpop.f32.mrb[0].mxu0
  %v1232 = vadd.f32 0.0, %v1231
  %v1233 = vpop.f32.mrb[0].mxu0
  %v1234 = vpop.f32.mrb[0].mxu0
  %v1235 = vpop.f32.mrb[0].mxu0
  %1236 = vdwg.mxu0
  %v1237 = vpack.c.bf16 %v1232, %v1232
  %v1242 = vunpack.c.l.b16 %v1076
  %v1243 = vunpack.c.l.b16 %v1077
  %v1244 = vunpack.c.l.b16 %v1078
  %v1245 = vunpack.c.l.b16 %v1079
  %v1246 = vpack.c.b16 %v1243, %v1242
  %v1247 = vpack.c.b16 %v1245, %v1244
  %v1251 = vsel %vm1095, %v1237, 0
  %1253 = vmatprep.subr.bf16.mxu0 0
  %1254 = vmatpush1.bf16.msra.mxu0 %v1246
  %1255 = vmatprep.subr.bf16.mxu0 0
  %1256 = vmatpush1.bf16.msra.mxu0 %v1247
  %1257 = vmatprep.subr.bf16.mxu0 0
  %1258 = vmatpush1.bf16.msra.mxu0 0
  %1259 = vmatprep.subr.bf16.mxu0 0
  %1260 = vmatpush1.bf16.msra.mxu0 0
  %1261 = vmatprep.subr.bf16.mxu0 0
  %1262 = vmatpush1.bf16.msra.mxu0 0
  %1263 = vmatprep.subr.bf16.mxu0 0
  %1264 = vmatpush1.bf16.msra.mxu0 0
  %1265 = vmatprep.subr.bf16.mxu0 0
  %1266 = vmatpush1.bf16.msra.mxu0 0
  %1267 = vmatprep.subr.bf16.mxu0 0
  %1268 = vmatpush1.bf16.msra.mxu0 0
  %1269 = vmatprep.subr.bf16.mxu0 0
  %1270 = vmatpush1.bf16.msra.mxu0 0
  %1271 = vmatprep.subr.bf16.mxu0 0
  %1272 = vmatpush1.bf16.msra.mxu0 0
  %1273 = vmatprep.subr.bf16.mxu0 0
  %1274 = vmatpush1.bf16.msra.mxu0 0
  %1275 = vmatprep.subr.bf16.mxu0 0
  %1276 = vmatpush1.bf16.msra.mxu0 0
  %1277 = vmatprep.subr.bf16.mxu0 0
  %1278 = vmatpush1.bf16.msra.mxu0 0
  %1279 = vmatprep.subr.bf16.mxu0 0
  %1280 = vmatpush1.bf16.msra.mxu0 0
  %1281 = vmatprep.subr.bf16.mxu0 0
  %1282 = vmatpush1.bf16.msra.mxu0 0
  %1283 = vmatprep.subr.bf16.mxu0 0
  %1284 = vmatpush1.bf16.msra.mxu0 0
  %1285 = vmatprep.mubr.bf16.mxu0 0
  %1286 = vmatmul.mubr.bf16.gmra.mrb[0].mxu0 %v1251
  %v1287 = vpop.f32.mrb[0].mxu0
  %v1288 = vadd.f32 0.0, %v1287
  %v1289 = vpop.f32.mrb[0].mxu0
  %v1290 = vpop.f32.mrb[0].mxu0
  %v1291 = vpop.f32.mrb[0].mxu0
  %1292 = vdwg.mxu0
  %v1293 = vadd.f32 %v771, %v1288
  %1294 = vrot.lane.b32.xlu0 %v1092, 96
  %v1295 = vpop.permute.xlu0 %1294
  %1296 = vrot.lane.b32.xlu0 %v1093, 96
  %v1297 = vpop.permute.xlu0 %1296
  %v1298 = vsel %vm1095, %v1295, 0
  %v1300 = vsel %vm1095, %v1297, 0
  %1302 = vmatprep.subr.mxu0 0.0
  %1303 = vmatpush1.xpose.msra.mxu0 %v1300
  %1304 = vmatprep.subr.mxu0 0.0
  %1305 = vmatpush1.xpose.msra.mxu0 0.0
  %1306 = vmatprep.subr.mxu0 0.0
  %1307 = vmatpush1.xpose.msra.mxu0 0.0
  %1308 = vmatprep.subr.mxu0 0.0
  %1309 = vmatpush1.xpose.msra.mxu0 0.0
  %1310 = vmatprep.subr.mxu0 0.0
  %1311 = vmatpush1.xpose.msra.mxu0 0.0
  %1312 = vmatprep.subr.mxu0 0.0
  %1313 = vmatpush1.xpose.msra.mxu0 0.0
  %1314 = vmatprep.subr.mxu0 0.0
  %1315 = vmatpush1.xpose.msra.mxu0 0.0
  %1316 = vmatprep.subr.mxu0 0.0
  %1317 = vmatpush1.xpose.msra.mxu0 0.0
  %1318 = vmatprep.subr.mxu0 0.0
  %1319 = vmatpush1.xpose.msra.mxu0 0.0
  %1320 = vmatprep.subr.mxu0 0.0
  %1321 = vmatpush1.xpose.msra.mxu0 0.0
  %1322 = vmatprep.subr.mxu0 0.0
  %1323 = vmatpush1.xpose.msra.mxu0 0.0
  %1324 = vmatprep.subr.mxu0 0.0
  %1325 = vmatpush1.xpose.msra.mxu0 0.0
  %1326 = vmatprep.subr.mxu0 0.0
  %1327 = vmatpush1.xpose.msra.mxu0 0.0
  %1328 = vmatprep.subr.mxu0 0.0
  %1329 = vmatpush1.xpose.msra.mxu0 0.0
  %1330 = vmatprep.subr.mxu0 0.0
  %1331 = vmatpush1.xpose.msra.mxu0 0.0
  %1332 = vmatprep.subr.mxu0 0.0
  %1333 = vmatpush1.xpose.msra.mxu0 0.0
  %1334 = vmatprep.subr.mxu0 0.0
  %1335 = vmatpush1.xpose.msra.mxu0 0.0
  %1336 = vmatprep.subr.mxu0 0.0
  %1337 = vmatpush1.xpose.msra.mxu0 0.0
  %1338 = vmatprep.subr.mxu0 0.0
  %1339 = vmatpush1.xpose.msra.mxu0 0.0
  %1340 = vmatprep.subr.mxu0 0.0
  %1341 = vmatpush1.xpose.msra.mxu0 0.0
  %1342 = vmatprep.subr.mxu0 0.0
  %1343 = vmatpush1.xpose.msra.mxu0 0.0
  %1344 = vmatprep.subr.mxu0 0.0
  %1345 = vmatpush1.xpose.msra.mxu0 0.0
  %1346 = vmatprep.subr.mxu0 0.0
  %1347 = vmatpush1.xpose.msra.mxu0 0.0
  %1348 = vmatprep.subr.mxu0 0.0
  %1349 = vmatpush1.xpose.msra.mxu0 0.0
  %1350 = vmatprep.subr.mxu0 0.0
  %1351 = vmatpush1.xpose.msra.mxu0 0.0
  %1352 = vmatprep.subr.mxu0 0.0
  %1353 = vmatpush1.xpose.msra.mxu0 0.0
  %1354 = vmatprep.subr.mxu0 0.0
  %1355 = vmatpush1.xpose.msra.mxu0 0.0
  %1356 = vmatprep.subr.mxu0 0.0
  %1357 = vmatpush1.xpose.msra.mxu0 0.0
  %1358 = vmatprep.subr.mxu0 0.0
  %1359 = vmatpush1.xpose.msra.mxu0 0.0
  %1360 = vmatprep.subr.mxu0 0.0
  %1361 = vmatpush1.xpose.msra.mxu0 0.0
  %1362 = vmatprep.subr.mxu0 0.0
  %1363 = vmatpush1.xpose.msra.mxu0 0.0
  %1364 = vmatprep.subr.mxu0 0.0
  %1365 = vmatpush1.xpose.msra.mxu0 0.0
  %1366 = vmatprep.mubr.f32.mxu0 0.0
  %1367 = vmatmul.mubr.f32.gmra.mrb[0].mxu0 %v1298
  %v1368 = vpop.f32.mrb[0].mxu0
  %v1369 = vadd.f32 0.0, %v1368
  %v1370 = vpop.f32.mrb[0].mxu0
  %1371 = vdwg.mxu0
  %v1372 = vmul.f32 %v1369, 0.17677669
  %v1373 = vsel %vm1173, %v1372, -inf
  %1374 = vmax.xlane.f32.xlu0 %v1373
  %v1375 = vpop.xlane.xlu0 %1374
  %v1376 = vsub.f32 %v1372, %v1375
  %v1377 = vmul.f32 %v1376, 1.442695
  %v1378 = vpow.pop %v1377
  %v1379 = vsel %vm1173, %v1378, 0.0
  %1380 = vadd.xlane.f32.xlu0 %v1379
  %v1381 = vpop.xlane.xlu0 %1380
  %v1382 = vrcp.pop %v1381
  %v1383 = vmul.f32 %v1378, %v1382
  %v1384 = vpack.c.bf16 %v1383, %v1383
  %1386 = vrot.lane.b32.xlu0 %v1186, 96
  %v1387 = vpop.permute.xlu0 %1386
  %v1389 = vsel %vm1187, %v1384, 0
  %v1392 = vand.u32 %v1387, %v1193
  %1394 = vmatprep.subr.bf16.mxu0 0
  %1395 = vmatpush1.bf16.msra.mxu0 %v1392
  %1396 = vmatprep.subr.bf16.mxu0 0
  %1397 = vmatpush1.bf16.msra.mxu0 0
  %1398 = vmatprep.subr.bf16.mxu0 0
  %1399 = vmatpush1.bf16.msra.mxu0 0
  %1400 = vmatprep.subr.bf16.mxu0 0
  %1401 = vmatpush1.bf16.msra.mxu0 0
  %1402 = vmatprep.subr.bf16.mxu0 0
  %1403 = vmatpush1.bf16.msra.mxu0 0
  %1404 = vmatprep.subr.bf16.mxu0 0
  %1405 = vmatpush1.bf16.msra.mxu0 0
  %1406 = vmatprep.subr.bf16.mxu0 0
  %1407 = vmatpush1.bf16.msra.mxu0 0
  %1408 = vmatprep.subr.bf16.mxu0 0
  %1409 = vmatpush1.bf16.msra.mxu0 0
  %1410 = vmatprep.subr.bf16.mxu0 0
  %1411 = vmatpush1.bf16.msra.mxu0 0
  %1412 = vmatprep.subr.bf16.mxu0 0
  %1413 = vmatpush1.bf16.msra.mxu0 0
  %1414 = vmatprep.subr.bf16.mxu0 0
  %1415 = vmatpush1.bf16.msra.mxu0 0
  %1416 = vmatprep.subr.bf16.mxu0 0
  %1417 = vmatpush1.bf16.msra.mxu0 0
  %1418 = vmatprep.subr.bf16.mxu0 0
  %1419 = vmatpush1.bf16.msra.mxu0 0
  %1420 = vmatprep.subr.bf16.mxu0 0
  %1421 = vmatpush1.bf16.msra.mxu0 0
  %1422 = vmatprep.subr.bf16.mxu0 0
  %1423 = vmatpush1.bf16.msra.mxu0 0
  %1424 = vmatprep.subr.bf16.mxu0 0
  %1425 = vmatpush1.bf16.msra.mxu0 0
  %1426 = vmatprep.mubr.bf16.mxu0 0
  %1427 = vmatmul.mubr.bf16.gmra.mrb[0].mxu0 %v1389
  %v1428 = vpop.f32.mrb[0].mxu0
  %v1429 = vadd.f32 0.0, %v1428
  %v1430 = vpop.f32.mrb[0].mxu0
  %v1431 = vpop.f32.mrb[0].mxu0
  %v1432 = vpop.f32.mrb[0].mxu0
  %1433 = vdwg.mxu0
  %v1434 = vpack.c.bf16 %v1429, %v1429
  %v1439 = vunpack.c.l.b16 %v1080
  %v1440 = vunpack.c.l.b16 %v1081
  %v1441 = vunpack.c.l.b16 %v1082
  %v1442 = vunpack.c.l.b16 %v1083
  %v1443 = vpack.c.b16 %v1440, %v1439
  %v1444 = vpack.c.b16 %v1442, %v1441
  %v1448 = vsel %vm1095, %v1434, 0
  %1450 = vmatprep.subr.bf16.mxu0 0
  %1451 = vmatpush1.bf16.msra.mxu0 %v1443
  %1452 = vmatprep.subr.bf16.mxu0 0
  %1453 = vmatpush1.bf16.msra.mxu0 %v1444
  %1454 = vmatprep.subr.bf16.mxu0 0
  %1455 = vmatpush1.bf16.msra.mxu0 0
  %1456 = vmatprep.subr.bf16.mxu0 0
  %1457 = vmatpush1.bf16.msra.mxu0 0
  %1458 = vmatprep.subr.bf16.mxu0 0
  %1459 = vmatpush1.bf16.msra.mxu0 0
  %1460 = vmatprep.subr.bf16.mxu0 0
  %1461 = vmatpush1.bf16.msra.mxu0 0
  %1462 = vmatprep.subr.bf16.mxu0 0
  %1463 = vmatpush1.bf16.msra.mxu0 0
  %1464 = vmatprep.subr.bf16.mxu0 0
  %1465 = vmatpush1.bf16.msra.mxu0 0
  %1466 = vmatprep.subr.bf16.mxu0 0
  %1467 = vmatpush1.bf16.msra.mxu0 0
  %1468 = vmatprep.subr.bf16.mxu0 0
  %1469 = vmatpush1.bf16.msra.mxu0 0
  %1470 = vmatprep.subr.bf16.mxu0 0
  %1471 = vmatpush1.bf16.msra.mxu0 0
  %1472 = vmatprep.subr.bf16.mxu0 0
  %1473 = vmatpush1.bf16.msra.mxu0 0
  %1474 = vmatprep.subr.bf16.mxu0 0
  %1475 = vmatpush1.bf16.msra.mxu0 0
  %1476 = vmatprep.subr.bf16.mxu0 0
  %1477 = vmatpush1.bf16.msra.mxu0 0
  %1478 = vmatprep.subr.bf16.mxu0 0
  %1479 = vmatpush1.bf16.msra.mxu0 0
  %1480 = vmatprep.subr.bf16.mxu0 0
  %1481 = vmatpush1.bf16.msra.mxu0 0
  %1482 = vmatprep.mubr.bf16.mxu0 0
  %1483 = vmatmul.mubr.bf16.gmra.mrb[0].mxu0 %v1448
  %v1484 = vpop.f32.mrb[0].mxu0
  %v1485 = vadd.f32 0.0, %v1484
  %v1486 = vpop.f32.mrb[0].mxu0
  %v1487 = vpop.f32.mrb[0].mxu0
  %v1488 = vpop.f32.mrb[0].mxu0
  %1489 = vdwg.mxu0
  %v1490 = vadd.f32 %v1293, %v1485
  %1491 = vrot.lane.b32.xlu0 %v1092, 64
  %v1492 = vpop.permute.xlu0 %1491
  %1493 = vrot.lane.b32.xlu0 %v1093, 64
  %v1494 = vpop.permute.xlu0 %1493
  %v1495 = vsel %vm1095, %v1492, 0
  %v1497 = vsel %vm1095, %v1494, 0
  %1499 = vmatprep.subr.mxu0 0.0
  %1500 = vmatpush1.xpose.msra.mxu0 %v1497
  %1501 = vmatprep.subr.mxu0 0.0
  %1502 = vmatpush1.xpose.msra.mxu0 0.0
  %1503 = vmatprep.subr.mxu0 0.0
  %1504 = vmatpush1.xpose.msra.mxu0 0.0
  %1505 = vmatprep.subr.mxu0 0.0
  %1506 = vmatpush1.xpose.msra.mxu0 0.0
  %1507 = vmatprep.subr.mxu0 0.0
  %1508 = vmatpush1.xpose.msra.mxu0 0.0
  %1509 = vmatprep.subr.mxu0 0.0
  %1510 = vmatpush1.xpose.msra.mxu0 0.0
  %1511 = vmatprep.subr.mxu0 0.0
  %1512 = vmatpush1.xpose.msra.mxu0 0.0
  %1513 = vmatprep.subr.mxu0 0.0
  %1514 = vmatpush1.xpose.msra.mxu0 0.0
  %1515 = vmatprep.subr.mxu0 0.0
  %1516 = vmatpush1.xpose.msra.mxu0 0.0
  %1517 = vmatprep.subr.mxu0 0.0
  %1518 = vmatpush1.xpose.msra.mxu0 0.0
  %1519 = vmatprep.subr.mxu0 0.0
  %1520 = vmatpush1.xpose.msra.mxu0 0.0
  %1521 = vmatprep.subr.mxu0 0.0
  %1522 = vmatpush1.xpose.msra.mxu0 0.0
  %1523 = vmatprep.subr.mxu0 0.0
  %1524 = vmatpush1.xpose.msra.mxu0 0.0
  %1525 = vmatprep.subr.mxu0 0.0
  %1526 = vmatpush1.xpose.msra.mxu0 0.0
  %1527 = vmatprep.subr.mxu0 0.0
  %1528 = vmatpush1.xpose.msra.mxu0 0.0
  %1529 = vmatprep.subr.mxu0 0.0
  %1530 = vmatpush1.xpose.msra.mxu0 0.0
  %1531 = vmatprep.subr.mxu0 0.0
  %1532 = vmatpush1.xpose.msra.mxu0 0.0
  %1533 = vmatprep.subr.mxu0 0.0
  %1534 = vmatpush1.xpose.msra.mxu0 0.0
  %1535 = vmatprep.subr.mxu0 0.0
  %1536 = vmatpush1.xpose.msra.mxu0 0.0
  %1537 = vmatprep.subr.mxu0 0.0
  %1538 = vmatpush1.xpose.msra.mxu0 0.0
  %1539 = vmatprep.subr.mxu0 0.0
  %1540 = vmatpush1.xpose.msra.mxu0 0.0
  %1541 = vmatprep.subr.mxu0 0.0
  %1542 = vmatpush1.xpose.msra.mxu0 0.0
  %1543 = vmatprep.subr.mxu0 0.0
  %1544 = vmatpush1.xpose.msra.mxu0 0.0
  %1545 = vmatprep.subr.mxu0 0.0
  %1546 = vmatpush1.xpose.msra.mxu0 0.0
  %1547 = vmatprep.subr.mxu0 0.0
  %1548 = vmatpush1.xpose.msra.mxu0 0.0
  %1549 = vmatprep.subr.mxu0 0.0
  %1550 = vmatpush1.xpose.msra.mxu0 0.0
  %1551 = vmatprep.subr.mxu0 0.0
  %1552 = vmatpush1.xpose.msra.mxu0 0.0
  %1553 = vmatprep.subr.mxu0 0.0
  %1554 = vmatpush1.xpose.msra.mxu0 0.0
  %1555 = vmatprep.subr.mxu0 0.0
  %1556 = vmatpush1.xpose.msra.mxu0 0.0
  %1557 = vmatprep.subr.mxu0 0.0
  %1558 = vmatpush1.xpose.msra.mxu0 0.0
  %1559 = vmatprep.subr.mxu0 0.0
  %1560 = vmatpush1.xpose.msra.mxu0 0.0
  %1561 = vmatprep.subr.mxu0 0.0
  %1562 = vmatpush1.xpose.msra.mxu0 0.0
  %1563 = vmatprep.mubr.f32.mxu0 0.0
  %1564 = vmatmul.mubr.f32.gmra.mrb[0].mxu0 %v1495
  %v1565 = vpop.f32.mrb[0].mxu0
  %v1566 = vadd.f32 0.0, %v1565
  %v1567 = vpop.f32.mrb[0].mxu0
  %1568 = vdwg.mxu0
  %v1569 = vmul.f32 %v1566, 0.17677669
  %v1570 = vsel %vm1173, %v1569, -inf
  %1571 = vmax.xlane.f32.xlu0 %v1570
  %v1572 = vpop.xlane.xlu0 %1571
  %v1573 = vsub.f32 %v1569, %v1572
  %v1574 = vmul.f32 %v1573, 1.442695
  %v1575 = vpow.pop %v1574
  %v1576 = vsel %vm1173, %v1575, 0.0
  %1577 = vadd.xlane.f32.xlu0 %v1576
  %v1578 = vpop.xlane.xlu0 %1577
  %v1579 = vrcp.pop %v1578
  %v1580 = vmul.f32 %v1575, %v1579
  %v1581 = vpack.c.bf16 %v1580, %v1580
  %1582 = vrot.lane.b32.xlu0 %v1186, 64
  %v1583 = vpop.permute.xlu0 %1582
  %v1585 = vsel %vm1187, %v1581, 0
  %v1588 = vand.u32 %v1583, %v1193
  %1590 = vmatprep.subr.bf16.mxu0 0
  %1591 = vmatpush1.bf16.msra.mxu0 %v1588
  %1592 = vmatprep.subr.bf16.mxu0 0
  %1593 = vmatpush1.bf16.msra.mxu0 0
  %1594 = vmatprep.subr.bf16.mxu0 0
  %1595 = vmatpush1.bf16.msra.mxu0 0
  %1596 = vmatprep.subr.bf16.mxu0 0
  %1597 = vmatpush1.bf16.msra.mxu0 0
  %1598 = vmatprep.subr.bf16.mxu0 0
  %1599 = vmatpush1.bf16.msra.mxu0 0
  %1600 = vmatprep.subr.bf16.mxu0 0
  %1601 = vmatpush1.bf16.msra.mxu0 0
  %1602 = vmatprep.subr.bf16.mxu0 0
  %1603 = vmatpush1.bf16.msra.mxu0 0
  %1604 = vmatprep.subr.bf16.mxu0 0
  %1605 = vmatpush1.bf16.msra.mxu0 0
  %1606 = vmatprep.subr.bf16.mxu0 0
  %1607 = vmatpush1.bf16.msra.mxu0 0
  %1608 = vmatprep.subr.bf16.mxu0 0
  %1609 = vmatpush1.bf16.msra.mxu0 0
  %1610 = vmatprep.subr.bf16.mxu0 0
  %1611 = vmatpush1.bf16.msra.mxu0 0
  %1612 = vmatprep.subr.bf16.mxu0 0
  %1613 = vmatpush1.bf16.msra.mxu0 0
  %1614 = vmatprep.subr.bf16.mxu0 0
  %1615 = vmatpush1.bf16.msra.mxu0 0
  %1616 = vmatprep.subr.bf16.mxu0 0
  %1617 = vmatpush1.bf16.msra.mxu0 0
  %1618 = vmatprep.subr.bf16.mxu0 0
  %1619 = vmatpush1.bf16.msra.mxu0 0
  %1620 = vmatprep.subr.bf16.mxu0 0
  %1621 = vmatpush1.bf16.msra.mxu0 0
  %1622 = vmatprep.mubr.bf16.mxu0 0
  %1623 = vmatmul.mubr.bf16.gmra.mrb[0].mxu0 %v1585
  %v1624 = vpop.f32.mrb[0].mxu0
  %v1625 = vadd.f32 0.0, %v1624
  %v1626 = vpop.f32.mrb[0].mxu0
  %v1627 = vpop.f32.mrb[0].mxu0
  %v1628 = vpop.f32.mrb[0].mxu0
  %1629 = vdwg.mxu0
  %v1630 = vpack.c.bf16 %v1625, %v1625
  %v1635 = vunpack.c.l.b16 %v1084
  %v1636 = vunpack.c.l.b16 %v1085
  %v1637 = vunpack.c.l.b16 %v1086
  %v1638 = vunpack.c.l.b16 %v1087
  %v1639 = vpack.c.b16 %v1636, %v1635
  %v1640 = vpack.c.b16 %v1638, %v1637
  %v1644 = vsel %vm1095, %v1630, 0
  %1646 = vmatprep.subr.bf16.mxu0 0
  %1647 = vmatpush1.bf16.msra.mxu0 %v1639
  %1648 = vmatprep.subr.bf16.mxu0 0
  %1649 = vmatpush1.bf16.msra.mxu0 %v1640
  %1650 = vmatprep.subr.bf16.mxu0 0
  %1651 = vmatpush1.bf16.msra.mxu0 0
  %1652 = vmatprep.subr.bf16.mxu0 0
  %1653 = vmatpush1.bf16.msra.mxu0 0
  %1654 = vmatprep.subr.bf16.mxu0 0
  %1655 = vmatpush1.bf16.msra.mxu0 0
  %1656 = vmatprep.subr.bf16.mxu0 0
  %1657 = vmatpush1.bf16.msra.mxu0 0
  %1658 = vmatprep.subr.bf16.mxu0 0
  %1659 = vmatpush1.bf16.msra.mxu0 0
  %1660 = vmatprep.subr.bf16.mxu0 0
  %1661 = vmatpush1.bf16.msra.mxu0 0
  %1662 = vmatprep.subr.bf16.mxu0 0
  %1663 = vmatpush1.bf16.msra.mxu0 0
  %1664 = vmatprep.subr.bf16.mxu0 0
  %1665 = vmatpush1.bf16.msra.mxu0 0
  %1666 = vmatprep.subr.bf16.mxu0 0
  %1667 = vmatpush1.bf16.msra.mxu0 0
  %1668 = vmatprep.subr.bf16.mxu0 0
  %1669 = vmatpush1.bf16.msra.mxu0 0
  %1670 = vmatprep.subr.bf16.mxu0 0
  %1671 = vmatpush1.bf16.msra.mxu0 0
  %1672 = vmatprep.subr.bf16.mxu0 0
  %1673 = vmatpush1.bf16.msra.mxu0 0
  %1674 = vmatprep.subr.bf16.mxu0 0
  %1675 = vmatpush1.bf16.msra.mxu0 0
  %1676 = vmatprep.subr.bf16.mxu0 0
  %1677 = vmatpush1.bf16.msra.mxu0 0
  %1678 = vmatprep.mubr.bf16.mxu0 0
  %1679 = vmatmul.mubr.bf16.gmra.mrb[0].mxu0 %v1644
  %v1680 = vpop.f32.mrb[0].mxu0
  %v1681 = vadd.f32 0.0, %v1680
  %v1682 = vpop.f32.mrb[0].mxu0
  %v1683 = vpop.f32.mrb[0].mxu0
  %v1684 = vpop.f32.mrb[0].mxu0
  %1685 = vdwg.mxu0
  %v1686 = vadd.f32 %v1490, %v1681
  %1687 = vrot.lane.b32.xlu0 %v1092, 32
  %v1688 = vpop.permute.xlu0 %1687
  %1689 = vrot.lane.b32.xlu0 %v1093, 32
  %v1690 = vpop.permute.xlu0 %1689
  %v1691 = vsel %vm1095, %v1688, 0
  %v1693 = vsel %vm1095, %v1690, 0
  %1695 = vmatprep.subr.mxu0 0.0
  %1696 = vmatpush1.xpose.msra.mxu0 %v1693
  %1697 = vmatprep.subr.mxu0 0.0
  %1698 = vmatpush1.xpose.msra.mxu0 0.0
  %1699 = vmatprep.subr.mxu0 0.0
  %1700 = vmatpush1.xpose.msra.mxu0 0.0
  %1701 = vmatprep.subr.mxu0 0.0
  %1702 = vmatpush1.xpose.msra.mxu0 0.0
  %1703 = vmatprep.subr.mxu0 0.0
  %1704 = vmatpush1.xpose.msra.mxu0 0.0
  %1705 = vmatprep.subr.mxu0 0.0
  %1706 = vmatpush1.xpose.msra.mxu0 0.0
  %1707 = vmatprep.subr.mxu0 0.0
  %1708 = vmatpush1.xpose.msra.mxu0 0.0
  %1709 = vmatprep.subr.mxu0 0.0
  %1710 = vmatpush1.xpose.msra.mxu0 0.0
  %1711 = vmatprep.subr.mxu0 0.0
  %1712 = vmatpush1.xpose.msra.mxu0 0.0
  %1713 = vmatprep.subr.mxu0 0.0
  %1714 = vmatpush1.xpose.msra.mxu0 0.0
  %1715 = vmatprep.subr.mxu0 0.0
  %1716 = vmatpush1.xpose.msra.mxu0 0.0
  %1717 = vmatprep.subr.mxu0 0.0
  %1718 = vmatpush1.xpose.msra.mxu0 0.0
  %1719 = vmatprep.subr.mxu0 0.0
  %1720 = vmatpush1.xpose.msra.mxu0 0.0
  %1721 = vmatprep.subr.mxu0 0.0
  %1722 = vmatpush1.xpose.msra.mxu0 0.0
  %1723 = vmatprep.subr.mxu0 0.0
  %1724 = vmatpush1.xpose.msra.mxu0 0.0
  %1725 = vmatprep.subr.mxu0 0.0
  %1726 = vmatpush1.xpose.msra.mxu0 0.0
  %1727 = vmatprep.subr.mxu0 0.0
  %1728 = vmatpush1.xpose.msra.mxu0 0.0
  %1729 = vmatprep.subr.mxu0 0.0
  %1730 = vmatpush1.xpose.msra.mxu0 0.0
  %1731 = vmatprep.subr.mxu0 0.0
  %1732 = vmatpush1.xpose.msra.mxu0 0.0
  %1733 = vmatprep.subr.mxu0 0.0
  %1734 = vmatpush1.xpose.msra.mxu0 0.0
  %1735 = vmatprep.subr.mxu0 0.0
  %1736 = vmatpush1.xpose.msra.mxu0 0.0
  %1737 = vmatprep.subr.mxu0 0.0
  %1738 = vmatpush1.xpose.msra.mxu0 0.0
  %1739 = vmatprep.subr.mxu0 0.0
  %1740 = vmatpush1.xpose.msra.mxu0 0.0
  %1741 = vmatprep.subr.mxu0 0.0
  %1742 = vmatpush1.xpose.msra.mxu0 0.0
  %1743 = vmatprep.subr.mxu0 0.0
  %1744 = vmatpush1.xpose.msra.mxu0 0.0
  %1745 = vmatprep.subr.mxu0 0.0
  %1746 = vmatpush1.xpose.msra.mxu0 0.0
  %1747 = vmatprep.subr.mxu0 0.0
  %1748 = vmatpush1.xpose.msra.mxu0 0.0
  %1749 = vmatprep.subr.mxu0 0.0
  %1750 = vmatpush1.xpose.msra.mxu0 0.0
  %1751 = vmatprep.subr.mxu0 0.0
  %1752 = vmatpush1.xpose.msra.mxu0 0.0
  %1753 = vmatprep.subr.mxu0 0.0
  %1754 = vmatpush1.xpose.msra.mxu0 0.0
  %1755 = vmatprep.subr.mxu0 0.0
  %1756 = vmatpush1.xpose.msra.mxu0 0.0
  %1757 = vmatprep.subr.mxu0 0.0
  %1758 = vmatpush1.xpose.msra.mxu0 0.0
  %1759 = vmatprep.mubr.f32.mxu0 0.0
  %1760 = vmatmul.mubr.f32.gmra.mrb[0].mxu0 %v1691
  %v1761 = vpop.f32.mrb[0].mxu0
  %v1762 = vadd.f32 0.0, %v1761
  %v1763 = vpop.f32.mrb[0].mxu0
  %1764 = vdwg.mxu0
  %v1765 = vmul.f32 %v1762, 0.17677669
  %v1766 = vsel %vm1173, %v1765, -inf
  %1767 = vmax.xlane.f32.xlu0 %v1766
  %v1768 = vpop.xlane.xlu0 %1767
  %v1769 = vsub.f32 %v1765, %v1768
  %v1770 = vmul.f32 %v1769, 1.442695
  %v1771 = vpow.pop %v1770
  %v1772 = vsel %vm1173, %v1771, 0.0
  %1773 = vadd.xlane.f32.xlu0 %v1772
  %v1774 = vpop.xlane.xlu0 %1773
  %v1775 = vrcp.pop %v1774
  %v1776 = vmul.f32 %v1771, %v1775
  %v1777 = vpack.c.bf16 %v1776, %v1776
  %1778 = vrot.lane.b32.xlu0 %v1186, 32
  %v1779 = vpop.permute.xlu0 %1778
  %v1781 = vsel %vm1187, %v1777, 0
  %v1784 = vand.u32 %v1779, %v1193
  %1786 = vmatprep.subr.bf16.mxu0 0
  %1787 = vmatpush1.bf16.msra.mxu0 %v1784
  %1788 = vmatprep.subr.bf16.mxu0 0
  %1789 = vmatpush1.bf16.msra.mxu0 0
  %1790 = vmatprep.subr.bf16.mxu0 0
  %1791 = vmatpush1.bf16.msra.mxu0 0
  %1792 = vmatprep.subr.bf16.mxu0 0
  %1793 = vmatpush1.bf16.msra.mxu0 0
  %1794 = vmatprep.subr.bf16.mxu0 0
  %1795 = vmatpush1.bf16.msra.mxu0 0
  %1796 = vmatprep.subr.bf16.mxu0 0
  %1797 = vmatpush1.bf16.msra.mxu0 0
  %1798 = vmatprep.subr.bf16.mxu0 0
  %1799 = vmatpush1.bf16.msra.mxu0 0
  %1800 = vmatprep.subr.bf16.mxu0 0
  %1801 = vmatpush1.bf16.msra.mxu0 0
  %1802 = vmatprep.subr.bf16.mxu0 0
  %1803 = vmatpush1.bf16.msra.mxu0 0
  %1804 = vmatprep.subr.bf16.mxu0 0
  %1805 = vmatpush1.bf16.msra.mxu0 0
  %1806 = vmatprep.subr.bf16.mxu0 0
  %1807 = vmatpush1.bf16.msra.mxu0 0
  %1808 = vmatprep.subr.bf16.mxu0 0
  %1809 = vmatpush1.bf16.msra.mxu0 0
  %1810 = vmatprep.subr.bf16.mxu0 0
  %1811 = vmatpush1.bf16.msra.mxu0 0
  %1812 = vmatprep.subr.bf16.mxu0 0
  %1813 = vmatpush1.bf16.msra.mxu0 0
  %1814 = vmatprep.subr.bf16.mxu0 0
  %1815 = vmatpush1.bf16.msra.mxu0 0
  %1816 = vmatprep.subr.bf16.mxu0 0
  %1817 = vmatpush1.bf16.msra.mxu0 0
  %1818 = vmatprep.mubr.bf16.mxu0 0
  %1819 = vmatmul.mubr.bf16.gmra.mrb[0].mxu0 %v1781
  %v1820 = vpop.f32.mrb[0].mxu0
  %v1821 = vadd.f32 0.0, %v1820
  %v1822 = vpop.f32.mrb[0].mxu0
  %v1823 = vpop.f32.mrb[0].mxu0
  %v1824 = vpop.f32.mrb[0].mxu0
  %1825 = vdwg.mxu0
  %v1826 = vpack.c.bf16 %v1821, %v1821
  %v1831 = vunpack.c.l.b16 %v1088
  %v1832 = vunpack.c.l.b16 %v1089
  %v1833 = vunpack.c.l.b16 %v1090
  %v1834 = vunpack.c.l.b16 %v1091
  %v1835 = vpack.c.b16 %v1832, %v1831
  %v1836 = vpack.c.b16 %v1834, %v1833
  %v1840 = vsel %vm1095, %v1826, 0
  %1842 = vmatprep.subr.bf16.mxu0 0
  %1843 = vmatpush1.bf16.msra.mxu0 %v1835
  %1844 = vmatprep.subr.bf16.mxu0 0
  %1845 = vmatpush1.bf16.msra.mxu0 %v1836
  %1846 = vmatprep.subr.bf16.mxu0 0
  %1847 = vmatpush1.bf16.msra.mxu0 0
  %1848 = vmatprep.subr.bf16.mxu0 0
  %1849 = vmatpush1.bf16.msra.mxu0 0
  %1850 = vmatprep.subr.bf16.mxu0 0
  %1851 = vmatpush1.bf16.msra.mxu0 0
  %1852 = vmatprep.subr.bf16.mxu0 0
  %1853 = vmatpush1.bf16.msra.mxu0 0
  %1854 = vmatprep.subr.bf16.mxu0 0
  %1855 = vmatpush1.bf16.msra.mxu0 0
  %1856 = vmatprep.subr.bf16.mxu0 0
  %1857 = vmatpush1.bf16.msra.mxu0 0
  %1858 = vmatprep.subr.bf16.mxu0 0
  %1859 = vmatpush1.bf16.msra.mxu0 0
  %1860 = vmatprep.subr.bf16.mxu0 0
  %1861 = vmatpush1.bf16.msra.mxu0 0
  %1862 = vmatprep.subr.bf16.mxu0 0
  %1863 = vmatpush1.bf16.msra.mxu0 0
  %1864 = vmatprep.subr.bf16.mxu0 0
  %1865 = vmatpush1.bf16.msra.mxu0 0
  %1866 = vmatprep.subr.bf16.mxu0 0
  %1867 = vmatpush1.bf16.msra.mxu0 0
  %1868 = vmatprep.subr.bf16.mxu0 0
  %1869 = vmatpush1.bf16.msra.mxu0 0
  %1870 = vmatprep.subr.bf16.mxu0 0
  %1871 = vmatpush1.bf16.msra.mxu0 0
  %1872 = vmatprep.subr.bf16.mxu0 0
  %1873 = vmatpush1.bf16.msra.mxu0 0
  %1874 = vmatprep.mubr.bf16.mxu0 0
  %1875 = vmatmul.mubr.bf16.gmra.mrb[0].mxu0 %v1840
  %v1876 = vpop.f32.mrb[0].mxu0
  %v1877 = vadd.f32 0.0, %v1876
  %v1878 = vpop.f32.mrb[0].mxu0
  %v1879 = vpop.f32.mrb[0].mxu0
  %v1880 = vpop.f32.mrb[0].mxu0
  %1881 = vdwg.mxu0
  %v1882 = vadd.f32 %v1686, %v1877
  %v1883 = vld [vmem:[#allocation2] sm:$0x1f]
  %v1884 = vadd.f32 %v1883, %v1882
  %1885 = vst [vmem:[#allocation2] sm:$0x1f] %v1884
  %v1886 = vld [vmem:[#allocation3] sm:$0xe0]
  %v1887 = vld [vmem:[#allocation3 + $0x18] sm:$0x3]
  %v1888 = vld [vmem:[#allocation3 + $0x8] sm:$0xe0]
  %v1889 = vld [vmem:[#allocation3 + $0x20] sm:$0x3]
  %v1890 = vld [vmem:[#allocation3 + $0x10] sm:$0xe0]
  %v1891 = vld [vmem:[#allocation3 + $0x28] sm:$0x3]
  %v1894 = vrot.slane %v1886, 5
  %v1895 = vrot.slane %v1887, 5
  %v1896 = vsel %vm1191, %v1894, %v1895
  %v1899 = vrot.slane %v1888, 5
  %v1900 = vrot.slane %v1889, 5
  %v1901 = vsel %vm1191, %v1899, %v1900
  %v1902 = vsel %vm1095, %v1896, 0
  %v1904 = vsel %vm1095, %v1901, 0
  %1906 = vmatprep.subr.mxu0 0.0
  %1907 = vmatpush1.xpose.msra.mxu0 %v1904
  %1908 = vmatprep.subr.mxu0 0.0
  %1909 = vmatpush1.xpose.msra.mxu0 0.0
  %1910 = vmatprep.subr.mxu0 0.0
  %1911 = vmatpush1.xpose.msra.mxu0 0.0
  %1912 = vmatprep.subr.mxu0 0.0
  %1913 = vmatpush1.xpose.msra.mxu0 0.0
  %1914 = vmatprep.subr.mxu0 0.0
  %1915 = vmatpush1.xpose.msra.mxu0 0.0
  %1916 = vmatprep.subr.mxu0 0.0
  %1917 = vmatpush1.xpose.msra.mxu0 0.0
  %1918 = vmatprep.subr.mxu0 0.0
  %1919 = vmatpush1.xpose.msra.mxu0 0.0
  %1920 = vmatprep.subr.mxu0 0.0
  %1921 = vmatpush1.xpose.msra.mxu0 0.0
  %1922 = vmatprep.subr.mxu0 0.0
  %1923 = vmatpush1.xpose.msra.mxu0 0.0
  %1924 = vmatprep.subr.mxu0 0.0
  %1925 = vmatpush1.xpose.msra.mxu0 0.0
  %1926 = vmatprep.subr.mxu0 0.0
  %1927 = vmatpush1.xpose.msra.mxu0 0.0
  %1928 = vmatprep.subr.mxu0 0.0
  %1929 = vmatpush1.xpose.msra.mxu0 0.0
  %1930 = vmatprep.subr.mxu0 0.0
  %1931 = vmatpush1.xpose.msra.mxu0 0.0
  %1932 = vmatprep.subr.mxu0 0.0
  %1933 = vmatpush1.xpose.msra.mxu0 0.0
  %1934 = vmatprep.subr.mxu0 0.0
  %1935 = vmatpush1.xpose.msra.mxu0 0.0
  %1936 = vmatprep.subr.mxu0 0.0
  %1937 = vmatpush1.xpose.msra.mxu0 0.0
  %1938 = vmatprep.subr.mxu0 0.0
  %1939 = vmatpush1.xpose.msra.mxu0 0.0
  %1940 = vmatprep.subr.mxu0 0.0
  %1941 = vmatpush1.xpose.msra.mxu0 0.0
  %1942 = vmatprep.subr.mxu0 0.0
  %1943 = vmatpush1.xpose.msra.mxu0 0.0
  %1944 = vmatprep.subr.mxu0 0.0
  %1945 = vmatpush1.xpose.msra.mxu0 0.0
  %1946 = vmatprep.subr.mxu0 0.0
  %1947 = vmatpush1.xpose.msra.mxu0 0.0
  %1948 = vmatprep.subr.mxu0 0.0
  %1949 = vmatpush1.xpose.msra.mxu0 0.0
  %1950 = vmatprep.subr.mxu0 0.0
  %1951 = vmatpush1.xpose.msra.mxu0 0.0
  %1952 = vmatprep.subr.mxu0 0.0
  %1953 = vmatpush1.xpose.msra.mxu0 0.0
  %1954 = vmatprep.subr.mxu0 0.0
  %1955 = vmatpush1.xpose.msra.mxu0 0.0
  %1956 = vmatprep.subr.mxu0 0.0
  %1957 = vmatpush1.xpose.msra.mxu0 0.0
  %1958 = vmatprep.subr.mxu0 0.0
  %1959 = vmatpush1.xpose.msra.mxu0 0.0
  %1960 = vmatprep.subr.mxu0 0.0
  %1961 = vmatpush1.xpose.msra.mxu0 0.0
  %1962 = vmatprep.subr.mxu0 0.0
  %1963 = vmatpush1.xpose.msra.mxu0 0.0
  %1964 = vmatprep.subr.mxu0 0.0
  %1965 = vmatpush1.xpose.msra.mxu0 0.0
  %1966 = vmatprep.subr.mxu0 0.0
  %1967 = vmatpush1.xpose.msra.mxu0 0.0
  %1968 = vmatprep.subr.mxu0 0.0
  %1969 = vmatpush1.xpose.msra.mxu0 0.0
  %1970 = vmatprep.mubr.f32.mxu0 0.0
  %1971 = vmatmul.mubr.f32.gmra.mrb[0].mxu0 %v1902
  %v1972 = vpop.f32.mrb[0].mxu0
  %v1973 = vadd.f32 0.0, %v1972
  %v1974 = vpop.f32.mrb[0].mxu0
  %1975 = vdwg.mxu0
  %v1976 = vmul.f32 %v1973, 0.17677669
  %v1977 = vsel %vm1173, %v1976, -inf
  %1978 = vmax.xlane.f32.xlu0 %v1977
  %v1979 = vpop.xlane.xlu0 %1978
  %v1980 = vsub.f32 %v1976, %v1979
  %v1981 = vmul.f32 %v1980, 1.442695
  %v1982 = vpow.pop %v1981
  %v1983 = vsel %vm1173, %v1982, 0.0
  %1984 = vadd.xlane.f32.xlu0 %v1983
  %v1985 = vpop.xlane.xlu0 %1984
  %v1986 = vrcp.pop %v1985
  %v1987 = vmul.f32 %v1982, %v1986
  %v1988 = vpack.c.bf16 %v1987, %v1987
  %v1989 = vpack.c.bf16 %v1891, %v1890
  %v1991 = vshrl.u32 %v1989, 16
  %v1993 = vrot.slane %v1991, 2
  %v1994 = vshll.u32 %v1989, 16
  %v1996 = vrot.slane %v1994, 3
  %v1997 = vor.u32 %v1993, %v1996
  %v1999 = vsel %vm1187, %v1988, 0
  %v2002 = vand.u32 %v1997, %v1193
  %2004 = vmatprep.subr.bf16.mxu0 0
  %2005 = vmatpush1.bf16.msra.mxu0 %v2002
  %2006 = vmatprep.subr.bf16.mxu0 0
  %2007 = vmatpush1.bf16.msra.mxu0 0
  %2008 = vmatprep.subr.bf16.mxu0 0
  %2009 = vmatpush1.bf16.msra.mxu0 0
  %2010 = vmatprep.subr.bf16.mxu0 0
  %2011 = vmatpush1.bf16.msra.mxu0 0
  %2012 = vmatprep.subr.bf16.mxu0 0
  %2013 = vmatpush1.bf16.msra.mxu0 0
  %2014 = vmatprep.subr.bf16.mxu0 0
  %2015 = vmatpush1.bf16.msra.mxu0 0
  %2016 = vmatprep.subr.bf16.mxu0 0
  %2017 = vmatpush1.bf16.msra.mxu0 0
  %2018 = vmatprep.subr.bf16.mxu0 0
  %2019 = vmatpush1.bf16.msra.mxu0 0
  %2020 = vmatprep.subr.bf16.mxu0 0
  %2021 = vmatpush1.bf16.msra.mxu0 0
  %2022 = vmatprep.subr.bf16.mxu0 0
  %2023 = vmatpush1.bf16.msra.mxu0 0
  %2024 = vmatprep.subr.bf16.mxu0 0
  %2025 = vmatpush1.bf16.msra.mxu0 0
  %2026 = vmatprep.subr.bf16.mxu0 0
  %2027 = vmatpush1.bf16.msra.mxu0 0
  %2028 = vmatprep.subr.bf16.mxu0 0
  %2029 = vmatpush1.bf16.msra.mxu0 0
  %2030 = vmatprep.subr.bf16.mxu0 0
  %2031 = vmatpush1.bf16.msra.mxu0 0
  %2032 = vmatprep.subr.bf16.mxu0 0
  %2033 = vmatpush1.bf16.msra.mxu0 0
  %2034 = vmatprep.subr.bf16.mxu0 0
  %2035 = vmatpush1.bf16.msra.mxu0 0
  %2036 = vmatprep.mubr.bf16.mxu0 0
  %2037 = vmatmul.mubr.bf16.gmra.mrb[0].mxu0 %v1999
  %v2038 = vpop.f32.mrb[0].mxu0
  %v2039 = vadd.f32 0.0, %v2038
  %v2040 = vpop.f32.mrb[0].mxu0
  %v2041 = vpop.f32.mrb[0].mxu0
  %v2042 = vpop.f32.mrb[0].mxu0
  %2043 = vdwg.mxu0
  %v2044 = vpack.c.bf16 %v2039, %v2039
  %v2046 = vsel %vm1095, %v2044, 0
  %2048 = vmatprep.subr.bf16.mxu0 0
  %2049 = vmatpush1.bf16.msra.mxu0 %v1246
  %2050 = vmatprep.subr.bf16.mxu0 0
  %2051 = vmatpush1.bf16.msra.mxu0 %v1247
  %2052 = vmatprep.subr.bf16.mxu0 0
  %2053 = vmatpush1.bf16.msra.mxu0 0
  %2054 = vmatprep.subr.bf16.mxu0 0
  %2055 = vmatpush1.bf16.msra.mxu0 0
  %2056 = vmatprep.subr.bf16.mxu0 0
  %2057 = vmatpush1.bf16.msra.mxu0 0
  %2058 = vmatprep.subr.bf16.mxu0 0
  %2059 = vmatpush1.bf16.msra.mxu0 0
  %2060 = vmatprep.subr.bf16.mxu0 0
  %2061 = vmatpush1.bf16.msra.mxu0 0
  %2062 = vmatprep.subr.bf16.mxu0 0
  %2063 = vmatpush1.bf16.msra.mxu0 0
  %2064 = vmatprep.subr.bf16.mxu0 0
  %2065 = vmatpush1.bf16.msra.mxu0 0
  %2066 = vmatprep.subr.bf16.mxu0 0
  %2067 = vmatpush1.bf16.msra.mxu0 0
  %2068 = vmatprep.subr.bf16.mxu0 0
  %2069 = vmatpush1.bf16.msra.mxu0 0
  %2070 = vmatprep.subr.bf16.mxu0 0
  %2071 = vmatpush1.bf16.msra.mxu0 0
  %2072 = vmatprep.subr.bf16.mxu0 0
  %2073 = vmatpush1.bf16.msra.mxu0 0
  %2074 = vmatprep.subr.bf16.mxu0 0
  %2075 = vmatpush1.bf16.msra.mxu0 0
  %2076 = vmatprep.subr.bf16.mxu0 0
  %2077 = vmatpush1.bf16.msra.mxu0 0
  %2078 = vmatprep.subr.bf16.mxu0 0
  %2079 = vmatpush1.bf16.msra.mxu0 0
  %2080 = vmatprep.mubr.bf16.mxu0 0
  %2081 = vmatmul.mubr.bf16.gmra.mrb[0].mxu0 %v2046
  %v2082 = vpop.f32.mrb[0].mxu0
  %v2083 = vadd.f32 0.0, %v2082
  %v2084 = vpop.f32.mrb[0].mxu0
  %v2085 = vpop.f32.mrb[0].mxu0
  %v2086 = vpop.f32.mrb[0].mxu0
  %2087 = vdwg.mxu0
  %v2088 = vadd.f32 %v771, %v2083
  %2089 = vrot.lane.b32.xlu0 %v1896, 96
  %v2090 = vpop.permute.xlu0 %2089
  %2091 = vrot.lane.b32.xlu0 %v1901, 96
  %v2092 = vpop.permute.xlu0 %2091
  %v2093 = vsel %vm1095, %v2090, 0
  %v2095 = vsel %vm1095, %v2092, 0
  %2097 = vmatprep.subr.mxu0 0.0
  %2098 = vmatpush1.xpose.msra.mxu0 %v2095
  %2099 = vmatprep.subr.mxu0 0.0
  %2100 = vmatpush1.xpose.msra.mxu0 0.0
  %2101 = vmatprep.subr.mxu0 0.0
  %2102 = vmatpush1.xpose.msra.mxu0 0.0
  %2103 = vmatprep.subr.mxu0 0.0
  %2104 = vmatpush1.xpose.msra.mxu0 0.0
  %2105 = vmatprep.subr.mxu0 0.0
  %2106 = vmatpush1.xpose.msra.mxu0 0.0
  %2107 = vmatprep.subr.mxu0 0.0
  %2108 = vmatpush1.xpose.msra.mxu0 0.0
  %2109 = vmatprep.subr.mxu0 0.0
  %2110 = vmatpush1.xpose.msra.mxu0 0.0
  %2111 = vmatprep.subr.mxu0 0.0
  %2112 = vmatpush1.xpose.msra.mxu0 0.0
  %2113 = vmatprep.subr.mxu0 0.0
  %2114 = vmatpush1.xpose.msra.mxu0 0.0
  %2115 = vmatprep.subr.mxu0 0.0
  %2116 = vmatpush1.xpose.msra.mxu0 0.0
  %2117 = vmatprep.subr.mxu0 0.0
  %2118 = vmatpush1.xpose.msra.mxu0 0.0
  %2119 = vmatprep.subr.mxu0 0.0
  %2120 = vmatpush1.xpose.msra.mxu0 0.0
  %2121 = vmatprep.subr.mxu0 0.0
  %2122 = vmatpush1.xpose.msra.mxu0 0.0
  %2123 = vmatprep.subr.mxu0 0.0
  %2124 = vmatpush1.xpose.msra.mxu0 0.0
  %2125 = vmatprep.subr.mxu0 0.0
  %2126 = vmatpush1.xpose.msra.mxu0 0.0
  %2127 = vmatprep.subr.mxu0 0.0
  %2128 = vmatpush1.xpose.msra.mxu0 0.0
  %2129 = vmatprep.subr.mxu0 0.0
  %2130 = vmatpush1.xpose.msra.mxu0 0.0
  %2131 = vmatprep.subr.mxu0 0.0
  %2132 = vmatpush1.xpose.msra.mxu0 0.0
  %2133 = vmatprep.subr.mxu0 0.0
  %2134 = vmatpush1.xpose.msra.mxu0 0.0
  %2135 = vmatprep.subr.mxu0 0.0
  %2136 = vmatpush1.xpose.msra.mxu0 0.0
  %2137 = vmatprep.subr.mxu0 0.0
  %2138 = vmatpush1.xpose.msra.mxu0 0.0
  %2139 = vmatprep.subr.mxu0 0.0
  %2140 = vmatpush1.xpose.msra.mxu0 0.0
  %2141 = vmatprep.subr.mxu0 0.0
  %2142 = vmatpush1.xpose.msra.mxu0 0.0
  %2143 = vmatprep.subr.mxu0 0.0
  %2144 = vmatpush1.xpose.msra.mxu0 0.0
  %2145 = vmatprep.subr.mxu0 0.0
  %2146 = vmatpush1.xpose.msra.mxu0 0.0
  %2147 = vmatprep.subr.mxu0 0.0
  %2148 = vmatpush1.xpose.msra.mxu0 0.0
  %2149 = vmatprep.subr.mxu0 0.0
  %2150 = vmatpush1.xpose.msra.mxu0 0.0
  %2151 = vmatprep.subr.mxu0 0.0
  %2152 = vmatpush1.xpose.msra.mxu0 0.0
  %2153 = vmatprep.subr.mxu0 0.0
  %2154 = vmatpush1.xpose.msra.mxu0 0.0
  %2155 = vmatprep.subr.mxu0 0.0
  %2156 = vmatpush1.xpose.msra.mxu0 0.0
  %2157 = vmatprep.subr.mxu0 0.0
  %2158 = vmatpush1.xpose.msra.mxu0 0.0
  %2159 = vmatprep.subr.mxu0 0.0
  %2160 = vmatpush1.xpose.msra.mxu0 0.0
  %2161 = vmatprep.mubr.f32.mxu0 0.0
  %2162 = vmatmul.mubr.f32.gmra.mrb[0].mxu0 %v2093
  %v2163 = vpop.f32.mrb[0].mxu0
  %v2164 = vadd.f32 0.0, %v2163
  %v2165 = vpop.f32.mrb[0].mxu0
  %2166 = vdwg.mxu0
  %v2167 = vmul.f32 %v2164, 0.17677669
  %v2168 = vsel %vm1173, %v2167, -inf
  %2169 = vmax.xlane.f32.xlu0 %v2168
  %v2170 = vpop.xlane.xlu0 %2169
  %v2171 = vsub.f32 %v2167, %v2170
  %v2172 = vmul.f32 %v2171, 1.442695
  %v2173 = vpow.pop %v2172
  %v2174 = vsel %vm1173, %v2173, 0.0
  %2175 = vadd.xlane.f32.xlu0 %v2174
  %v2176 = vpop.xlane.xlu0 %2175
  %v2177 = vrcp.pop %v2176
  %v2178 = vmul.f32 %v2173, %v2177
  %v2179 = vpack.c.bf16 %v2178, %v2178
  %2180 = vrot.lane.b32.xlu0 %v1997, 96
  %v2181 = vpop.permute.xlu0 %2180
  %v2183 = vsel %vm1187, %v2179, 0
  %v2186 = vand.u32 %v2181, %v1193
  %2188 = vmatprep.subr.bf16.mxu0 0
  %2189 = vmatpush1.bf16.msra.mxu0 %v2186
  %2190 = vmatprep.subr.bf16.mxu0 0
  %2191 = vmatpush1.bf16.msra.mxu0 0
  %2192 = vmatprep.subr.bf16.mxu0 0
  %2193 = vmatpush1.bf16.msra.mxu0 0
  %2194 = vmatprep.subr.bf16.mxu0 0
  %2195 = vmatpush1.bf16.msra.mxu0 0
  %2196 = vmatprep.subr.bf16.mxu0 0
  %2197 = vmatpush1.bf16.msra.mxu0 0
  %2198 = vmatprep.subr.bf16.mxu0 0
  %2199 = vmatpush1.bf16.msra.mxu0 0
  %2200 = vmatprep.subr.bf16.mxu0 0
  %2201 = vmatpush1.bf16.msra.mxu0 0
  %2202 = vmatprep.subr.bf16.mxu0 0
  %2203 = vmatpush1.bf16.msra.mxu0 0
  %2204 = vmatprep.subr.bf16.mxu0 0
  %2205 = vmatpush1.bf16.msra.mxu0 0
  %2206 = vmatprep.subr.bf16.mxu0 0
  %2207 = vmatpush1.bf16.msra.mxu0 0
  %2208 = vmatprep.subr.bf16.mxu0 0
  %2209 = vmatpush1.bf16.msra.mxu0 0
  %2210 = vmatprep.subr.bf16.mxu0 0
  %2211 = vmatpush1.bf16.msra.mxu0 0
  %2212 = vmatprep.subr.bf16.mxu0 0
  %2213 = vmatpush1.bf16.msra.mxu0 0
  %2214 = vmatprep.subr.bf16.mxu0 0
  %2215 = vmatpush1.bf16.msra.mxu0 0
  %2216 = vmatprep.subr.bf16.mxu0 0
  %2217 = vmatpush1.bf16.msra.mxu0 0
  %2218 = vmatprep.subr.bf16.mxu0 0
  %2219 = vmatpush1.bf16.msra.mxu0 0
  %2220 = vmatprep.mubr.bf16.mxu0 0
  %2221 = vmatmul.mubr.bf16.gmra.mrb[0].mxu0 %v2183
  %v2222 = vpop.f32.mrb[0].mxu0
  %v2223 = vadd.f32 0.0, %v2222
  %v2224 = vpop.f32.mrb[0].mxu0
  %v2225 = vpop.f32.mrb[0].mxu0
  %v2226 = vpop.f32.mrb[0].mxu0
  %2227 = vdwg.mxu0
  %v2228 = vpack.c.bf16 %v2223, %v2223
  %v2230 = vsel %vm1095, %v2228, 0
  %2232 = vmatprep.subr.bf16.mxu0 0
  %2233 = vmatpush1.bf16.msra.mxu0 %v1443
  %2234 = vmatprep.subr.bf16.mxu0 0
  %2235 = vmatpush1.bf16.msra.mxu0 %v1444
  %2236 = vmatprep.subr.bf16.mxu0 0
  %2237 = vmatpush1.bf16.msra.mxu0 0
  %2238 = vmatprep.subr.bf16.mxu0 0
  %2239 = vmatpush1.bf16.msra.mxu0 0
  %2240 = vmatprep.subr.bf16.mxu0 0
  %2241 = vmatpush1.bf16.msra.mxu0 0
  %2242 = vmatprep.subr.bf16.mxu0 0
  %2243 = vmatpush1.bf16.msra.mxu0 0
  %2244 = vmatprep.subr.bf16.mxu0 0
  %2245 = vmatpush1.bf16.msra.mxu0 0
  %2246 = vmatprep.subr.bf16.mxu0 0
  %2247 = vmatpush1.bf16.msra.mxu0 0
  %2248 = vmatprep.subr.bf16.mxu0 0
  %2249 = vmatpush1.bf16.msra.mxu0 0
  %2250 = vmatprep.subr.bf16.mxu0 0
  %2251 = vmatpush1.bf16.msra.mxu0 0
  %2252 = vmatprep.subr.bf16.mxu0 0
  %2253 = vmatpush1.bf16.msra.mxu0 0
  %2254 = vmatprep.subr.bf16.mxu0 0
  %2255 = vmatpush1.bf16.msra.mxu0 0
  %2256 = vmatprep.subr.bf16.mxu0 0
  %2257 = vmatpush1.bf16.msra.mxu0 0
  %2258 = vmatprep.subr.bf16.mxu0 0
  %2259 = vmatpush1.bf16.msra.mxu0 0
  %2260 = vmatprep.subr.bf16.mxu0 0
  %2261 = vmatpush1.bf16.msra.mxu0 0
  %2262 = vmatprep.subr.bf16.mxu0 0
  %2263 = vmatpush1.bf16.msra.mxu0 0
  %2264 = vmatprep.mubr.bf16.mxu0 0
  %2265 = vmatmul.mubr.bf16.gmra.mrb[0].mxu0 %v2230
  %v2266 = vpop.f32.mrb[0].mxu0
  %v2267 = vadd.f32 0.0, %v2266
  %v2268 = vpop.f32.mrb[0].mxu0
  %v2269 = vpop.f32.mrb[0].mxu0
  %v2270 = vpop.f32.mrb[0].mxu0
  %2271 = vdwg.mxu0
  %v2272 = vadd.f32 %v2088, %v2267
  %2273 = vrot.lane.b32.xlu0 %v1896, 64
  %v2274 = vpop.permute.xlu0 %2273
  %2275 = vrot.lane.b32.xlu0 %v1901, 64
  %v2276 = vpop.permute.xlu0 %2275
  %v2277 = vsel %vm1095, %v2274, 0
  %v2279 = vsel %vm1095, %v2276, 0
  %2281 = vmatprep.subr.mxu0 0.0
  %2282 = vmatpush1.xpose.msra.mxu0 %v2279
  %2283 = vmatprep.subr.mxu0 0.0
  %2284 = vmatpush1.xpose.msra.mxu0 0.0
  %2285 = vmatprep.subr.mxu0 0.0
  %2286 = vmatpush1.xpose.msra.mxu0 0.0
  %2287 = vmatprep.subr.mxu0 0.0
  %2288 = vmatpush1.xpose.msra.mxu0 0.0
  %2289 = vmatprep.subr.mxu0 0.0
  %2290 = vmatpush1.xpose.msra.mxu0 0.0
  %2291 = vmatprep.subr.mxu0 0.0
  %2292 = vmatpush1.xpose.msra.mxu0 0.0
  %2293 = vmatprep.subr.mxu0 0.0
  %2294 = vmatpush1.xpose.msra.mxu0 0.0
  %2295 = vmatprep.subr.mxu0 0.0
  %2296 = vmatpush1.xpose.msra.mxu0 0.0
  %2297 = vmatprep.subr.mxu0 0.0
  %2298 = vmatpush1.xpose.msra.mxu0 0.0
  %2299 = vmatprep.subr.mxu0 0.0
  %2300 = vmatpush1.xpose.msra.mxu0 0.0
  %2301 = vmatprep.subr.mxu0 0.0
  %2302 = vmatpush1.xpose.msra.mxu0 0.0
  %2303 = vmatprep.subr.mxu0 0.0
  %2304 = vmatpush1.xpose.msra.mxu0 0.0
  %2305 = vmatprep.subr.mxu0 0.0
  %2306 = vmatpush1.xpose.msra.mxu0 0.0
  %2307 = vmatprep.subr.mxu0 0.0
  %2308 = vmatpush1.xpose.msra.mxu0 0.0
  %2309 = vmatprep.subr.mxu0 0.0
  %2310 = vmatpush1.xpose.msra.mxu0 0.0
  %2311 = vmatprep.subr.mxu0 0.0
  %2312 = vmatpush1.xpose.msra.mxu0 0.0
  %2313 = vmatprep.subr.mxu0 0.0
  %2314 = vmatpush1.xpose.msra.mxu0 0.0
  %2315 = vmatprep.subr.mxu0 0.0
  %2316 = vmatpush1.xpose.msra.mxu0 0.0
  %2317 = vmatprep.subr.mxu0 0.0
  %2318 = vmatpush1.xpose.msra.mxu0 0.0
  %2319 = vmatprep.subr.mxu0 0.0
  %2320 = vmatpush1.xpose.msra.mxu0 0.0
  %2321 = vmatprep.subr.mxu0 0.0
  %2322 = vmatpush1.xpose.msra.mxu0 0.0
  %2323 = vmatprep.subr.mxu0 0.0
  %2324 = vmatpush1.xpose.msra.mxu0 0.0
  %2325 = vmatprep.subr.mxu0 0.0
  %2326 = vmatpush1.xpose.msra.mxu0 0.0
  %2327 = vmatprep.subr.mxu0 0.0
  %2328 = vmatpush1.xpose.msra.mxu0 0.0
  %2329 = vmatprep.subr.mxu0 0.0
  %2330 = vmatpush1.xpose.msra.mxu0 0.0
  %2331 = vmatprep.subr.mxu0 0.0
  %2332 = vmatpush1.xpose.msra.mxu0 0.0
  %2333 = vmatprep.subr.mxu0 0.0
  %2334 = vmatpush1.xpose.msra.mxu0 0.0
  %2335 = vmatprep.subr.mxu0 0.0
  %2336 = vmatpush1.xpose.msra.mxu0 0.0
  %2337 = vmatprep.subr.mxu0 0.0
  %2338 = vmatpush1.xpose.msra.mxu0 0.0
  %2339 = vmatprep.subr.mxu0 0.0
  %2340 = vmatpush1.xpose.msra.mxu0 0.0
  %2341 = vmatprep.subr.mxu0 0.0
  %2342 = vmatpush1.xpose.msra.mxu0 0.0
  %2343 = vmatprep.subr.mxu0 0.0
  %2344 = vmatpush1.xpose.msra.mxu0 0.0
  %2345 = vmatprep.mubr.f32.mxu0 0.0
  %2346 = vmatmul.mubr.f32.gmra.mrb[0].mxu0 %v2277
  %v2347 = vpop.f32.mrb[0].mxu0
  %v2348 = vadd.f32 0.0, %v2347
  %v2349 = vpop.f32.mrb[0].mxu0
  %2350 = vdwg.mxu0
  %v2351 = vmul.f32 %v2348, 0.17677669
  %v2352 = vsel %vm1173, %v2351, -inf
  %2353 = vmax.xlane.f32.xlu0 %v2352
  %v2354 = vpop.xlane.xlu0 %2353
  %v2355 = vsub.f32 %v2351, %v2354
  %v2356 = vmul.f32 %v2355, 1.442695
  %v2357 = vpow.pop %v2356
  %v2358 = vsel %vm1173, %v2357, 0.0
  %2359 = vadd.xlane.f32.xlu0 %v2358
  %v2360 = vpop.xlane.xlu0 %2359
  %v2361 = vrcp.pop %v2360
  %v2362 = vmul.f32 %v2357, %v2361
  %v2363 = vpack.c.bf16 %v2362, %v2362
  %2364 = vrot.lane.b32.xlu0 %v1997, 64
  %v2365 = vpop.permute.xlu0 %2364
  %v2367 = vsel %vm1187, %v2363, 0
  %v2370 = vand.u32 %v2365, %v1193
  %2372 = vmatprep.subr.bf16.mxu0 0
  %2373 = vmatpush1.bf16.msra.mxu0 %v2370
  %2374 = vmatprep.subr.bf16.mxu0 0
  %2375 = vmatpush1.bf16.msra.mxu0 0
  %2376 = vmatprep.subr.bf16.mxu0 0
  %2377 = vmatpush1.bf16.msra.mxu0 0
  %2378 = vmatprep.subr.bf16.mxu0 0
  %2379 = vmatpush1.bf16.msra.mxu0 0
  %2380 = vmatprep.subr.bf16.mxu0 0
  %2381 = vmatpush1.bf16.msra.mxu0 0
  %2382 = vmatprep.subr.bf16.mxu0 0
  %2383 = vmatpush1.bf16.msra.mxu0 0
  %2384 = vmatprep.subr.bf16.mxu0 0
  %2385 = vmatpush1.bf16.msra.mxu0 0
  %2386 = vmatprep.subr.bf16.mxu0 0
  %2387 = vmatpush1.bf16.msra.mxu0 0
  %2388 = vmatprep.subr.bf16.mxu0 0
  %2389 = vmatpush1.bf16.msra.mxu0 0
  %2390 = vmatprep.subr.bf16.mxu0 0
  %2391 = vmatpush1.bf16.msra.mxu0 0
  %2392 = vmatprep.subr.bf16.mxu0 0
  %2393 = vmatpush1.bf16.msra.mxu0 0
  %2394 = vmatprep.subr.bf16.mxu0 0
  %2395 = vmatpush1.bf16.msra.mxu0 0
  %2396 = vmatprep.subr.bf16.mxu0 0
  %2397 = vmatpush1.bf16.msra.mxu0 0
  %2398 = vmatprep.subr.bf16.mxu0 0
  %2399 = vmatpush1.bf16.msra.mxu0 0
  %2400 = vmatprep.subr.bf16.mxu0 0
  %2401 = vmatpush1.bf16.msra.mxu0 0
  %2402 = vmatprep.subr.bf16.mxu0 0
  %2403 = vmatpush1.bf16.msra.mxu0 0
  %2404 = vmatprep.mubr.bf16.mxu0 0
  %2405 = vmatmul.mubr.bf16.gmra.mrb[0].mxu0 %v2367
  %v2406 = vpop.f32.mrb[0].mxu0
  %v2407 = vadd.f32 0.0, %v2406
  %v2408 = vpop.f32.mrb[0].mxu0
  %v2409 = vpop.f32.mrb[0].mxu0
  %v2410 = vpop.f32.mrb[0].mxu0
  %2411 = vdwg.mxu0
  %v2412 = vpack.c.bf16 %v2407, %v2407
  %v2414 = vsel %vm1095, %v2412, 0
  %2416 = vmatprep.subr.bf16.mxu0 0
  %2417 = vmatpush1.bf16.msra.mxu0 %v1639
  %2418 = vmatprep.subr.bf16.mxu0 0
  %2419 = vmatpush1.bf16.msra.mxu0 %v1640
  %2420 = vmatprep.subr.bf16.mxu0 0
  %2421 = vmatpush1.bf16.msra.mxu0 0
  %2422 = vmatprep.subr.bf16.mxu0 0
  %2423 = vmatpush1.bf16.msra.mxu0 0
  %2424 = vmatprep.subr.bf16.mxu0 0
  %2425 = vmatpush1.bf16.msra.mxu0 0
  %2426 = vmatprep.subr.bf16.mxu0 0
  %2427 = vmatpush1.bf16.msra.mxu0 0
  %2428 = vmatprep.subr.bf16.mxu0 0
  %2429 = vmatpush1.bf16.msra.mxu0 0
  %2430 = vmatprep.subr.bf16.mxu0 0
  %2431 = vmatpush1.bf16.msra.mxu0 0
  %2432 = vmatprep.subr.bf16.mxu0 0
  %2433 = vmatpush1.bf16.msra.mxu0 0
  %2434 = vmatprep.subr.bf16.mxu0 0
  %2435 = vmatpush1.bf16.msra.mxu0 0
  %2436 = vmatprep.subr.bf16.mxu0 0
  %2437 = vmatpush1.bf16.msra.mxu0 0
  %2438 = vmatprep.subr.bf16.mxu0 0
  %2439 = vmatpush1.bf16.msra.mxu0 0
  %2440 = vmatprep.subr.bf16.mxu0 0
  %2441 = vmatpush1.bf16.msra.mxu0 0
  %2442 = vmatprep.subr.bf16.mxu0 0
  %2443 = vmatpush1.bf16.msra.mxu0 0
  %2444 = vmatprep.subr.bf16.mxu0 0
  %2445 = vmatpush1.bf16.msra.mxu0 0
  %2446 = vmatprep.subr.bf16.mxu0 0
  %2447 = vmatpush1.bf16.msra.mxu0 0
  %2448 = vmatprep.mubr.bf16.mxu0 0
  %2449 = vmatmul.mubr.bf16.gmra.mrb[0].mxu0 %v2414
  %v2450 = vpop.f32.mrb[0].mxu0
  %v2451 = vadd.f32 0.0, %v2450
  %v2452 = vpop.f32.mrb[0].mxu0
  %v2453 = vpop.f32.mrb[0].mxu0
  %v2454 = vpop.f32.mrb[0].mxu0
  %2455 = vdwg.mxu0
  %v2456 = vadd.f32 %v2272, %v2451
  %2457 = vrot.lane.b32.xlu0 %v1896, 32
  %v2458 = vpop.permute.xlu0 %2457
  %2459 = vrot.lane.b32.xlu0 %v1901, 32
  %v2460 = vpop.permute.xlu0 %2459
  %v2461 = vsel %vm1095, %v2458, 0
  %v2463 = vsel %vm1095, %v2460, 0
  %2465 = vmatprep.subr.mxu0 0.0
  %2466 = vmatpush1.xpose.msra.mxu0 %v2463
  %2467 = vmatprep.subr.mxu0 0.0
  %2468 = vmatpush1.xpose.msra.mxu0 0.0
  %2469 = vmatprep.subr.mxu0 0.0
  %2470 = vmatpush1.xpose.msra.mxu0 0.0
  %2471 = vmatprep.subr.mxu0 0.0
  %2472 = vmatpush1.xpose.msra.mxu0 0.0
  %2473 = vmatprep.subr.mxu0 0.0
  %2474 = vmatpush1.xpose.msra.mxu0 0.0
  %2475 = vmatprep.subr.mxu0 0.0
  %2476 = vmatpush1.xpose.msra.mxu0 0.0
  %2477 = vmatprep.subr.mxu0 0.0
  %2478 = vmatpush1.xpose.msra.mxu0 0.0
  %2479 = vmatprep.subr.mxu0 0.0
  %2480 = vmatpush1.xpose.msra.mxu0 0.0
  %2481 = vmatprep.subr.mxu0 0.0
  %2482 = vmatpush1.xpose.msra.mxu0 0.0
  %2483 = vmatprep.subr.mxu0 0.0
  %2484 = vmatpush1.xpose.msra.mxu0 0.0
  %2485 = vmatprep.subr.mxu0 0.0
  %2486 = vmatpush1.xpose.msra.mxu0 0.0
  %2487 = vmatprep.subr.mxu0 0.0
  %2488 = vmatpush1.xpose.msra.mxu0 0.0
  %2489 = vmatprep.subr.mxu0 0.0
  %2490 = vmatpush1.xpose.msra.mxu0 0.0
  %2491 = vmatprep.subr.mxu0 0.0
  %2492 = vmatpush1.xpose.msra.mxu0 0.0
  %2493 = vmatprep.subr.mxu0 0.0
  %2494 = vmatpush1.xpose.msra.mxu0 0.0
  %2495 = vmatprep.subr.mxu0 0.0
  %2496 = vmatpush1.xpose.msra.mxu0 0.0
  %2497 = vmatprep.subr.mxu0 0.0
  %2498 = vmatpush1.xpose.msra.mxu0 0.0
  %2499 = vmatprep.subr.mxu0 0.0
  %2500 = vmatpush1.xpose.msra.mxu0 0.0
  %2501 = vmatprep.subr.mxu0 0.0
  %2502 = vmatpush1.xpose.msra.mxu0 0.0
  %2503 = vmatprep.subr.mxu0 0.0
  %2504 = vmatpush1.xpose.msra.mxu0 0.0
  %2505 = vmatprep.subr.mxu0 0.0
  %2506 = vmatpush1.xpose.msra.mxu0 0.0
  %2507 = vmatprep.subr.mxu0 0.0
  %2508 = vmatpush1.xpose.msra.mxu0 0.0
  %2509 = vmatprep.subr.mxu0 0.0
  %2510 = vmatpush1.xpose.msra.mxu0 0.0
  %2511 = vmatprep.subr.mxu0 0.0
  %2512 = vmatpush1.xpose.msra.mxu0 0.0
  %2513 = vmatprep.subr.mxu0 0.0
  %2514 = vmatpush1.xpose.msra.mxu0 0.0
  %2515 = vmatprep.subr.mxu0 0.0
  %2516 = vmatpush1.xpose.msra.mxu0 0.0
  %2517 = vmatprep.subr.mxu0 0.0
  %2518 = vmatpush1.xpose.msra.mxu0 0.0
  %2519 = vmatprep.subr.mxu0 0.0
  %2520 = vmatpush1.xpose.msra.mxu0 0.0
  %2521 = vmatprep.subr.mxu0 0.0
  %2522 = vmatpush1.xpose.msra.mxu0 0.0
  %2523 = vmatprep.subr.mxu0 0.0
  %2524 = vmatpush1.xpose.msra.mxu0 0.0
  %2525 = vmatprep.subr.mxu0 0.0
  %2526 = vmatpush1.xpose.msra.mxu0 0.0
  %2527 = vmatprep.subr.mxu0 0.0
  %2528 = vmatpush1.xpose.msra.mxu0 0.0
  %2529 = vmatprep.mubr.f32.mxu0 0.0
  %2530 = vmatmul.mubr.f32.gmra.mrb[0].mxu0 %v2461
  %v2531 = vpop.f32.mrb[0].mxu0
  %v2532 = vadd.f32 0.0, %v2531
  %v2533 = vpop.f32.mrb[0].mxu0
  %2534 = vdwg.mxu0
  %v2535 = vmul.f32 %v2532, 0.17677669
  %v2536 = vsel %vm1173, %v2535, -inf
  %2537 = vmax.xlane.f32.xlu0 %v2536
  %v2538 = vpop.xlane.xlu0 %2537
  %v2539 = vsub.f32 %v2535, %v2538
  %v2540 = vmul.f32 %v2539, 1.442695
  %v2541 = vpow.pop %v2540
  %v2542 = vsel %vm1173, %v2541, 0.0
  %2543 = vadd.xlane.f32.xlu0 %v2542
  %v2544 = vpop.xlane.xlu0 %2543
  %v2545 = vrcp.pop %v2544
  %v2546 = vmul.f32 %v2541, %v2545
  %v2547 = vpack.c.bf16 %v2546, %v2546
  %2548 = vrot.lane.b32.xlu0 %v1997, 32
  %v2549 = vpop.permute.xlu0 %2548
  %v2551 = vsel %vm1187, %v2547, 0
  %v2554 = vand.u32 %v2549, %v1193
  %2556 = vmatprep.subr.bf16.mxu0 0
  %2557 = vmatpush1.bf16.msra.mxu0 %v2554
  %2558 = vmatprep.subr.bf16.mxu0 0
  %2559 = vmatpush1.bf16.msra.mxu0 0
  %2560 = vmatprep.subr.bf16.mxu0 0
  %2561 = vmatpush1.bf16.msra.mxu0 0
  %2562 = vmatprep.subr.bf16.mxu0 0
  %2563 = vmatpush1.bf16.msra.mxu0 0
  %2564 = vmatprep.subr.bf16.mxu0 0
  %2565 = vmatpush1.bf16.msra.mxu0 0
  %2566 = vmatprep.subr.bf16.mxu0 0
  %2567 = vmatpush1.bf16.msra.mxu0 0
  %2568 = vmatprep.subr.bf16.mxu0 0
  %2569 = vmatpush1.bf16.msra.mxu0 0
  %2570 = vmatprep.subr.bf16.mxu0 0
  %2571 = vmatpush1.bf16.msra.mxu0 0
  %2572 = vmatprep.subr.bf16.mxu0 0
  %2573 = vmatpush1.bf16.msra.mxu0 0
  %2574 = vmatprep.subr.bf16.mxu0 0
  %2575 = vmatpush1.bf16.msra.mxu0 0
  %2576 = vmatprep.subr.bf16.mxu0 0
  %2577 = vmatpush1.bf16.msra.mxu0 0
  %2578 = vmatprep.subr.bf16.mxu0 0
  %2579 = vmatpush1.bf16.msra.mxu0 0
  %2580 = vmatprep.subr.bf16.mxu0 0
  %2581 = vmatpush1.bf16.msra.mxu0 0
  %2582 = vmatprep.subr.bf16.mxu0 0
  %2583 = vmatpush1.bf16.msra.mxu0 0
  %2584 = vmatprep.subr.bf16.mxu0 0
  %2585 = vmatpush1.bf16.msra.mxu0 0
  %2586 = vmatprep.subr.bf16.mxu0 0
  %2587 = vmatpush1.bf16.msra.mxu0 0
  %2588 = vmatprep.mubr.bf16.mxu0 0
  %2589 = vmatmul.mubr.bf16.gmra.mrb[0].mxu0 %v2551
  %v2590 = vpop.f32.mrb[0].mxu0
  %v2591 = vadd.f32 0.0, %v2590
  %v2592 = vpop.f32.mrb[0].mxu0
  %v2593 = vpop.f32.mrb[0].mxu0
  %v2594 = vpop.f32.mrb[0].mxu0
  %2595 = vdwg.mxu0
  %v2596 = vpack.c.bf16 %v2591, %v2591
  %v2598 = vsel %vm1095, %v2596, 0
  %2600 = vmatprep.subr.bf16.mxu0 0
  %2601 = vmatpush1.bf16.msra.mxu0 %v1835
  %2602 = vmatprep.subr.bf16.mxu0 0
  %2603 = vmatpush1.bf16.msra.mxu0 %v1836
  %2604 = vmatprep.subr.bf16.mxu0 0
  %2605 = vmatpush1.bf16.msra.mxu0 0
  %2606 = vmatprep.subr.bf16.mxu0 0
  %2607 = vmatpush1.bf16.msra.mxu0 0
  %2608 = vmatprep.subr.bf16.mxu0 0
  %2609 = vmatpush1.bf16.msra.mxu0 0
  %2610 = vmatprep.subr.bf16.mxu0 0
  %2611 = vmatpush1.bf16.msra.mxu0 0
  %2612 = vmatprep.subr.bf16.mxu0 0
  %2613 = vmatpush1.bf16.msra.mxu0 0
  %2614 = vmatprep.subr.bf16.mxu0 0
  %2615 = vmatpush1.bf16.msra.mxu0 0
  %2616 = vmatprep.subr.bf16.mxu0 0
  %2617 = vmatpush1.bf16.msra.mxu0 0
  %2618 = vmatprep.subr.bf16.mxu0 0
  %2619 = vmatpush1.bf16.msra.mxu0 0
  %2620 = vmatprep.subr.bf16.mxu0 0
  %2621 = vmatpush1.bf16.msra.mxu0 0
  %2622 = vmatprep.subr.bf16.mxu0 0
  %2623 = vmatpush1.bf16.msra.mxu0 0
  %2624 = vmatprep.subr.bf16.mxu0 0
  %2625 = vmatpush1.bf16.msra.mxu0 0
  %2626 = vmatprep.subr.bf16.mxu0 0
  %2627 = vmatpush1.bf16.msra.mxu0 0
  %2628 = vmatprep.subr.bf16.mxu0 0
  %2629 = vmatpush1.bf16.msra.mxu0 0
  %2630 = vmatprep.subr.bf16.mxu0 0
  %2631 = vmatpush1.bf16.msra.mxu0 0
  %2632 = vmatprep.mubr.bf16.mxu0 0
  %2633 = vmatmul.mubr.bf16.gmra.mrb[0].mxu0 %v2598
  %v2634 = vpop.f32.mrb[0].mxu0
  %v2635 = vadd.f32 0.0, %v2634
  %v2636 = vpop.f32.mrb[0].mxu0
  %v2637 = vpop.f32.mrb[0].mxu0
  %v2638 = vpop.f32.mrb[0].mxu0
  %2639 = vdwg.mxu0
  %v2640 = vadd.f32 %v2456, %v2635
  %v2641 = vld [vmem:[#allocation2 + $0x5] sm:$0x1f]
  %v2642 = vadd.f32 %v2641, %v2640
  %2643 = vst [vmem:[#allocation2 + $0x5] sm:$0x1f] %v2642
  %v2644 = vld [vmem:[#allocation2] sm:$0xff]
  %v2645 = vld [vmem:[#allocation2 + $0x8] sm:$0x3]
  %2646 = vadd.xlane.f32.xlu0 %v2644
  %v2647 = vpop.xlane.xlu0 %2646
  %v2648 = vsel %vm781, %v2645, 0.0
  %2649 = vadd.xlane.f32.xlu0 %v2648
  %v2650 = vpop.xlane.xlu0 %2649
  %v2651 = vmul.f32 %v2647, %v785
  %v2652 = vmul.f32 %v2650, %v785
  %v2653 = vsub.f32 %v2644, %v2651
  %v2654 = vsub.f32 %v2645, %v2652
  %v2655 = vmul.f32 %v2653, %v2653
  %v2656 = vmul.f32 %v2654, %v2654
  %2657 = vadd.xlane.f32.xlu0 %v2655
  %v2658 = vpop.xlane.xlu0 %2657
  %v2659 = vsel %vm781, %v2656, 0.0
  %2660 = vadd.xlane.f32.xlu0 %v2659
  %v2661 = vpop.xlane.xlu0 %2660
  %v2662 = vmul.f32 %v2658, %v785
  %v2663 = vmul.f32 %v2661, %v785
  %v2664 = vadd.f32 %v2662, 1e-12
  %v2665 = vadd.f32 %v2663, 1e-12
  %v2666 = vrsqrt.pop %v2664
  %v2667 = vrsqrt.pop %v2665
  %v2668 = vmul.f32 %v2653, %v2666
  %v2669 = vmul.f32 %v2654, %v2667
  %v2670 = vmul.f32 %v2668, %v769
  %v2671 = vmul.f32 %v2669, %v769
  %v2672 = vadd.f32 %v2670, %v770
  %v2673 = vadd.f32 %v2671, %v770
  %v2674 = vpack.c.bf16 %v2673, %v2672
  %v2675 = vld [vmem:[%s5] sm:$0xff]
  %v2676 = vld [vmem:[%s5 + $0x8] sm:$0xff]
  %v2677 = vld [vmem:[%s5 + $0x10] sm:$0xff]
  %v2678 = vld [vmem:[%s5 + $0x18] sm:$0xff]
  %v2679 = vld [vmem:[%s5 + $0x20] sm:$0xff]
  %v2680 = vld [vmem:[%s5 + $0x28] sm:$0xff]
  %v2681 = vld [vmem:[%s5 + $0x30] sm:$0xff]
  %v2682 = vld [vmem:[%s5 + $0x38] sm:$0xff]
  %v2683 = vld [vmem:[%s5 + $0x40] sm:$0xff]
  %v2684 = vld [vmem:[%s5 + $0x48] sm:$0xff]
  %v2685 = vld [vmem:[%s5 + $0x50] sm:$0xff]
  %v2686 = vld [vmem:[%s5 + $0x58] sm:$0xff]
  %v2687 = vld [vmem:[%s5 + $0x60] sm:$0xff]
  %v2688 = vld [vmem:[%s5 + $0x68] sm:$0xff]
  %v2689 = vld [vmem:[%s5 + $0x70] sm:$0xff]
  %v2690 = vld [vmem:[%s5 + $0x78] sm:$0xff]
  %v2692 = vlaneseq
  %v2693 = vshrl.u32 %v2692, 7
  %v2694 = vsub.s32 0, %v2693
  %v2695 = vrot.slane %v776, %v2694
  %v2696 = vlaneseq
  %v2697 = vshrl.u32 %v2696, 7
  %v2698 = vsub.s32 1, %v2697
  %v2699 = vrot.slane %v776, %v2698
  %v2718 = vunpack.c.l.b16 %v2675
  %v2719 = vunpack.c.h.b16 %v2675
  %v2720 = vunpack.c.l.b16 %v2676
  %v2721 = vunpack.c.h.b16 %v2676
  %v2722 = vunpack.c.l.b16 %v2677
  %v2723 = vunpack.c.h.b16 %v2677
  %v2724 = vunpack.c.l.b16 %v2678
  %v2725 = vunpack.c.h.b16 %v2678
  %v2726 = vunpack.c.l.b16 %v2679
  %v2727 = vunpack.c.h.b16 %v2679
  %v2728 = vunpack.c.l.b16 %v2680
  %v2729 = vunpack.c.h.b16 %v2680
  %v2730 = vunpack.c.l.b16 %v2681
  %v2731 = vunpack.c.h.b16 %v2681
  %v2732 = vunpack.c.l.b16 %v2682
  %v2733 = vunpack.c.h.b16 %v2682
  %v2734 = vunpack.c.l.b16 %v2683
  %v2735 = vunpack.c.h.b16 %v2683
  %v2736 = vunpack.c.l.b16 %v2684
  %v2737 = vunpack.c.h.b16 %v2684
  %v2738 = vunpack.c.l.b16 %v2685
  %v2739 = vunpack.c.h.b16 %v2685
  %v2740 = vunpack.c.l.b16 %v2686
  %v2741 = vunpack.c.h.b16 %v2686
  %v2742 = vunpack.c.l.b16 %v2687
  %v2743 = vunpack.c.h.b16 %v2687
  %v2744 = vunpack.c.l.b16 %v2688
  %v2745 = vunpack.c.h.b16 %v2688
  %v2746 = vunpack.c.l.b16 %v2689
  %v2747 = vunpack.c.h.b16 %v2689
  %v2748 = vunpack.c.l.b16 %v2690
  %v2749 = vunpack.c.h.b16 %v2690
  %v2750 = vpack.c.b16 %v2720, %v2718
  %v2751 = vpack.c.b16 %v2721, %v2719
  %v2752 = vpack.c.b16 %v2724, %v2722
  %v2753 = vpack.c.b16 %v2725, %v2723
  %v2754 = vpack.c.b16 %v2728, %v2726
  %v2755 = vpack.c.b16 %v2729, %v2727
  %v2756 = vpack.c.b16 %v2732, %v2730
  %v2757 = vpack.c.b16 %v2733, %v2731
  %v2758 = vpack.c.b16 %v2736, %v2734
  %v2759 = vpack.c.b16 %v2737, %v2735
  %v2760 = vpack.c.b16 %v2740, %v2738
  %v2761 = vpack.c.b16 %v2741, %v2739
  %v2762 = vpack.c.b16 %v2744, %v2742
  %v2763 = vpack.c.b16 %v2745, %v2743
  %v2764 = vpack.c.b16 %v2748, %v2746
  %v2765 = vpack.c.b16 %v2749, %v2747
  %2782 = vmatprep.subr.bf16.mxu0 %v2751
  %2783 = vmatpush1.bf16.msra.mxu0 %v2750
  %2784 = vmatprep.subr.bf16.mxu0 %v2753
  %2785 = vmatpush1.bf16.msra.mxu0 %v2752
  %2786 = vmatprep.subr.bf16.mxu0 %v2755
  %2787 = vmatpush1.bf16.msra.mxu0 %v2754
  %2788 = vmatprep.subr.bf16.mxu0 %v2757
  %2789 = vmatpush1.bf16.msra.mxu0 %v2756
  %2790 = vmatprep.subr.bf16.mxu0 %v2759
  %2791 = vmatpush1.bf16.msra.mxu0 %v2758
  %2792 = vmatprep.subr.bf16.mxu0 %v2761
  %2793 = vmatpush1.bf16.msra.mxu0 %v2760
  %2794 = vmatprep.subr.bf16.mxu0 %v2763
  %2795 = vmatpush1.bf16.msra.mxu0 %v2762
  %2796 = vmatprep.subr.bf16.mxu0 %v2765
  %2797 = vmatpush1.bf16.msra.mxu0 %v2764
  %2798 = vmatprep.subr.bf16.mxu0 0
  %2799 = vmatpush1.bf16.msra.mxu0 0
  %2800 = vmatprep.subr.bf16.mxu0 0
  %2801 = vmatpush1.bf16.msra.mxu0 0
  %2802 = vmatprep.subr.bf16.mxu0 0
  %2803 = vmatpush1.bf16.msra.mxu0 0
  %2804 = vmatprep.subr.bf16.mxu0 0
  %2805 = vmatpush1.bf16.msra.mxu0 0
  %2806 = vmatprep.subr.bf16.mxu0 0
  %2807 = vmatpush1.bf16.msra.mxu0 0
  %2808 = vmatprep.subr.bf16.mxu0 0
  %2809 = vmatpush1.bf16.msra.mxu0 0
  %2810 = vmatprep.subr.bf16.mxu0 0
  %2811 = vmatpush1.bf16.msra.mxu0 0
  %2812 = vmatprep.subr.bf16.mxu0 0
  %2813 = vmatpush1.bf16.msra.mxu0 0
  %2814 = vmatprep.mubr.bf16.mxu0 0
  %2815 = vmatmul.mubr.bf16.gmra.mrb[0].mxu0 %v2674
  %v2816 = vpop.f32.mrb[0].mxu0
  %v2817 = vadd.f32 %v2695, %v2816
  %v2818 = vpop.f32.mrb[0].mxu0
  %v2819 = vadd.f32 %v2699, %v2818
  %v2820 = vpop.f32.mrb[0].mxu0
  %v2821 = vadd.f32 %v2695, %v2820
  %v2822 = vpop.f32.mrb[0].mxu0
  %v2823 = vadd.f32 %v2699, %v2822
  %2824 = vdwg.mxu0
  %v2825 = vmul.f32 %v2817, 0.5
  %v2826 = vmul.f32 %v2819, 0.5
  %v2827 = vmul.f32 %v2821, 0.5
  %v2828 = vmul.f32 %v2823, 0.5
  %v2829 = vmul.f32 %v2817, 0.044715
  %v2830 = vmul.f32 %v2819, 0.044715
  %v2831 = vmul.f32 %v2821, 0.044715
  %v2832 = vmul.f32 %v2823, 0.044715
  %v2833 = vmul.f32 %v2829, %v2817
  %v2834 = vmul.f32 %v2830, %v2819
  %v2835 = vmul.f32 %v2831, %v2821
  %v2836 = vmul.f32 %v2832, %v2823
  %v2837 = vmul.f32 %v2833, %v2817
  %v2838 = vmul.f32 %v2834, %v2819
  %v2839 = vmul.f32 %v2835, %v2821
  %v2840 = vmul.f32 %v2836, %v2823
  %v2841 = vadd.f32 %v2817, %v2837
  %v2842 = vadd.f32 %v2819, %v2838
  %v2843 = vadd.f32 %v2821, %v2839
  %v2844 = vadd.f32 %v2823, %v2840
  %v2845 = vmul.f32 %v2841, 0.7978846
  %v2846 = vmul.f32 %v2842, 0.7978846
  %v2847 = vmul.f32 %v2843, 0.7978846
  %v2848 = vmul.f32 %v2844, 0.7978846
  %v2849 = vtanh.pop %v2845
  %v2850 = vtanh.pop %v2846
  %v2851 = vtanh.pop %v2847
  %v2852 = vtanh.pop %v2848
  %v2853 = vadd.f32 %v2849, 1.0
  %v2854 = vadd.f32 %v2850, 1.0
  %v2855 = vadd.f32 %v2851, 1.0
  %v2856 = vadd.f32 %v2852, 1.0
  %v2857 = vmul.f32 %v2825, %v2853
  %v2858 = vmul.f32 %v2826, %v2854
  %v2859 = vmul.f32 %v2827, %v2855
  %v2860 = vmul.f32 %v2828, %v2856
  %v2861 = vpack.c.bf16 %v2859, %v2857
  %v2862 = vpack.c.bf16 %v2860, %v2858
  %v2863 = vld [vmem:[%s6] sm:$0xf]
  %v2864 = vld [vmem:[%s6 + $0x4] sm:$0xf]
  %v2865 = vld [vmem:[%s6 + $0x8] sm:$0xf]
  %v2866 = vld [vmem:[%s6 + $0xc] sm:$0xf]
  %v2867 = vld [vmem:[%s6 + $0x10] sm:$0xf]
  %v2868 = vld [vmem:[%s6 + $0x14] sm:$0xf]
  %v2869 = vld [vmem:[%s6 + $0x18] sm:$0xf]
  %v2870 = vld [vmem:[%s6 + $0x1c] sm:$0xf]
  %v2871 = vld [vmem:[%s6 + $0x20] sm:$0xf]
  %v2872 = vld [vmem:[%s6 + $0x24] sm:$0xf]
  %v2873 = vld [vmem:[%s6 + $0x28] sm:$0xf]
  %v2874 = vld [vmem:[%s6 + $0x2c] sm:$0xf]
  %v2875 = vld [vmem:[%s6 + $0x30] sm:$0xf]
  %v2876 = vld [vmem:[%s6 + $0x34] sm:$0xf]
  %v2877 = vld [vmem:[%s6 + $0x38] sm:$0xf]
  %v2878 = vld [vmem:[%s6 + $0x3c] sm:$0xf]
  %v2879 = vld [vmem:[%s6 + $0x40] sm:$0xf]
  %v2880 = vld [vmem:[%s6 + $0x44] sm:$0xf]
  %v2881 = vld [vmem:[%s6 + $0x48] sm:$0xf]
  %v2882 = vld [vmem:[%s6 + $0x4c] sm:$0xf]
  %v2883 = vld [vmem:[%s6 + $0x50] sm:$0xf]
  %v2884 = vld [vmem:[%s6 + $0x54] sm:$0xf]
  %v2885 = vld [vmem:[%s6 + $0x58] sm:$0xf]
  %v2886 = vld [vmem:[%s6 + $0x5c] sm:$0xf]
  %v2887 = vld [vmem:[%s6 + $0x60] sm:$0xf]
  %v2888 = vld [vmem:[%s6 + $0x64] sm:$0xf]
  %v2889 = vld [vmem:[%s6 + $0x68] sm:$0xf]
  %v2890 = vld [vmem:[%s6 + $0x6c] sm:$0xf]
  %v2891 = vld [vmem:[%s6 + $0x70] sm:$0xf]
  %v2892 = vld [vmem:[%s6 + $0x74] sm:$0xf]
  %v2893 = vld [vmem:[%s6 + $0x78] sm:$0xf]
  %v2894 = vld [vmem:[%s6 + $0x7c] sm:$0xf]
  %v2927 = vunpack.c.l.b16 %v2863
  %v2928 = vunpack.c.l.b16 %v2864
  %v2929 = vunpack.c.l.b16 %v2865
  %v2930 = vunpack.c.l.b16 %v2866
  %v2931 = vunpack.c.l.b16 %v2867
  %v2932 = vunpack.c.l.b16 %v2868
  %v2933 = vunpack.c.l.b16 %v2869
  %v2934 = vunpack.c.l.b16 %v2870
  %v2935 = vunpack.c.l.b16 %v2871
  %v2936 = vunpack.c.l.b16 %v2872
  %v2937 = vunpack.c.l.b16 %v2873
  %v2938 = vunpack.c.l.b16 %v2874
  %v2939 = vunpack.c.l.b16 %v2875
  %v2940 = vunpack.c.l.b16 %v2876
  %v2941 = vunpack.c.l.b16 %v2877
  %v2942 = vunpack.c.l.b16 %v2878
  %v2943 = vunpack.c.l.b16 %v2879
  %v2944 = vunpack.c.l.b16 %v2880
  %v2945 = vunpack.c.l.b16 %v2881
  %v2946 = vunpack.c.l.b16 %v2882
  %v2947 = vunpack.c.l.b16 %v2883
  %v2948 = vunpack.c.l.b16 %v2884
  %v2949 = vunpack.c.l.b16 %v2885
  %v2950 = vunpack.c.l.b16 %v2886
  %v2951 = vunpack.c.l.b16 %v2887
  %v2952 = vunpack.c.l.b16 %v2888
  %v2953 = vunpack.c.l.b16 %v2889
  %v2954 = vunpack.c.l.b16 %v2890
  %v2955 = vunpack.c.l.b16 %v2891
  %v2956 = vunpack.c.l.b16 %v2892
  %v2957 = vunpack.c.l.b16 %v2893
  %v2958 = vunpack.c.l.b16 %v2894
  %v2959 = vpack.c.b16 %v2928, %v2927
  %v2960 = vpack.c.b16 %v2930, %v2929
  %v2961 = vpack.c.b16 %v2932, %v2931
  %v2962 = vpack.c.b16 %v2934, %v2933
  %v2963 = vpack.c.b16 %v2936, %v2935
  %v2964 = vpack.c.b16 %v2938, %v2937
  %v2965 = vpack.c.b16 %v2940, %v2939
  %v2966 = vpack.c.b16 %v2942, %v2941
  %v2967 = vpack.c.b16 %v2944, %v2943
  %v2968 = vpack.c.b16 %v2946, %v2945
  %v2969 = vpack.c.b16 %v2948, %v2947
  %v2970 = vpack.c.b16 %v2950, %v2949
  %v2971 = vpack.c.b16 %v2952, %v2951
  %v2972 = vpack.c.b16 %v2954, %v2953
  %v2973 = vpack.c.b16 %v2956, %v2955
  %v2974 = vpack.c.b16 %v2958, %v2957
  %2991 = vmatprep.subr.bf16.mxu0 0
  %2992 = vmatpush1.bf16.msra.mxu0 %v2959
  %2993 = vmatprep.subr.bf16.mxu0 0
  %2994 = vmatpush1.bf16.msra.mxu0 %v2960
  %2995 = vmatprep.subr.bf16.mxu0 0
  %2996 = vmatpush1.bf16.msra.mxu0 %v2961
  %2997 = vmatprep.subr.bf16.mxu0 0
  %2998 = vmatpush1.bf16.msra.mxu0 %v2962
  %2999 = vmatprep.subr.bf16.mxu0 0
  %3000 = vmatpush1.bf16.msra.mxu0 %v2963
  %3001 = vmatprep.subr.bf16.mxu0 0
  %3002 = vmatpush1.bf16.msra.mxu0 %v2964
  %3003 = vmatprep.subr.bf16.mxu0 0
  %3004 = vmatpush1.bf16.msra.mxu0 %v2965
  %3005 = vmatprep.subr.bf16.mxu0 0
  %3006 = vmatpush1.bf16.msra.mxu0 %v2966
  %3007 = vmatprep.subr.bf16.mxu0 0
  %3008 = vmatpush1.bf16.msra.mxu0 %v2967
  %3009 = vmatprep.subr.bf16.mxu0 0
  %3010 = vmatpush1.bf16.msra.mxu0 %v2968
  %3011 = vmatprep.subr.bf16.mxu0 0
  %3012 = vmatpush1.bf16.msra.mxu0 %v2969
  %3013 = vmatprep.subr.bf16.mxu0 0
  %3014 = vmatpush1.bf16.msra.mxu0 %v2970
  %3015 = vmatprep.subr.bf16.mxu0 0
  %3016 = vmatpush1.bf16.msra.mxu0 %v2971
  %3017 = vmatprep.subr.bf16.mxu0 0
  %3018 = vmatpush1.bf16.msra.mxu0 %v2972
  %3019 = vmatprep.subr.bf16.mxu0 0
  %3020 = vmatpush1.bf16.msra.mxu0 %v2973
  %3021 = vmatprep.subr.bf16.mxu0 0
  %3022 = vmatpush1.bf16.msra.mxu0 %v2974
  %3023 = vmatprep.mubr.bf16.mxu0 %v2862
  %3024 = vmatmul.mubr.bf16.gmra.mrb[0].mxu0 %v2861
  %v3025 = vpop.f32.mrb[0].mxu0
  %v3026 = vadd.f32 %v772, %v3025
  %v3027 = vpop.f32.mrb[0].mxu0
  %v3028 = vpop.f32.mrb[0].mxu0
  %v3029 = vadd.f32 %v772, %v3028
  %v3030 = vpop.f32.mrb[0].mxu0
  %3031 = vdwg.mxu0
  %v3032 = vadd.f32 %v2644, %v3026
  %v3033 = vadd.f32 %v2645, %v3029
  %3034 = vst [vmem:[#allocation2] sm:$0xff] %v3032
  %3035 = vst [vmem:[#allocation2 + $0x8] sm:$0x3] %v3033
  %s3036 = scalar_lea.vmem %s7, 24
  %v3037 = vld [vmem:[%s3036] ss:$0 sm:$0xff]
  %v3038 = vld [vmem:[%s3036 + $0x1] ss:$0 sm:$0xff]
  %v3039 = vld [vmem:[%s3036 + $0x2] ss:$0 sm:$0xff]
  %v3040 = vld [vmem:[%s3036 + $0x3] ss:$0 sm:$0xff]
  %v3041 = vld [vmem:[%s3036 + $0x4] ss:$0 sm:$0xff]
  %v3042 = vld [vmem:[%s3036 + $0x5] ss:$0 sm:$0xff]
  %s3043 = scalar_lea.vmem %s3036, 6
  %v3044 = vld [vmem:[%s3043] ss:$8 sm:$0x7]
  %s3045 = scalar_lea.vmem %s3036, 7
  %v3046 = vld [vmem:[%s3045] ss:$8 sm:$0x3]
  %v3047 = vld [vmem:[#allocation2] sm:$0xff]
  %v3048 = vld [vmem:[#allocation2 + $0x8] sm:$0x3]
  %3049 = vadd.xlane.f32.xlu0 %v3047
  %v3050 = vpop.xlane.xlu0 %3049
  %v3051 = vsel %vm781, %v3048, 0.0
  %3052 = vadd.xlane.f32.xlu0 %v3051
  %v3053 = vpop.xlane.xlu0 %3052
  %v3054 = vmul.f32 %v3050, %v785
  %v3055 = vmul.f32 %v3053, %v785
  %v3056 = vsub.f32 %v3047, %v3054
  %v3057 = vsub.f32 %v3048, %v3055
  %v3058 = vmul.f32 %v3056, %v3056
  %v3059 = vmul.f32 %v3057, %v3057
  %3060 = vadd.xlane.f32.xlu0 %v3058
  %v3061 = vpop.xlane.xlu0 %3060
  %v3062 = vsel %vm781, %v3059, 0.0
  %3063 = vadd.xlane.f32.xlu0 %v3062
  %v3064 = vpop.xlane.xlu0 %3063
  %v3065 = vmul.f32 %v3061, %v785
  %v3066 = vmul.f32 %v3064, %v785
  %v3067 = vadd.f32 %v3065, 1e-12
  %v3068 = vadd.f32 %v3066, 1e-12
  %v3069 = vrsqrt.pop %v3067
  %v3070 = vrsqrt.pop %v3068
  %v3071 = vmul.f32 %v3056, %v3069
  %v3072 = vmul.f32 %v3057, %v3070
  %v3073 = vmul.f32 %v3071, %v3037
  %v3074 = vmul.f32 %v3072, %v3037
  %v3075 = vadd.f32 %v3073, %v3038
  %v3076 = vadd.f32 %v3074, %v3038
  %v3077 = vpack.c.bf16 %v3076, %v3075
  %s3078 = scalar_lea.vmem %s3, 192
  %v3079 = vld [vmem:[%s3078] sm:$0xff]
  %v3080 = vld [vmem:[%s3078 + $0x8] sm:$0xf]
  %v3081 = vld [vmem:[%s3078 + $0xc] sm:$0xff]
  %v3082 = vld [vmem:[%s3078 + $0x14] sm:$0xf]
  %v3083 = vld [vmem:[%s3078 + $0x18] sm:$0xff]
  %v3084 = vld [vmem:[%s3078 + $0x20] sm:$0xf]
  %v3085 = vld [vmem:[%s3078 + $0x24] sm:$0xff]
  %v3086 = vld [vmem:[%s3078 + $0x2c] sm:$0xf]
  %v3087 = vld [vmem:[%s3078 + $0x30] sm:$0xff]
  %v3088 = vld [vmem:[%s3078 + $0x38] sm:$0xf]
  %v3089 = vld [vmem:[%s3078 + $0x3c] sm:$0xff]
  %v3090 = vld [vmem:[%s3078 + $0x44] sm:$0xf]
  %v3091 = vld [vmem:[%s3078 + $0x48] sm:$0xff]
  %v3092 = vld [vmem:[%s3078 + $0x50] sm:$0xf]
  %v3093 = vld [vmem:[%s3078 + $0x54] sm:$0xff]
  %v3094 = vld [vmem:[%s3078 + $0x5c] sm:$0xf]
  %v3095 = vld [vmem:[%s3078 + $0x60] sm:$0xff]
  %v3096 = vld [vmem:[%s3078 + $0x68] sm:$0xf]
  %v3097 = vld [vmem:[%s3078 + $0x6c] sm:$0xff]
  %v3098 = vld [vmem:[%s3078 + $0x74] sm:$0xf]
  %v3099 = vld [vmem:[%s3078 + $0x78] sm:$0xff]
  %v3100 = vld [vmem:[%s3078 + $0x80] sm:$0xf]
  %v3101 = vld [vmem:[%s3078 + $0x84] sm:$0xff]
  %v3102 = vld [vmem:[%s3078 + $0x8c] sm:$0xf]
  %v3103 = vld [vmem:[%s3078 + $0x90] sm:$0xff]
  %v3104 = vld [vmem:[%s3078 + $0x98] sm:$0xf]
  %v3105 = vld [vmem:[%s3078 + $0x9c] sm:$0xff]
  %v3106 = vld [vmem:[%s3078 + $0xa4] sm:$0xf]
  %v3107 = vld [vmem:[%s3078 + $0xa8] sm:$0xff]
  %v3108 = vld [vmem:[%s3078 + $0xb0] sm:$0xf]
  %v3109 = vld [vmem:[%s3078 + $0xb4] sm:$0xff]
  %v3110 = vld [vmem:[%s3078 + $0xbc] sm:$0xf]
  %v3112 = vlaneseq
  %v3113 = vshrl.u32 %v3112, 7
  %v3114 = vsub.s32 0, %v3113
  %v3115 = vrot.slane %v3044, %v3114
  %v3116 = vlaneseq
  %v3117 = vshrl.u32 %v3116, 7
  %v3118 = vsub.s32 1, %v3117
  %v3119 = vrot.slane %v3044, %v3118
  %v3120 = vlaneseq
  %v3121 = vshrl.u32 %v3120, 7
  %v3122 = vsub.s32 2, %v3121
  %v3123 = vrot.slane %v3044, %v3122
  %v3159 = vunpack.c.l.b16 %v3079
  %v3160 = vunpack.c.h.b16 %v3079
  %v3161 = vunpack.c.l.b16 %v3080
  %v3162 = vunpack.c.l.b16 %v3081
  %v3163 = vunpack.c.h.b16 %v3081
  %v3164 = vunpack.c.l.b16 %v3082
  %v3165 = vunpack.c.l.b16 %v3083
  %v3166 = vunpack.c.h.b16 %v3083
  %v3167 = vunpack.c.l.b16 %v3084
  %v3168 = vunpack.c.l.b16 %v3085
  %v3169 = vunpack.c.h.b16 %v3085
  %v3170 = vunpack.c.l.b16 %v3086
  %v3171 = vunpack.c.l.b16 %v3087
  %v3172 = vunpack.c.h.b16 %v3087
  %v3173 = vunpack.c.l.b16 %v3088
  %v3174 = vunpack.c.l.b16 %v3089
  %v3175 = vunpack.c.h.b16 %v3089
  %v3176 = vunpack.c.l.b16 %v3090
  %v3177 = vunpack.c.l.b16 %v3091
  %v3178 = vunpack.c.h.b16 %v3091
  %v3179 = vunpack.c.l.b16 %v3092
  %v3180 = vunpack.c.l.b16 %v3093
  %v3181 = vunpack.c.h.b16 %v3093
  %v3182 = vunpack.c.l.b16 %v3094
  %v3183 = vunpack.c.l.b16 %v3095
  %v3184 = vunpack.c.h.b16 %v3095
  %v3185 = vunpack.c.l.b16 %v3096
  %v3186 = vunpack.c.l.b16 %v3097
  %v3187 = vunpack.c.h.b16 %v3097
  %v3188 = vunpack.c.l.b16 %v3098
  %v3189 = vunpack.c.l.b16 %v3099
  %v3190 = vunpack.c.h.b16 %v3099
  %v3191 = vunpack.c.l.b16 %v3100
  %v3192 = vunpack.c.l.b16 %v3101
  %v3193 = vunpack.c.h.b16 %v3101
  %v3194 = vunpack.c.l.b16 %v3102
  %v3195 = vunpack.c.l.b16 %v3103
  %v3196 = vunpack.c.h.b16 %v3103
  %v3197 = vunpack.c.l.b16 %v3104
  %v3198 = vunpack.c.l.b16 %v3105
  %v3199 = vunpack.c.h.b16 %v3105
  %v3200 = vunpack.c.l.b16 %v3106
  %v3201 = vunpack.c.l.b16 %v3107
  %v3202 = vunpack.c.h.b16 %v3107
  %v3203 = vunpack.c.l.b16 %v3108
  %v3204 = vunpack.c.l.b16 %v3109
  %v3205 = vunpack.c.h.b16 %v3109
  %v3206 = vunpack.c.l.b16 %v3110
  %v3207 = vpack.c.b16 %v3162, %v3159
  %v3208 = vpack.c.b16 %v3163, %v3160
  %v3209 = vpack.c.b16 %v3164, %v3161
  %v3210 = vpack.c.b16 %v3168, %v3165
  %v3211 = vpack.c.b16 %v3169, %v3166
  %v3212 = vpack.c.b16 %v3170, %v3167
  %v3213 = vpack.c.b16 %v3174, %v3171
  %v3214 = vpack.c.b16 %v3175, %v3172
  %v3215 = vpack.c.b16 %v3176, %v3173
  %v3216 = vpack.c.b16 %v3180, %v3177
  %v3217 = vpack.c.b16 %v3181, %v3178
  %v3218 = vpack.c.b16 %v3182, %v3179
  %v3219 = vpack.c.b16 %v3186, %v3183
  %v3220 = vpack.c.b16 %v3187, %v3184
  %v3221 = vpack.c.b16 %v3188, %v3185
  %v3222 = vpack.c.b16 %v3192, %v3189
  %v3223 = vpack.c.b16 %v3193, %v3190
  %v3224 = vpack.c.b16 %v3194, %v3191
  %v3225 = vpack.c.b16 %v3198, %v3195
  %v3226 = vpack.c.b16 %v3199, %v3196
  %v3227 = vpack.c.b16 %v3200, %v3197
  %v3228 = vpack.c.b16 %v3204, %v3201
  %v3229 = vpack.c.b16 %v3205, %v3202
  %v3230 = vpack.c.b16 %v3206, %v3203
  %3255 = vmatprep.subr.bf16.mxu0 %v3208
  %3256 = vmatpush1.bf16.msra.mxu0 %v3207
  %3257 = vmatprep.subr.bf16.mxu0 %v3211
  %3258 = vmatpush1.bf16.msra.mxu0 %v3210
  %3259 = vmatprep.subr.bf16.mxu0 %v3214
  %3260 = vmatpush1.bf16.msra.mxu0 %v3213
  %3261 = vmatprep.subr.bf16.mxu0 %v3217
  %3262 = vmatpush1.bf16.msra.mxu0 %v3216
  %3263 = vmatprep.subr.bf16.mxu0 %v3220
  %3264 = vmatpush1.bf16.msra.mxu0 %v3219
  %3265 = vmatprep.subr.bf16.mxu0 %v3223
  %3266 = vmatpush1.bf16.msra.mxu0 %v3222
  %3267 = vmatprep.subr.bf16.mxu0 %v3226
  %3268 = vmatpush1.bf16.msra.mxu0 %v3225
  %3269 = vmatprep.subr.bf16.mxu0 %v3229
  %3270 = vmatpush1.bf16.msra.mxu0 %v3228
  %3271 = vmatprep.subr.bf16.mxu0 0
  %3272 = vmatpush1.bf16.msra.mxu0 0
  %3273 = vmatprep.subr.bf16.mxu0 0
  %3274 = vmatpush1.bf16.msra.mxu0 0
  %3275 = vmatprep.subr.bf16.mxu0 0
  %3276 = vmatpush1.bf16.msra.mxu0 0
  %3277 = vmatprep.subr.bf16.mxu0 0
  %3278 = vmatpush1.bf16.msra.mxu0 0
  %3279 = vmatprep.subr.bf16.mxu0 0
  %3280 = vmatpush1.bf16.msra.mxu0 0
  %3281 = vmatprep.subr.bf16.mxu0 0
  %3282 = vmatpush1.bf16.msra.mxu0 0
  %3283 = vmatprep.subr.bf16.mxu0 0
  %3284 = vmatpush1.bf16.msra.mxu0 0
  %3285 = vmatprep.subr.bf16.mxu0 0
  %3286 = vmatpush1.bf16.msra.mxu0 0
  %3287 = vmatprep.mubr.bf16.mxu0 0
  %3288 = vmatmul.mubr.bf16.gmra.mrb[0].mxu0 %v3077
  %v3289 = vpop.f32.mrb[0].mxu0
  %v3290 = vadd.f32 %v3115, %v3289
  %v3291 = vpop.f32.mrb[0].mxu0
  %v3292 = vadd.f32 %v3119, %v3291
  %v3293 = vpop.f32.mrb[0].mxu0
  %v3294 = vadd.f32 %v3115, %v3293
  %v3295 = vpop.f32.mrb[0].mxu0
  %v3296 = vadd.f32 %v3119, %v3295
  %3297 = vdwg.mxu0
  %3298 = vmatprep.subr.bf16.mxu0 0
  %3299 = vmatpush1.bf16.msra.mxu0 %v3209
  %3300 = vmatprep.subr.bf16.mxu0 0
  %3301 = vmatpush1.bf16.msra.mxu0 %v3212
  %3302 = vmatprep.subr.bf16.mxu0 0
  %3303 = vmatpush1.bf16.msra.mxu0 %v3215
  %3304 = vmatprep.subr.bf16.mxu0 0
  %3305 = vmatpush1.bf16.msra.mxu0 %v3218
  %3306 = vmatprep.subr.bf16.mxu0 0
  %3307 = vmatpush1.bf16.msra.mxu0 %v3221
  %3308 = vmatprep.subr.bf16.mxu0 0
  %3309 = vmatpush1.bf16.msra.mxu0 %v3224
  %3310 = vmatprep.subr.bf16.mxu0 0
  %3311 = vmatpush1.bf16.msra.mxu0 %v3227
  %3312 = vmatprep.subr.bf16.mxu0 0
  %3313 = vmatpush1.bf16.msra.mxu0 %v3230
  %3314 = vmatprep.subr.bf16.mxu0 0
  %3315 = vmatpush1.bf16.msra.mxu0 0
  %3316 = vmatprep.subr.bf16.mxu0 0
  %3317 = vmatpush1.bf16.msra.mxu0 0
  %3318 = vmatprep.subr.bf16.mxu0 0
  %3319 = vmatpush1.bf16.msra.mxu0 0
  %3320 = vmatprep.subr.bf16.mxu0 0
  %3321 = vmatpush1.bf16.msra.mxu0 0
  %3322 = vmatprep.subr.bf16.mxu0 0
  %3323 = vmatpush1.bf16.msra.mxu0 0
  %3324 = vmatprep.subr.bf16.mxu0 0
  %3325 = vmatpush1.bf16.msra.mxu0 0
  %3326 = vmatprep.subr.bf16.mxu0 0
  %3327 = vmatpush1.bf16.msra.mxu0 0
  %3328 = vmatprep.subr.bf16.mxu0 0
  %3329 = vmatpush1.bf16.msra.mxu0 0
  %3330 = vmatprep.mubr.bf16.mxu0 0
  %3331 = vmatmul.mubr.bf16.gmra.mrb[0].mxu0 %v3077
  %v3332 = vpop.f32.mrb[0].mxu0
  %v3333 = vadd.f32 %v3123, %v3332
  %v3334 = vpop.f32.mrb[0].mxu0
  %v3335 = vpop.f32.mrb[0].mxu0
  %v3336 = vadd.f32 %v3123, %v3335
  %v3337 = vpop.f32.mrb[0].mxu0
  %3338 = vdwg.mxu0
  %3339 = vst [vmem:[#allocation3] sm:$0xff] %v3290
  %3340 = vst [vmem:[#allocation3 + $0x8] sm:$0xff] %v3292
  %3341 = vst [vmem:[#allocation3 + $0x10] sm:$0xff] %v3333
  %3342 = vst [vmem:[#allocation3 + $0x18] sm:$0x3] %v3294
  %3343 = vst [vmem:[#allocation3 + $0x20] sm:$0x3] %v3296
  %3344 = vst [vmem:[#allocation3 + $0x28] sm:$0x3] %v3336
  %s3345 = scalar_lea.vmem %s4, 64
  %v3346 = vld [vmem:[%s3345] sm:$0xf]
  %v3347 = vld [vmem:[%s3345 + $0x4] sm:$0xf]
  %v3348 = vld [vmem:[%s3345 + $0x8] sm:$0xf]
  %v3349 = vld [vmem:[%s3345 + $0xc] sm:$0xf]
  %v3350 = vld [vmem:[%s3345 + $0x10] sm:$0xf]
  %v3351 = vld [vmem:[%s3345 + $0x14] sm:$0xf]
  %v3352 = vld [vmem:[%s3345 + $0x18] sm:$0xf]
  %v3353 = vld [vmem:[%s3345 + $0x1c] sm:$0xf]
  %v3354 = vld [vmem:[%s3345 + $0x20] sm:$0xf]
  %v3355 = vld [vmem:[%s3345 + $0x24] sm:$0xf]
  %v3356 = vld [vmem:[%s3345 + $0x28] sm:$0xf]
  %v3357 = vld [vmem:[%s3345 + $0x2c] sm:$0xf]
  %v3358 = vld [vmem:[%s3345 + $0x30] sm:$0xf]
  %v3359 = vld [vmem:[%s3345 + $0x34] sm:$0xf]
  %v3360 = vld [vmem:[%s3345 + $0x38] sm:$0xf]
  %v3361 = vld [vmem:[%s3345 + $0x3c] sm:$0xf]
  %v3362 = vld [vmem:[#allocation3] sm:$0x1f]
  %v3363 = vld [vmem:[#allocation3 + $0x8] sm:$0x1f]
  %v3364 = vld [vmem:[#allocation3 + $0x10] sm:$0x1f]
  %v3366 = vsel %vm1095, %v3362, 0
  %v3369 = vsel %vm1095, %v3363, 0
  %3371 = vmatprep.subr.mxu0 0.0
  %3372 = vmatpush1.xpose.msra.mxu0 %v3369
  %3373 = vmatprep.subr.mxu0 0.0
  %3374 = vmatpush1.xpose.msra.mxu0 0.0
  %3375 = vmatprep.subr.mxu0 0.0
  %3376 = vmatpush1.xpose.msra.mxu0 0.0
  %3377 = vmatprep.subr.mxu0 0.0
  %3378 = vmatpush1.xpose.msra.mxu0 0.0
  %3379 = vmatprep.subr.mxu0 0.0
  %3380 = vmatpush1.xpose.msra.mxu0 0.0
  %3381 = vmatprep.subr.mxu0 0.0
  %3382 = vmatpush1.xpose.msra.mxu0 0.0
  %3383 = vmatprep.subr.mxu0 0.0
  %3384 = vmatpush1.xpose.msra.mxu0 0.0
  %3385 = vmatprep.subr.mxu0 0.0
  %3386 = vmatpush1.xpose.msra.mxu0 0.0
  %3387 = vmatprep.subr.mxu0 0.0
  %3388 = vmatpush1.xpose.msra.mxu0 0.0
  %3389 = vmatprep.subr.mxu0 0.0
  %3390 = vmatpush1.xpose.msra.mxu0 0.0
  %3391 = vmatprep.subr.mxu0 0.0
  %3392 = vmatpush1.xpose.msra.mxu0 0.0
  %3393 = vmatprep.subr.mxu0 0.0
  %3394 = vmatpush1.xpose.msra.mxu0 0.0
  %3395 = vmatprep.subr.mxu0 0.0
  %3396 = vmatpush1.xpose.msra.mxu0 0.0
  %3397 = vmatprep.subr.mxu0 0.0
  %3398 = vmatpush1.xpose.msra.mxu0 0.0
  %3399 = vmatprep.subr.mxu0 0.0
  %3400 = vmatpush1.xpose.msra.mxu0 0.0
  %3401 = vmatprep.subr.mxu0 0.0
  %3402 = vmatpush1.xpose.msra.mxu0 0.0
  %3403 = vmatprep.subr.mxu0 0.0
  %3404 = vmatpush1.xpose.msra.mxu0 0.0
  %3405 = vmatprep.subr.mxu0 0.0
  %3406 = vmatpush1.xpose.msra.mxu0 0.0
  %3407 = vmatprep.subr.mxu0 0.0
  %3408 = vmatpush1.xpose.msra.mxu0 0.0
  %3409 = vmatprep.subr.mxu0 0.0
  %3410 = vmatpush1.xpose.msra.mxu0 0.0
  %3411 = vmatprep.subr.mxu0 0.0
  %3412 = vmatpush1.xpose.msra.mxu0 0.0
  %3413 = vmatprep.subr.mxu0 0.0
  %3414 = vmatpush1.xpose.msra.mxu0 0.0
  %3415 = vmatprep.subr.mxu0 0.0
  %3416 = vmatpush1.xpose.msra.mxu0 0.0
  %3417 = vmatprep.subr.mxu0 0.0
  %3418 = vmatpush1.xpose.msra.mxu0 0.0
  %3419 = vmatprep.subr.mxu0 0.0
  %3420 = vmatpush1.xpose.msra.mxu0 0.0
  %3421 = vmatprep.subr.mxu0 0.0
  %3422 = vmatpush1.xpose.msra.mxu0 0.0
  %3423 = vmatprep.subr.mxu0 0.0
  %3424 = vmatpush1.xpose.msra.mxu0 0.0
  %3425 = vmatprep.subr.mxu0 0.0
  %3426 = vmatpush1.xpose.msra.mxu0 0.0
  %3427 = vmatprep.subr.mxu0 0.0
  %3428 = vmatpush1.xpose.msra.mxu0 0.0
  %3429 = vmatprep.subr.mxu0 0.0
  %3430 = vmatpush1.xpose.msra.mxu0 0.0
  %3431 = vmatprep.subr.mxu0 0.0
  %3432 = vmatpush1.xpose.msra.mxu0 0.0
  %3433 = vmatprep.subr.mxu0 0.0
  %3434 = vmatpush1.xpose.msra.mxu0 0.0
  %3435 = vmatprep.mubr.f32.mxu0 0.0
  %3436 = vmatmul.mubr.f32.gmra.mrb[0].mxu0 %v3366
  %v3437 = vpop.f32.mrb[0].mxu0
  %v3438 = vadd.f32 0.0, %v3437
  %v3439 = vpop.f32.mrb[0].mxu0
  %3440 = vdwg.mxu0
  %v3441 = vmul.f32 %v3438, 0.17677669
  %v3442 = vsel %vm1173, %v3441, -inf
  %3443 = vmax.xlane.f32.xlu0 %v3442
  %v3444 = vpop.xlane.xlu0 %3443
  %v3445 = vsub.f32 %v3441, %v3444
  %v3446 = vmul.f32 %v3445, 1.442695
  %v3447 = vpow.pop %v3446
  %v3448 = vsel %vm1173, %v3447, 0.0
  %3449 = vadd.xlane.f32.xlu0 %v3448
  %v3450 = vpop.xlane.xlu0 %3449
  %v3451 = vrcp.pop %v3450
  %v3452 = vmul.f32 %v3447, %v3451
  %v3453 = vpack.c.bf16 %v3452, %v3452
  %v3454 = vpack.c.bf16 %v3364, %v3364
  %v3456 = vsel %vm1187, %v3453, 0
  %v3459 = vand.u32 %v3454, %v1193
  %3461 = vmatprep.subr.bf16.mxu0 0
  %3462 = vmatpush1.bf16.msra.mxu0 %v3459
  %3463 = vmatprep.subr.bf16.mxu0 0
  %3464 = vmatpush1.bf16.msra.mxu0 0
  %3465 = vmatprep.subr.bf16.mxu0 0
  %3466 = vmatpush1.bf16.msra.mxu0 0
  %3467 = vmatprep.subr.bf16.mxu0 0
  %3468 = vmatpush1.bf16.msra.mxu0 0
  %3469 = vmatprep.subr.bf16.mxu0 0
  %3470 = vmatpush1.bf16.msra.mxu0 0
  %3471 = vmatprep.subr.bf16.mxu0 0
  %3472 = vmatpush1.bf16.msra.mxu0 0
  %3473 = vmatprep.subr.bf16.mxu0 0
  %3474 = vmatpush1.bf16.msra.mxu0 0
  %3475 = vmatprep.subr.bf16.mxu0 0
  %3476 = vmatpush1.bf16.msra.mxu0 0
  %3477 = vmatprep.subr.bf16.mxu0 0
  %3478 = vmatpush1.bf16.msra.mxu0 0
  %3479 = vmatprep.subr.bf16.mxu0 0
  %3480 = vmatpush1.bf16.msra.mxu0 0
  %3481 = vmatprep.subr.bf16.mxu0 0
  %3482 = vmatpush1.bf16.msra.mxu0 0
  %3483 = vmatprep.subr.bf16.mxu0 0
  %3484 = vmatpush1.bf16.msra.mxu0 0
  %3485 = vmatprep.subr.bf16.mxu0 0
  %3486 = vmatpush1.bf16.msra.mxu0 0
  %3487 = vmatprep.subr.bf16.mxu0 0
  %3488 = vmatpush1.bf16.msra.mxu0 0
  %3489 = vmatprep.subr.bf16.mxu0 0
  %3490 = vmatpush1.bf16.msra.mxu0 0
  %3491 = vmatprep.subr.bf16.mxu0 0
  %3492 = vmatpush1.bf16.msra.mxu0 0
  %3493 = vmatprep.mubr.bf16.mxu0 0
  %3494 = vmatmul.mubr.bf16.gmra.mrb[0].mxu0 %v3456
  %v3495 = vpop.f32.mrb[0].mxu0
  %v3496 = vadd.f32 0.0, %v3495
  %v3497 = vpop.f32.mrb[0].mxu0
  %v3498 = vpop.f32.mrb[0].mxu0
  %v3499 = vpop.f32.mrb[0].mxu0
  %3500 = vdwg.mxu0
  %v3501 = vpack.c.bf16 %v3496, %v3496
  %v3506 = vunpack.c.l.b16 %v3346
  %v3507 = vunpack.c.l.b16 %v3347
  %v3508 = vunpack.c.l.b16 %v3348
  %v3509 = vunpack.c.l.b16 %v3349
  %v3510 = vpack.c.b16 %v3507, %v3506
  %v3511 = vpack.c.b16 %v3509, %v3508
  %v3515 = vsel %vm1095, %v3501, 0
  %3517 = vmatprep.subr.bf16.mxu0 0
  %3518 = vmatpush1.bf16.msra.mxu0 %v3510
  %3519 = vmatprep.subr.bf16.mxu0 0
  %3520 = vmatpush1.bf16.msra.mxu0 %v3511
  %3521 = vmatprep.subr.bf16.mxu0 0
  %3522 = vmatpush1.bf16.msra.mxu0 0
  %3523 = vmatprep.subr.bf16.mxu0 0
  %3524 = vmatpush1.bf16.msra.mxu0 0
  %3525 = vmatprep.subr.bf16.mxu0 0
  %3526 = vmatpush1.bf16.msra.mxu0 0
  %3527 = vmatprep.subr.bf16.mxu0 0
  %3528 = vmatpush1.bf16.msra.mxu0 0
  %3529 = vmatprep.subr.bf16.mxu0 0
  %3530 = vmatpush1.bf16.msra.mxu0 0
  %3531 = vmatprep.subr.bf16.mxu0 0
  %3532 = vmatpush1.bf16.msra.mxu0 0
  %3533 = vmatprep.subr.bf16.mxu0 0
  %3534 = vmatpush1.bf16.msra.mxu0 0
  %3535 = vmatprep.subr.bf16.mxu0 0
  %3536 = vmatpush1.bf16.msra.mxu0 0
  %3537 = vmatprep.subr.bf16.mxu0 0
  %3538 = vmatpush1.bf16.msra.mxu0 0
  %3539 = vmatprep.subr.bf16.mxu0 0
  %3540 = vmatpush1.bf16.msra.mxu0 0
  %3541 = vmatprep.subr.bf16.mxu0 0
  %3542 = vmatpush1.bf16.msra.mxu0 0
  %3543 = vmatprep.subr.bf16.mxu0 0
  %3544 = vmatpush1.bf16.msra.mxu0 0
  %3545 = vmatprep.subr.bf16.mxu0 0
  %3546 = vmatpush1.bf16.msra.mxu0 0
  %3547 = vmatprep.subr.bf16.mxu0 0
  %3548 = vmatpush1.bf16.msra.mxu0 0
  %3549 = vmatprep.mubr.bf16.mxu0 0
  %3550 = vmatmul.mubr.bf16.gmra.mrb[0].mxu0 %v3515
  %v3551 = vpop.f32.mrb[0].mxu0
  %v3552 = vadd.f32 0.0, %v3551
  %v3553 = vpop.f32.mrb[0].mxu0
  %v3554 = vpop.f32.mrb[0].mxu0
  %v3555 = vpop.f32.mrb[0].mxu0
  %3556 = vdwg.mxu0
  %v3557 = vadd.f32 %v3041, %v3552
  %3558 = vrot.lane.b32.xlu0 %v3362, 96
  %v3559 = vpop.permute.xlu0 %3558
  %3560 = vrot.lane.b32.xlu0 %v3363, 96
  %v3561 = vpop.permute.xlu0 %3560
  %v3562 = vsel %vm1095, %v3559, 0
  %v3564 = vsel %vm1095, %v3561, 0
  %3566 = vmatprep.subr.mxu0 0.0
  %3567 = vmatpush1.xpose.msra.mxu0 %v3564
  %3568 = vmatprep.subr.mxu0 0.0
  %3569 = vmatpush1.xpose.msra.mxu0 0.0
  %3570 = vmatprep.subr.mxu0 0.0
  %3571 = vmatpush1.xpose.msra.mxu0 0.0
  %3572 = vmatprep.subr.mxu0 0.0
  %3573 = vmatpush1.xpose.msra.mxu0 0.0
  %3574 = vmatprep.subr.mxu0 0.0
  %3575 = vmatpush1.xpose.msra.mxu0 0.0
  %3576 = vmatprep.subr.mxu0 0.0
  %3577 = vmatpush1.xpose.msra.mxu0 0.0
  %3578 = vmatprep.subr.mxu0 0.0
  %3579 = vmatpush1.xpose.msra.mxu0 0.0
  %3580 = vmatprep.subr.mxu0 0.0
  %3581 = vmatpush1.xpose.msra.mxu0 0.0
  %3582 = vmatprep.subr.mxu0 0.0
  %3583 = vmatpush1.xpose.msra.mxu0 0.0
  %3584 = vmatprep.subr.mxu0 0.0
  %3585 = vmatpush1.xpose.msra.mxu0 0.0
  %3586 = vmatprep.subr.mxu0 0.0
  %3587 = vmatpush1.xpose.msra.mxu0 0.0
  %3588 = vmatprep.subr.mxu0 0.0
  %3589 = vmatpush1.xpose.msra.mxu0 0.0
  %3590 = vmatprep.subr.mxu0 0.0
  %3591 = vmatpush1.xpose.msra.mxu0 0.0
  %3592 = vmatprep.subr.mxu0 0.0
  %3593 = vmatpush1.xpose.msra.mxu0 0.0
  %3594 = vmatprep.subr.mxu0 0.0
  %3595 = vmatpush1.xpose.msra.mxu0 0.0
  %3596 = vmatprep.subr.mxu0 0.0
  %3597 = vmatpush1.xpose.msra.mxu0 0.0
  %3598 = vmatprep.subr.mxu0 0.0
  %3599 = vmatpush1.xpose.msra.mxu0 0.0
  %3600 = vmatprep.subr.mxu0 0.0
  %3601 = vmatpush1.xpose.msra.mxu0 0.0
  %3602 = vmatprep.subr.mxu0 0.0
  %3603 = vmatpush1.xpose.msra.mxu0 0.0
  %3604 = vmatprep.subr.mxu0 0.0
  %3605 = vmatpush1.xpose.msra.mxu0 0.0
  %3606 = vmatprep.subr.mxu0 0.0
  %3607 = vmatpush1.xpose.msra.mxu0 0.0
  %3608 = vmatprep.subr.mxu0 0.0
  %3609 = vmatpush1.xpose.msra.mxu0 0.0
  %3610 = vmatprep.subr.mxu0 0.0
  %3611 = vmatpush1.xpose.msra.mxu0 0.0
  %3612 = vmatprep.subr.mxu0 0.0
  %3613 = vmatpush1.xpose.msra.mxu0 0.0
  %3614 = vmatprep.subr.mxu0 0.0
  %3615 = vmatpush1.xpose.msra.mxu0 0.0
  %3616 = vmatprep.subr.mxu0 0.0
  %3617 = vmatpush1.xpose.msra.mxu0 0.0
  %3618 = vmatprep.subr.mxu0 0.0
  %3619 = vmatpush1.xpose.msra.mxu0 0.0
  %3620 = vmatprep.subr.mxu0 0.0
  %3621 = vmatpush1.xpose.msra.mxu0 0.0
  %3622 = vmatprep.subr.mxu0 0.0
  %3623 = vmatpush1.xpose.msra.mxu0 0.0
  %3624 = vmatprep.subr.mxu0 0.0
  %3625 = vmatpush1.xpose.msra.mxu0 0.0
  %3626 = vmatprep.subr.mxu0 0.0
  %3627 = vmatpush1.xpose.msra.mxu0 0.0
  %3628 = vmatprep.subr.mxu0 0.0
  %3629 = vmatpush1.xpose.msra.mxu0 0.0
  %3630 = vmatprep.mubr.f32.mxu0 0.0
  %3631 = vmatmul.mubr.f32.gmra.mrb[0].mxu0 %v3562
  %v3632 = vpop.f32.mrb[0].mxu0
  %v3633 = vadd.f32 0.0, %v3632
  %v3634 = vpop.f32.mrb[0].mxu0
  %3635 = vdwg.mxu0
  %v3636 = vmul.f32 %v3633, 0.17677669
  %v3637 = vsel %vm1173, %v3636, -inf
  %3638 = vmax.xlane.f32.xlu0 %v3637
  %v3639 = vpop.xlane.xlu0 %3638
  %v3640 = vsub.f32 %v3636, %v3639
  %v3641 = vmul.f32 %v3640, 1.442695
  %v3642 = vpow.pop %v3641
  %v3643 = vsel %vm1173, %v3642, 0.0
  %3644 = vadd.xlane.f32.xlu0 %v3643
  %v3645 = vpop.xlane.xlu0 %3644
  %v3646 = vrcp.pop %v3645
  %v3647 = vmul.f32 %v3642, %v3646
  %v3648 = vpack.c.bf16 %v3647, %v3647
  %3650 = vrot.lane.b32.xlu0 %v3454, 96
  %v3651 = vpop.permute.xlu0 %3650
  %v3653 = vsel %vm1187, %v3648, 0
  %v3656 = vand.u32 %v3651, %v1193
  %3658 = vmatprep.subr.bf16.mxu0 0
  %3659 = vmatpush1.bf16.msra.mxu0 %v3656
  %3660 = vmatprep.subr.bf16.mxu0 0
  %3661 = vmatpush1.bf16.msra.mxu0 0
  %3662 = vmatprep.subr.bf16.mxu0 0
  %3663 = vmatpush1.bf16.msra.mxu0 0
  %3664 = vmatprep.subr.bf16.mxu0 0
  %3665 = vmatpush1.bf16.msra.mxu0 0
  %3666 = vmatprep.subr.bf16.mxu0 0
  %3667 = vmatpush1.bf16.msra.mxu0 0
  %3668 = vmatprep.subr.bf16.mxu0 0
  %3669 = vmatpush1.bf16.msra.mxu0 0
  %3670 = vmatprep.subr.bf16.mxu0 0
  %3671 = vmatpush1.bf16.msra.mxu0 0
  %3672 = vmatprep.subr.bf16.mxu0 0
  %3673 = vmatpush1.bf16.msra.mxu0 0
  %3674 = vmatprep.subr.bf16.mxu0 0
  %3675 = vmatpush1.bf16.msra.mxu0 0
  %3676 = vmatprep.subr.bf16.mxu0 0
  %3677 = vmatpush1.bf16.msra.mxu0 0
  %3678 = vmatprep.subr.bf16.mxu0 0
  %3679 = vmatpush1.bf16.msra.mxu0 0
  %3680 = vmatprep.subr.bf16.mxu0 0
  %3681 = vmatpush1.bf16.msra.mxu0 0
  %3682 = vmatprep.subr.bf16.mxu0 0
  %3683 = vmatpush1.bf16.msra.mxu0 0
  %3684 = vmatprep.subr.bf16.mxu0 0
  %3685 = vmatpush1.bf16.msra.mxu0 0
  %3686 = vmatprep.subr.bf16.mxu0 0
  %3687 = vmatpush1.bf16.msra.mxu0 0
  %3688 = vmatprep.subr.bf16.mxu0 0
  %3689 = vmatpush1.bf16.msra.mxu0 0
  %3690 = vmatprep.mubr.bf16.mxu0 0
  %3691 = vmatmul.mubr.bf16.gmra.mrb[0].mxu0 %v3653
  %v3692 = vpop.f32.mrb[0].mxu0
  %v3693 = vadd.f32 0.0, %v3692
  %v3694 = vpop.f32.mrb[0].mxu0
  %v3695 = vpop.f32.mrb[0].mxu0
  %v3696 = vpop.f32.mrb[0].mxu0
  %3697 = vdwg.mxu0
  %v3698 = vpack.c.bf16 %v3693, %v3693
  %v3703 = vunpack.c.l.b16 %v3350
  %v3704 = vunpack.c.l.b16 %v3351
  %v3705 = vunpack.c.l.b16 %v3352
  %v3706 = vunpack.c.l.b16 %v3353
  %v3707 = vpack.c.b16 %v3704, %v3703
  %v3708 = vpack.c.b16 %v3706, %v3705
  %v3712 = vsel %vm1095, %v3698, 0
  %3714 = vmatprep.subr.bf16.mxu0 0
  %3715 = vmatpush1.bf16.msra.mxu0 %v3707
  %3716 = vmatprep.subr.bf16.mxu0 0
  %3717 = vmatpush1.bf16.msra.mxu0 %v3708
  %3718 = vmatprep.subr.bf16.mxu0 0
  %3719 = vmatpush1.bf16.msra.mxu0 0
  %3720 = vmatprep.subr.bf16.mxu0 0
  %3721 = vmatpush1.bf16.msra.mxu0 0
  %3722 = vmatprep.subr.bf16.mxu0 0
  %3723 = vmatpush1.bf16.msra.mxu0 0
  %3724 = vmatprep.subr.bf16.mxu0 0
  %3725 = vmatpush1.bf16.msra.mxu0 0
  %3726 = vmatprep.subr.bf16.mxu0 0
  %3727 = vmatpush1.bf16.msra.mxu0 0
  %3728 = vmatprep.subr.bf16.mxu0 0
  %3729 = vmatpush1.bf16.msra.mxu0 0
  %3730 = vmatprep.subr.bf16.mxu0 0
  %3731 = vmatpush1.bf16.msra.mxu0 0
  %3732 = vmatprep.subr.bf16.mxu0 0
  %3733 = vmatpush1.bf16.msra.mxu0 0
  %3734 = vmatprep.subr.bf16.mxu0 0
  %3735 = vmatpush1.bf16.msra.mxu0 0
  %3736 = vmatprep.subr.bf16.mxu0 0
  %3737 = vmatpush1.bf16.msra.mxu0 0
  %3738 = vmatprep.subr.bf16.mxu0 0
  %3739 = vmatpush1.bf16.msra.mxu0 0
  %3740 = vmatprep.subr.bf16.mxu0 0
  %3741 = vmatpush1.bf16.msra.mxu0 0
  %3742 = vmatprep.subr.bf16.mxu0 0
  %3743 = vmatpush1.bf16.msra.mxu0 0
  %3744 = vmatprep.subr.bf16.mxu0 0
  %3745 = vmatpush1.bf16.msra.mxu0 0
  %3746 = vmatprep.mubr.bf16.mxu0 0
  %3747 = vmatmul.mubr.bf16.gmra.mrb[0].mxu0 %v3712
  %v3748 = vpop.f32.mrb[0].mxu0
  %v3749 = vadd.f32 0.0, %v3748
  %v3750 = vpop.f32.mrb[0].mxu0
  %v3751 = vpop.f32.mrb[0].mxu0
  %v3752 = vpop.f32.mrb[0].mxu0
  %3753 = vdwg.mxu0
  %v3754 = vadd.f32 %v3557, %v3749
  %3755 = vrot.lane.b32.xlu0 %v3362, 64
  %v3756 = vpop.permute.xlu0 %3755
  %3757 = vrot.lane.b32.xlu0 %v3363, 64
  %v3758 = vpop.permute.xlu0 %3757
  %v3759 = vsel %vm1095, %v3756, 0
  %v3761 = vsel %vm1095, %v3758, 0
  %3763 = vmatprep.subr.mxu0 0.0
  %3764 = vmatpush1.xpose.msra.mxu0 %v3761
  %3765 = vmatprep.subr.mxu0 0.0
  %3766 = vmatpush1.xpose.msra.mxu0 0.0
  %3767 = vmatprep.subr.mxu0 0.0
  %3768 = vmatpush1.xpose.msra.mxu0 0.0
  %3769 = vmatprep.subr.mxu0 0.0
  %3770 = vmatpush1.xpose.msra.mxu0 0.0
  %3771 = vmatprep.subr.mxu0 0.0
  %3772 = vmatpush1.xpose.msra.mxu0 0.0
  %3773 = vmatprep.subr.mxu0 0.0
  %3774 = vmatpush1.xpose.msra.mxu0 0.0
  %3775 = vmatprep.subr.mxu0 0.0
  %3776 = vmatpush1.xpose.msra.mxu0 0.0
  %3777 = vmatprep.subr.mxu0 0.0
  %3778 = vmatpush1.xpose.msra.mxu0 0.0
  %3779 = vmatprep.subr.mxu0 0.0
  %3780 = vmatpush1.xpose.msra.mxu0 0.0
  %3781 = vmatprep.subr.mxu0 0.0
  %3782 = vmatpush1.xpose.msra.mxu0 0.0
  %3783 = vmatprep.subr.mxu0 0.0
  %3784 = vmatpush1.xpose.msra.mxu0 0.0
  %3785 = vmatprep.subr.mxu0 0.0
  %3786 = vmatpush1.xpose.msra.mxu0 0.0
  %3787 = vmatprep.subr.mxu0 0.0
  %3788 = vmatpush1.xpose.msra.mxu0 0.0
  %3789 = vmatprep.subr.mxu0 0.0
  %3790 = vmatpush1.xpose.msra.mxu0 0.0
  %3791 = vmatprep.subr.mxu0 0.0
  %3792 = vmatpush1.xpose.msra.mxu0 0.0
  %3793 = vmatprep.subr.mxu0 0.0
  %3794 = vmatpush1.xpose.msra.mxu0 0.0
  %3795 = vmatprep.subr.mxu0 0.0
  %3796 = vmatpush1.xpose.msra.mxu0 0.0
  %3797 = vmatprep.subr.mxu0 0.0
  %3798 = vmatpush1.xpose.msra.mxu0 0.0
  %3799 = vmatprep.subr.mxu0 0.0
  %3800 = vmatpush1.xpose.msra.mxu0 0.0
  %3801 = vmatprep.subr.mxu0 0.0
  %3802 = vmatpush1.xpose.msra.mxu0 0.0
  %3803 = vmatprep.subr.mxu0 0.0
  %3804 = vmatpush1.xpose.msra.mxu0 0.0
  %3805 = vmatprep.subr.mxu0 0.0
  %3806 = vmatpush1.xpose.msra.mxu0 0.0
  %3807 = vmatprep.subr.mxu0 0.0
  %3808 = vmatpush1.xpose.msra.mxu0 0.0
  %3809 = vmatprep.subr.mxu0 0.0
  %3810 = vmatpush1.xpose.msra.mxu0 0.0
  %3811 = vmatprep.subr.mxu0 0.0
  %3812 = vmatpush1.xpose.msra.mxu0 0.0
  %3813 = vmatprep.subr.mxu0 0.0
  %3814 = vmatpush1.xpose.msra.mxu0 0.0
  %3815 = vmatprep.subr.mxu0 0.0
  %3816 = vmatpush1.xpose.msra.mxu0 0.0
  %3817 = vmatprep.subr.mxu0 0.0
  %3818 = vmatpush1.xpose.msra.mxu0 0.0
  %3819 = vmatprep.subr.mxu0 0.0
  %3820 = vmatpush1.xpose.msra.mxu0 0.0
  %3821 = vmatprep.subr.mxu0 0.0
  %3822 = vmatpush1.xpose.msra.mxu0 0.0
  %3823 = vmatprep.subr.mxu0 0.0
  %3824 = vmatpush1.xpose.msra.mxu0 0.0
  %3825 = vmatprep.subr.mxu0 0.0
  %3826 = vmatpush1.xpose.msra.mxu0 0.0
  %3827 = vmatprep.mubr.f32.mxu0 0.0
  %3828 = vmatmul.mubr.f32.gmra.mrb[0].mxu0 %v3759
  %v3829 = vpop.f32.mrb[0].mxu0
  %v3830 = vadd.f32 0.0, %v3829
  %v3831 = vpop.f32.mrb[0].mxu0
  %3832 = vdwg.mxu0
  %v3833 = vmul.f32 %v3830, 0.17677669
  %v3834 = vsel %vm1173, %v3833, -inf
  %3835 = vmax.xlane.f32.xlu0 %v3834
  %v3836 = vpop.xlane.xlu0 %3835
  %v3837 = vsub.f32 %v3833, %v3836
  %v3838 = vmul.f32 %v3837, 1.442695
  %v3839 = vpow.pop %v3838
  %v3840 = vsel %vm1173, %v3839, 0.0
  %3841 = vadd.xlane.f32.xlu0 %v3840
  %v3842 = vpop.xlane.xlu0 %3841
  %v3843 = vrcp.pop %v3842
  %v3844 = vmul.f32 %v3839, %v3843
  %v3845 = vpack.c.bf16 %v3844, %v3844
  %3846 = vrot.lane.b32.xlu0 %v3454, 64
  %v3847 = vpop.permute.xlu0 %3846
  %v3849 = vsel %vm1187, %v3845, 0
  %v3852 = vand.u32 %v3847, %v1193
  %3854 = vmatprep.subr.bf16.mxu0 0
  %3855 = vmatpush1.bf16.msra.mxu0 %v3852
  %3856 = vmatprep.subr.bf16.mxu0 0
  %3857 = vmatpush1.bf16.msra.mxu0 0
  %3858 = vmatprep.subr.bf16.mxu0 0
  %3859 = vmatpush1.bf16.msra.mxu0 0
  %3860 = vmatprep.subr.bf16.mxu0 0
  %3861 = vmatpush1.bf16.msra.mxu0 0
  %3862 = vmatprep.subr.bf16.mxu0 0
  %3863 = vmatpush1.bf16.msra.mxu0 0
  %3864 = vmatprep.subr.bf16.mxu0 0
  %3865 = vmatpush1.bf16.msra.mxu0 0
  %3866 = vmatprep.subr.bf16.mxu0 0
  %3867 = vmatpush1.bf16.msra.mxu0 0
  %3868 = vmatprep.subr.bf16.mxu0 0
  %3869 = vmatpush1.bf16.msra.mxu0 0
  %3870 = vmatprep.subr.bf16.mxu0 0
  %3871 = vmatpush1.bf16.msra.mxu0 0
  %3872 = vmatprep.subr.bf16.mxu0 0
  %3873 = vmatpush1.bf16.msra.mxu0 0
  %3874 = vmatprep.subr.bf16.mxu0 0
  %3875 = vmatpush1.bf16.msra.mxu0 0
  %3876 = vmatprep.subr.bf16.mxu0 0
  %3877 = vmatpush1.bf16.msra.mxu0 0
  %3878 = vmatprep.subr.bf16.mxu0 0
  %3879 = vmatpush1.bf16.msra.mxu0 0
  %3880 = vmatprep.subr.bf16.mxu0 0
  %3881 = vmatpush1.bf16.msra.mxu0 0
  %3882 = vmatprep.subr.bf16.mxu0 0
  %3883 = vmatpush1.bf16.msra.mxu0 0
  %3884 = vmatprep.subr.bf16.mxu0 0
  %3885 = vmatpush1.bf16.msra.mxu0 0
  %3886 = vmatprep.mubr.bf16.mxu0 0
  %3887 = vmatmul.mubr.bf16.gmra.mrb[0].mxu0 %v3849
  %v3888 = vpop.f32.mrb[0].mxu0
  %v3889 = vadd.f32 0.0, %v3888
  %v3890 = vpop.f32.mrb[0].mxu0
  %v3891 = vpop.f32.mrb[0].mxu0
  %v3892 = vpop.f32.mrb[0].mxu0
  %3893 = vdwg.mxu0
  %v3894 = vpack.c.bf16 %v3889, %v3889
  %v3899 = vunpack.c.l.b16 %v3354
  %v3900 = vunpack.c.l.b16 %v3355
  %v3901 = vunpack.c.l.b16 %v3356
  %v3902 = vunpack.c.l.b16 %v3357
  %v3903 = vpack.c.b16 %v3900, %v3899
  %v3904 = vpack.c.b16 %v3902, %v3901
  %v3908 = vsel %vm1095, %v3894, 0
  %3910 = vmatprep.subr.bf16.mxu0 0
  %3911 = vmatpush1.bf16.msra.mxu0 %v3903
  %3912 = vmatprep.subr.bf16.mxu0 0
  %3913 = vmatpush1.bf16.msra.mxu0 %v3904
  %3914 = vmatprep.subr.bf16.mxu0 0
  %3915 = vmatpush1.bf16.msra.mxu0 0
  %3916 = vmatprep.subr.bf16.mxu0 0
  %3917 = vmatpush1.bf16.msra.mxu0 0
  %3918 = vmatprep.subr.bf16.mxu0 0
  %3919 = vmatpush1.bf16.msra.mxu0 0
  %3920 = vmatprep.subr.bf16.mxu0 0
  %3921 = vmatpush1.bf16.msra.mxu0 0
  %3922 = vmatprep.subr.bf16.mxu0 0
  %3923 = vmatpush1.bf16.msra.mxu0 0
  %3924 = vmatprep.subr.bf16.mxu0 0
  %3925 = vmatpush1.bf16.msra.mxu0 0
  %3926 = vmatprep.subr.bf16.mxu0 0
  %3927 = vmatpush1.bf16.msra.mxu0 0
  %3928 = vmatprep.subr.bf16.mxu0 0
  %3929 = vmatpush1.bf16.msra.mxu0 0
  %3930 = vmatprep.subr.bf16.mxu0 0
  %3931 = vmatpush1.bf16.msra.mxu0 0
  %3932 = vmatprep.subr.bf16.mxu0 0
  %3933 = vmatpush1.bf16.msra.mxu0 0
  %3934 = vmatprep.subr.bf16.mxu0 0
  %3935 = vmatpush1.bf16.msra.mxu0 0
  %3936 = vmatprep.subr.bf16.mxu0 0
  %3937 = vmatpush1.bf16.msra.mxu0 0
  %3938 = vmatprep.subr.bf16.mxu0 0
  %3939 = vmatpush1.bf16.msra.mxu0 0
  %3940 = vmatprep.subr.bf16.mxu0 0
  %3941 = vmatpush1.bf16.msra.mxu0 0
  %3942 = vmatprep.mubr.bf16.mxu0 0
  %3943 = vmatmul.mubr.bf16.gmra.mrb[0].mxu0 %v3908
  %v3944 = vpop.f32.mrb[0].mxu0
  %v3945 = vadd.f32 0.0, %v3944
  %v3946 = vpop.f32.mrb[0].mxu0
  %v3947 = vpop.f32.mrb[0].mxu0
  %v3948 = vpop.f32.mrb[0].mxu0
  %3949 = vdwg.mxu0
  %v3950 = vadd.f32 %v3754, %v3945
  %3951 = vrot.lane.b32.xlu0 %v3362, 32
  %v3952 = vpop.permute.xlu0 %3951
  %3953 = vrot.lane.b32.xlu0 %v3363, 32
  %v3954 = vpop.permute.xlu0 %3953
  %v3955 = vsel %vm1095, %v3952, 0
  %v3957 = vsel %vm1095, %v3954, 0
  %3959 = vmatprep.subr.mxu0 0.0
  %3960 = vmatpush1.xpose.msra.mxu0 %v3957
  %3961 = vmatprep.subr.mxu0 0.0
  %3962 = vmatpush1.xpose.msra.mxu0 0.0
  %3963 = vmatprep.subr.mxu0 0.0
  %3964 = vmatpush1.xpose.msra.mxu0 0.0
  %3965 = vmatprep.subr.mxu0 0.0
  %3966 = vmatpush1.xpose.msra.mxu0 0.0
  %3967 = vmatprep.subr.mxu0 0.0
  %3968 = vmatpush1.xpose.msra.mxu0 0.0
  %3969 = vmatprep.subr.mxu0 0.0
  %3970 = vmatpush1.xpose.msra.mxu0 0.0
  %3971 = vmatprep.subr.mxu0 0.0
  %3972 = vmatpush1.xpose.msra.mxu0 0.0
  %3973 = vmatprep.subr.mxu0 0.0
  %3974 = vmatpush1.xpose.msra.mxu0 0.0
  %3975 = vmatprep.subr.mxu0 0.0
  %3976 = vmatpush1.xpose.msra.mxu0 0.0
  %3977 = vmatprep.subr.mxu0 0.0
  %3978 = vmatpush1.xpose.msra.mxu0 0.0
  %3979 = vmatprep.subr.mxu0 0.0
  %3980 = vmatpush1.xpose.msra.mxu0 0.0
  %3981 = vmatprep.subr.mxu0 0.0
  %3982 = vmatpush1.xpose.msra.mxu0 0.0
  %3983 = vmatprep.subr.mxu0 0.0
  %3984 = vmatpush1.xpose.msra.mxu0 0.0
  %3985 = vmatprep.subr.mxu0 0.0
  %3986 = vmatpush1.xpose.msra.mxu0 0.0
  %3987 = vmatprep.subr.mxu0 0.0
  %3988 = vmatpush1.xpose.msra.mxu0 0.0
  %3989 = vmatprep.subr.mxu0 0.0
  %3990 = vmatpush1.xpose.msra.mxu0 0.0
  %3991 = vmatprep.subr.mxu0 0.0
  %3992 = vmatpush1.xpose.msra.mxu0 0.0
  %3993 = vmatprep.subr.mxu0 0.0
  %3994 = vmatpush1.xpose.msra.mxu0 0.0
  %3995 = vmatprep.subr.mxu0 0.0
  %3996 = vmatpush1.xpose.msra.mxu0 0.0
  %3997 = vmatprep.subr.mxu0 0.0
  %3998 = vmatpush1.xpose.msra.mxu0 0.0
  %3999 = vmatprep.subr.mxu0 0.0
  %4000 = vmatpush1.xpose.msra.mxu0 0.0
  %4001 = vmatprep.subr.mxu0 0.0
  %4002 = vmatpush1.xpose.msra.mxu0 0.0
  %4003 = vmatprep.subr.mxu0 0.0
  %4004 = vmatpush1.xpose.msra.mxu0 0.0
  %4005 = vmatprep.subr.mxu0 0.0
  %4006 = vmatpush1.xpose.msra.mxu0 0.0
  %4007 = vmatprep.subr.mxu0 0.0
  %4008 = vmatpush1.xpose.msra.mxu0 0.0
  %4009 = vmatprep.subr.mxu0 0.0
  %4010 = vmatpush1.xpose.msra.mxu0 0.0
  %4011 = vmatprep.subr.mxu0 0.0
  %4012 = vmatpush1.xpose.msra.mxu0 0.0
  %4013 = vmatprep.subr.mxu0 0.0
  %4014 = vmatpush1.xpose.msra.mxu0 0.0
  %4015 = vmatprep.subr.mxu0 0.0
  %4016 = vmatpush1.xpose.msra.mxu0 0.0
  %4017 = vmatprep.subr.mxu0 0.0
  %4018 = vmatpush1.xpose.msra.mxu0 0.0
  %4019 = vmatprep.subr.mxu0 0.0
  %4020 = vmatpush1.xpose.msra.mxu0 0.0
  %4021 = vmatprep.subr.mxu0 0.0
  %4022 = vmatpush1.xpose.msra.mxu0 0.0
  %4023 = vmatprep.mubr.f32.mxu0 0.0
  %4024 = vmatmul.mubr.f32.gmra.mrb[0].mxu0 %v3955
  %v4025 = vpop.f32.mrb[0].mxu0
  %v4026 = vadd.f32 0.0, %v4025
  %v4027 = vpop.f32.mrb[0].mxu0
  %4028 = vdwg.mxu0
  %v4029 = vmul.f32 %v4026, 0.17677669
  %v4030 = vsel %vm1173, %v4029, -inf
  %4031 = vmax.xlane.f32.xlu0 %v4030
  %v4032 = vpop.xlane.xlu0 %4031
  %v4033 = vsub.f32 %v4029, %v4032
  %v4034 = vmul.f32 %v4033, 1.442695
  %v4035 = vpow.pop %v4034
  %v4036 = vsel %vm1173, %v4035, 0.0
  %4037 = vadd.xlane.f32.xlu0 %v4036
  %v4038 = vpop.xlane.xlu0 %4037
  %v4039 = vrcp.pop %v4038
  %v4040 = vmul.f32 %v4035, %v4039
  %v4041 = vpack.c.bf16 %v4040, %v4040
  %4042 = vrot.lane.b32.xlu0 %v3454, 32
  %v4043 = vpop.permute.xlu0 %4042
  %v4045 = vsel %vm1187, %v4041, 0
  %v4048 = vand.u32 %v4043, %v1193
  %4050 = vmatprep.subr.bf16.mxu0 0
  %4051 = vmatpush1.bf16.msra.mxu0 %v4048
  %4052 = vmatprep.subr.bf16.mxu0 0
  %4053 = vmatpush1.bf16.msra.mxu0 0
  %4054 = vmatprep.subr.bf16.mxu0 0
  %4055 = vmatpush1.bf16.msra.mxu0 0
  %4056 = vmatprep.subr.bf16.mxu0 0
  %4057 = vmatpush1.bf16.msra.mxu0 0
  %4058 = vmatprep.subr.bf16.mxu0 0
  %4059 = vmatpush1.bf16.msra.mxu0 0
  %4060 = vmatprep.subr.bf16.mxu0 0
  %4061 = vmatpush1.bf16.msra.mxu0 0
  %4062 = vmatprep.subr.bf16.mxu0 0
  %4063 = vmatpush1.bf16.msra.mxu0 0
  %4064 = vmatprep.subr.bf16.mxu0 0
  %4065 = vmatpush1.bf16.msra.mxu0 0
  %4066 = vmatprep.subr.bf16.mxu0 0
  %4067 = vmatpush1.bf16.msra.mxu0 0
  %4068 = vmatprep.subr.bf16.mxu0 0
  %4069 = vmatpush1.bf16.msra.mxu0 0
  %4070 = vmatprep.subr.bf16.mxu0 0
  %4071 = vmatpush1.bf16.msra.mxu0 0
  %4072 = vmatprep.subr.bf16.mxu0 0
  %4073 = vmatpush1.bf16.msra.mxu0 0
  %4074 = vmatprep.subr.bf16.mxu0 0
  %4075 = vmatpush1.bf16.msra.mxu0 0
  %4076 = vmatprep.subr.bf16.mxu0 0
  %4077 = vmatpush1.bf16.msra.mxu0 0
  %4078 = vmatprep.subr.bf16.mxu0 0
  %4079 = vmatpush1.bf16.msra.mxu0 0
  %4080 = vmatprep.subr.bf16.mxu0 0
  %4081 = vmatpush1.bf16.msra.mxu0 0
  %4082 = vmatprep.mubr.bf16.mxu0 0
  %4083 = vmatmul.mubr.bf16.gmra.mrb[0].mxu0 %v4045
  %v4084 = vpop.f32.mrb[0].mxu0
  %v4085 = vadd.f32 0.0, %v4084
  %v4086 = vpop.f32.mrb[0].mxu0
  %v4087 = vpop.f32.mrb[0].mxu0
  %v4088 = vpop.f32.mrb[0].mxu0
  %4089 = vdwg.mxu0
  %v4090 = vpack.c.bf16 %v4085, %v4085
  %v4095 = vunpack.c.l.b16 %v3358
  %v4096 = vunpack.c.l.b16 %v3359
  %v4097 = vunpack.c.l.b16 %v3360
  %v4098 = vunpack.c.l.b16 %v3361
  %v4099 = vpack.c.b16 %v4096, %v4095
  %v4100 = vpack.c.b16 %v4098, %v4097
  %v4104 = vsel %vm1095, %v4090, 0
  %4106 = vmatprep.subr.bf16.mxu0 0
  %4107 = vmatpush1.bf16.msra.mxu0 %v4099
  %4108 = vmatprep.subr.bf16.mxu0 0
  %4109 = vmatpush1.bf16.msra.mxu0 %v4100
  %4110 = vmatprep.subr.bf16.mxu0 0
  %4111 = vmatpush1.bf16.msra.mxu0 0
  %4112 = vmatprep.subr.bf16.mxu0 0
  %4113 = vmatpush1.bf16.msra.mxu0 0
  %4114 = vmatprep.subr.bf16.mxu0 0
  %4115 = vmatpush1.bf16.msra.mxu0 0
  %4116 = vmatprep.subr.bf16.mxu0 0
  %4117 = vmatpush1.bf16.msra.mxu0 0
  %4118 = vmatprep.subr.bf16.mxu0 0
  %4119 = vmatpush1.bf16.msra.mxu0 0
  %4120 = vmatprep.subr.bf16.mxu0 0
  %4121 = vmatpush1.bf16.msra.mxu0 0
  %4122 = vmatprep.subr.bf16.mxu0 0
  %4123 = vmatpush1.bf16.msra.mxu0 0
  %4124 = vmatprep.subr.bf16.mxu0 0
  %4125 = vmatpush1.bf16.msra.mxu0 0
  %4126 = vmatprep.subr.bf16.mxu0 0
  %4127 = vmatpush1.bf16.msra.mxu0 0
  %4128 = vmatprep.subr.bf16.mxu0 0
  %4129 = vmatpush1.bf16.msra.mxu0 0
  %4130 = vmatprep.subr.bf16.mxu0 0
  %4131 = vmatpush1.bf16.msra.mxu0 0
  %4132 = vmatprep.subr.bf16.mxu0 0
  %4133 = vmatpush1.bf16.msra.mxu0 0
  %4134 = vmatprep.subr.bf16.mxu0 0
  %4135 = vmatpush1.bf16.msra.mxu0 0
  %4136 = vmatprep.subr.bf16.mxu0 0
  %4137 = vmatpush1.bf16.msra.mxu0 0
  %4138 = vmatprep.mubr.bf16.mxu0 0
  %4139 = vmatmul.mubr.bf16.gmra.mrb[0].mxu0 %v4104
  %v4140 = vpop.f32.mrb[0].mxu0
  %v4141 = vadd.f32 0.0, %v4140
  %v4142 = vpop.f32.mrb[0].mxu0
  %v4143 = vpop.f32.mrb[0].mxu0
  %v4144 = vpop.f32.mrb[0].mxu0
  %4145 = vdwg.mxu0
  %v4146 = vadd.f32 %v3950, %v4141
  %v4147 = vld [vmem:[#allocation2] sm:$0x1f]
  %v4148 = vadd.f32 %v4147, %v4146
  %4149 = vst [vmem:[#allocation2] sm:$0x1f] %v4148
  %v4150 = vld [vmem:[#allocation3] sm:$0xe0]
  %v4151 = vld [vmem:[#allocation3 + $0x18] sm:$0x3]
  %v4152 = vld [vmem:[#allocation3 + $0x8] sm:$0xe0]
  %v4153 = vld [vmem:[#allocation3 + $0x20] sm:$0x3]
  %v4154 = vld [vmem:[#allocation3 + $0x10] sm:$0xe0]
  %v4155 = vld [vmem:[#allocation3 + $0x28] sm:$0x3]
  %v4158 = vrot.slane %v4150, 5
  %v4159 = vrot.slane %v4151, 5
  %v4160 = vsel %vm1191, %v4158, %v4159
  %v4163 = vrot.slane %v4152, 5
  %v4164 = vrot.slane %v4153, 5
  %v4165 = vsel %vm1191, %v4163, %v4164
  %v4166 = vsel %vm1095, %v4160, 0
  %v4168 = vsel %vm1095, %v4165, 0
  %4170 = vmatprep.subr.mxu0 0.0
  %4171 = vmatpush1.xpose.msra.mxu0 %v4168
  %4172 = vmatprep.subr.mxu0 0.0
  %4173 = vmatpush1.xpose.msra.mxu0 0.0
  %4174 = vmatprep.subr.mxu0 0.0
  %4175 = vmatpush1.xpose.msra.mxu0 0.0
  %4176 = vmatprep.subr.mxu0 0.0
  %4177 = vmatpush1.xpose.msra.mxu0 0.0
  %4178 = vmatprep.subr.mxu0 0.0
  %4179 = vmatpush1.xpose.msra.mxu0 0.0
  %4180 = vmatprep.subr.mxu0 0.0
  %4181 = vmatpush1.xpose.msra.mxu0 0.0
  %4182 = vmatprep.subr.mxu0 0.0
  %4183 = vmatpush1.xpose.msra.mxu0 0.0
  %4184 = vmatprep.subr.mxu0 0.0
  %4185 = vmatpush1.xpose.msra.mxu0 0.0
  %4186 = vmatprep.subr.mxu0 0.0
  %4187 = vmatpush1.xpose.msra.mxu0 0.0
  %4188 = vmatprep.subr.mxu0 0.0
  %4189 = vmatpush1.xpose.msra.mxu0 0.0
  %4190 = vmatprep.subr.mxu0 0.0
  %4191 = vmatpush1.xpose.msra.mxu0 0.0
  %4192 = vmatprep.subr.mxu0 0.0
  %4193 = vmatpush1.xpose.msra.mxu0 0.0
  %4194 = vmatprep.subr.mxu0 0.0
  %4195 = vmatpush1.xpose.msra.mxu0 0.0
  %4196 = vmatprep.subr.mxu0 0.0
  %4197 = vmatpush1.xpose.msra.mxu0 0.0
  %4198 = vmatprep.subr.mxu0 0.0
  %4199 = vmatpush1.xpose.msra.mxu0 0.0
  %4200 = vmatprep.subr.mxu0 0.0
  %4201 = vmatpush1.xpose.msra.mxu0 0.0
  %4202 = vmatprep.subr.mxu0 0.0
  %4203 = vmatpush1.xpose.msra.mxu0 0.0
  %4204 = vmatprep.subr.mxu0 0.0
  %4205 = vmatpush1.xpose.msra.mxu0 0.0
  %4206 = vmatprep.subr.mxu0 0.0
  %4207 = vmatpush1.xpose.msra.mxu0 0.0
  %4208 = vmatprep.subr.mxu0 0.0
  %4209 = vmatpush1.xpose.msra.mxu0 0.0
  %4210 = vmatprep.subr.mxu0 0.0
  %4211 = vmatpush1.xpose.msra.mxu0 0.0
  %4212 = vmatprep.subr.mxu0 0.0
  %4213 = vmatpush1.xpose.msra.mxu0 0.0
  %4214 = vmatprep.subr.mxu0 0.0
  %4215 = vmatpush1.xpose.msra.mxu0 0.0
  %4216 = vmatprep.subr.mxu0 0.0
  %4217 = vmatpush1.xpose.msra.mxu0 0.0
  %4218 = vmatprep.subr.mxu0 0.0
  %4219 = vmatpush1.xpose.msra.mxu0 0.0
  %4220 = vmatprep.subr.mxu0 0.0
  %4221 = vmatpush1.xpose.msra.mxu0 0.0
  %4222 = vmatprep.subr.mxu0 0.0
  %4223 = vmatpush1.xpose.msra.mxu0 0.0
  %4224 = vmatprep.subr.mxu0 0.0
  %4225 = vmatpush1.xpose.msra.mxu0 0.0
  %4226 = vmatprep.subr.mxu0 0.0
  %4227 = vmatpush1.xpose.msra.mxu0 0.0
  %4228 = vmatprep.subr.mxu0 0.0
  %4229 = vmatpush1.xpose.msra.mxu0 0.0
  %4230 = vmatprep.subr.mxu0 0.0
  %4231 = vmatpush1.xpose.msra.mxu0 0.0
  %4232 = vmatprep.subr.mxu0 0.0
  %4233 = vmatpush1.xpose.msra.mxu0 0.0
  %4234 = vmatprep.mubr.f32.mxu0 0.0
  %4235 = vmatmul.mubr.f32.gmra.mrb[0].mxu0 %v4166
  %v4236 = vpop.f32.mrb[0].mxu0
  %v4237 = vadd.f32 0.0, %v4236
  %v4238 = vpop.f32.mrb[0].mxu0
  %4239 = vdwg.mxu0
  %v4240 = vmul.f32 %v4237, 0.17677669
  %v4241 = vsel %vm1173, %v4240, -inf
  %4242 = vmax.xlane.f32.xlu0 %v4241
  %v4243 = vpop.xlane.xlu0 %4242
  %v4244 = vsub.f32 %v4240, %v4243
  %v4245 = vmul.f32 %v4244, 1.442695
  %v4246 = vpow.pop %v4245
  %v4247 = vsel %vm1173, %v4246, 0.0
  %4248 = vadd.xlane.f32.xlu0 %v4247
  %v4249 = vpop.xlane.xlu0 %4248
  %v4250 = vrcp.pop %v4249
  %v4251 = vmul.f32 %v4246, %v4250
  %v4252 = vpack.c.bf16 %v4251, %v4251
  %v4253 = vpack.c.bf16 %v4155, %v4154
  %v4255 = vshrl.u32 %v4253, 16
  %v4257 = vrot.slane %v4255, 2
  %v4258 = vshll.u32 %v4253, 16
  %v4260 = vrot.slane %v4258, 3
  %v4261 = vor.u32 %v4257, %v4260
  %v4263 = vsel %vm1187, %v4252, 0
  %v4266 = vand.u32 %v4261, %v1193
  %4268 = vmatprep.subr.bf16.mxu0 0
  %4269 = vmatpush1.bf16.msra.mxu0 %v4266
  %4270 = vmatprep.subr.bf16.mxu0 0
  %4271 = vmatpush1.bf16.msra.mxu0 0
  %4272 = vmatprep.subr.bf16.mxu0 0
  %4273 = vmatpush1.bf16.msra.mxu0 0
  %4274 = vmatprep.subr.bf16.mxu0 0
  %4275 = vmatpush1.bf16.msra.mxu0 0
  %4276 = vmatprep.subr.bf16.mxu0 0
  %4277 = vmatpush1.bf16.msra.mxu0 0
  %4278 = vmatprep.subr.bf16.mxu0 0
  %4279 = vmatpush1.bf16.msra.mxu0 0
  %4280 = vmatprep.subr.bf16.mxu0 0
  %4281 = vmatpush1.bf16.msra.mxu0 0
  %4282 = vmatprep.subr.bf16.mxu0 0
  %4283 = vmatpush1.bf16.msra.mxu0 0
  %4284 = vmatprep.subr.bf16.mxu0 0
  %4285 = vmatpush1.bf16.msra.mxu0 0
  %4286 = vmatprep.subr.bf16.mxu0 0
  %4287 = vmatpush1.bf16.msra.mxu0 0
  %4288 = vmatprep.subr.bf16.mxu0 0
  %4289 = vmatpush1.bf16.msra.mxu0 0
  %4290 = vmatprep.subr.bf16.mxu0 0
  %4291 = vmatpush1.bf16.msra.mxu0 0
  %4292 = vmatprep.subr.bf16.mxu0 0
  %4293 = vmatpush1.bf16.msra.mxu0 0
  %4294 = vmatprep.subr.bf16.mxu0 0
  %4295 = vmatpush1.bf16.msra.mxu0 0
  %4296 = vmatprep.subr.bf16.mxu0 0
  %4297 = vmatpush1.bf16.msra.mxu0 0
  %4298 = vmatprep.subr.bf16.mxu0 0
  %4299 = vmatpush1.bf16.msra.mxu0 0
  %4300 = vmatprep.mubr.bf16.mxu0 0
  %4301 = vmatmul.mubr.bf16.gmra.mrb[0].mxu0 %v4263
  %v4302 = vpop.f32.mrb[0].mxu0
  %v4303 = vadd.f32 0.0, %v4302
  %v4304 = vpop.f32.mrb[0].mxu0
  %v4305 = vpop.f32.mrb[0].mxu0
  %v4306 = vpop.f32.mrb[0].mxu0
  %4307 = vdwg.mxu0
  %v4308 = vpack.c.bf16 %v4303, %v4303
  %v4310 = vsel %vm1095, %v4308, 0
  %4312 = vmatprep.subr.bf16.mxu0 0
  %4313 = vmatpush1.bf16.msra.mxu0 %v3510
  %4314 = vmatprep.subr.bf16.mxu0 0
  %4315 = vmatpush1.bf16.msra.mxu0 %v3511
  %4316 = vmatprep.subr.bf16.mxu0 0
  %4317 = vmatpush1.bf16.msra.mxu0 0
  %4318 = vmatprep.subr.bf16.mxu0 0
  %4319 = vmatpush1.bf16.msra.mxu0 0
  %4320 = vmatprep.subr.bf16.mxu0 0
  %4321 = vmatpush1.bf16.msra.mxu0 0
  %4322 = vmatprep.subr.bf16.mxu0 0
  %4323 = vmatpush1.bf16.msra.mxu0 0
  %4324 = vmatprep.subr.bf16.mxu0 0
  %4325 = vmatpush1.bf16.msra.mxu0 0
  %4326 = vmatprep.subr.bf16.mxu0 0
  %4327 = vmatpush1.bf16.msra.mxu0 0
  %4328 = vmatprep.subr.bf16.mxu0 0
  %4329 = vmatpush1.bf16.msra.mxu0 0
  %4330 = vmatprep.subr.bf16.mxu0 0
  %4331 = vmatpush1.bf16.msra.mxu0 0
  %4332 = vmatprep.subr.bf16.mxu0 0
  %4333 = vmatpush1.bf16.msra.mxu0 0
  %4334 = vmatprep.subr.bf16.mxu0 0
  %4335 = vmatpush1.bf16.msra.mxu0 0
  %4336 = vmatprep.subr.bf16.mxu0 0
  %4337 = vmatpush1.bf16.msra.mxu0 0
  %4338 = vmatprep.subr.bf16.mxu0 0
  %4339 = vmatpush1.bf16.msra.mxu0 0
  %4340 = vmatprep.subr.bf16.mxu0 0
  %4341 = vmatpush1.bf16.msra.mxu0 0
  %4342 = vmatprep.subr.bf16.mxu0 0
  %4343 = vmatpush1.bf16.msra.mxu0 0
  %4344 = vmatprep.mubr.bf16.mxu0 0
  %4345 = vmatmul.mubr.bf16.gmra.mrb[0].mxu0 %v4310
  %v4346 = vpop.f32.mrb[0].mxu0
  %v4347 = vadd.f32 0.0, %v4346
  %v4348 = vpop.f32.mrb[0].mxu0
  %v4349 = vpop.f32.mrb[0].mxu0
  %v4350 = vpop.f32.mrb[0].mxu0
  %4351 = vdwg.mxu0
  %v4352 = vadd.f32 %v3041, %v4347
  %4353 = vrot.lane.b32.xlu0 %v4160, 96
  %v4354 = vpop.permute.xlu0 %4353
  %4355 = vrot.lane.b32.xlu0 %v4165, 96
  %v4356 = vpop.permute.xlu0 %4355
  %v4357 = vsel %vm1095, %v4354, 0
  %v4359 = vsel %vm1095, %v4356, 0
  %4361 = vmatprep.subr.mxu0 0.0
  %4362 = vmatpush1.xpose.msra.mxu0 %v4359
  %4363 = vmatprep.subr.mxu0 0.0
  %4364 = vmatpush1.xpose.msra.mxu0 0.0
  %4365 = vmatprep.subr.mxu0 0.0
  %4366 = vmatpush1.xpose.msra.mxu0 0.0
  %4367 = vmatprep.subr.mxu0 0.0
  %4368 = vmatpush1.xpose.msra.mxu0 0.0
  %4369 = vmatprep.subr.mxu0 0.0
  %4370 = vmatpush1.xpose.msra.mxu0 0.0
  %4371 = vmatprep.subr.mxu0 0.0
  %4372 = vmatpush1.xpose.msra.mxu0 0.0
  %4373 = vmatprep.subr.mxu0 0.0
  %4374 = vmatpush1.xpose.msra.mxu0 0.0
  %4375 = vmatprep.subr.mxu0 0.0
  %4376 = vmatpush1.xpose.msra.mxu0 0.0
  %4377 = vmatprep.subr.mxu0 0.0
  %4378 = vmatpush1.xpose.msra.mxu0 0.0
  %4379 = vmatprep.subr.mxu0 0.0
  %4380 = vmatpush1.xpose.msra.mxu0 0.0
  %4381 = vmatprep.subr.mxu0 0.0
  %4382 = vmatpush1.xpose.msra.mxu0 0.0
  %4383 = vmatprep.subr.mxu0 0.0
  %4384 = vmatpush1.xpose.msra.mxu0 0.0
  %4385 = vmatprep.subr.mxu0 0.0
  %4386 = vmatpush1.xpose.msra.mxu0 0.0
  %4387 = vmatprep.subr.mxu0 0.0
  %4388 = vmatpush1.xpose.msra.mxu0 0.0
  %4389 = vmatprep.subr.mxu0 0.0
  %4390 = vmatpush1.xpose.msra.mxu0 0.0
  %4391 = vmatprep.subr.mxu0 0.0
  %4392 = vmatpush1.xpose.msra.mxu0 0.0
  %4393 = vmatprep.subr.mxu0 0.0
  %4394 = vmatpush1.xpose.msra.mxu0 0.0
  %4395 = vmatprep.subr.mxu0 0.0
  %4396 = vmatpush1.xpose.msra.mxu0 0.0
  %4397 = vmatprep.subr.mxu0 0.0
  %4398 = vmatpush1.xpose.msra.mxu0 0.0
  %4399 = vmatprep.subr.mxu0 0.0
  %4400 = vmatpush1.xpose.msra.mxu0 0.0
  %4401 = vmatprep.subr.mxu0 0.0
  %4402 = vmatpush1.xpose.msra.mxu0 0.0
  %4403 = vmatprep.subr.mxu0 0.0
  %4404 = vmatpush1.xpose.msra.mxu0 0.0
  %4405 = vmatprep.subr.mxu0 0.0
  %4406 = vmatpush1.xpose.msra.mxu0 0.0
  %4407 = vmatprep.subr.mxu0 0.0
  %4408 = vmatpush1.xpose.msra.mxu0 0.0
  %4409 = vmatprep.subr.mxu0 0.0
  %4410 = vmatpush1.xpose.msra.mxu0 0.0
  %4411 = vmatprep.subr.mxu0 0.0
  %4412 = vmatpush1.xpose.msra.mxu0 0.0
  %4413 = vmatprep.subr.mxu0 0.0
  %4414 = vmatpush1.xpose.msra.mxu0 0.0
  %4415 = vmatprep.subr.mxu0 0.0
  %4416 = vmatpush1.xpose.msra.mxu0 0.0
  %4417 = vmatprep.subr.mxu0 0.0
  %4418 = vmatpush1.xpose.msra.mxu0 0.0
  %4419 = vmatprep.subr.mxu0 0.0
  %4420 = vmatpush1.xpose.msra.mxu0 0.0
  %4421 = vmatprep.subr.mxu0 0.0
  %4422 = vmatpush1.xpose.msra.mxu0 0.0
  %4423 = vmatprep.subr.mxu0 0.0
  %4424 = vmatpush1.xpose.msra.mxu0 0.0
  %4425 = vmatprep.mubr.f32.mxu0 0.0
  %4426 = vmatmul.mubr.f32.gmra.mrb[0].mxu0 %v4357
  %v4427 = vpop.f32.mrb[0].mxu0
  %v4428 = vadd.f32 0.0, %v4427
  %v4429 = vpop.f32.mrb[0].mxu0
  %4430 = vdwg.mxu0
  %v4431 = vmul.f32 %v4428, 0.17677669
  %v4432 = vsel %vm1173, %v4431, -inf
  %4433 = vmax.xlane.f32.xlu0 %v4432
  %v4434 = vpop.xlane.xlu0 %4433
  %v4435 = vsub.f32 %v4431, %v4434
  %v4436 = vmul.f32 %v4435, 1.442695
  %v4437 = vpow.pop %v4436
  %v4438 = vsel %vm1173, %v4437, 0.0
  %4439 = vadd.xlane.f32.xlu0 %v4438
  %v4440 = vpop.xlane.xlu0 %4439
  %v4441 = vrcp.pop %v4440
  %v4442 = vmul.f32 %v4437, %v4441
  %v4443 = vpack.c.bf16 %v4442, %v4442
  %4444 = vrot.lane.b32.xlu0 %v4261, 96
  %v4445 = vpop.permute.xlu0 %4444
  %v4447 = vsel %vm1187, %v4443, 0
  %v4450 = vand.u32 %v4445, %v1193
  %4452 = vmatprep.subr.bf16.mxu0 0
  %4453 = vmatpush1.bf16.msra.mxu0 %v4450
  %4454 = vmatprep.subr.bf16.mxu0 0
  %4455 = vmatpush1.bf16.msra.mxu0 0
  %4456 = vmatprep.subr.bf16.mxu0 0
  %4457 = vmatpush1.bf16.msra.mxu0 0
  %4458 = vmatprep.subr.bf16.mxu0 0
  %4459 = vmatpush1.bf16.msra.mxu0 0
  %4460 = vmatprep.subr.bf16.mxu0 0
  %4461 = vmatpush1.bf16.msra.mxu0 0
  %4462 = vmatprep.subr.bf16.mxu0 0
  %4463 = vmatpush1.bf16.msra.mxu0 0
  %4464 = vmatprep.subr.bf16.mxu0 0
  %4465 = vmatpush1.bf16.msra.mxu0 0
  %4466 = vmatprep.subr.bf16.mxu0 0
  %4467 = vmatpush1.bf16.msra.mxu0 0
  %4468 = vmatprep.subr.bf16.mxu0 0
  %4469 = vmatpush1.bf16.msra.mxu0 0
  %4470 = vmatprep.subr.bf16.mxu0 0
  %4471 = vmatpush1.bf16.msra.mxu0 0
  %4472 = vmatprep.subr.bf16.mxu0 0
  %4473 = vmatpush1.bf16.msra.mxu0 0
  %4474 = vmatprep.subr.bf16.mxu0 0
  %4475 = vmatpush1.bf16.msra.mxu0 0
  %4476 = vmatprep.subr.bf16.mxu0 0
  %4477 = vmatpush1.bf16.msra.mxu0 0
  %4478 = vmatprep.subr.bf16.mxu0 0
  %4479 = vmatpush1.bf16.msra.mxu0 0
  %4480 = vmatprep.subr.bf16.mxu0 0
  %4481 = vmatpush1.bf16.msra.mxu0 0
  %4482 = vmatprep.subr.bf16.mxu0 0
  %4483 = vmatpush1.bf16.msra.mxu0 0
  %4484 = vmatprep.mubr.bf16.mxu0 0
  %4485 = vmatmul.mubr.bf16.gmra.mrb[0].mxu0 %v4447
  %v4486 = vpop.f32.mrb[0].mxu0
  %v4487 = vadd.f32 0.0, %v4486
  %v4488 = vpop.f32.mrb[0].mxu0
  %v4489 = vpop.f32.mrb[0].mxu0
  %v4490 = vpop.f32.mrb[0].mxu0
  %4491 = vdwg.mxu0
  %v4492 = vpack.c.bf16 %v4487, %v4487
  %v4494 = vsel %vm1095, %v4492, 0
  %4496 = vmatprep.subr.bf16.mxu0 0
  %4497 = vmatpush1.bf16.msra.mxu0 %v3707
  %4498 = vmatprep.subr.bf16.mxu0 0
  %4499 = vmatpush1.bf16.msra.mxu0 %v3708
  %4500 = vmatprep.subr.bf16.mxu0 0
  %4501 = vmatpush1.bf16.msra.mxu0 0
  %4502 = vmatprep.subr.bf16.mxu0 0
  %4503 = vmatpush1.bf16.msra.mxu0 0
  %4504 = vmatprep.subr.bf16.mxu0 0
  %4505 = vmatpush1.bf16.msra.mxu0 0
  %4506 = vmatprep.subr.bf16.mxu0 0
  %4507 = vmatpush1.bf16.msra.mxu0 0
  %4508 = vmatprep.subr.bf16.mxu0 0
  %4509 = vmatpush1.bf16.msra.mxu0 0
  %4510 = vmatprep.subr.bf16.mxu0 0
  %4511 = vmatpush1.bf16.msra.mxu0 0
  %4512 = vmatprep.subr.bf16.mxu0 0
  %4513 = vmatpush1.bf16.msra.mxu0 0
  %4514 = vmatprep.subr.bf16.mxu0 0
  %4515 = vmatpush1.bf16.msra.mxu0 0
  %4516 = vmatprep.subr.bf16.mxu0 0
  %4517 = vmatpush1.bf16.msra.mxu0 0
  %4518 = vmatprep.subr.bf16.mxu0 0
  %4519 = vmatpush1.bf16.msra.mxu0 0
  %4520 = vmatprep.subr.bf16.mxu0 0
  %4521 = vmatpush1.bf16.msra.mxu0 0
  %4522 = vmatprep.subr.bf16.mxu0 0
  %4523 = vmatpush1.bf16.msra.mxu0 0
  %4524 = vmatprep.subr.bf16.mxu0 0
  %4525 = vmatpush1.bf16.msra.mxu0 0
  %4526 = vmatprep.subr.bf16.mxu0 0
  %4527 = vmatpush1.bf16.msra.mxu0 0
  %4528 = vmatprep.mubr.bf16.mxu0 0
  %4529 = vmatmul.mubr.bf16.gmra.mrb[0].mxu0 %v4494
  %v4530 = vpop.f32.mrb[0].mxu0
  %v4531 = vadd.f32 0.0, %v4530
  %v4532 = vpop.f32.mrb[0].mxu0
  %v4533 = vpop.f32.mrb[0].mxu0
  %v4534 = vpop.f32.mrb[0].mxu0
  %4535 = vdwg.mxu0
  %v4536 = vadd.f32 %v4352, %v4531
  %4537 = vrot.lane.b32.xlu0 %v4160, 64
  %v4538 = vpop.permute.xlu0 %4537
  %4539 = vrot.lane.b32.xlu0 %v4165, 64
  %v4540 = vpop.permute.xlu0 %4539
  %v4541 = vsel %vm1095, %v4538, 0
  %v4543 = vsel %vm1095, %v4540, 0
  %4545 = vmatprep.subr.mxu0 0.0
  %4546 = vmatpush1.xpose.msra.mxu0 %v4543
  %4547 = vmatprep.subr.mxu0 0.0
  %4548 = vmatpush1.xpose.msra.mxu0 0.0
  %4549 = vmatprep.subr.mxu0 0.0
  %4550 = vmatpush1.xpose.msra.mxu0 0.0
  %4551 = vmatprep.subr.mxu0 0.0
  %4552 = vmatpush1.xpose.msra.mxu0 0.0
  %4553 = vmatprep.subr.mxu0 0.0
  %4554 = vmatpush1.xpose.msra.mxu0 0.0
  %4555 = vmatprep.subr.mxu0 0.0
  %4556 = vmatpush1.xpose.msra.mxu0 0.0
  %4557 = vmatprep.subr.mxu0 0.0
  %4558 = vmatpush1.xpose.msra.mxu0 0.0
  %4559 = vmatprep.subr.mxu0 0.0
  %4560 = vmatpush1.xpose.msra.mxu0 0.0
  %4561 = vmatprep.subr.mxu0 0.0
  %4562 = vmatpush1.xpose.msra.mxu0 0.0
  %4563 = vmatprep.subr.mxu0 0.0
  %4564 = vmatpush1.xpose.msra.mxu0 0.0
  %4565 = vmatprep.subr.mxu0 0.0
  %4566 = vmatpush1.xpose.msra.mxu0 0.0
  %4567 = vmatprep.subr.mxu0 0.0
  %4568 = vmatpush1.xpose.msra.mxu0 0.0
  %4569 = vmatprep.subr.mxu0 0.0
  %4570 = vmatpush1.xpose.msra.mxu0 0.0
  %4571 = vmatprep.subr.mxu0 0.0
  %4572 = vmatpush1.xpose.msra.mxu0 0.0
  %4573 = vmatprep.subr.mxu0 0.0
  %4574 = vmatpush1.xpose.msra.mxu0 0.0
  %4575 = vmatprep.subr.mxu0 0.0
  %4576 = vmatpush1.xpose.msra.mxu0 0.0
  %4577 = vmatprep.subr.mxu0 0.0
  %4578 = vmatpush1.xpose.msra.mxu0 0.0
  %4579 = vmatprep.subr.mxu0 0.0
  %4580 = vmatpush1.xpose.msra.mxu0 0.0
  %4581 = vmatprep.subr.mxu0 0.0
  %4582 = vmatpush1.xpose.msra.mxu0 0.0
  %4583 = vmatprep.subr.mxu0 0.0
  %4584 = vmatpush1.xpose.msra.mxu0 0.0
  %4585 = vmatprep.subr.mxu0 0.0
  %4586 = vmatpush1.xpose.msra.mxu0 0.0
  %4587 = vmatprep.subr.mxu0 0.0
  %4588 = vmatpush1.xpose.msra.mxu0 0.0
  %4589 = vmatprep.subr.mxu0 0.0
  %4590 = vmatpush1.xpose.msra.mxu0 0.0
  %4591 = vmatprep.subr.mxu0 0.0
  %4592 = vmatpush1.xpose.msra.mxu0 0.0
  %4593 = vmatprep.subr.mxu0 0.0
  %4594 = vmatpush1.xpose.msra.mxu0 0.0
  %4595 = vmatprep.subr.mxu0 0.0
  %4596 = vmatpush1.xpose.msra.mxu0 0.0
  %4597 = vmatprep.subr.mxu0 0.0
  %4598 = vmatpush1.xpose.msra.mxu0 0.0
  %4599 = vmatprep.subr.mxu0 0.0
  %4600 = vmatpush1.xpose.msra.mxu0 0.0
  %4601 = vmatprep.subr.mxu0 0.0
  %4602 = vmatpush1.xpose.msra.mxu0 0.0
  %4603 = vmatprep.subr.mxu0 0.0
  %4604 = vmatpush1.xpose.msra.mxu0 0.0
  %4605 = vmatprep.subr.mxu0 0.0
  %4606 = vmatpush1.xpose.msra.mxu0 0.0
  %4607 = vmatprep.subr.mxu0 0.0
  %4608 = vmatpush1.xpose.msra.mxu0 0.0
  %4609 = vmatprep.mubr.f32.mxu0 0.0
  %4610 = vmatmul.mubr.f32.gmra.mrb[0].mxu0 %v4541
  %v4611 = vpop.f32.mrb[0].mxu0
  %v4612 = vadd.f32 0.0, %v4611
  %v4613 = vpop.f32.mrb[0].mxu0
  %4614 = vdwg.mxu0
  %v4615 = vmul.f32 %v4612, 0.17677669
  %v4616 = vsel %vm1173, %v4615, -inf
  %4617 = vmax.xlane.f32.xlu0 %v4616
  %v4618 = vpop.xlane.xlu0 %4617
  %v4619 = vsub.f32 %v4615, %v4618
  %v4620 = vmul.f32 %v4619, 1.442695
  %v4621 = vpow.pop %v4620
  %v4622 = vsel %vm1173, %v4621, 0.0
  %4623 = vadd.xlane.f32.xlu0 %v4622
  %v4624 = vpop.xlane.xlu0 %4623
  %v4625 = vrcp.pop %v4624
  %v4626 = vmul.f32 %v4621, %v4625
  %v4627 = vpack.c.bf16 %v4626, %v4626
  %4628 = vrot.lane.b32.xlu0 %v4261, 64
  %v4629 = vpop.permute.xlu0 %4628
  %v4631 = vsel %vm1187, %v4627, 0
  %v4634 = vand.u32 %v4629, %v1193
  %4636 = vmatprep.subr.bf16.mxu0 0
  %4637 = vmatpush1.bf16.msra.mxu0 %v4634
  %4638 = vmatprep.subr.bf16.mxu0 0
  %4639 = vmatpush1.bf16.msra.mxu0 0
  %4640 = vmatprep.subr.bf16.mxu0 0
  %4641 = vmatpush1.bf16.msra.mxu0 0
  %4642 = vmatprep.subr.bf16.mxu0 0
  %4643 = vmatpush1.bf16.msra.mxu0 0
  %4644 = vmatprep.subr.bf16.mxu0 0
  %4645 = vmatpush1.bf16.msra.mxu0 0
  %4646 = vmatprep.subr.bf16.mxu0 0
  %4647 = vmatpush1.bf16.msra.mxu0 0
  %4648 = vmatprep.subr.bf16.mxu0 0
  %4649 = vmatpush1.bf16.msra.mxu0 0
  %4650 = vmatprep.subr.bf16.mxu0 0
  %4651 = vmatpush1.bf16.msra.mxu0 0
  %4652 = vmatprep.subr.bf16.mxu0 0
  %4653 = vmatpush1.bf16.msra.mxu0 0
  %4654 = vmatprep.subr.bf16.mxu0 0
  %4655 = vmatpush1.bf16.msra.mxu0 0
  %4656 = vmatprep.subr.bf16.mxu0 0
  %4657 = vmatpush1.bf16.msra.mxu0 0
  %4658 = vmatprep.subr.bf16.mxu0 0
  %4659 = vmatpush1.bf16.msra.mxu0 0
  %4660 = vmatprep.subr.bf16.mxu0 0
  %4661 = vmatpush1.bf16.msra.mxu0 0
  %4662 = vmatprep.subr.bf16.mxu0 0
  %4663 = vmatpush1.bf16.msra.mxu0 0
  %4664 = vmatprep.subr.bf16.mxu0 0
  %4665 = vmatpush1.bf16.msra.mxu0 0
  %4666 = vmatprep.subr.bf16.mxu0 0
  %4667 = vmatpush1.bf16.msra.mxu0 0
  %4668 = vmatprep.mubr.bf16.mxu0 0
  %4669 = vmatmul.mubr.bf16.gmra.mrb[0].mxu0 %v4631
  %v4670 = vpop.f32.mrb[0].mxu0
  %v4671 = vadd.f32 0.0, %v4670
  %v4672 = vpop.f32.mrb[0].mxu0
  %v4673 = vpop.f32.mrb[0].mxu0
  %v4674 = vpop.f32.mrb[0].mxu0
  %4675 = vdwg.mxu0
  %v4676 = vpack.c.bf16 %v4671, %v4671
  %v4678 = vsel %vm1095, %v4676, 0
  %4680 = vmatprep.subr.bf16.mxu0 0
  %4681 = vmatpush1.bf16.msra.mxu0 %v3903
  %4682 = vmatprep.subr.bf16.mxu0 0
  %4683 = vmatpush1.bf16.msra.mxu0 %v3904
  %4684 = vmatprep.subr.bf16.mxu0 0
  %4685 = vmatpush1.bf16.msra.mxu0 0
  %4686 = vmatprep.subr.bf16.mxu0 0
  %4687 = vmatpush1.bf16.msra.mxu0 0
  %4688 = vmatprep.subr.bf16.mxu0 0
  %4689 = vmatpush1.bf16.msra.mxu0 0
  %4690 = vmatprep.subr.bf16.mxu0 0
  %4691 = vmatpush1.bf16.msra.mxu0 0
  %4692 = vmatprep.subr.bf16.mxu0 0
  %4693 = vmatpush1.bf16.msra.mxu0 0
  %4694 = vmatprep.subr.bf16.mxu0 0
  %4695 = vmatpush1.bf16.msra.mxu0 0
  %4696 = vmatprep.subr.bf16.mxu0 0
  %4697 = vmatpush1.bf16.msra.mxu0 0
  %4698 = vmatprep.subr.bf16.mxu0 0
  %4699 = vmatpush1.bf16.msra.mxu0 0
  %4700 = vmatprep.subr.bf16.mxu0 0
  %4701 = vmatpush1.bf16.msra.mxu0 0
  %4702 = vmatprep.subr.bf16.mxu0 0
  %4703 = vmatpush1.bf16.msra.mxu0 0
  %4704 = vmatprep.subr.bf16.mxu0 0
  %4705 = vmatpush1.bf16.msra.mxu0 0
  %4706 = vmatprep.subr.bf16.mxu0 0
  %4707 = vmatpush1.bf16.msra.mxu0 0
  %4708 = vmatprep.subr.bf16.mxu0 0
  %4709 = vmatpush1.bf16.msra.mxu0 0
  %4710 = vmatprep.subr.bf16.mxu0 0
  %4711 = vmatpush1.bf16.msra.mxu0 0
  %4712 = vmatprep.mubr.bf16.mxu0 0
  %4713 = vmatmul.mubr.bf16.gmra.mrb[0].mxu0 %v4678
  %v4714 = vpop.f32.mrb[0].mxu0
  %v4715 = vadd.f32 0.0, %v4714
  %v4716 = vpop.f32.mrb[0].mxu0
  %v4717 = vpop.f32.mrb[0].mxu0
  %v4718 = vpop.f32.mrb[0].mxu0
  %4719 = vdwg.mxu0
  %v4720 = vadd.f32 %v4536, %v4715
  %4721 = vrot.lane.b32.xlu0 %v4160, 32
  %v4722 = vpop.permute.xlu0 %4721
  %4723 = vrot.lane.b32.xlu0 %v4165, 32
  %v4724 = vpop.permute.xlu0 %4723
  %v4725 = vsel %vm1095, %v4722, 0
  %v4727 = vsel %vm1095, %v4724, 0
  %4729 = vmatprep.subr.mxu0 0.0
  %4730 = vmatpush1.xpose.msra.mxu0 %v4727
  %4731 = vmatprep.subr.mxu0 0.0
  %4732 = vmatpush1.xpose.msra.mxu0 0.0
  %4733 = vmatprep.subr.mxu0 0.0
  %4734 = vmatpush1.xpose.msra.mxu0 0.0
  %4735 = vmatprep.subr.mxu0 0.0
  %4736 = vmatpush1.xpose.msra.mxu0 0.0
  %4737 = vmatprep.subr.mxu0 0.0
  %4738 = vmatpush1.xpose.msra.mxu0 0.0
  %4739 = vmatprep.subr.mxu0 0.0
  %4740 = vmatpush1.xpose.msra.mxu0 0.0
  %4741 = vmatprep.subr.mxu0 0.0
  %4742 = vmatpush1.xpose.msra.mxu0 0.0
  %4743 = vmatprep.subr.mxu0 0.0
  %4744 = vmatpush1.xpose.msra.mxu0 0.0
  %4745 = vmatprep.subr.mxu0 0.0
  %4746 = vmatpush1.xpose.msra.mxu0 0.0
  %4747 = vmatprep.subr.mxu0 0.0
  %4748 = vmatpush1.xpose.msra.mxu0 0.0
  %4749 = vmatprep.subr.mxu0 0.0
  %4750 = vmatpush1.xpose.msra.mxu0 0.0
  %4751 = vmatprep.subr.mxu0 0.0
  %4752 = vmatpush1.xpose.msra.mxu0 0.0
  %4753 = vmatprep.subr.mxu0 0.0
  %4754 = vmatpush1.xpose.msra.mxu0 0.0
  %4755 = vmatprep.subr.mxu0 0.0
  %4756 = vmatpush1.xpose.msra.mxu0 0.0
  %4757 = vmatprep.subr.mxu0 0.0
  %4758 = vmatpush1.xpose.msra.mxu0 0.0
  %4759 = vmatprep.subr.mxu0 0.0
  %4760 = vmatpush1.xpose.msra.mxu0 0.0
  %4761 = vmatprep.subr.mxu0 0.0
  %4762 = vmatpush1.xpose.msra.mxu0 0.0
  %4763 = vmatprep.subr.mxu0 0.0
  %4764 = vmatpush1.xpose.msra.mxu0 0.0
  %4765 = vmatprep.subr.mxu0 0.0
  %4766 = vmatpush1.xpose.msra.mxu0 0.0
  %4767 = vmatprep.subr.mxu0 0.0
  %4768 = vmatpush1.xpose.msra.mxu0 0.0
  %4769 = vmatprep.subr.mxu0 0.0
  %4770 = vmatpush1.xpose.msra.mxu0 0.0
  %4771 = vmatprep.subr.mxu0 0.0
  %4772 = vmatpush1.xpose.msra.mxu0 0.0
  %4773 = vmatprep.subr.mxu0 0.0
  %4774 = vmatpush1.xpose.msra.mxu0 0.0
  %4775 = vmatprep.subr.mxu0 0.0
  %4776 = vmatpush1.xpose.msra.mxu0 0.0
  %4777 = vmatprep.subr.mxu0 0.0
  %4778 = vmatpush1.xpose.msra.mxu0 0.0
  %4779 = vmatprep.subr.mxu0 0.0
  %4780 = vmatpush1.xpose.msra.mxu0 0.0
  %4781 = vmatprep.subr.mxu0 0.0
  %4782 = vmatpush1.xpose.msra.mxu0 0.0
  %4783 = vmatprep.subr.mxu0 0.0
  %4784 = vmatpush1.xpose.msra.mxu0 0.0
  %4785 = vmatprep.subr.mxu0 0.0
  %4786 = vmatpush1.xpose.msra.mxu0 0.0
  %4787 = vmatprep.subr.mxu0 0.0
  %4788 = vmatpush1.xpose.msra.mxu0 0.0
  %4789 = vmatprep.subr.mxu0 0.0
  %4790 = vmatpush1.xpose.msra.mxu0 0.0
  %4791 = vmatprep.subr.mxu0 0.0
  %4792 = vmatpush1.xpose.msra.mxu0 0.0
  %4793 = vmatprep.mubr.f32.mxu0 0.0
  %4794 = vmatmul.mubr.f32.gmra.mrb[0].mxu0 %v4725
  %v4795 = vpop.f32.mrb[0].mxu0
  %v4796 = vadd.f32 0.0, %v4795
  %v4797 = vpop.f32.mrb[0].mxu0
  %4798 = vdwg.mxu0
  %v4799 = vmul.f32 %v4796, 0.17677669
  %v4800 = vsel %vm1173, %v4799, -inf
  %4801 = vmax.xlane.f32.xlu0 %v4800
  %v4802 = vpop.xlane.xlu0 %4801
  %v4803 = vsub.f32 %v4799, %v4802
  %v4804 = vmul.f32 %v4803, 1.442695
  %v4805 = vpow.pop %v4804
  %v4806 = vsel %vm1173, %v4805, 0.0
  %4807 = vadd.xlane.f32.xlu0 %v4806
  %v4808 = vpop.xlane.xlu0 %4807
  %v4809 = vrcp.pop %v4808
  %v4810 = vmul.f32 %v4805, %v4809
  %v4811 = vpack.c.bf16 %v4810, %v4810
  %4812 = vrot.lane.b32.xlu0 %v4261, 32
  %v4813 = vpop.permute.xlu0 %4812
  %v4815 = vsel %vm1187, %v4811, 0
  %v4818 = vand.u32 %v4813, %v1193
  %4820 = vmatprep.subr.bf16.mxu0 0
  %4821 = vmatpush1.bf16.msra.mxu0 %v4818
  %4822 = vmatprep.subr.bf16.mxu0 0
  %4823 = vmatpush1.bf16.msra.mxu0 0
  %4824 = vmatprep.subr.bf16.mxu0 0
  %4825 = vmatpush1.bf16.msra.mxu0 0
  %4826 = vmatprep.subr.bf16.mxu0 0
  %4827 = vmatpush1.bf16.msra.mxu0 0
  %4828 = vmatprep.subr.bf16.mxu0 0
  %4829 = vmatpush1.bf16.msra.mxu0 0
  %4830 = vmatprep.subr.bf16.mxu0 0
  %4831 = vmatpush1.bf16.msra.mxu0 0
  %4832 = vmatprep.subr.bf16.mxu0 0
  %4833 = vmatpush1.bf16.msra.mxu0 0
  %4834 = vmatprep.subr.bf16.mxu0 0
  %4835 = vmatpush1.bf16.msra.mxu0 0
  %4836 = vmatprep.subr.bf16.mxu0 0
  %4837 = vmatpush1.bf16.msra.mxu0 0
  %4838 = vmatprep.subr.bf16.mxu0 0
  %4839 = vmatpush1.bf16.msra.mxu0 0
  %4840 = vmatprep.subr.bf16.mxu0 0
  %4841 = vmatpush1.bf16.msra.mxu0 0
  %4842 = vmatprep.subr.bf16.mxu0 0
  %4843 = vmatpush1.bf16.msra.mxu0 0
  %4844 = vmatprep.subr.bf16.mxu0 0
  %4845 = vmatpush1.bf16.msra.mxu0 0
  %4846 = vmatprep.subr.bf16.mxu0 0
  %4847 = vmatpush1.bf16.msra.mxu0 0
  %4848 = vmatprep.subr.bf16.mxu0 0
  %4849 = vmatpush1.bf16.msra.mxu0 0
  %4850 = vmatprep.subr.bf16.mxu0 0
  %4851 = vmatpush1.bf16.msra.mxu0 0
  %4852 = vmatprep.mubr.bf16.mxu0 0
  %4853 = vmatmul.mubr.bf16.gmra.mrb[0].mxu0 %v4815
  %v4854 = vpop.f32.mrb[0].mxu0
  %v4855 = vadd.f32 0.0, %v4854
  %v4856 = vpop.f32.mrb[0].mxu0
  %v4857 = vpop.f32.mrb[0].mxu0
  %v4858 = vpop.f32.mrb[0].mxu0
  %4859 = vdwg.mxu0
  %v4860 = vpack.c.bf16 %v4855, %v4855
  %v4862 = vsel %vm1095, %v4860, 0
  %4864 = vmatprep.subr.bf16.mxu0 0
  %4865 = vmatpush1.bf16.msra.mxu0 %v4099
  %4866 = vmatprep.subr.bf16.mxu0 0
  %4867 = vmatpush1.bf16.msra.mxu0 %v4100
  %4868 = vmatprep.subr.bf16.mxu0 0
  %4869 = vmatpush1.bf16.msra.mxu0 0
  %4870 = vmatprep.subr.bf16.mxu0 0
  %4871 = vmatpush1.bf16.msra.mxu0 0
  %4872 = vmatprep.subr.bf16.mxu0 0
  %4873 = vmatpush1.bf16.msra.mxu0 0
  %4874 = vmatprep.subr.bf16.mxu0 0
  %4875 = vmatpush1.bf16.msra.mxu0 0
  %4876 = vmatprep.subr.bf16.mxu0 0
  %4877 = vmatpush1.bf16.msra.mxu0 0
  %4878 = vmatprep.subr.bf16.mxu0 0
  %4879 = vmatpush1.bf16.msra.mxu0 0
  %4880 = vmatprep.subr.bf16.mxu0 0
  %4881 = vmatpush1.bf16.msra.mxu0 0
  %4882 = vmatprep.subr.bf16.mxu0 0
  %4883 = vmatpush1.bf16.msra.mxu0 0
  %4884 = vmatprep.subr.bf16.mxu0 0
  %4885 = vmatpush1.bf16.msra.mxu0 0
  %4886 = vmatprep.subr.bf16.mxu0 0
  %4887 = vmatpush1.bf16.msra.mxu0 0
  %4888 = vmatprep.subr.bf16.mxu0 0
  %4889 = vmatpush1.bf16.msra.mxu0 0
  %4890 = vmatprep.subr.bf16.mxu0 0
  %4891 = vmatpush1.bf16.msra.mxu0 0
  %4892 = vmatprep.subr.bf16.mxu0 0
  %4893 = vmatpush1.bf16.msra.mxu0 0
  %4894 = vmatprep.subr.bf16.mxu0 0
  %4895 = vmatpush1.bf16.msra.mxu0 0
  %4896 = vmatprep.mubr.bf16.mxu0 0
  %4897 = vmatmul.mubr.bf16.gmra.mrb[0].mxu0 %v4862
  %v4898 = vpop.f32.mrb[0].mxu0
  %v4899 = vadd.f32 0.0, %v4898
  %v4900 = vpop.f32.mrb[0].mxu0
  %v4901 = vpop.f32.mrb[0].mxu0
  %v4902 = vpop.f32.mrb[0].mxu0
  %4903 = vdwg.mxu0
  %v4904 = vadd.f32 %v4720, %v4899
  %v4905 = vld [vmem:[#allocation2 + $0x5] sm:$0x1f]
  %v4906 = vadd.f32 %v4905, %v4904
  %4907 = vst [vmem:[#allocation2 + $0x5] sm:$0x1f] %v4906
  %v4908 = vld [vmem:[#allocation2] sm:$0xff]
  %v4909 = vld [vmem:[#allocation2 + $0x8] sm:$0x3]
  %4910 = vadd.xlane.f32.xlu0 %v4908
  %v4911 = vpop.xlane.xlu0 %4910
  %v4912 = vsel %vm781, %v4909, 0.0
  %4913 = vadd.xlane.f32.xlu0 %v4912
  %v4914 = vpop.xlane.xlu0 %4913
  %v4915 = vmul.f32 %v4911, %v785
  %v4916 = vmul.f32 %v4914, %v785
  %v4917 = vsub.f32 %v4908, %v4915
  %v4918 = vsub.f32 %v4909, %v4916
  %v4919 = vmul.f32 %v4917, %v4917
  %v4920 = vmul.f32 %v4918, %v4918
  %4921 = vadd.xlane.f32.xlu0 %v4919
  %v4922 = vpop.xlane.xlu0 %4921
  %v4923 = vsel %vm781, %v4920, 0.0
  %4924 = vadd.xlane.f32.xlu0 %v4923
  %v4925 = vpop.xlane.xlu0 %4924
  %v4926 = vmul.f32 %v4922, %v785
  %v4927 = vmul.f32 %v4925, %v785
  %v4928 = vadd.f32 %v4926, 1e-12
  %v4929 = vadd.f32 %v4927, 1e-12
  %v4930 = vrsqrt.pop %v4928
  %v4931 = vrsqrt.pop %v4929
  %v4932 = vmul.f32 %v4917, %v4930
  %v4933 = vmul.f32 %v4918, %v4931
  %v4934 = vmul.f32 %v4932, %v3039
  %v4935 = vmul.f32 %v4933, %v3039
  %v4936 = vadd.f32 %v4934, %v3040
  %v4937 = vadd.f32 %v4935, %v3040
  %v4938 = vpack.c.bf16 %v4937, %v4936
  %s4939 = scalar_lea.vmem %s5, 128
  %v4940 = vld [vmem:[%s4939] sm:$0xff]
  %v4941 = vld [vmem:[%s4939 + $0x8] sm:$0xff]
  %v4942 = vld [vmem:[%s4939 + $0x10] sm:$0xff]
  %v4943 = vld [vmem:[%s4939 + $0x18] sm:$0xff]
  %v4944 = vld [vmem:[%s4939 + $0x20] sm:$0xff]
  %v4945 = vld [vmem:[%s4939 + $0x28] sm:$0xff]
  %v4946 = vld [vmem:[%s4939 + $0x30] sm:$0xff]
  %v4947 = vld [vmem:[%s4939 + $0x38] sm:$0xff]
  %v4948 = vld [vmem:[%s4939 + $0x40] sm:$0xff]
  %v4949 = vld [vmem:[%s4939 + $0x48] sm:$0xff]
  %v4950 = vld [vmem:[%s4939 + $0x50] sm:$0xff]
  %v4951 = vld [vmem:[%s4939 + $0x58] sm:$0xff]
  %v4952 = vld [vmem:[%s4939 + $0x60] sm:$0xff]
  %v4953 = vld [vmem:[%s4939 + $0x68] sm:$0xff]
  %v4954 = vld [vmem:[%s4939 + $0x70] sm:$0xff]
  %v4955 = vld [vmem:[%s4939 + $0x78] sm:$0xff]
  %v4957 = vlaneseq
  %v4958 = vshrl.u32 %v4957, 7
  %v4959 = vsub.s32 0, %v4958
  %v4960 = vrot.slane %v3046, %v4959
  %v4961 = vlaneseq
  %v4962 = vshrl.u32 %v4961, 7
  %v4963 = vsub.s32 1, %v4962
  %v4964 = vrot.slane %v3046, %v4963
  %v4983 = vunpack.c.l.b16 %v4940
  %v4984 = vunpack.c.h.b16 %v4940
  %v4985 = vunpack.c.l.b16 %v4941
  %v4986 = vunpack.c.h.b16 %v4941
  %v4987 = vunpack.c.l.b16 %v4942
  %v4988 = vunpack.c.h.b16 %v4942
  %v4989 = vunpack.c.l.b16 %v4943
  %v4990 = vunpack.c.h.b16 %v4943
  %v4991 = vunpack.c.l.b16 %v4944
  %v4992 = vunpack.c.h.b16 %v4944
  %v4993 = vunpack.c.l.b16 %v4945
  %v4994 = vunpack.c.h.b16 %v4945
  %v4995 = vunpack.c.l.b16 %v4946
  %v4996 = vunpack.c.h.b16 %v4946
  %v4997 = vunpack.c.l.b16 %v4947
  %v4998 = vunpack.c.h.b16 %v4947
  %v4999 = vunpack.c.l.b16 %v4948
  %v5000 = vunpack.c.h.b16 %v4948
  %v5001 = vunpack.c.l.b16 %v4949
  %v5002 = vunpack.c.h.b16 %v4949
  %v5003 = vunpack.c.l.b16 %v4950
  %v5004 = vunpack.c.h.b16 %v4950
  %v5005 = vunpack.c.l.b16 %v4951
  %v5006 = vunpack.c.h.b16 %v4951
  %v5007 = vunpack.c.l.b16 %v4952
  %v5008 = vunpack.c.h.b16 %v4952
  %v5009 = vunpack.c.l.b16 %v4953
  %v5010 = vunpack.c.h.b16 %v4953
  %v5011 = vunpack.c.l.b16 %v4954
  %v5012 = vunpack.c.h.b16 %v4954
  %v5013 = vunpack.c.l.b16 %v4955
  %v5014 = vunpack.c.h.b16 %v4955
  %v5015 = vpack.c.b16 %v4985, %v4983
  %v5016 = vpack.c.b16 %v4986, %v4984
  %v5017 = vpack.c.b16 %v4989, %v4987
  %v5018 = vpack.c.b16 %v4990, %v4988
  %v5019 = vpack.c.b16 %v4993, %v4991
  %v5020 = vpack.c.b16 %v4994, %v4992
  %v5021 = vpack.c.b16 %v4997, %v4995
  %v5022 = vpack.c.b16 %v4998, %v4996
  %v5023 = vpack.c.b16 %v5001, %v4999
  %v5024 = vpack.c.b16 %v5002, %v5000
  %v5025 = vpack.c.b16 %v5005, %v5003
  %v5026 = vpack.c.b16 %v5006, %v5004
  %v5027 = vpack.c.b16 %v5009, %v5007
  %v5028 = vpack.c.b16 %v5010, %v5008
  %v5029 = vpack.c.b16 %v5013, %v5011
  %v5030 = vpack.c.b16 %v5014, %v5012
  %5047 = vmatprep.subr.bf16.mxu0 %v5016
  %5048 = vmatpush1.bf16.msra.mxu0 %v5015
  %5049 = vmatprep.subr.bf16.mxu0 %v5018
  %5050 = vmatpush1.bf16.msra.mxu0 %v5017
  %5051 = vmatprep.subr.bf16.mxu0 %v5020
  %5052 = vmatpush1.bf16.msra.mxu0 %v5019
  %5053 = vmatprep.subr.bf16.mxu0 %v5022
  %5054 = vmatpush1.bf16.msra.mxu0 %v5021
  %5055 = vmatprep.subr.bf16.mxu0 %v5024
  %5056 = vmatpush1.bf16.msra.mxu0 %v5023
  %5057 = vmatprep.subr.bf16.mxu0 %v5026
  %5058 = vmatpush1.bf16.msra.mxu0 %v5025
  %5059 = vmatprep.subr.bf16.mxu0 %v5028
  %5060 = vmatpush1.bf16.msra.mxu0 %v5027
  %5061 = vmatprep.subr.bf16.mxu0 %v5030
  %5062 = vmatpush1.bf16.msra.mxu0 %v5029
  %5063 = vmatprep.subr.bf16.mxu0 0
  %5064 = vmatpush1.bf16.msra.mxu0 0
  %5065 = vmatprep.subr.bf16.mxu0 0
  %5066 = vmatpush1.bf16.msra.mxu0 0
  %5067 = vmatprep.subr.bf16.mxu0 0
  %5068 = vmatpush1.bf16.msra.mxu0 0
  %5069 = vmatprep.subr.bf16.mxu0 0
  %5070 = vmatpush1.bf16.msra.mxu0 0
  %5071 = vmatprep.subr.bf16.mxu0 0
  %5072 = vmatpush1.bf16.msra.mxu0 0
  %5073 = vmatprep.subr.bf16.mxu0 0
  %5074 = vmatpush1.bf16.msra.mxu0 0
  %5075 = vmatprep.subr.bf16.mxu0 0
  %5076 = vmatpush1.bf16.msra.mxu0 0
  %5077 = vmatprep.subr.bf16.mxu0 0
  %5078 = vmatpush1.bf16.msra.mxu0 0
  %5079 = vmatprep.mubr.bf16.mxu0 0
  %5080 = vmatmul.mubr.bf16.gmra.mrb[0].mxu0 %v4938
  %v5081 = vpop.f32.mrb[0].mxu0
  %v5082 = vadd.f32 %v4960, %v5081
  %v5083 = vpop.f32.mrb[0].mxu0
  %v5084 = vadd.f32 %v4964, %v5083
  %v5085 = vpop.f32.mrb[0].mxu0
  %v5086 = vadd.f32 %v4960, %v5085
  %v5087 = vpop.f32.mrb[0].mxu0
  %v5088 = vadd.f32 %v4964, %v5087
  %5089 = vdwg.mxu0
  %v5090 = vmul.f32 %v5082, 0.5
  %v5091 = vmul.f32 %v5084, 0.5
  %v5092 = vmul.f32 %v5086, 0.5
  %v5093 = vmul.f32 %v5088, 0.5
  %v5094 = vmul.f32 %v5082, 0.044715
  %v5095 = vmul.f32 %v5084, 0.044715
  %v5096 = vmul.f32 %v5086, 0.044715
  %v5097 = vmul.f32 %v5088, 0.044715
  %v5098 = vmul.f32 %v5094, %v5082
  %v5099 = vmul.f32 %v5095, %v5084
  %v5100 = vmul.f32 %v5096, %v5086
  %v5101 = vmul.f32 %v5097, %v5088
  %v5102 = vmul.f32 %v5098, %v5082
  %v5103 = vmul.f32 %v5099, %v5084
  %v5104 = vmul.f32 %v5100, %v5086
  %v5105 = vmul.f32 %v5101, %v5088
  %v5106 = vadd.f32 %v5082, %v5102
  %v5107 = vadd.f32 %v5084, %v5103
  %v5108 = vadd.f32 %v5086, %v5104
  %v5109 = vadd.f32 %v5088, %v5105
  %v5110 = vmul.f32 %v5106, 0.7978846
  %v5111 = vmul.f32 %v5107, 0.7978846
  %v5112 = vmul.f32 %v5108, 0.7978846
  %v5113 = vmul.f32 %v5109, 0.7978846
  %v5114 = vtanh.pop %v5110
  %v5115 = vtanh.pop %v5111
  %v5116 = vtanh.pop %v5112
  %v5117 = vtanh.pop %v5113
  %v5118 = vadd.f32 %v5114, 1.0
  %v5119 = vadd.f32 %v5115, 1.0
  %v5120 = vadd.f32 %v5116, 1.0
  %v5121 = vadd.f32 %v5117, 1.0
  %v5122 = vmul.f32 %v5090, %v5118
  %v5123 = vmul.f32 %v5091, %v5119
  %v5124 = vmul.f32 %v5092, %v5120
  %v5125 = vmul.f32 %v5093, %v5121
  %v5126 = vpack.c.bf16 %v5124, %v5122
  %v5127 = vpack.c.bf16 %v5125, %v5123
  %s5128 = scalar_lea.vmem %s6, 128
  %v5129 = vld [vmem:[%s5128] sm:$0xf]
  %v5130 = vld [vmem:[%s5128 + $0x4] sm:$0xf]
  %v5131 = vld [vmem:[%s5128 + $0x8] sm:$0xf]
  %v5132 = vld [vmem:[%s5128 + $0xc] sm:$0xf]
  %v5133 = vld [vmem:[%s5128 + $0x10] sm:$0xf]
  %v5134 = vld [vmem:[%s5128 + $0x14] sm:$0xf]
  %v5135 = vld [vmem:[%s5128 + $0x18] sm:$0xf]
  %v5136 = vld [vmem:[%s5128 + $0x1c] sm:$0xf]
  %v5137 = vld [vmem:[%s5128 + $0x20] sm:$0xf]
  %v5138 = vld [vmem:[%s5128 + $0x24] sm:$0xf]
  %v5139 = vld [vmem:[%s5128 + $0x28] sm:$0xf]
  %v5140 = vld [vmem:[%s5128 + $0x2c] sm:$0xf]
  %v5141 = vld [vmem:[%s5128 + $0x30] sm:$0xf]
  %v5142 = vld [vmem:[%s5128 + $0x34] sm:$0xf]
  %v5143 = vld [vmem:[%s5128 + $0x38] sm:$0xf]
  %v5144 = vld [vmem:[%s5128 + $0x3c] sm:$0xf]
  %v5145 = vld [vmem:[%s5128 + $0x40] sm:$0xf]
  %v5146 = vld [vmem:[%s5128 + $0x44] sm:$0xf]
  %v5147 = vld [vmem:[%s5128 + $0x48] sm:$0xf]
  %v5148 = vld [vmem:[%s5128 + $0x4c] sm:$0xf]
  %v5149 = vld [vmem:[%s5128 + $0x50] sm:$0xf]
  %v5150 = vld [vmem:[%s5128 + $0x54] sm:$0xf]
  %v5151 = vld [vmem:[%s5128 + $0x58] sm:$0xf]
  %v5152 = vld [vmem:[%s5128 + $0x5c] sm:$0xf]
  %v5153 = vld [vmem:[%s5128 + $0x60] sm:$0xf]
  %v5154 = vld [vmem:[%s5128 + $0x64] sm:$0xf]
  %v5155 = vld [vmem:[%s5128 + $0x68] sm:$0xf]
  %v5156 = vld [vmem:[%s5128 + $0x6c] sm:$0xf]
  %v5157 = vld [vmem:[%s5128 + $0x70] sm:$0xf]
  %v5158 = vld [vmem:[%s5128 + $0x74] sm:$0xf]
  %v5159 = vld [vmem:[%s5128 + $0x78] sm:$0xf]
  %v5160 = vld [vmem:[%s5128 + $0x7c] sm:$0xf]
  %v5193 = vunpack.c.l.b16 %v5129
  %v5194 = vunpack.c.l.b16 %v5130
  %v5195 = vunpack.c.l.b16 %v5131
  %v5196 = vunpack.c.l.b16 %v5132
  %v5197 = vunpack.c.l.b16 %v5133
  %v5198 = vunpack.c.l.b16 %v5134
  %v5199 = vunpack.c.l.b16 %v5135
  %v5200 = vunpack.c.l.b16 %v5136
  %v5201 = vunpack.c.l.b16 %v5137
  %v5202 = vunpack.c.l.b16 %v5138
  %v5203 = vunpack.c.l.b16 %v5139
  %v5204 = vunpack.c.l.b16 %v5140
  %v5205 = vunpack.c.l.b16 %v5141
  %v5206 = vunpack.c.l.b16 %v5142
  %v5207 = vunpack.c.l.b16 %v5143
  %v5208 = vunpack.c.l.b16 %v5144
  %v5209 = vunpack.c.l.b16 %v5145
  %v5210 = vunpack.c.l.b16 %v5146
  %v5211 = vunpack.c.l.b16 %v5147
  %v5212 = vunpack.c.l.b16 %v5148
  %v5213 = vunpack.c.l.b16 %v5149
  %v5214 = vunpack.c.l.b16 %v5150
  %v5215 = vunpack.c.l.b16 %v5151
  %v5216 = vunpack.c.l.b16 %v5152
  %v5217 = vunpack.c.l.b16 %v5153
  %v5218 = vunpack.c.l.b16 %v5154
  %v5219 = vunpack.c.l.b16 %v5155
  %v5220 = vunpack.c.l.b16 %v5156
  %v5221 = vunpack.c.l.b16 %v5157
  %v5222 = vunpack.c.l.b16 %v5158
  %v5223 = vunpack.c.l.b16 %v5159
  %v5224 = vunpack.c.l.b16 %v5160
  %v5225 = vpack.c.b16 %v5194, %v5193
  %v5226 = vpack.c.b16 %v5196, %v5195
  %v5227 = vpack.c.b16 %v5198, %v5197
  %v5228 = vpack.c.b16 %v5200, %v5199
  %v5229 = vpack.c.b16 %v5202, %v5201
  %v5230 = vpack.c.b16 %v5204, %v5203
  %v5231 = vpack.c.b16 %v5206, %v5205
  %v5232 = vpack.c.b16 %v5208, %v5207
  %v5233 = vpack.c.b16 %v5210, %v5209
  %v5234 = vpack.c.b16 %v5212, %v5211
  %v5235 = vpack.c.b16 %v5214, %v5213
  %v5236 = vpack.c.b16 %v5216, %v5215
  %v5237 = vpack.c.b16 %v5218, %v5217
  %v5238 = vpack.c.b16 %v5220, %v5219
  %v5239 = vpack.c.b16 %v5222, %v5221
  %v5240 = vpack.c.b16 %v5224, %v5223
  %5257 = vmatprep.subr.bf16.mxu0 0
  %5258 = vmatpush1.bf16.msra.mxu0 %v5225
  %5259 = vmatprep.subr.bf16.mxu0 0
  %5260 = vmatpush1.bf16.msra.mxu0 %v5226
  %5261 = vmatprep.subr.bf16.mxu0 0
  %5262 = vmatpush1.bf16.msra.mxu0 %v5227
  %5263 = vmatprep.subr.bf16.mxu0 0
  %5264 = vmatpush1.bf16.msra.mxu0 %v5228
  %5265 = vmatprep.subr.bf16.mxu0 0
  %5266 = vmatpush1.bf16.msra.mxu0 %v5229
  %5267 = vmatprep.subr.bf16.mxu0 0
  %5268 = vmatpush1.bf16.msra.mxu0 %v5230
  %5269 = vmatprep.subr.bf16.mxu0 0
  %5270 = vmatpush1.bf16.msra.mxu0 %v5231
  %5271 = vmatprep.subr.bf16.mxu0 0
  %5272 = vmatpush1.bf16.msra.mxu0 %v5232
  %5273 = vmatprep.subr.bf16.mxu0 0
  %5274 = vmatpush1.bf16.msra.mxu0 %v5233
  %5275 = vmatprep.subr.bf16.mxu0 0
  %5276 = vmatpush1.bf16.msra.mxu0 %v5234
  %5277 = vmatprep.subr.bf16.mxu0 0
  %5278 = vmatpush1.bf16.msra.mxu0 %v5235
  %5279 = vmatprep.subr.bf16.mxu0 0
  %5280 = vmatpush1.bf16.msra.mxu0 %v5236
  %5281 = vmatprep.subr.bf16.mxu0 0
  %5282 = vmatpush1.bf16.msra.mxu0 %v5237
  %5283 = vmatprep.subr.bf16.mxu0 0
  %5284 = vmatpush1.bf16.msra.mxu0 %v5238
  %5285 = vmatprep.subr.bf16.mxu0 0
  %5286 = vmatpush1.bf16.msra.mxu0 %v5239
  %5287 = vmatprep.subr.bf16.mxu0 0
  %5288 = vmatpush1.bf16.msra.mxu0 %v5240
  %5289 = vmatprep.mubr.bf16.mxu0 %v5127
  %5290 = vmatmul.mubr.bf16.gmra.mrb[0].mxu0 %v5126
  %v5291 = vpop.f32.mrb[0].mxu0
  %v5292 = vadd.f32 %v3042, %v5291
  %v5293 = vpop.f32.mrb[0].mxu0
  %v5294 = vpop.f32.mrb[0].mxu0
  %v5295 = vadd.f32 %v3042, %v5294
  %v5296 = vpop.f32.mrb[0].mxu0
  %5297 = vdwg.mxu0
  %v5298 = vadd.f32 %v4908, %v5292
  %v5299 = vadd.f32 %v4909, %v5295
  %5300 = vst [vmem:[#allocation2] sm:$0xff] %v5298
  %5301 = vst [vmem:[#allocation2 + $0x8] sm:$0x3] %v5299
  %v5302 = vld [vmem:[#allocation2] sm:$0xff]
  %v5303 = vld [vmem:[#allocation2 + $0x8] sm:$0x3]
  %v5304 = vld [vmem:[%s8] sm:$0x1]
  %v5305 = vld [vmem:[%s8 + $0x1] sm:$0x1]
  %5306 = vadd.xlane.f32.xlu0 %v5302
  %v5307 = vpop.xlane.xlu0 %5306
  %v5308 = vsel %vm781, %v5303, 0.0
  %5309 = vadd.xlane.f32.xlu0 %v5308
  %v5310 = vpop.xlane.xlu0 %5309
  %v5311 = vmul.f32 %v5307, %v785
  %v5312 = vmul.f32 %v5310, %v785
  %v5313 = vsub.f32 %v5302, %v5311
  %v5314 = vsub.f32 %v5303, %v5312
  %v5315 = vmul.f32 %v5313, %v5313
  %v5316 = vmul.f32 %v5314, %v5314
  %5317 = vadd.xlane.f32.xlu0 %v5315
  %v5318 = vpop.xlane.xlu0 %5317
  %v5319 = vsel %vm781, %v5316, 0.0
  %5320 = vadd.xlane.f32.xlu0 %v5319
  %v5321 = vpop.xlane.xlu0 %5320
  %v5322 = vmul.f32 %v5318, %v785
  %v5323 = vmul.f32 %v5321, %v785
  %v5324 = vadd.f32 %v5322, 1e-12
  %v5325 = vadd.f32 %v5323, 1e-12
  %v5326 = vrsqrt.pop %v5324
  %v5327 = vrsqrt.pop %v5325
  %v5328 = vmul.f32 %v5313, %v5326
  %v5329 = vmul.f32 %v5314, %v5327
  %v5330 = vlaneseq
  %v5331 = vshrl.u32 %v5330, 7
  %v5332 = vsub.s32 0, %v5331
  %v5333 = vrot.slane %v5304, %v5332
  %v5334 = vmul.f32 %v5328, %v5333
  %v5335 = vmul.f32 %v5329, %v5333
  %v5336 = vlaneseq
  %v5337 = vshrl.u32 %v5336, 7
  %v5338 = vsub.s32 0, %v5337
  %v5339 = vrot.slane %v5305, %v5338
  %v5340 = vadd.f32 %v5334, %v5339
  %v5341 = vadd.f32 %v5335, %v5339
  %5342 = vst [vmem:[#allocation2] sm:$0xff] %v5340
  %5343 = vst [vmem:[#allocation2 + $0x8] sm:$0x3] %v5341
  %v5344 = vld [vmem:[#allocation2] sm:$0x1f]
  %vm5345 = vcmask 1044480
  %v5346 = vsel %vm5345, %v5344, 0.0
  %v5347 = vrot.slane %v5346, 4
  %v5348 = vadd.f32 %v5346, %v5347
  %v5349 = vrot.slane %v5348, 2
  %v5350 = vadd.f32 %v5348, %v5349
  %v5351 = vrot.slane %v5350, 1
  %v5352 = vadd.f32 %v5350, %v5351
  %v5353 = vrcp.pop 5.0
  %v5354 = vmul.f32 %v5352, %v5353
  %5355 = vst [vmem:[#allocation4] sm:$0x1] %v5354
  %v5356 = vld [vmem:[#allocation2 + $0x5] sm:$0x1f]
  %v5357 = vsel %vm5345, %v5356, 0.0
  %v5358 = vrot.slane %v5357, 4
  %v5359 = vadd.f32 %v5357, %v5358
  %v5360 = vrot.slane %v5359, 2
  %v5361 = vadd.f32 %v5359, %v5360
  %v5362 = vrot.slane %v5361, 1
  %v5363 = vadd.f32 %v5361, %v5362
  %v5364 = vmul.f32 %v5363, %v5353
  %5365 = vst [vmem:[#allocation4 + $0x1] sm:$0x1] %v5364
  %v5366 = vld [vmem:[#allocation4] sm:$0x3]
  %v5367 = vpack.c.bf16 %v5366, %v5366
  %v5368 = vld [vmem:[%s9] sm:$0xff]
  %v5369 = vld [vmem:[%s9 + $0x8] sm:$0xff]
  %v5370 = vld [vmem:[%s9 + $0x10] sm:$0xff]
  %v5371 = vld [vmem:[%s9 + $0x18] sm:$0xff]
  %v5372 = vld [vmem:[%s9 + $0x20] sm:$0xff]
  %v5373 = vld [vmem:[%s9 + $0x28] sm:$0xff]
  %v5374 = vld [vmem:[%s9 + $0x30] sm:$0xff]
  %v5375 = vld [vmem:[%s9 + $0x38] sm:$0xff]
  %v5376 = vld [vmem:[%s9 + $0x40] sm:$0xff]
  %v5377 = vld [vmem:[%s9 + $0x48] sm:$0xff]
  %v5378 = vld [vmem:[%s9 + $0x50] sm:$0xff]
  %v5379 = vld [vmem:[%s9 + $0x58] sm:$0xff]
  %v5380 = vld [vmem:[%s9 + $0x60] sm:$0xff]
  %v5381 = vld [vmem:[%s9 + $0x68] sm:$0xff]
  %v5382 = vld [vmem:[%s9 + $0x70] sm:$0xff]
  %v5383 = vld [vmem:[%s9 + $0x78] sm:$0xff]
  %v5384 = vld [vmem:[%s10] sm:$0x3]
  %v5386 = vlaneseq
  %v5387 = vshrl.u32 %v5386, 7
  %v5388 = vsub.s32 0, %v5387
  %v5389 = vrot.slane %v5384, %v5388
  %v5390 = vlaneseq
  %v5391 = vshrl.u32 %v5390, 7
  %v5392 = vsub.s32 1, %v5391
  %v5393 = vrot.slane %v5384, %v5392
  %v5412 = vunpack.c.l.b16 %v5368
  %v5413 = vunpack.c.h.b16 %v5368
  %v5414 = vunpack.c.l.b16 %v5369
  %v5415 = vunpack.c.h.b16 %v5369
  %v5416 = vunpack.c.l.b16 %v5370
  %v5417 = vunpack.c.h.b16 %v5370
  %v5418 = vunpack.c.l.b16 %v5371
  %v5419 = vunpack.c.h.b16 %v5371
  %v5420 = vunpack.c.l.b16 %v5372
  %v5421 = vunpack.c.h.b16 %v5372
  %v5422 = vunpack.c.l.b16 %v5373
  %v5423 = vunpack.c.h.b16 %v5373
  %v5424 = vunpack.c.l.b16 %v5374
  %v5425 = vunpack.c.h.b16 %v5374
  %v5426 = vunpack.c.l.b16 %v5375
  %v5427 = vunpack.c.h.b16 %v5375
  %v5428 = vunpack.c.l.b16 %v5376
  %v5429 = vunpack.c.h.b16 %v5376
  %v5430 = vunpack.c.l.b16 %v5377
  %v5431 = vunpack.c.h.b16 %v5377
  %v5432 = vunpack.c.l.b16 %v5378
  %v5433 = vunpack.c.h.b16 %v5378
  %v5434 = vunpack.c.l.b16 %v5379
  %v5435 = vunpack.c.h.b16 %v5379
  %v5436 = vunpack.c.l.b16 %v5380
  %v5437 = vunpack.c.h.b16 %v5380
  %v5438 = vunpack.c.l.b16 %v5381
  %v5439 = vunpack.c.h.b16 %v5381
  %v5440 = vunpack.c.l.b16 %v5382
  %v5441 = vunpack.c.h.b16 %v5382
  %v5442 = vunpack.c.l.b16 %v5383
  %v5443 = vunpack.c.h.b16 %v5383
  %v5444 = vpack.c.b16 %v5414, %v5412
  %v5445 = vpack.c.b16 %v5415, %v5413
  %v5446 = vpack.c.b16 %v5418, %v5416
  %v5447 = vpack.c.b16 %v5419, %v5417
  %v5448 = vpack.c.b16 %v5422, %v5420
  %v5449 = vpack.c.b16 %v5423, %v5421
  %v5450 = vpack.c.b16 %v5426, %v5424
  %v5451 = vpack.c.b16 %v5427, %v5425
  %v5452 = vpack.c.b16 %v5430, %v5428
  %v5453 = vpack.c.b16 %v5431, %v5429
  %v5454 = vpack.c.b16 %v5434, %v5432
  %v5455 = vpack.c.b16 %v5435, %v5433
  %v5456 = vpack.c.b16 %v5438, %v5436
  %v5457 = vpack.c.b16 %v5439, %v5437
  %v5458 = vpack.c.b16 %v5442, %v5440
  %v5459 = vpack.c.b16 %v5443, %v5441
  %5476 = vmatprep.subr.bf16.mxu0 %v5445
  %5477 = vmatpush1.bf16.msra.mxu0 %v5444
  %5478 = vmatprep.subr.bf16.mxu0 %v5447
  %5479 = vmatpush1.bf16.msra.mxu0 %v5446
  %5480 = vmatprep.subr.bf16.mxu0 %v5449
  %5481 = vmatpush1.bf16.msra.mxu0 %v5448
  %5482 = vmatprep.subr.bf16.mxu0 %v5451
  %5483 = vmatpush1.bf16.msra.mxu0 %v5450
  %5484 = vmatprep.subr.bf16.mxu0 %v5453
  %5485 = vmatpush1.bf16.msra.mxu0 %v5452
  %5486 = vmatprep.subr.bf16.mxu0 %v5455
  %5487 = vmatpush1.bf16.msra.mxu0 %v5454
  %5488 = vmatprep.subr.bf16.mxu0 %v5457
  %5489 = vmatpush1.bf16.msra.mxu0 %v5456
  %5490 = vmatprep.subr.bf16.mxu0 %v5459
  %5491 = vmatpush1.bf16.msra.mxu0 %v5458
  %5492 = vmatprep.subr.bf16.mxu0 0
  %5493 = vmatpush1.bf16.msra.mxu0 0
  %5494 = vmatprep.subr.bf16.mxu0 0
  %5495 = vmatpush1.bf16.msra.mxu0 0
  %5496 = vmatprep.subr.bf16.mxu0 0
  %5497 = vmatpush1.bf16.msra.mxu0 0
  %5498 = vmatprep.subr.bf16.mxu0 0
  %5499 = vmatpush1.bf16.msra.mxu0 0
  %5500 = vmatprep.subr.bf16.mxu0 0
  %5501 = vmatpush1.bf16.msra.mxu0 0
  %5502 = vmatprep.subr.bf16.mxu0 0
  %5503 = vmatpush1.bf16.msra.mxu0 0
  %5504 = vmatprep.subr.bf16.mxu0 0
  %5505 = vmatpush1.bf16.msra.mxu0 0
  %5506 = vmatprep.subr.bf16.mxu0 0
  %5507 = vmatpush1.bf16.msra.mxu0 0
  %5508 = vmatprep.mubr.bf16.mxu0 0
  %5509 = vmatmul.mubr.bf16.gmra.mrb[0].mxu0 %v5367
  %v5510 = vpop.f32.mrb[0].mxu0
  %v5511 = vadd.f32 %v5389, %v5510
  %v5512 = vpop.f32.mrb[0].mxu0
  %v5513 = vadd.f32 %v5393, %v5512
  %v5514 = vpop.f32.mrb[0].mxu0
  %v5515 = vpop.f32.mrb[0].mxu0
  %5516 = vdwg.mxu0
  %v5519 = vcombine.low %v5511, %v5513
  %v5521 = vunpack.c.l.s4 1983009808
  %v5522 = vunpack.c.0.s8 %v5521
  %v5523 = vlaneseq
  %v5524 = vshrl.u32 %v5523, 7
  %v5525 = vsub.s32 %v5522, %v5524
  %v5526 = vrot.slane %v5519, %v5525
  %5528 = vst [vmem:[%s11] sm:$0xf] %v5526
  // Predicated region
  $region46: #{vit_image_encoder.1} parent=0 // pred_check
    _
  $region47: #{vit_image_encoder.1} parent=0 // pred_check_branch
    %5530 = sbr.rel (0) target = $region49
  $region48: #{vit_image_encoder.1} parent=0 // pred_region
    _
  $region49: #{vit_image_encoder.1} parent=0 // pred_fallthru
    _
  // Predicated region
  $region50: #{vit_image_encoder.1} parent=0 // pred_check
    _
  $region51: #{vit_image_encoder.1} parent=0 // pred_check_branch
    %5532 = sbr.rel (0) target = $region53
  $region52: #{vit_image_encoder.1} parent=0 // pred_region
    _
  $region53: #{vit_image_encoder.1} parent=0 // pred_fallthru
    _

</llo_original>
